<compile_context>
chip_gen: v6e
topology: v6e:2x2x1
jax: 0.10.0
libtpu: 0.0.40
codegen_flags: <defaults>
</compile_context>

<pallas_src>
import functools
import math

import jax
import jax.numpy as jnp
from jax import lax
from jax.experimental import pallas as pl
from jax.experimental.pallas import tpu as pltpu


# ----------------------------------------------------------------------------
# In-kernel helpers
# ----------------------------------------------------------------------------

def _ln(x, g, b, eps):
    """LayerNorm over the last axis. x: [M, C], g/b: [1, C]."""
    mu = jnp.mean(x, axis=-1, keepdims=True)
    xc = x - mu
    var = jnp.mean(xc * xc, axis=-1, keepdims=True)
    return xc * lax.rsqrt(var + eps) * g + b


def _heads_attn(q, k, v, nhead, scale):
    """Per-head softmax attention. q: [Lq, C], k/v: [Lk, C] -> [Lq, C] (f32)."""
    _, C = q.shape
    dh = C // nhead
    outs = []
    for h in range(nhead):
        lo, hi = h * dh, (h + 1) * dh
        qh, kh, vh = q[:, lo:hi], k[:, lo:hi], v[:, lo:hi]
        s = lax.dot_general(qh, kh, (((1,), (1,)), ((), ())),
                            preferred_element_type=jnp.float32) * scale
        m = jnp.max(s, axis=-1, keepdims=True)
        p = jnp.exp(s - m)
        p = p * pl.reciprocal(jnp.sum(p, axis=-1, keepdims=True), approx=True)
        outs.append(jnp.dot(p, vh, preferred_element_type=jnp.float32))
    return jnp.concatenate(outs, axis=-1)


def _bcast_spec(arr):
    """BlockSpec for a weight that is identical for every grid step."""
    nd = arr.ndim
    return pl.BlockSpec(arr.shape, lambda *_, _nd=nd: (0,) * _nd)


def _bf16(w):
    return w.astype(jnp.bfloat16)


# ----------------------------------------------------------------------------
# Pallas kernels
# ----------------------------------------------------------------------------

def _linear_kernel(a_ref, w_ref, *rest, relu, has_bias):
    o_ref = rest[-1]
    acc = jnp.dot(a_ref[...].astype(jnp.bfloat16), w_ref[...],
                  preferred_element_type=jnp.float32)
    if has_bias:
        acc = acc + rest[0][...]
    if relu:
        acc = jnp.maximum(acc, 0.0)
    o_ref[...] = acc


def pallas_linear(a, w, bias=None, relu=False):
    """a: [M, K] @ w: [K, N] (+ bias[1, N]) (+ ReLU) -> [M, N] f32.

    Weights run through the MXU in bf16 with f32 accumulation. For large M the
    row axis is tiled with a 1-D grid (double-buffered, "parallel" so multi-TC
    chips can shard it); for small M the whole slab sits in VMEM.
    """
    M, K = a.shape
    K2, N = w.shape
    assert K == K2
    has_bias = bias is not None
    kern = functools.partial(_linear_kernel, relu=relu, has_bias=has_bias)
    args = [a, _bf16(w)]
    if has_bias:
        args.append(jnp.reshape(bias, (1, N)).astype(jnp.float32))

    tm = None
    for cand in (1024, 512, 256):
        if M > cand and M % cand == 0:
            tm = cand
            break

    if tm is None:
        return pl.pallas_call(
            kern,
            out_shape=jax.ShapeDtypeStruct((M, N), jnp.float32),
            in_specs=[pl.BlockSpec(memory_space=pltpu.MemorySpace.VMEM)] * len(args),
            out_specs=pl.BlockSpec(memory_space=pltpu.MemorySpace.VMEM),
        )(*args)

    in_specs = [pl.BlockSpec((tm, K), lambda i: (i, 0)),
                pl.BlockSpec((K, N), lambda i: (0, 0))]
    if has_bias:
        in_specs.append(pl.BlockSpec((1, N), lambda i: (0, 0)))
    return pl.pallas_call(
        kern,
        out_shape=jax.ShapeDtypeStruct((M, N), jnp.float32),
        grid=(M // tm,),
        in_specs=in_specs,
        out_specs=pl.BlockSpec((tm, N), lambda i: (i, 0)),
        compiler_params=pltpu.CompilerParams(dimension_semantics=("parallel",)),
    )(*args)


def _dcc_kernel(x_ref, dcc_ref, dww_ref, dwb_ref, g1_ref, b1_ref,
                pww_ref, pwb_ref, g2_ref, b2_ref, o_ref, *, dilation, t_out, eps):
    """One fused DepthwiseSeparableConv layer + residual, channel-last."""
    xin = dcc_ref[0]                                    # [T_in, C] f32
    w = dww_ref[...]                                    # [3, C]
    d = dilation
    y = (w[0:1, :] * xin[0:t_out, :]
         + w[1:2, :] * xin[d:d + t_out, :]
         + w[2:3, :] * xin[2 * d:2 * d + t_out, :]) + dwb_ref[...]
    y = jnp.maximum(_ln(y, g1_ref[...], b1_ref[...], eps), 0.0)
    y = jnp.dot(y.astype(jnp.bfloat16), pww_ref[...],
                preferred_element_type=jnp.float32) + pwb_ref[...]
    y = jnp.maximum(_ln(y, g2_ref[...], b2_ref[...], eps), 0.0)
    o_ref[0] = x_ref[0] + y                             # residual add fused


def fused_dcc_layer(x, dcc_in, p, dilation):
    """x: [B, T, C]; dcc_in: [B, T + 2*dilation, C] -> [B, T, C]."""
    B, T, C = x.shape
    Tin = dcc_in.shape[1]
    weights = (p["dw_w"], p["dw_b"], p["ln1_g"], p["ln1_b"],
               _bf16(p["pw_w"]), p["pw_b"], p["ln2_g"], p["ln2_b"])
    kern = functools.partial(_dcc_kernel, dilation=dilation, t_out=T, eps=1e-5)
    return pl.pallas_call(
        kern,
        out_shape=jax.ShapeDtypeStruct((B, T, C), jnp.float32),
        grid=(B,),
        in_specs=[pl.BlockSpec((1, T, C), lambda b: (b, 0, 0)),
                  pl.BlockSpec((1, Tin, C), lambda b: (b, 0, 0))]
                 + [_bcast_spec(w) for w in weights],
        out_specs=pl.BlockSpec((1, T, C), lambda b: (b, 0, 0)),
        compiler_params=pltpu.CompilerParams(dimension_semantics=("parallel",)),
    )(x, dcc_in, *weights)


def _dec_layer_kernel(tgt_ref, mem_ref,
                      wqkv_ref, bqkv_ref, wos_ref, bos_ref,
                      wqc_ref, bqc_ref, wkvc_ref, bkvc_ref, woc_ref, boc_ref,
                      n1g, n1b, n2g, n2b, n3g, n3b,
                      w1_ref, b1_ref, w2_ref, b2_ref,
                      o_ref, *, chunk, nhead, eps):
    """One full CausalTransformerDecoderLayer (post-norm, ReLU FFN)."""
    tgt = tgt_ref[0]                                    # [Lt, C] f32
    mem = mem_ref[0]                                    # [Lm, C] f32
    Lt, C = tgt.shape
    dh = C // nhead
    scale = 1.0 / math.sqrt(dh)

    # ---- self attention: Q from last chunk, K/V from full context ----------
    qkv = jnp.dot(tgt.astype(jnp.bfloat16), wqkv_ref[...],
                  preferred_element_type=jnp.float32) + bqkv_ref[...]   # [Lt, 3C]
    q_s = qkv[Lt - chunk:, 0:C]
    k_s = qkv[:, C:2 * C]
    v_s = qkv[:, 2 * C:3 * C]
    sa = _heads_attn(q_s, k_s, v_s, nhead, scale)                       # [chunk, C]
    sa = jnp.dot(sa.astype(jnp.bfloat16), wos_ref[...],
                 preferred_element_type=jnp.float32) + bos_ref[...]
    x = _ln(tgt[Lt - chunk:, :] + sa, n1g[...], n1b[...], eps)

    # ---- cross attention ----------------------------------------------------
    qc = jnp.dot(x.astype(jnp.bfloat16), wqc_ref[...],
                 preferred_element_type=jnp.float32) + bqc_ref[...]
    kv = jnp.dot(mem.astype(jnp.bfloat16), wkvc_ref[...],
                 preferred_element_type=jnp.float32) + bkvc_ref[...]    # [Lm, 2C]
    ca = _heads_attn(qc, kv[:, 0:C], kv[:, C:2 * C], nhead, scale)
    ca = jnp.dot(ca.astype(jnp.bfloat16), woc_ref[...],
                 preferred_element_type=jnp.float32) + boc_ref[...]
    x = _ln(x + ca, n2g[...], n2b[...], eps)

    # ---- feed-forward -------------------------------------------------------
    h = jnp.maximum(jnp.dot(x.astype(jnp.bfloat16), w1_ref[...],
                            preferred_element_type=jnp.float32) + b1_ref[...], 0.0)
    h = jnp.dot(h.astype(jnp.bfloat16), w2_ref[...],
                preferred_element_type=jnp.float32) + b2_ref[...]
    x = _ln(x + h, n3g[...], n3b[...], eps)
    o_ref[0] = x


def fused_decoder_layer(tgt_ctx, mem_ctx, p, chunk, nhead):
    """tgt_ctx: [N, Lt, C], mem_ctx: [N, Lm, C] -> [N, chunk, C]."""
    N, Lt, C = tgt_ctx.shape
    _, Lm, _ = mem_ctx.shape
    weights = (_bf16(p["wqkv_s"]), p["bqkv_s"], _bf16(p["wo_s"]), p["bo_s"],
               _bf16(p["wq_c"]), p["bq_c"], _bf16(p["wkv_c"]), p["bkv_c"],
               _bf16(p["wo_c"]), p["bo_c"],
               p["norm1_g"], p["norm1_b"], p["norm2_g"], p["norm2_b"],
               p["norm3_g"], p["norm3_b"],
               _bf16(p["w1"]), p["b1"], _bf16(p["w2"]), p["b2"])
    kern = functools.partial(_dec_layer_kernel, chunk=chunk, nhead=nhead, eps=1e-5)
    return pl.pallas_call(
        kern,
        out_shape=jax.ShapeDtypeStruct((N, chunk, C), jnp.float32),
        grid=(N,),
        in_specs=[pl.BlockSpec((1, Lt, C), lambda n: (n, 0, 0)),
                  pl.BlockSpec((1, Lm, C), lambda n: (n, 0, 0))]
                 + [_bcast_spec(w) for w in weights],
        out_specs=pl.BlockSpec((1, chunk, C), lambda n: (n, 0, 0)),
        compiler_params=pltpu.CompilerParams(dimension_semantics=("parallel",)),
    )(tgt_ctx, mem_ctx, *weights)


def _mask_apply_kernel(dec_ref, w_ref, b_ref, skip_ref, xin_ref, o_ref):
    """out = x_in * (enc_skip + relu(dec_out @ W_d2e + b)) — all fused."""
    m = jnp.dot(dec_ref[...].astype(jnp.bfloat16), w_ref[...],
                preferred_element_type=jnp.float32) + b_ref[...]
    m = jnp.maximum(m, 0.0)
    o_ref[...] = xin_ref[...] * (skip_ref[...] + m)


def mask_apply(dec_out, w_d2e, b_d2e, skip, x_in):
    M, Cd = dec_out.shape
    Ce = w_d2e.shape[1]
    return pl.pallas_call(
        _mask_apply_kernel,
        out_shape=jax.ShapeDtypeStruct((M, Ce), jnp.float32),
        in_specs=[pl.BlockSpec(memory_space=pltpu.MemorySpace.VMEM)] * 5,
        out_specs=pl.BlockSpec(memory_space=pltpu.MemorySpace.VMEM),
    )(dec_out, _bf16(w_d2e), jnp.reshape(b_d2e, (1, Ce)).astype(jnp.float32),
      skip, x_in)


def _out_conv_kernel(x_ref, w_ref, o_ref, *, nk, l):
    """ConvTranspose1d (C -> 1) as matmul + fused overlap-add."""
    x = x_ref[0]                                        # [Tc, C]
    contrib = jnp.dot(x.astype(jnp.bfloat16), w_ref[...],
                      preferred_element_type=jnp.float32)   # [Tc, nk*l]
    acc = None
    for j in range(nk):
        part = contrib[:, j * l:(j + 1) * l]            # [Tc, l]
        pieces = []
        if j > 0:
            pieces.append(jnp.zeros((j, l), jnp.float32))
        pieces.append(part)
        if nk - 1 - j > 0:
            pieces.append(jnp.zeros((nk - 1 - j, l), jnp.float32))
        seg = pieces[0] if len(pieces) == 1 else jnp.concatenate(pieces, axis=0)
        acc = seg if acc is None else acc + seg
    o_ref[0] = acc                                      # [Tc + nk - 1, l]


def out_conv(x, w_out, L, out_buf_len):
    """x: [B, Tc, C] channel-last -> [B, 1, out_len]."""
    B, Tc, C = x.shape
    K = (out_buf_len + 1) * L
    pad = out_buf_len * L
    nk = K // L
    kern = functools.partial(_out_conv_kernel, nk=nk, l=L)
    y = pl.pallas_call(
        kern,
        out_shape=jax.ShapeDtypeStruct((B, Tc + nk - 1, L), jnp.float32),
        grid=(B,),
        in_specs=[pl.BlockSpec((1, Tc, C), lambda b: (b, 0, 0)),
                  pl.BlockSpec((C, K), lambda b: (0, 0))],
        out_specs=pl.BlockSpec((1, Tc + nk - 1, L), lambda b: (b, 0, 0)),
        compiler_params=pltpu.CompilerParams(dimension_semantics=("parallel",)),
    )(x, _bf16(w_out))
    y_full = y.reshape(B, (Tc + nk - 1) * L)
    out_len = (Tc - 1) * L - 2 * pad + K
    return y_full[:, pad:pad + out_len][:, None, :]


# ----------------------------------------------------------------------------
# Model glue (padding, gathers, buffers) — plain JAX, no data movement kernels
# ----------------------------------------------------------------------------

def mod_pad(x, chunk_size, pad):
    """x: [B, C, T]; pad last axis to a multiple of chunk_size, then pad."""
    mod = 0
    if x.shape[-1] % chunk_size != 0:
        mod = chunk_size - x.shape[-1] % chunk_size
    x = jnp.pad(x, ((0, 0), (0, 0), (0, mod)))
    x = jnp.pad(x, ((0, 0), (0, 0), (pad[0], pad[1])))
    return x, mod


def positional_encoding(max_len, d_model):
    pos = jnp.arange(max_len)[:, None].astype(jnp.float32)
    div = jnp.exp(jnp.arange(0, d_model, 2).astype(jnp.float32)
                  * (-math.log(10000.0) / d_model))
    pe = jnp.zeros((max_len, d_model), jnp.float32)
    pe = pe.at[:, 0::2].set(jnp.sin(pos * div))
    pe = pe.at[:, 1::2].set(jnp.cos(pos * div))
    return pe[None]                                     # [1, max_len, d_model]


def causal_unfold(x, ctx_len, chunk):
    """x: [B, ctx_len + T, C] -> [B * (T // chunk), ctx_len + chunk, C]."""
    B, Ttot, C = x.shape
    T = Ttot - ctx_len
    n = T // chunk
    idx = jnp.arange(n)[:, None] * chunk + jnp.arange(ctx_len + chunk)[None, :]
    out = x[:, idx, :]                                  # [B, n, ctx+chunk, C]
    return out.reshape(B * n, ctx_len + chunk, C)


# ----------------------------------------------------------------------------
# Net forward pieces (channel-last [B, T, C] activations throughout)
# ----------------------------------------------------------------------------

def in_conv(x, w_in, L, enc_dim):
    """Conv1d(n_mics, enc_dim, k=7L, stride=L, bias=False) + ReLU via im2col."""
    B, _, Tp = x.shape
    K = w_in.shape[0]
    Tout = (Tp - K) // L + 1
    idx = (jnp.arange(Tout) * L)[:, None] + jnp.arange(K)[None, :]
    patches = x[:, 0, :][:, idx]                        # [B, Tout, K]  (n_mics=1)
    y = pallas_linear(patches.reshape(B * Tout, K), w_in, relu=True)
    return y.reshape(B, Tout, enc_dim)                  # channel-last


def encoder_forward(x, enc_buf, enc_params):
    """DilatedCausalConvEncoder, channel-last. x: [B, T, C], enc_buf: [B, buf, C]."""
    num_layers = len(enc_params["dcc"])
    kernel_size = 3
    buf_lengths = [(kernel_size - 1) * 2 ** i for i in range(num_layers)]
    buf_indices = [0]
    for i in range(num_layers - 1):
        buf_indices.append(buf_indices[-1] + buf_lengths[i])
    for i in range(num_layers):
        p = enc_params["dcc"][i]
        s, l = buf_indices[i], buf_lengths[i]
        dcc_in = jnp.concatenate([enc_buf[:, s:s + l, :], x], axis=1)
        enc_buf = enc_buf.at[:, s:s + l, :].set(dcc_in[:, -l:, :])
        x = fused_dcc_layer(x, dcc_in, p, dilation=2 ** i)
    return x, enc_buf


def decoder_forward(tgt, mem, dec_buf, dec_params, ctx_len, chunk, nhead,
                    use_pos_enc=True):
    """CausalTransformerDecoder.forward, channel-last. tgt/mem: [B, T, C]."""
    B, T0, C = tgt.shape
    mod = (-T0) % chunk
    if mod:
        tgt = jnp.pad(tgt, ((0, 0), (0, mod), (0, 0)))
        mem = jnp.pad(mem, ((0, 0), (0, mod), (0, 0)))
    T = T0 + mod

    mem = jnp.concatenate([dec_buf[:, 0], mem], axis=1)
    dec_buf = dec_buf.at[:, 0].set(mem[:, -ctx_len:])
    mem_ctx = causal_unfold(mem, ctx_len, chunk)
    pe = dec_params["pos_enc"]
    if use_pos_enc:
        mem_ctx = mem_ctx + pe[:, :mem_ctx.shape[1], :]

    # NOTE: the K=1000 micro-batching loop of the reference is a no-op here.
    for i, lp in enumerate(dec_params["layers"]):
        tgt = jnp.concatenate([dec_buf[:, i + 1], tgt], axis=1)
        dec_buf = dec_buf.at[:, i + 1].set(tgt[:, -ctx_len:])
        tgt_ctx = causal_unfold(tgt, ctx_len, chunk)
        if use_pos_enc and i == 0:
            tgt_ctx = tgt_ctx + pe[:, :tgt_ctx.shape[1], :]
        out = fused_decoder_layer(tgt_ctx, mem_ctx, lp, chunk, nhead)  # [B*n, chunk, C]
        tgt = out.reshape(B, T, C)
    if mod:
        tgt = tgt[:, :T0, :]
    return tgt, dec_buf


def mask_net_apply(x_in, enc_buf, dec_buf, mp, cfg):
    """MaskNet (proj=True, skip_connection=True) fused with the final x*m mask.

    Returns in_conv(x) * (encoder_out + relu(proj_d2e(decoder_out))).
    """
    x_enc, enc_buf = encoder_forward(x_in, enc_buf, mp["encoder"])
    B, T, C = x_enc.shape
    # grouped 1x1 conv realized as block-diagonal dense matmul (exact) + ReLU
    e = pallas_linear(x_enc.reshape(B * T, C), mp["proj_e2d_w"],
                      mp["proj_e2d_b"], relu=True)
    e = e.reshape(B, T, cfg["dec_dim"])
    d, dec_buf = decoder_forward(e, e, dec_buf, mp["decoder"],
                                 cfg["dec_buf_len"], cfg["dec_chunk_size"],
                                 cfg["nhead"])
    masked = mask_apply(d.reshape(B * T, cfg["dec_dim"]),
                        mp["proj_d2e_w"], mp["proj_d2e_b"],
                        x_enc.reshape(B * T, C), x_in.reshape(B * T, C))
    return masked.reshape(B, T, C), enc_buf, dec_buf


def init_buffers(B, cfg):
    enc_buf = jnp.zeros((B, 2 * (2 ** cfg["num_enc_layers"] - 1),
                         cfg["enc_dim"]), jnp.float32)          # channel-last
    dec_buf = jnp.zeros((B, cfg["num_dec_layers"] + 1,
                         cfg["dec_buf_len"], cfg["dec_dim"]), jnp.float32)
    out_buf = jnp.zeros((B, cfg["out_buf_len"], cfg["enc_dim"]), jnp.float32)
    return enc_buf, dec_buf, out_buf


def net_forward(x, params, cfg):
    """Net.forward / Net.predict with pad=True, input_state=None."""
    L = cfg["L"]
    x, mod = mod_pad(x, L, (0, 6 * L))                  # lookahead=True
    enc_buf, dec_buf, out_buf = init_buffers(x.shape[0], cfg)
    x_in = in_conv(x, params["in_conv_w"], L, cfg["enc_dim"])     # [B, T, C]
    x_masked, enc_buf, dec_buf = mask_net_apply(x_in, enc_buf, dec_buf,
                                                params["mask_gen"], cfg)
    x_cat = jnp.concatenate([out_buf, x_masked], axis=1)          # [B, T+obl, C]
    y = out_conv(x_cat, params["out_conv_w"], L, cfg["out_buf_len"])
    if mod != 0:
        y = y[:, :, :-mod]
    return y                                            # next_state is None in predict()


# ----------------------------------------------------------------------------
# Deterministic parameter construction
# ----------------------------------------------------------------------------

def init_params(key, cfg):
    L, enc_dim, dec_dim = cfg["L"], cfg["enc_dim"], cfg["dec_dim"]
    ff_dim = 2 * dec_dim
    r = enc_dim // dec_dim
    keys = iter(jax.random.split(key, 256))

    def rnd(shape, fan_in):
        return jax.random.normal(next(keys), shape, jnp.float32) / math.sqrt(fan_in)

    params = {"in_conv_w": rnd((7 * L * cfg["n_mics"], enc_dim),
                               7 * L * cfg["n_mics"])}

    enc_layers = []
    for _ in range(cfg["num_enc_layers"]):
        enc_layers.append(dict(
            dw_w=rnd((3, enc_dim), 3), dw_b=rnd((1, enc_dim), 3),
            ln1_g=jnp.ones((1, enc_dim), jnp.float32),
            ln1_b=jnp.zeros((1, enc_dim), jnp.float32),
            pw_w=rnd((enc_dim, enc_dim), enc_dim), pw_b=rnd((1, enc_dim), enc_dim),
            ln2_g=jnp.ones((1, enc_dim), jnp.float32),
            ln2_b=jnp.zeros((1, enc_dim), jnp.float32),
        ))

    # proj_e2d_e: Conv1d(enc_dim, dec_dim, 1, groups=dec_dim) -> block-diag [enc, dec]
    w_e2d = rnd((dec_dim, r), r)
    rows = (jnp.arange(dec_dim)[:, None] * r + jnp.arange(r)[None, :]).reshape(-1)
    cols = jnp.repeat(jnp.arange(dec_dim), r)
    proj_e2d_w = jnp.zeros((enc_dim, dec_dim), jnp.float32).at[rows, cols].set(
        w_e2d.reshape(-1))
    proj_e2d_b = rnd((1, dec_dim), r)

    # proj_d2e: Conv1d(dec_dim, enc_dim, 1, groups=dec_dim) -> block-diag [dec, enc]
    w_d2e = rnd((enc_dim,), 1)
    cols2 = jnp.arange(enc_dim)
    rows2 = cols2 // r
    proj_d2e_w = jnp.zeros((dec_dim, enc_dim), jnp.float32).at[rows2, cols2].set(w_d2e)
    proj_d2e_b = rnd((1, enc_dim), 1)

    dec_layers = []
    for _ in range(cfg["num_dec_layers"]):
        dec_layers.append(dict(
            wqkv_s=rnd((dec_dim, 3 * dec_dim), dec_dim),
            bqkv_s=jnp.zeros((1, 3 * dec_dim), jnp.float32),
            wo_s=rnd((dec_dim, dec_dim), dec_dim),
            bo_s=jnp.zeros((1, dec_dim), jnp.float32),
            wq_c=rnd((dec_dim, dec_dim), dec_dim),
            bq_c=jnp.zeros((1, dec_dim), jnp.float32),
            wkv_c=rnd((dec_dim, 2 * dec_dim), dec_dim),
            bkv_c=jnp.zeros((1, 2 * dec_dim), jnp.float32),
            wo_c=rnd((dec_dim, dec_dim), dec_dim),
            bo_c=jnp.zeros((1, dec_dim), jnp.float32),
            norm1_g=jnp.ones((1, dec_dim), jnp.float32),
            norm1_b=jnp.zeros((1, dec_dim), jnp.float32),
            norm2_g=jnp.ones((1, dec_dim), jnp.float32),
            norm2_b=jnp.zeros((1, dec_dim), jnp.float32),
            norm3_g=jnp.ones((1, dec_dim), jnp.float32),
            norm3_b=jnp.zeros((1, dec_dim), jnp.float32),
            w1=rnd((dec_dim, ff_dim), dec_dim),
            b1=jnp.zeros((1, ff_dim), jnp.float32),
            w2=rnd((ff_dim, dec_dim), ff_dim),
            b2=jnp.zeros((1, dec_dim), jnp.float32),
        ))

    params["mask_gen"] = dict(
        encoder=dict(dcc=enc_layers),
        proj_e2d_w=proj_e2d_w, proj_e2d_b=proj_e2d_b,
        proj_d2e_w=proj_d2e_w, proj_d2e_b=proj_d2e_b,
        decoder=dict(layers=dec_layers,
                     pos_enc=positional_encoding(200, dec_dim)),
    )
    params["out_conv_w"] = rnd((enc_dim, (cfg["out_buf_len"] + 1) * L), enc_dim)
    return params


# ----------------------------------------------------------------------------
# Main
# ----------------------------------------------------------------------------

CFG = dict(n_mics=1, L=4, enc_dim=128, num_enc_layers=2, dec_dim=64,
           dec_buf_len=8, num_dec_layers=2, dec_chunk_size=4, out_buf_len=2,
           nhead=8)

if __name__ == "__main__":
    key = jax.random.PRNGKey(0)
    pkey, xkey = jax.random.split(key)
    params = init_params(pkey, CFG)

    # inputs['mixture']: [B, n_mics, T]  (T=30 exercises the mod-padding path)
    x = jax.random.normal(xkey, (2, CFG["n_mics"], 30), jnp.float32)

    fwd = jax.jit(lambda inp, prm: net_forward(inp, prm, CFG))
    out = fwd(x, params)
    out = jax.block_until_ready(out)
    assert out.shape == (2, 1, 30), out.shape
    assert bool(jnp.all(jnp.isfinite(out)))
    print("KERNEL_OK")
</pallas_src>

<mosaic_0001>
module attributes {stable_mosaic.version = 11 : i64} {
  func.func @_linear_kernel(%arg0: memref<16x28xf32, #tpu.memory_space<vmem>>, %arg1: memref<28x128xbf16, #tpu.memory_space<vmem>>, %arg2: memref<16x128xf32, #tpu.memory_space<vmem>>) attributes {dimension_semantics = [], scalar_prefetch = 0 : i64, scratch_operands = 0 : i64, tpu.core_type = #tpu.core_type<tc>} {
    %c0 = arith.constant 0 : index
    %c0_0 = arith.constant 0 : index
    %0 = vector.load %arg0[%c0, %c0_0] : memref<16x28xf32, #tpu.memory_space<vmem>>, vector<16x28xf32>
    %1 = arith.truncf %0 : vector<16x28xf32> to vector<16x28xbf16>
    %c0_1 = arith.constant 0 : index
    %c0_2 = arith.constant 0 : index
    %2 = vector.load %arg1[%c0_1, %c0_2] : memref<28x128xbf16, #tpu.memory_space<vmem>>, vector<28x128xbf16>
    %cst = arith.constant dense<0.000000e+00> : vector<16x128xf32>
    %3 = tpu.matmul %1, %2, %cst {dimension_numbers = #tpu.dot_dimension_numbers<[1], [0], [0], [1], [0, 0, 1, 1], [], []>} : vector<16x28xbf16>, vector<28x128xbf16>, vector<16x128xf32> -> vector<16x128xf32>
    %cst_3 = arith.constant 0.000000e+00 : f32
    %4 = vector.broadcast %cst_3 : f32 to vector<16x128xf32>
    %5 = arith.maximumf %3, %4 : vector<16x128xf32>
    %c0_4 = arith.constant 0 : index
    %c0_5 = arith.constant 0 : index
    %6 = vector.load %arg2[%c0_4, %c0_5] : memref<16x128xf32, #tpu.memory_space<vmem>>, vector<16x128xf32>
    tpu.vector_store %arg2[%c0_4, %c0_5], %5 {strides = array<i32>} : memref<16x128xf32, #tpu.memory_space<vmem>>, vector<16x128xf32>,
    return
  }
}

module attributes {stable_mosaic.version = 11 : i64} {
  func.func @_dcc_kernel(%arg0: i32, %arg1: memref<1x8x128xf32, #tpu.memory_space<vmem>>, %arg2: memref<1x10x128xf32, #tpu.memory_space<vmem>>, %arg3: memref<3x128xf32, #tpu.memory_space<vmem>>, %arg4: memref<1x128xf32, #tpu.memory_space<vmem>>, %arg5: memref<1x128xf32, #tpu.memory_space<vmem>>, %arg6: memref<1x128xf32, #tpu.memory_space<vmem>>, %arg7: memref<128x128xbf16, #tpu.memory_space<vmem>>, %arg8: memref<1x128xf32, #tpu.memory_space<vmem>>, %arg9: memref<1x128xf32, #tpu.memory_space<vmem>>, %arg10: memref<1x128xf32, #tpu.memory_space<vmem>>, %arg11: memref<1x8x128xf32, #tpu.memory_space<vmem>>) attributes {dimension_semantics = [#tpu.dimension_semantics<parallel>], iteration_bounds = array<i64: 2>, scalar_prefetch = 0 : i64, scratch_operands = 0 : i64, tpu.core_type = #tpu.core_type<tc>, window_params = [{transform_indices = @transform_0, window_bounds = array<i64: 1, 8, 128>}, {transform_indices = @transform_1, window_bounds = array<i64: 1, 10, 128>}, {pipeline_mode = #tpu.pipeline_mode<synchronous>, transform_indices = @transform_2, window_bounds = array<i64: 3, 128>}, {pipeline_mode = #tpu.pipeline_mode<synchronous>, transform_indices = @transform_3, window_bounds = array<i64: 1, 128>}, {pipeline_mode = #tpu.pipeline_mode<synchronous>, transform_indices = @transform_4, window_bounds = array<i64: 1, 128>}, {pipeline_mode = #tpu.pipeline_mode<synchronous>, transform_indices = @transform_5, window_bounds = array<i64: 1, 128>}, {pipeline_mode = #tpu.pipeline_mode<synchronous>, transform_indices = @transform_6, window_bounds = array<i64: 128, 128>}, {pipeline_mode = #tpu.pipeline_mode<synchronous>, transform_indices = @transform_7, window_bounds = array<i64: 1, 128>}, {pipeline_mode = #tpu.pipeline_mode<synchronous>, transform_indices = @transform_8, window_bounds = array<i64: 1, 128>}, {pipeline_mode = #tpu.pipeline_mode<synchronous>, transform_indices = @transform_9, window_bounds = array<i64: 1, 128>}, {transform_indices = @transform_10, window_bounds = array<i64: 1, 8, 128>}]} {
    %c0 = arith.constant 0 : index
    %c0_0 = arith.constant 0 : index
    %c0_1 = arith.constant 0 : index
    %0 = vector.load %arg2[%c0, %c0_0, %c0_1] : memref<1x10x128xf32, #tpu.memory_space<vmem>>, vector<1x10x128xf32>
    %1 = vector.shape_cast %0 : vector<1x10x128xf32> to vector<10x128xf32>
    %c0_2 = arith.constant 0 : index
    %c0_3 = arith.constant 0 : index
    %2 = vector.load %arg3[%c0_2, %c0_3] : memref<3x128xf32, #tpu.memory_space<vmem>>, vector<3x128xf32>
    %3 = vector.extract_strided_slice %2 {offsets = [0, 0], sizes = [1, 128], strides = [1, 1]} : vector<3x128xf32> to vector<1x128xf32>
    %4 = vector.extract_strided_slice %1 {offsets = [0, 0], sizes = [8, 128], strides = [1, 1]} : vector<10x128xf32> to vector<8x128xf32>
    %5 = vector.broadcast %3 : vector<1x128xf32> to vector<8x128xf32>
    %6 = arith.mulf %5, %4 : vector<8x128xf32>
    %7 = vector.extract_strided_slice %2 {offsets = [1, 0], sizes = [1, 128], strides = [1, 1]} : vector<3x128xf32> to vector<1x128xf32>
    %8 = vector.extract_strided_slice %1 {offsets = [1, 0], sizes = [8, 128], strides = [1, 1]} : vector<10x128xf32> to vector<8x128xf32>
    %9 = vector.broadcast %7 : vector<1x128xf32> to vector<8x128xf32>
    %10 = arith.mulf %9, %8 : vector<8x128xf32>
    %11 = arith.addf %6, %10 : vector<8x128xf32>
    %12 = vector.extract_strided_slice %2 {offsets = [2, 0], sizes = [1, 128], strides = [1, 1]} : vector<3x128xf32> to vector<1x128xf32>
    %13 = vector.extract_strided_slice %1 {offsets = [2, 0], sizes = [8, 128], strides = [1, 1]} : vector<10x128xf32> to vector<8x128xf32>
    %14 = vector.broadcast %12 : vector<1x128xf32> to vector<8x128xf32>
    %15 = arith.mulf %14, %13 : vector<8x128xf32>
    %16 = arith.addf %11, %15 : vector<8x128xf32>
    %c0_4 = arith.constant 0 : index
    %c0_5 = arith.constant 0 : index
    %17 = vector.load %arg4[%c0_4, %c0_5] : memref<1x128xf32, #tpu.memory_space<vmem>>, vector<1x128xf32>
    %18 = vector.broadcast %17 : vector<1x128xf32> to vector<8x128xf32>
    %19 = arith.addf %16, %18 : vector<8x128xf32>
    %c0_6 = arith.constant 0 : index
    %c0_7 = arith.constant 0 : index
    %20 = vector.load %arg5[%c0_6, %c0_7] : memref<1x128xf32, #tpu.memory_space<vmem>>, vector<1x128xf32>
    %c0_8 = arith.constant 0 : index
    %c0_9 = arith.constant 0 : index
    %21 = vector.load %arg6[%c0_8, %c0_9] : memref<1x128xf32, #tpu.memory_space<vmem>>, vector<1x128xf32>
    %cst = arith.constant dense<0.000000e+00> : vector<8xf32>
    %22 = vector.multi_reduction <add>, %19, %cst [1] : vector<8x128xf32> to vector<8xf32>
    %23 = vector.shape_cast %22 : vector<8xf32> to vector<8x1xf32>
    %cst_10 = arith.constant 1.280000e+02 : f32
    %24 = vector.broadcast %cst_10 : f32 to vector<8x1xf32>
    %25 = arith.divf %23, %24 : vector<8x1xf32>
    %26 = vector.broadcast %25 : vector<8x1xf32> to vector<8x128xf32>
    %27 = arith.subf %19, %26 : vector<8x128xf32>
    %28 = arith.mulf %27, %27 : vector<8x128xf32>
    %cst_11 = arith.constant dense<0.000000e+00> : vector<8xf32>
    %29 = vector.multi_reduction <add>, %28, %cst_11 [1] : vector<8x128xf32> to vector<8xf32>
    %30 = vector.shape_cast %29 : vector<8xf32> to vector<8x1xf32>
    %cst_12 = arith.constant 1.280000e+02 : f32
    %31 = vector.broadcast %cst_12 : f32 to vector<8x1xf32>
    %32 = arith.divf %30, %31 : vector<8x1xf32>
    %cst_13 = arith.constant 9.99999974E-6 : f32
    %33 = vector.broadcast %cst_13 : f32 to vector<8x1xf32>
    %34 = arith.addf %32, %33 : vector<8x1xf32>
    %35 = math.rsqrt %34 : vector<8x1xf32>
    %36 = vector.broadcast %35 : vector<8x1xf32> to vector<8x128xf32>
    %37 = arith.mulf %27, %36 : vector<8x128xf32>
    %38 = vector.broadcast %20 : vector<1x128xf32> to vector<8x128xf32>
    %39 = arith.mulf %37, %38 : vector<8x128xf32>
    %40 = vector.broadcast %21 : vector<1x128xf32> to vector<8x128xf32>
    %41 = arith.addf %39, %40 : vector<8x128xf32>
    %cst_14 = arith.constant 0.000000e+00 : f32
    %42 = vector.broadcast %cst_14 : f32 to vector<8x128xf32>
    %43 = arith.maximumf %41, %42 : vector<8x128xf32>
    %44 = arith.truncf %43 : vector<8x128xf32> to vector<8x128xbf16>
    %c0_15 = arith.constant 0 : index
    %c0_16 = arith.constant 0 : index
    %45 = vector.load %arg7[%c0_15, %c0_16] : memref<128x128xbf16, #tpu.memory_space<vmem>>, vector<128x128xbf16>
    %cst_17 = arith.constant dense<0.000000e+00> : vector<8x128xf32>
    %46 = tpu.matmul %44, %45, %cst_17 {dimension_numbers = #tpu.dot_dimension_numbers<[1], [0], [0], [1], [0, 0, 1, 1], [], []>} : vector<8x128xbf16>, vector<128x128xbf16>, vector<8x128xf32> -> vector<8x128xf32>
    %c0_18 = arith.constant 0 : index
    %c0_19 = arith.constant 0 : index
    %47 = vector.load %arg8[%c0_18, %c0_19] : memref<1x128xf32, #tpu.memory_space<vmem>>, vector<1x128xf32>
    %48 = vector.broadcast %47 : vector<1x128xf32> to vector<8x128xf32>
    %49 = arith.addf %46, %48 : vector<8x128xf32>
    %c0_20 = arith.constant 0 : index
    %c0_21 = arith.constant 0 : index
    %50 = vector.load %arg9[%c0_20, %c0_21] : memref<1x128xf32, #tpu.memory_space<vmem>>, vector<1x128xf32>
    %c0_22 = arith.constant 0 : index
    %c0_23 = arith.constant 0 : index
    %51 = vector.load %arg10[%c0_22, %c0_23] : memref<1x128xf32, #tpu.memory_space<vmem>>, vector<1x128xf32>
    %cst_24 = arith.constant dense<0.000000e+00> : vector<8xf32>
    %52 = vector.multi_reduction <add>, %49, %cst_24 [1] : vector<8x128xf32> to vector<8xf32>
    %53 = vector.shape_cast %52 : vector<8xf32> to vector<8x1xf32>
    %cst_25 = arith.constant 1.280000e+02 : f32
    %54 = vector.broadcast %cst_25 : f32 to vector<8x1xf32>
    %55 = arith.divf %53, %54 : vector<8x1xf32>
    %56 = vector.broadcast %55 : vector<8x1xf32> to vector<8x128xf32>
    %57 = arith.subf %49, %56 : vector<8x128xf32>
    %58 = arith.mulf %57, %57 : vector<8x128xf32>
    %cst_26 = arith.constant dense<0.000000e+00> : vector<8xf32>
    %59 = vector.multi_reduction <add>, %58, %cst_26 [1] : vector<8x128xf32> to vector<8xf32>
    %60 = vector.shape_cast %59 : vector<8xf32> to vector<8x1xf32>
    %cst_27 = arith.constant 1.280000e+02 : f32
    %61 = vector.broadcast %cst_27 : f32 to vector<8x1xf32>
    %62 = arith.divf %60, %61 : vector<8x1xf32>
    %cst_28 = arith.constant 9.99999974E-6 : f32
    %63 = vector.broadcast %cst_28 : f32 to vector<8x1xf32>
    %64 = arith.addf %62, %63 : vector<8x1xf32>
    %65 = math.rsqrt %64 : vector<8x1xf32>
    %66 = vector.broadcast %65 : vector<8x1xf32> to vector<8x128xf32>
    %67 = arith.mulf %57, %66 : vector<8x128xf32>
    %68 = vector.broadcast %50 : vector<1x128xf32> to vector<8x128xf32>
    %69 = arith.mulf %67, %68 : vector<8x128xf32>
    %70 = vector.broadcast %51 : vector<1x128xf32> to vector<8x128xf32>
    %71 = arith.addf %69, %70 : vector<8x128xf32>
    %cst_29 = arith.constant 0.000000e+00 : f32
    %72 = vector.broadcast %cst_29 : f32 to vector<8x128xf32>
    %73 = arith.maximumf %71, %72 : vector<8x128xf32>
    %c0_30 = arith.constant 0 : index
    %c0_31 = arith.constant 0 : index
    %c0_32 = arith.constant 0 : index
    %74 = vector.load %arg1[%c0_30, %c0_31, %c0_32] : memref<1x8x128xf32, #tpu.memory_space<vmem>>, vector<1x8x128xf32>
    %75 = vector.shape_cast %74 : vector<1x8x128xf32> to vector<8x128xf32>
    %76 = arith.addf %75, %73 : vector<8x128xf32>
    %c0_33 = arith.constant 0 : index
    %c0_34 = arith.constant 0 : index
    %c0_35 = arith.constant 0 : index
    %77 = vector.load %arg11[%c0_33, %c0_34, %c0_35] : memref<1x8x128xf32, #tpu.memory_space<vmem>>, vector<1x8x128xf32>
    %78 = vector.shape_cast %77 : vector<1x8x128xf32> to vector<8x128xf32>
    %79 = vector.shape_cast %76 : vector<8x128xf32> to vector<1x8x128xf32>
    tpu.vector_store %arg11[%c0_33, %c0_34, %c0_35], %79 {strides = array<i32>} : memref<1x8x128xf32, #tpu.memory_space<vmem>>, vector<1x8x128xf32>,
    return
  }
  func.func @transform_0(%arg0: i32) -> (i32, i32, i32) {
    %c0_i32 = arith.constant 0 : i32
    %c0_i32_0 = arith.constant 0 : i32
    %c0_i32_1 = arith.constant 0 : i32
    return %arg0, %c0_i32, %c0_i32_0 : i32, i32, i32
  }
  func.func @transform_1(%arg0: i32) -> (i32, i32, i32) {
    %c0_i32 = arith.constant 0 : i32
    %c0_i32_0 = arith.constant 0 : i32
    %c0_i32_1 = arith.constant 0 : i32
    return %arg0, %c0_i32, %c0_i32_0 : i32, i32, i32
  }
  func.func @transform_2(%arg0: i32) -> (i32, i32) {
    %c0_i32 = arith.constant 0 : i32
    %c0_i32_0 = arith.constant 0 : i32
    %c0_i32_1 = arith.constant 0 : i32
    return %c0_i32, %c0_i32_0 : i32, i32
  }
  func.func @transform_3(%arg0: i32) -> (i32, i32) {
    %c0_i32 = arith.constant 0 : i32
    %c0_i32_0 = arith.constant 0 : i32
    %c0_i32_1 = arith.constant 0 : i32
    return %c0_i32, %c0_i32_0 : i32, i32
  }
  func.func @transform_4(%arg0: i32) -> (i32, i32) {
    %c0_i32 = arith.constant 0 : i32
    %c0_i32_0 = arith.constant 0 : i32
    %c0_i32_1 = arith.constant 0 : i32
    return %c0_i32, %c0_i32_0 : i32, i32
  }
  func.func @transform_5(%arg0: i32) -> (i32, i32) {
    %c0_i32 = arith.constant 0 : i32
    %c0_i32_0 = arith.constant 0 : i32
    %c0_i32_1 = arith.constant 0 : i32
    return %c0_i32, %c0_i32_0 : i32, i32
  }
  func.func @transform_6(%arg0: i32) -> (i32, i32) {
    %c0_i32 = arith.constant 0 : i32
    %c0_i32_0 = arith.constant 0 : i32
    %c0_i32_1 = arith.constant 0 : i32
    return %c0_i32, %c0_i32_0 : i32, i32
  }
  func.func @transform_7(%arg0: i32) -> (i32, i32) {
    %c0_i32 = arith.constant 0 : i32
    %c0_i32_0 = arith.constant 0 : i32
    %c0_i32_1 = arith.constant 0 : i32
    return %c0_i32, %c0_i32_0 : i32, i32
  }
  func.func @transform_8(%arg0: i32) -> (i32, i32) {
    %c0_i32 = arith.constant 0 : i32
    %c0_i32_0 = arith.constant 0 : i32
    %c0_i32_1 = arith.constant 0 : i32
    return %c0_i32, %c0_i32_0 : i32, i32
  }
  func.func @transform_9(%arg0: i32) -> (i32, i32) {
    %c0_i32 = arith.constant 0 : i32
    %c0_i32_0 = arith.constant 0 : i32
    %c0_i32_1 = arith.constant 0 : i32
    return %c0_i32, %c0_i32_0 : i32, i32
  }
  func.func @transform_10(%arg0: i32) -> (i32, i32, i32) {
    %c0_i32 = arith.constant 0 : i32
    %c0_i32_0 = arith.constant 0 : i32
    %c0_i32_1 = arith.constant 0 : i32
    return %arg0, %c0_i32, %c0_i32_0 : i32, i32, i32
  }
}

module attributes {stable_mosaic.version = 11 : i64} {
  func.func @_dcc_kernel(%arg0: i32, %arg1: memref<1x8x128xf32, #tpu.memory_space<vmem>>, %arg2: memref<1x12x128xf32, #tpu.memory_space<vmem>>, %arg3: memref<3x128xf32, #tpu.memory_space<vmem>>, %arg4: memref<1x128xf32, #tpu.memory_space<vmem>>, %arg5: memref<1x128xf32, #tpu.memory_space<vmem>>, %arg6: memref<1x128xf32, #tpu.memory_space<vmem>>, %arg7: memref<128x128xbf16, #tpu.memory_space<vmem>>, %arg8: memref<1x128xf32, #tpu.memory_space<vmem>>, %arg9: memref<1x128xf32, #tpu.memory_space<vmem>>, %arg10: memref<1x128xf32, #tpu.memory_space<vmem>>, %arg11: memref<1x8x128xf32, #tpu.memory_space<vmem>>) attributes {dimension_semantics = [#tpu.dimension_semantics<parallel>], iteration_bounds = array<i64: 2>, scalar_prefetch = 0 : i64, scratch_operands = 0 : i64, tpu.core_type = #tpu.core_type<tc>, window_params = [{transform_indices = @transform_0, window_bounds = array<i64: 1, 8, 128>}, {transform_indices = @transform_1, window_bounds = array<i64: 1, 12, 128>}, {pipeline_mode = #tpu.pipeline_mode<synchronous>, transform_indices = @transform_2, window_bounds = array<i64: 3, 128>}, {pipeline_mode = #tpu.pipeline_mode<synchronous>, transform_indices = @transform_3, window_bounds = array<i64: 1, 128>}, {pipeline_mode = #tpu.pipeline_mode<synchronous>, transform_indices = @transform_4, window_bounds = array<i64: 1, 128>}, {pipeline_mode = #tpu.pipeline_mode<synchronous>, transform_indices = @transform_5, window_bounds = array<i64: 1, 128>}, {pipeline_mode = #tpu.pipeline_mode<synchronous>, transform_indices = @transform_6, window_bounds = array<i64: 128, 128>}, {pipeline_mode = #tpu.pipeline_mode<synchronous>, transform_indices = @transform_7, window_bounds = array<i64: 1, 128>}, {pipeline_mode = #tpu.pipeline_mode<synchronous>, transform_indices = @transform_8, window_bounds = array<i64: 1, 128>}, {pipeline_mode = #tpu.pipeline_mode<synchronous>, transform_indices = @transform_9, window_bounds = array<i64: 1, 128>}, {transform_indices = @transform_10, window_bounds = array<i64: 1, 8, 128>}]} {
    %c0 = arith.constant 0 : index
    %c0_0 = arith.constant 0 : index
    %c0_1 = arith.constant 0 : index
    %0 = vector.load %arg2[%c0, %c0_0, %c0_1] : memref<1x12x128xf32, #tpu.memory_space<vmem>>, vector<1x12x128xf32>
    %1 = vector.shape_cast %0 : vector<1x12x128xf32> to vector<12x128xf32>
    %c0_2 = arith.constant 0 : index
    %c0_3 = arith.constant 0 : index
    %2 = vector.load %arg3[%c0_2, %c0_3] : memref<3x128xf32, #tpu.memory_space<vmem>>, vector<3x128xf32>
    %3 = vector.extract_strided_slice %2 {offsets = [0, 0], sizes = [1, 128], strides = [1, 1]} : vector<3x128xf32> to vector<1x128xf32>
    %4 = vector.extract_strided_slice %1 {offsets = [0, 0], sizes = [8, 128], strides = [1, 1]} : vector<12x128xf32> to vector<8x128xf32>
    %5 = vector.broadcast %3 : vector<1x128xf32> to vector<8x128xf32>
    %6 = arith.mulf %5, %4 : vector<8x128xf32>
    %7 = vector.extract_strided_slice %2 {offsets = [1, 0], sizes = [1, 128], strides = [1, 1]} : vector<3x128xf32> to vector<1x128xf32>
    %8 = vector.extract_strided_slice %1 {offsets = [2, 0], sizes = [8, 128], strides = [1, 1]} : vector<12x128xf32> to vector<8x128xf32>
    %9 = vector.broadcast %7 : vector<1x128xf32> to vector<8x128xf32>
    %10 = arith.mulf %9, %8 : vector<8x128xf32>
    %11 = arith.addf %6, %10 : vector<8x128xf32>
    %12 = vector.extract_strided_slice %2 {offsets = [2, 0], sizes = [1, 128], strides = [1, 1]} : vector<3x128xf32> to vector<1x128xf32>
    %13 = vector.extract_strided_slice %1 {offsets = [4, 0], sizes = [8, 128], strides = [1, 1]} : vector<12x128xf32> to vector<8x128xf32>
    %14 = vector.broadcast %12 : vector<1x128xf32> to vector<8x128xf32>
    %15 = arith.mulf %14, %13 : vector<8x128xf32>
    %16 = arith.addf %11, %15 : vector<8x128xf32>
    %c0_4 = arith.constant 0 : index
    %c0_5 = arith.constant 0 : index
    %17 = vector.load %arg4[%c0_4, %c0_5] : memref<1x128xf32, #tpu.memory_space<vmem>>, vector<1x128xf32>
    %18 = vector.broadcast %17 : vector<1x128xf32> to vector<8x128xf32>
    %19 = arith.addf %16, %18 : vector<8x128xf32>
    %c0_6 = arith.constant 0 : index
    %c0_7 = arith.constant 0 : index
    %20 = vector.load %arg5[%c0_6, %c0_7] : memref<1x128xf32, #tpu.memory_space<vmem>>, vector<1x128xf32>
    %c0_8 = arith.constant 0 : index
    %c0_9 = arith.constant 0 : index
    %21 = vector.load %arg6[%c0_8, %c0_9] : memref<1x128xf32, #tpu.memory_space<vmem>>, vector<1x128xf32>
    %cst = arith.constant dense<0.000000e+00> : vector<8xf32>
    %22 = vector.multi_reduction <add>, %19, %cst [1] : vector<8x128xf32> to vector<8xf32>
    %23 = vector.shape_cast %22 : vector<8xf32> to vector<8x1xf32>
    %cst_10 = arith.constant 1.280000e+02 : f32
    %24 = vector.broadcast %cst_10 : f32 to vector<8x1xf32>
    %25 = arith.divf %23, %24 : vector<8x1xf32>
    %26 = vector.broadcast %25 : vector<8x1xf32> to vector<8x128xf32>
    %27 = arith.subf %19, %26 : vector<8x128xf32>
    %28 = arith.mulf %27, %27 : vector<8x128xf32>
    %cst_11 = arith.constant dense<0.000000e+00> : vector<8xf32>
    %29 = vector.multi_reduction <add>, %28, %cst_11 [1] : vector<8x128xf32> to vector<8xf32>
    %30 = vector.shape_cast %29 : vector<8xf32> to vector<8x1xf32>
    %cst_12 = arith.constant 1.280000e+02 : f32
    %31 = vector.broadcast %cst_12 : f32 to vector<8x1xf32>
    %32 = arith.divf %30, %31 : vector<8x1xf32>
    %cst_13 = arith.constant 9.99999974E-6 : f32
    %33 = vector.broadcast %cst_13 : f32 to vector<8x1xf32>
    %34 = arith.addf %32, %33 : vector<8x1xf32>
    %35 = math.rsqrt %34 : vector<8x1xf32>
    %36 = vector.broadcast %35 : vector<8x1xf32> to vector<8x128xf32>
    %37 = arith.mulf %27, %36 : vector<8x128xf32>
    %38 = vector.broadcast %20 : vector<1x128xf32> to vector<8x128xf32>
    %39 = arith.mulf %37, %38 : vector<8x128xf32>
    %40 = vector.broadcast %21 : vector<1x128xf32> to vector<8x128xf32>
    %41 = arith.addf %39, %40 : vector<8x128xf32>
    %cst_14 = arith.constant 0.000000e+00 : f32
    %42 = vector.broadcast %cst_14 : f32 to vector<8x128xf32>
    %43 = arith.maximumf %41, %42 : vector<8x128xf32>
    %44 = arith.truncf %43 : vector<8x128xf32> to vector<8x128xbf16>
    %c0_15 = arith.constant 0 : index
    %c0_16 = arith.constant 0 : index
    %45 = vector.load %arg7[%c0_15, %c0_16] : memref<128x128xbf16, #tpu.memory_space<vmem>>, vector<128x128xbf16>
    %cst_17 = arith.constant dense<0.000000e+00> : vector<8x128xf32>
    %46 = tpu.matmul %44, %45, %cst_17 {dimension_numbers = #tpu.dot_dimension_numbers<[1], [0], [0], [1], [0, 0, 1, 1], [], []>} : vector<8x128xbf16>, vector<128x128xbf16>, vector<8x128xf32> -> vector<8x128xf32>
    %c0_18 = arith.constant 0 : index
    %c0_19 = arith.constant 0 : index
    %47 = vector.load %arg8[%c0_18, %c0_19] : memref<1x128xf32, #tpu.memory_space<vmem>>, vector<1x128xf32>
    %48 = vector.broadcast %47 : vector<1x128xf32> to vector<8x128xf32>
    %49 = arith.addf %46, %48 : vector<8x128xf32>
    %c0_20 = arith.constant 0 : index
    %c0_21 = arith.constant 0 : index
    %50 = vector.load %arg9[%c0_20, %c0_21] : memref<1x128xf32, #tpu.memory_space<vmem>>, vector<1x128xf32>
    %c0_22 = arith.constant 0 : index
    %c0_23 = arith.constant 0 : index
    %51 = vector.load %arg10[%c0_22, %c0_23] : memref<1x128xf32, #tpu.memory_space<vmem>>, vector<1x128xf32>
    %cst_24 = arith.constant dense<0.000000e+00> : vector<8xf32>
    %52 = vector.multi_reduction <add>, %49, %cst_24 [1] : vector<8x128xf32> to vector<8xf32>
    %53 = vector.shape_cast %52 : vector<8xf32> to vector<8x1xf32>
    %cst_25 = arith.constant 1.280000e+02 : f32
    %54 = vector.broadcast %cst_25 : f32 to vector<8x1xf32>
    %55 = arith.divf %53, %54 : vector<8x1xf32>
    %56 = vector.broadcast %55 : vector<8x1xf32> to vector<8x128xf32>
    %57 = arith.subf %49, %56 : vector<8x128xf32>
    %58 = arith.mulf %57, %57 : vector<8x128xf32>
    %cst_26 = arith.constant dense<0.000000e+00> : vector<8xf32>
    %59 = vector.multi_reduction <add>, %58, %cst_26 [1] : vector<8x128xf32> to vector<8xf32>
    %60 = vector.shape_cast %59 : vector<8xf32> to vector<8x1xf32>
    %cst_27 = arith.constant 1.280000e+02 : f32
    %61 = vector.broadcast %cst_27 : f32 to vector<8x1xf32>
    %62 = arith.divf %60, %61 : vector<8x1xf32>
    %cst_28 = arith.constant 9.99999974E-6 : f32
    %63 = vector.broadcast %cst_28 : f32 to vector<8x1xf32>
    %64 = arith.addf %62, %63 : vector<8x1xf32>
    %65 = math.rsqrt %64 : vector<8x1xf32>
    %66 = vector.broadcast %65 : vector<8x1xf32> to vector<8x128xf32>
    %67 = arith.mulf %57, %66 : vector<8x128xf32>
    %68 = vector.broadcast %50 : vector<1x128xf32> to vector<8x128xf32>
    %69 = arith.mulf %67, %68 : vector<8x128xf32>
    %70 = vector.broadcast %51 : vector<1x128xf32> to vector<8x128xf32>
    %71 = arith.addf %69, %70 : vector<8x128xf32>
    %cst_29 = arith.constant 0.000000e+00 : f32
    %72 = vector.broadcast %cst_29 : f32 to vector<8x128xf32>
    %73 = arith.maximumf %71, %72 : vector<8x128xf32>
    %c0_30 = arith.constant 0 : index
    %c0_31 = arith.constant 0 : index
    %c0_32 = arith.constant 0 : index
    %74 = vector.load %arg1[%c0_30, %c0_31, %c0_32] : memref<1x8x128xf32, #tpu.memory_space<vmem>>, vector<1x8x128xf32>
    %75 = vector.shape_cast %74 : vector<1x8x128xf32> to vector<8x128xf32>
    %76 = arith.addf %75, %73 : vector<8x128xf32>
    %c0_33 = arith.constant 0 : index
    %c0_34 = arith.constant 0 : index
    %c0_35 = arith.constant 0 : index
    %77 = vector.load %arg11[%c0_33, %c0_34, %c0_35] : memref<1x8x128xf32, #tpu.memory_space<vmem>>, vector<1x8x128xf32>
    %78 = vector.shape_cast %77 : vector<1x8x128xf32> to vector<8x128xf32>
    %79 = vector.shape_cast %76 : vector<8x128xf32> to vector<1x8x128xf32>
    tpu.vector_store %arg11[%c0_33, %c0_34, %c0_35], %79 {strides = array<i32>} : memref<1x8x128xf32, #tpu.memory_space<vmem>>, vector<1x8x128xf32>,
    return
  }
  func.func @transform_0(%arg0: i32) -> (i32, i32, i32) {
    %c0_i32 = arith.constant 0 : i32
    %c0_i32_0 = arith.constant 0 : i32
    %c0_i32_1 = arith.constant 0 : i32
    return %arg0, %c0_i32, %c0_i32_0 : i32, i32, i32
  }
  func.func @transform_1(%arg0: i32) -> (i32, i32, i32) {
    %c0_i32 = arith.constant 0 : i32
    %c0_i32_0 = arith.constant 0 : i32
    %c0_i32_1 = arith.constant 0 : i32
    return %arg0, %c0_i32, %c0_i32_0 : i32, i32, i32
  }
  func.func @transform_2(%arg0: i32) -> (i32, i32) {
    %c0_i32 = arith.constant 0 : i32
    %c0_i32_0 = arith.constant 0 : i32
    %c0_i32_1 = arith.constant 0 : i32
    return %c0_i32, %c0_i32_0 : i32, i32
  }
  func.func @transform_3(%arg0: i32) -> (i32, i32) {
    %c0_i32 = arith.constant 0 : i32
    %c0_i32_0 = arith.constant 0 : i32
    %c0_i32_1 = arith.constant 0 : i32
    return %c0_i32, %c0_i32_0 : i32, i32
  }
  func.func @transform_4(%arg0: i32) -> (i32, i32) {
    %c0_i32 = arith.constant 0 : i32
    %c0_i32_0 = arith.constant 0 : i32
    %c0_i32_1 = arith.constant 0 : i32
    return %c0_i32, %c0_i32_0 : i32, i32
  }
  func.func @transform_5(%arg0: i32) -> (i32, i32) {
    %c0_i32 = arith.constant 0 : i32
    %c0_i32_0 = arith.constant 0 : i32
    %c0_i32_1 = arith.constant 0 : i32
    return %c0_i32, %c0_i32_0 : i32, i32
  }
  func.func @transform_6(%arg0: i32) -> (i32, i32) {
    %c0_i32 = arith.constant 0 : i32
    %c0_i32_0 = arith.constant 0 : i32
    %c0_i32_1 = arith.constant 0 : i32
    return %c0_i32, %c0_i32_0 : i32, i32
  }
  func.func @transform_7(%arg0: i32) -> (i32, i32) {
    %c0_i32 = arith.constant 0 : i32
    %c0_i32_0 = arith.constant 0 : i32
    %c0_i32_1 = arith.constant 0 : i32
    return %c0_i32, %c0_i32_0 : i32, i32
  }
  func.func @transform_8(%arg0: i32) -> (i32, i32) {
    %c0_i32 = arith.constant 0 : i32
    %c0_i32_0 = arith.constant 0 : i32
    %c0_i32_1 = arith.constant 0 : i32
    return %c0_i32, %c0_i32_0 : i32, i32
  }
  func.func @transform_9(%arg0: i32) -> (i32, i32) {
    %c0_i32 = arith.constant 0 : i32
    %c0_i32_0 = arith.constant 0 : i32
    %c0_i32_1 = arith.constant 0 : i32
    return %c0_i32, %c0_i32_0 : i32, i32
  }
  func.func @transform_10(%arg0: i32) -> (i32, i32, i32) {
    %c0_i32 = arith.constant 0 : i32
    %c0_i32_0 = arith.constant 0 : i32
    %c0_i32_1 = arith.constant 0 : i32
    return %arg0, %c0_i32, %c0_i32_0 : i32, i32, i32
  }
}

module attributes {stable_mosaic.version = 11 : i64} {
  func.func @_linear_kernel(%arg0: memref<16x128xf32, #tpu.memory_space<vmem>>, %arg1: memref<128x64xbf16, #tpu.memory_space<vmem>>, %arg2: memref<1x64xf32, #tpu.memory_space<vmem>>, %arg3: memref<16x64xf32, #tpu.memory_space<vmem>>) attributes {dimension_semantics = [], scalar_prefetch = 0 : i64, scratch_operands = 0 : i64, tpu.core_type = #tpu.core_type<tc>} {
    %c0 = arith.constant 0 : index
    %c0_0 = arith.constant 0 : index
    %0 = vector.load %arg0[%c0, %c0_0] : memref<16x128xf32, #tpu.memory_space<vmem>>, vector<16x128xf32>
    %1 = arith.truncf %0 : vector<16x128xf32> to vector<16x128xbf16>
    %c0_1 = arith.constant 0 : index
    %c0_2 = arith.constant 0 : index
    %2 = vector.load %arg1[%c0_1, %c0_2] : memref<128x64xbf16, #tpu.memory_space<vmem>>, vector<128x64xbf16>
    %cst = arith.constant dense<0.000000e+00> : vector<16x64xf32>
    %3 = tpu.matmul %1, %2, %cst {dimension_numbers = #tpu.dot_dimension_numbers<[1], [0], [0], [1], [0, 0, 1, 1], [], []>} : vector<16x128xbf16>, vector<128x64xbf16>, vector<16x64xf32> -> vector<16x64xf32>
    %c0_3 = arith.constant 0 : index
    %c0_4 = arith.constant 0 : index
    %4 = vector.load %arg2[%c0_3, %c0_4] : memref<1x64xf32, #tpu.memory_space<vmem>>, vector<1x64xf32>
    %5 = vector.broadcast %4 : vector<1x64xf32> to vector<16x64xf32>
    %6 = arith.addf %3, %5 : vector<16x64xf32>
    %cst_5 = arith.constant 0.000000e+00 : f32
    %7 = vector.broadcast %cst_5 : f32 to vector<16x64xf32>
    %8 = arith.maximumf %6, %7 : vector<16x64xf32>
    %c0_6 = arith.constant 0 : index
    %c0_7 = arith.constant 0 : index
    %9 = vector.load %arg3[%c0_6, %c0_7] : memref<16x64xf32, #tpu.memory_space<vmem>>, vector<16x64xf32>
    tpu.vector_store %arg3[%c0_6, %c0_7], %8 {strides = array<i32>} : memref<16x64xf32, #tpu.memory_space<vmem>>, vector<16x64xf32>,
    return
  }
}

module attributes {stable_mosaic.version = 11 : i64} {
  func.func @_mask_apply_kernel(%arg0: memref<16x64xf32, #tpu.memory_space<vmem>>, %arg1: memref<64x128xbf16, #tpu.memory_space<vmem>>, %arg2: memref<1x128xf32, #tpu.memory_space<vmem>>, %arg3: memref<16x128xf32, #tpu.memory_space<vmem>>, %arg4: memref<16x128xf32, #tpu.memory_space<vmem>>, %arg5: memref<16x128xf32, #tpu.memory_space<vmem>>) attributes {dimension_semantics = [], scalar_prefetch = 0 : i64, scratch_operands = 0 : i64, tpu.core_type = #tpu.core_type<tc>} {
    %c0 = arith.constant 0 : index
    %c0_0 = arith.constant 0 : index
    %0 = vector.load %arg0[%c0, %c0_0] : memref<16x64xf32, #tpu.memory_space<vmem>>, vector<16x64xf32>
    %1 = arith.truncf %0 : vector<16x64xf32> to vector<16x64xbf16>
    %c0_1 = arith.constant 0 : index
    %c0_2 = arith.constant 0 : index
    %2 = vector.load %arg1[%c0_1, %c0_2] : memref<64x128xbf16, #tpu.memory_space<vmem>>, vector<64x128xbf16>
    %cst = arith.constant dense<0.000000e+00> : vector<16x128xf32>
    %3 = tpu.matmul %1, %2, %cst {dimension_numbers = #tpu.dot_dimension_numbers<[1], [0], [0], [1], [0, 0, 1, 1], [], []>} : vector<16x64xbf16>, vector<64x128xbf16>, vector<16x128xf32> -> vector<16x128xf32>
    %c0_3 = arith.constant 0 : index
    %c0_4 = arith.constant 0 : index
    %4 = vector.load %arg2[%c0_3, %c0_4] : memref<1x128xf32, #tpu.memory_space<vmem>>, vector<1x128xf32>
    %5 = vector.broadcast %4 : vector<1x128xf32> to vector<16x128xf32>
    %6 = arith.addf %3, %5 : vector<16x128xf32>
    %cst_5 = arith.constant 0.000000e+00 : f32
    %7 = vector.broadcast %cst_5 : f32 to vector<16x128xf32>
    %8 = arith.maximumf %6, %7 : vector<16x128xf32>
    %c0_6 = arith.constant 0 : index
    %c0_7 = arith.constant 0 : index
    %9 = vector.load %arg4[%c0_6, %c0_7] : memref<16x128xf32, #tpu.memory_space<vmem>>, vector<16x128xf32>
    %c0_8 = arith.constant 0 : index
    %c0_9 = arith.constant 0 : index
    %10 = vector.load %arg3[%c0_8, %c0_9] : memref<16x128xf32, #tpu.memory_space<vmem>>, vector<16x128xf32>
    %11 = arith.addf %10, %8 : vector<16x128xf32>
    %12 = arith.mulf %9, %11 : vector<16x128xf32>
    %c0_10 = arith.constant 0 : index
    %c0_11 = arith.constant 0 : index
    %13 = vector.load %arg5[%c0_10, %c0_11] : memref<16x128xf32, #tpu.memory_space<vmem>>, vector<16x128xf32>
    tpu.vector_store %arg5[%c0_10, %c0_11], %12 {strides = array<i32>} : memref<16x128xf32, #tpu.memory_space<vmem>>, vector<16x128xf32>,
    return
  }
}

module attributes {stable_mosaic.version = 11 : i64} {
  func.func @_out_conv_kernel(%arg0: i32, %arg1: memref<1x10x128xf32, #tpu.memory_space<vmem>>, %arg2: memref<128x12xbf16, #tpu.memory_space<vmem>>, %arg3: memref<1x12x4xf32, #tpu.memory_space<vmem>>) attributes {dimension_semantics = [#tpu.dimension_semantics<parallel>], iteration_bounds = array<i64: 2>, scalar_prefetch = 0 : i64, scratch_operands = 0 : i64, tpu.core_type = #tpu.core_type<tc>, window_params = [{transform_indices = @transform_0, window_bounds = array<i64: 1, 10, 128>}, {pipeline_mode = #tpu.pipeline_mode<synchronous>, transform_indices = @transform_1, window_bounds = array<i64: 128, 12>}, {transform_indices = @transform_2, window_bounds = array<i64: 1, 12, 4>}]} {
    %c0 = arith.constant 0 : index
    %c0_0 = arith.constant 0 : index
    %c0_1 = arith.constant 0 : index
    %0 = vector.load %arg1[%c0, %c0_0, %c0_1] : memref<1x10x128xf32, #tpu.memory_space<vmem>>, vector<1x10x128xf32>
    %1 = vector.shape_cast %0 : vector<1x10x128xf32> to vector<10x128xf32>
    %2 = arith.truncf %1 : vector<10x128xf32> to vector<10x128xbf16>
    %c0_2 = arith.constant 0 : index
    %c0_3 = arith.constant 0 : index
    %3 = vector.load %arg2[%c0_2, %c0_3] : memref<128x12xbf16, #tpu.memory_space<vmem>>, vector<128x12xbf16>
    %cst = arith.constant dense<0.000000e+00> : vector<10x12xf32>
    %4 = tpu.matmul %2, %3, %cst {dimension_numbers = #tpu.dot_dimension_numbers<[1], [0], [0], [1], [0, 0, 1, 1], [], []>} : vector<10x128xbf16>, vector<128x12xbf16>, vector<10x12xf32> -> vector<10x12xf32>
    %5 = vector.extract_strided_slice %4 {offsets = [0, 0], sizes = [10, 4], strides = [1, 1]} : vector<10x12xf32> to vector<10x4xf32>
    %cst_4 = arith.constant 0.000000e+00 : f32
    %6 = vector.broadcast %cst_4 : f32 to vector<2x4xf32>
    %7 = tpu.concatenate %5, %6 in 0 : vector<10x4xf32>, vector<2x4xf32> -> vector<12x4xf32>
    %8 = vector.extract_strided_slice %4 {offsets = [0, 4], sizes = [10, 4], strides = [1, 1]} : vector<10x12xf32> to vector<10x4xf32>
    %cst_5 = arith.constant 0.000000e+00 : f32
    %9 = vector.broadcast %cst_5 : f32 to vector<1x4xf32>
    %cst_6 = arith.constant 0.000000e+00 : f32
    %10 = vector.broadcast %cst_6 : f32 to vector<1x4xf32>
    %11 = tpu.concatenate %9, %8, %10 in 0 : vector<1x4xf32>, vector<10x4xf32>, vector<1x4xf32> -> vector<12x4xf32>
    %12 = arith.addf %7, %11 : vector<12x4xf32>
    %13 = vector.extract_strided_slice %4 {offsets = [0, 8], sizes = [10, 4], strides = [1, 1]} : vector<10x12xf32> to vector<10x4xf32>
    %cst_7 = arith.constant 0.000000e+00 : f32
    %14 = vector.broadcast %cst_7 : f32 to vector<2x4xf32>
    %15 = tpu.concatenate %14, %13 in 0 : vector<2x4xf32>, vector<10x4xf32> -> vector<12x4xf32>
    %16 = arith.addf %12, %15 : vector<12x4xf32>
    %c0_8 = arith.constant 0 : index
    %c0_9 = arith.constant 0 : index
    %c0_10 = arith.constant 0 : index
    %17 = vector.load %arg3[%c0_8, %c0_9, %c0_10] : memref<1x12x4xf32, #tpu.memory_space<vmem>>, vector<1x12x4xf32>
    %18 = vector.shape_cast %17 : vector<1x12x4xf32> to vector<12x4xf32>
    %19 = vector.shape_cast %16 : vector<12x4xf32> to vector<1x12x4xf32>
    tpu.vector_store %arg3[%c0_8, %c0_9, %c0_10], %19 {strides = array<i32>} : memref<1x12x4xf32, #tpu.memory_space<vmem>>, vector<1x12x4xf32>,
    return
  }
  func.func @transform_0(%arg0: i32) -> (i32, i32, i32) {
    %c0_i32 = arith.constant 0 : i32
    %c0_i32_0 = arith.constant 0 : i32
    %c0_i32_1 = arith.constant 0 : i32
    return %arg0, %c0_i32, %c0_i32_0 : i32, i32, i32
  }
  func.func @transform_1(%arg0: i32) -> (i32, i32) {
    %c0_i32 = arith.constant 0 : i32
    %c0_i32_0 = arith.constant 0 : i32
    %c0_i32_1 = arith.constant 0 : i32
    return %c0_i32, %c0_i32_0 : i32, i32
  }
  func.func @transform_2(%arg0: i32) -> (i32, i32, i32) {
    %c0_i32 = arith.constant 0 : i32
    %c0_i32_0 = arith.constant 0 : i32
    %c0_i32_1 = arith.constant 0 : i32
    return %arg0, %c0_i32, %c0_i32_0 : i32, i32, i32
  }
}

module attributes {stable_mosaic.version = 11 : i64} {
  func.func @_dec_layer_kernel(%arg0: i32, %arg1: memref<1x12x64xf32, #tpu.memory_space<vmem>>, %arg2: memref<1x12x64xf32, #tpu.memory_space<vmem>>, %arg3: memref<64x192xbf16, #tpu.memory_space<vmem>>, %arg4: memref<1x192xf32, #tpu.memory_space<vmem>>, %arg5: memref<64x64xbf16, #tpu.memory_space<vmem>>, %arg6: memref<1x64xf32, #tpu.memory_space<vmem>>, %arg7: memref<64x64xbf16, #tpu.memory_space<vmem>>, %arg8: memref<1x64xf32, #tpu.memory_space<vmem>>, %arg9: memref<64x128xbf16, #tpu.memory_space<vmem>>, %arg10: memref<1x128xf32, #tpu.memory_space<vmem>>, %arg11: memref<64x64xbf16, #tpu.memory_space<vmem>>, %arg12: memref<1x64xf32, #tpu.memory_space<vmem>>, %arg13: memref<1x64xf32, #tpu.memory_space<vmem>>, %arg14: memref<1x64xf32, #tpu.memory_space<vmem>>, %arg15: memref<1x64xf32, #tpu.memory_space<vmem>>, %arg16: memref<1x64xf32, #tpu.memory_space<vmem>>, %arg17: memref<1x64xf32, #tpu.memory_space<vmem>>, %arg18: memref<1x64xf32, #tpu.memory_space<vmem>>, %arg19: memref<64x128xbf16, #tpu.memory_space<vmem>>, %arg20: memref<1x128xf32, #tpu.memory_space<vmem>>, %arg21: memref<128x64xbf16, #tpu.memory_space<vmem>>, %arg22: memref<1x64xf32, #tpu.memory_space<vmem>>, %arg23: memref<1x4x64xf32, #tpu.memory_space<vmem>>) attributes {dimension_semantics = [#tpu.dimension_semantics<parallel>], iteration_bounds = array<i64: 4>, scalar_prefetch = 0 : i64, scratch_operands = 0 : i64, tpu.core_type = #tpu.core_type<tc>, window_params = [{transform_indices = @transform_0, window_bounds = array<i64: 1, 12, 64>}, {transform_indices = @transform_1, window_bounds = array<i64: 1, 12, 64>}, {pipeline_mode = #tpu.pipeline_mode<synchronous>, transform_indices = @transform_2, window_bounds = array<i64: 64, 192>}, {pipeline_mode = #tpu.pipeline_mode<synchronous>, transform_indices = @transform_3, window_bounds = array<i64: 1, 192>}, {pipeline_mode = #tpu.pipeline_mode<synchronous>, transform_indices = @transform_4, window_bounds = array<i64: 64, 64>}, {pipeline_mode = #tpu.pipeline_mode<synchronous>, transform_indices = @transform_5, window_bounds = array<i64: 1, 64>}, {pipeline_mode = #tpu.pipeline_mode<synchronous>, transform_indices = @transform_6, window_bounds = array<i64: 64, 64>}, {pipeline_mode = #tpu.pipeline_mode<synchronous>, transform_indices = @transform_7, window_bounds = array<i64: 1, 64>}, {pipeline_mode = #tpu.pipeline_mode<synchronous>, transform_indices = @transform_8, window_bounds = array<i64: 64, 128>}, {pipeline_mode = #tpu.pipeline_mode<synchronous>, transform_indices = @transform_9, window_bounds = array<i64: 1, 128>}, {pipeline_mode = #tpu.pipeline_mode<synchronous>, transform_indices = @transform_10, window_bounds = array<i64: 64, 64>}, {pipeline_mode = #tpu.pipeline_mode<synchronous>, transform_indices = @transform_11, window_bounds = array<i64: 1, 64>}, {pipeline_mode = #tpu.pipeline_mode<synchronous>, transform_indices = @transform_12, window_bounds = array<i64: 1, 64>}, {pipeline_mode = #tpu.pipeline_mode<synchronous>, transform_indices = @transform_13, window_bounds = array<i64: 1, 64>}, {pipeline_mode = #tpu.pipeline_mode<synchronous>, transform_indices = @transform_14, window_bounds = array<i64: 1, 64>}, {pipeline_mode = #tpu.pipeline_mode<synchronous>, transform_indices = @transform_15, window_bounds = array<i64: 1, 64>}, {pipeline_mode = #tpu.pipeline_mode<synchronous>, transform_indices = @transform_16, window_bounds = array<i64: 1, 64>}, {pipeline_mode = #tpu.pipeline_mode<synchronous>, transform_indices = @transform_17, window_bounds = array<i64: 1, 64>}, {pipeline_mode = #tpu.pipeline_mode<synchronous>, transform_indices = @transform_18, window_bounds = array<i64: 64, 128>}, {pipeline_mode = #tpu.pipeline_mode<synchronous>, transform_indices = @transform_19, window_bounds = array<i64: 1, 128>}, {pipeline_mode = #tpu.pipeline_mode<synchronous>, transform_indices = @transform_20, window_bounds = array<i64: 128, 64>}, {pipeline_mode = #tpu.pipeline_mode<synchronous>, transform_indices = @transform_21, window_bounds = array<i64: 1, 64>}, {transform_indices = @transform_22, window_bounds = array<i64: 1, 4, 64>}]} {
    %c0 = arith.constant 0 : index
    %c0_0 = arith.constant 0 : index
    %c0_1 = arith.constant 0 : index
    %0 = vector.load %arg1[%c0, %c0_0, %c0_1] : memref<1x12x64xf32, #tpu.memory_space<vmem>>, vector<1x12x64xf32>
    %1 = vector.shape_cast %0 : vector<1x12x64xf32> to vector<12x64xf32>
    %c0_2 = arith.constant 0 : index
    %c0_3 = arith.constant 0 : index
    %c0_4 = arith.constant 0 : index
    %2 = vector.load %arg2[%c0_2, %c0_3, %c0_4] : memref<1x12x64xf32, #tpu.memory_space<vmem>>, vector<1x12x64xf32>
    %3 = vector.shape_cast %2 : vector<1x12x64xf32> to vector<12x64xf32>
    %4 = arith.truncf %1 : vector<12x64xf32> to vector<12x64xbf16>
    %c0_5 = arith.constant 0 : index
    %c0_6 = arith.constant 0 : index
    %5 = vector.load %arg3[%c0_5, %c0_6] : memref<64x192xbf16, #tpu.memory_space<vmem>>, vector<64x192xbf16>
    %cst = arith.constant dense<0.000000e+00> : vector<12x192xf32>
    %6 = tpu.matmul %4, %5, %cst {dimension_numbers = #tpu.dot_dimension_numbers<[1], [0], [0], [1], [0, 0, 1, 1], [], []>} : vector<12x64xbf16>, vector<64x192xbf16>, vector<12x192xf32> -> vector<12x192xf32>
    %c0_7 = arith.constant 0 : index
    %c0_8 = arith.constant 0 : index
    %7 = vector.load %arg4[%c0_7, %c0_8] : memref<1x192xf32, #tpu.memory_space<vmem>>, vector<1x192xf32>
    %8 = vector.broadcast %7 : vector<1x192xf32> to vector<12x192xf32>
    %9 = arith.addf %6, %8 : vector<12x192xf32>
    %10 = vector.extract_strided_slice %9 {offsets = [8, 0], sizes = [4, 64], strides = [1, 1]} : vector<12x192xf32> to vector<4x64xf32>
    %11 = vector.extract_strided_slice %9 {offsets = [0, 64], sizes = [12, 64], strides = [1, 1]} : vector<12x192xf32> to vector<12x64xf32>
    %12 = vector.extract_strided_slice %9 {offsets = [0, 128], sizes = [12, 64], strides = [1, 1]} : vector<12x192xf32> to vector<12x64xf32>
    %13 = vector.extract_strided_slice %10 {offsets = [0, 0], sizes = [4, 8], strides = [1, 1]} : vector<4x64xf32> to vector<4x8xf32>
    %14 = vector.extract_strided_slice %11 {offsets = [0, 0], sizes = [12, 8], strides = [1, 1]} : vector<12x64xf32> to vector<12x8xf32>
    %15 = vector.extract_strided_slice %12 {offsets = [0, 0], sizes = [12, 8], strides = [1, 1]} : vector<12x64xf32> to vector<12x8xf32>
    %cst_9 = arith.constant dense<0.000000e+00> : vector<4x12xf32>
    %16 = tpu.matmul %13, %14, %cst_9 {dimension_numbers = #tpu.dot_dimension_numbers<[1], [1], [0], [0], [0, 0, 1, 0], [], []>} : vector<4x8xf32>, vector<12x8xf32>, vector<4x12xf32> -> vector<4x12xf32>
    %cst_10 = arith.constant 0.353553385 : f32
    %17 = vector.broadcast %cst_10 : f32 to vector<4x12xf32>
    %18 = arith.mulf %16, %17 : vector<4x12xf32>
    %cst_11 = arith.constant dense<0xFF800000> : vector<4xf32>
    %19 = vector.multi_reduction <maximumf>, %18, %cst_11 [1] : vector<4x12xf32> to vector<4xf32>
    %20 = vector.shape_cast %19 : vector<4xf32> to vector<4x1xf32>
    %21 = vector.broadcast %20 : vector<4x1xf32> to vector<4x12xf32>
    %22 = arith.subf %18, %21 : vector<4x12xf32>
    %23 = math.exp %22 : vector<4x12xf32>
    %cst_12 = arith.constant dense<0.000000e+00> : vector<4xf32>
    %24 = vector.multi_reduction <add>, %23, %cst_12 [1] : vector<4x12xf32> to vector<4xf32>
    %25 = vector.shape_cast %24 : vector<4xf32> to vector<4x1xf32>
    %26 = tpu.reciprocal %25 {approx = true} : vector<4x1xf32> -> vector<4x1xf32>
    %27 = vector.broadcast %26 : vector<4x1xf32> to vector<4x12xf32>
    %28 = arith.mulf %23, %27 : vector<4x12xf32>
    %cst_13 = arith.constant dense<0.000000e+00> : vector<4x8xf32>
    %29 = tpu.matmul %28, %15, %cst_13 {dimension_numbers = #tpu.dot_dimension_numbers<[1], [0], [0], [1], [0, 0, 1, 1], [], []>} : vector<4x12xf32>, vector<12x8xf32>, vector<4x8xf32> -> vector<4x8xf32>
    %30 = vector.extract_strided_slice %10 {offsets = [0, 8], sizes = [4, 8], strides = [1, 1]} : vector<4x64xf32> to vector<4x8xf32>
    %31 = vector.extract_strided_slice %11 {offsets = [0, 8], sizes = [12, 8], strides = [1, 1]} : vector<12x64xf32> to vector<12x8xf32>
    %32 = vector.extract_strided_slice %12 {offsets = [0, 8], sizes = [12, 8], strides = [1, 1]} : vector<12x64xf32> to vector<12x8xf32>
    %cst_14 = arith.constant dense<0.000000e+00> : vector<4x12xf32>
    %33 = tpu.matmul %30, %31, %cst_14 {dimension_numbers = #tpu.dot_dimension_numbers<[1], [1], [0], [0], [0, 0, 1, 0], [], []>} : vector<4x8xf32>, vector<12x8xf32>, vector<4x12xf32> -> vector<4x12xf32>
    %cst_15 = arith.constant 0.353553385 : f32
    %34 = vector.broadcast %cst_15 : f32 to vector<4x12xf32>
    %35 = arith.mulf %33, %34 : vector<4x12xf32>
    %cst_16 = arith.constant dense<0xFF800000> : vector<4xf32>
    %36 = vector.multi_reduction <maximumf>, %35, %cst_16 [1] : vector<4x12xf32> to vector<4xf32>
    %37 = vector.shape_cast %36 : vector<4xf32> to vector<4x1xf32>
    %38 = vector.broadcast %37 : vector<4x1xf32> to vector<4x12xf32>
    %39 = arith.subf %35, %38 : vector<4x12xf32>
    %40 = math.exp %39 : vector<4x12xf32>
    %cst_17 = arith.constant dense<0.000000e+00> : vector<4xf32>
    %41 = vector.multi_reduction <add>, %40, %cst_17 [1] : vector<4x12xf32> to vector<4xf32>
    %42 = vector.shape_cast %41 : vector<4xf32> to vector<4x1xf32>
    %43 = tpu.reciprocal %42 {approx = true} : vector<4x1xf32> -> vector<4x1xf32>
    %44 = vector.broadcast %43 : vector<4x1xf32> to vector<4x12xf32>
    %45 = arith.mulf %40, %44 : vector<4x12xf32>
    %cst_18 = arith.constant dense<0.000000e+00> : vector<4x8xf32>
    %46 = tpu.matmul %45, %32, %cst_18 {dimension_numbers = #tpu.dot_dimension_numbers<[1], [0], [0], [1], [0, 0, 1, 1], [], []>} : vector<4x12xf32>, vector<12x8xf32>, vector<4x8xf32> -> vector<4x8xf32>
    %47 = vector.extract_strided_slice %10 {offsets = [0, 16], sizes = [4, 8], strides = [1, 1]} : vector<4x64xf32> to vector<4x8xf32>
    %48 = vector.extract_strided_slice %11 {offsets = [0, 16], sizes = [12, 8], strides = [1, 1]} : vector<12x64xf32> to vector<12x8xf32>
    %49 = vector.extract_strided_slice %12 {offsets = [0, 16], sizes = [12, 8], strides = [1, 1]} : vector<12x64xf32> to vector<12x8xf32>
    %cst_19 = arith.constant dense<0.000000e+00> : vector<4x12xf32>
    %50 = tpu.matmul %47, %48, %cst_19 {dimension_numbers = #tpu.dot_dimension_numbers<[1], [1], [0], [0], [0, 0, 1, 0], [], []>} : vector<4x8xf32>, vector<12x8xf32>, vector<4x12xf32> -> vector<4x12xf32>
    %cst_20 = arith.constant 0.353553385 : f32
    %51 = vector.broadcast %cst_20 : f32 to vector<4x12xf32>
    %52 = arith.mulf %50, %51 : vector<4x12xf32>
    %cst_21 = arith.constant dense<0xFF800000> : vector<4xf32>
    %53 = vector.multi_reduction <maximumf>, %52, %cst_21 [1] : vector<4x12xf32> to vector<4xf32>
    %54 = vector.shape_cast %53 : vector<4xf32> to vector<4x1xf32>
    %55 = vector.broadcast %54 : vector<4x1xf32> to vector<4x12xf32>
    %56 = arith.subf %52, %55 : vector<4x12xf32>
    %57 = math.exp %56 : vector<4x12xf32>
    %cst_22 = arith.constant dense<0.000000e+00> : vector<4xf32>
    %58 = vector.multi_reduction <add>, %57, %cst_22 [1] : vector<4x12xf32> to vector<4xf32>
    %59 = vector.shape_cast %58 : vector<4xf32> to vector<4x1xf32>
    %60 = tpu.reciprocal %59 {approx = true} : vector<4x1xf32> -> vector<4x1xf32>
    %61 = vector.broadcast %60 : vector<4x1xf32> to vector<4x12xf32>
    %62 = arith.mulf %57, %61 : vector<4x12xf32>
    %cst_23 = arith.constant dense<0.000000e+00> : vector<4x8xf32>
    %63 = tpu.matmul %62, %49, %cst_23 {dimension_numbers = #tpu.dot_dimension_numbers<[1], [0], [0], [1], [0, 0, 1, 1], [], []>} : vector<4x12xf32>, vector<12x8xf32>, vector<4x8xf32> -> vector<4x8xf32>
    %64 = vector.extract_strided_slice %10 {offsets = [0, 24], sizes = [4, 8], strides = [1, 1]} : vector<4x64xf32> to vector<4x8xf32>
    %65 = vector.extract_strided_slice %11 {offsets = [0, 24], sizes = [12, 8], strides = [1, 1]} : vector<12x64xf32> to vector<12x8xf32>
    %66 = vector.extract_strided_slice %12 {offsets = [0, 24], sizes = [12, 8], strides = [1, 1]} : vector<12x64xf32> to vector<12x8xf32>
    %cst_24 = arith.constant dense<0.000000e+00> : vector<4x12xf32>
    %67 = tpu.matmul %64, %65, %cst_24 {dimension_numbers = #tpu.dot_dimension_numbers<[1], [1], [0], [0], [0, 0, 1, 0], [], []>} : vector<4x8xf32>, vector<12x8xf32>, vector<4x12xf32> -> vector<4x12xf32>
    %cst_25 = arith.constant 0.353553385 : f32
    %68 = vector.broadcast %cst_25 : f32 to vector<4x12xf32>
    %69 = arith.mulf %67, %68 : vector<4x12xf32>
    %cst_26 = arith.constant dense<0xFF800000> : vector<4xf32>
    %70 = vector.multi_reduction <maximumf>, %69, %cst_26 [1] : vector<4x12xf32> to vector<4xf32>
    %71 = vector.shape_cast %70 : vector<4xf32> to vector<4x1xf32>
    %72 = vector.broadcast %71 : vector<4x1xf32> to vector<4x12xf32>
    %73 = arith.subf %69, %72 : vector<4x12xf32>
    %74 = math.exp %73 : vector<4x12xf32>
    %cst_27 = arith.constant dense<0.000000e+00> : vector<4xf32>
    %75 = vector.multi_reduction <add>, %74, %cst_27 [1] : vector<4x12xf32> to vector<4xf32>
    %76 = vector.shape_cast %75 : vector<4xf32> to vector<4x1xf32>
    %77 = tpu.reciprocal %76 {approx = true} : vector<4x1xf32> -> vector<4x1xf32>
    %78 = vector.broadcast %77 : vector<4x1xf32> to vector<4x12xf32>
    %79 = arith.mulf %74, %78 : vector<4x12xf32>
    %cst_28 = arith.constant dense<0.000000e+00> : vector<4x8xf32>
    %80 = tpu.matmul %79, %66, %cst_28 {dimension_numbers = #tpu.dot_dimension_numbers<[1], [0], [0], [1], [0, 0, 1, 1], [], []>} : vector<4x12xf32>, vector<12x8xf32>, vector<4x8xf32> -> vector<4x8xf32>
    %81 = vector.extract_strided_slice %10 {offsets = [0, 32], sizes = [4, 8], strides = [1, 1]} : vector<4x64xf32> to vector<4x8xf32>
    %82 = vector.extract_strided_slice %11 {offsets = [0, 32], sizes = [12, 8], strides = [1, 1]} : vector<12x64xf32> to vector<12x8xf32>
    %83 = vector.extract_strided_slice %12 {offsets = [0, 32], sizes = [12, 8], strides = [1, 1]} : vector<12x64xf32> to vector<12x8xf32>
    %cst_29 = arith.constant dense<0.000000e+00> : vector<4x12xf32>
    %84 = tpu.matmul %81, %82, %cst_29 {dimension_numbers = #tpu.dot_dimension_numbers<[1], [1], [0], [0], [0, 0, 1, 0], [], []>} : vector<4x8xf32>, vector<12x8xf32>, vector<4x12xf32> -> vector<4x12xf32>
    %cst_30 = arith.constant 0.353553385 : f32
    %85 = vector.broadcast %cst_30 : f32 to vector<4x12xf32>
    %86 = arith.mulf %84, %85 : vector<4x12xf32>
    %cst_31 = arith.constant dense<0xFF800000> : vector<4xf32>
    %87 = vector.multi_reduction <maximumf>, %86, %cst_31 [1] : vector<4x12xf32> to vector<4xf32>
    %88 = vector.shape_cast %87 : vector<4xf32> to vector<4x1xf32>
    %89 = vector.broadcast %88 : vector<4x1xf32> to vector<4x12xf32>
    %90 = arith.subf %86, %89 : vector<4x12xf32>
    %91 = math.exp %90 : vector<4x12xf32>
    %cst_32 = arith.constant dense<0.000000e+00> : vector<4xf32>
    %92 = vector.multi_reduction <add>, %91, %cst_32 [1] : vector<4x12xf32> to vector<4xf32>
    %93 = vector.shape_cast %92 : vector<4xf32> to vector<4x1xf32>
    %94 = tpu.reciprocal %93 {approx = true} : vector<4x1xf32> -> vector<4x1xf32>
    %95 = vector.broadcast %94 : vector<4x1xf32> to vector<4x12xf32>
    %96 = arith.mulf %91, %95 : vector<4x12xf32>
    %cst_33 = arith.constant dense<0.000000e+00> : vector<4x8xf32>
    %97 = tpu.matmul %96, %83, %cst_33 {dimension_numbers = #tpu.dot_dimension_numbers<[1], [0], [0], [1], [0, 0, 1, 1], [], []>} : vector<4x12xf32>, vector<12x8xf32>, vector<4x8xf32> -> vector<4x8xf32>
    %98 = vector.extract_strided_slice %10 {offsets = [0, 40], sizes = [4, 8], strides = [1, 1]} : vector<4x64xf32> to vector<4x8xf32>
    %99 = vector.extract_strided_slice %11 {offsets = [0, 40], sizes = [12, 8], strides = [1, 1]} : vector<12x64xf32> to vector<12x8xf32>
    %100 = vector.extract_strided_slice %12 {offsets = [0, 40], sizes = [12, 8], strides = [1, 1]} : vector<12x64xf32> to vector<12x8xf32>
    %cst_34 = arith.constant dense<0.000000e+00> : vector<4x12xf32>
    %101 = tpu.matmul %98, %99, %cst_34 {dimension_numbers = #tpu.dot_dimension_numbers<[1], [1], [0], [0], [0, 0, 1, 0], [], []>} : vector<4x8xf32>, vector<12x8xf32>, vector<4x12xf32> -> vector<4x12xf32>
    %cst_35 = arith.constant 0.353553385 : f32
    %102 = vector.broadcast %cst_35 : f32 to vector<4x12xf32>
    %103 = arith.mulf %101, %102 : vector<4x12xf32>
    %cst_36 = arith.constant dense<0xFF800000> : vector<4xf32>
    %104 = vector.multi_reduction <maximumf>, %103, %cst_36 [1] : vector<4x12xf32> to vector<4xf32>
    %105 = vector.shape_cast %104 : vector<4xf32> to vector<4x1xf32>
    %106 = vector.broadcast %105 : vector<4x1xf32> to vector<4x12xf32>
    %107 = arith.subf %103, %106 : vector<4x12xf32>
    %108 = math.exp %107 : vector<4x12xf32>
    %cst_37 = arith.constant dense<0.000000e+00> : vector<4xf32>
    %109 = vector.multi_reduction <add>, %108, %cst_37 [1] : vector<4x12xf32> to vector<4xf32>
    %110 = vector.shape_cast %109 : vector<4xf32> to vector<4x1xf32>
    %111 = tpu.reciprocal %110 {approx = true} : vector<4x1xf32> -> vector<4x1xf32>
    %112 = vector.broadcast %111 : vector<4x1xf32> to vector<4x12xf32>
    %113 = arith.mulf %108, %112 : vector<4x12xf32>
    %cst_38 = arith.constant dense<0.000000e+00> : vector<4x8xf32>
    %114 = tpu.matmul %113, %100, %cst_38 {dimension_numbers = #tpu.dot_dimension_numbers<[1], [0], [0], [1], [0, 0, 1, 1], [], []>} : vector<4x12xf32>, vector<12x8xf32>, vector<4x8xf32> -> vector<4x8xf32>
    %115 = vector.extract_strided_slice %10 {offsets = [0, 48], sizes = [4, 8], strides = [1, 1]} : vector<4x64xf32> to vector<4x8xf32>
    %116 = vector.extract_strided_slice %11 {offsets = [0, 48], sizes = [12, 8], strides = [1, 1]} : vector<12x64xf32> to vector<12x8xf32>
    %117 = vector.extract_strided_slice %12 {offsets = [0, 48], sizes = [12, 8], strides = [1, 1]} : vector<12x64xf32> to vector<12x8xf32>
    %cst_39 = arith.constant dense<0.000000e+00> : vector<4x12xf32>
    %118 = tpu.matmul %115, %116, %cst_39 {dimension_numbers = #tpu.dot_dimension_numbers<[1], [1], [0], [0], [0, 0, 1, 0], [], []>} : vector<4x8xf32>, vector<12x8xf32>, vector<4x12xf32> -> vector<4x12xf32>
    %cst_40 = arith.constant 0.353553385 : f32
    %119 = vector.broadcast %cst_40 : f32 to vector<4x12xf32>
    %120 = arith.mulf %118, %119 : vector<4x12xf32>
    %cst_41 = arith.constant dense<0xFF800000> : vector<4xf32>
    %121 = vector.multi_reduction <maximumf>, %120, %cst_41 [1] : vector<4x12xf32> to vector<4xf32>
    %122 = vector.shape_cast %121 : vector<4xf32> to vector<4x1xf32>
    %123 = vector.broadcast %122 : vector<4x1xf32> to vector<4x12xf32>
    %124 = arith.subf %120, %123 : vector<4x12xf32>
    %125 = math.exp %124 : vector<4x12xf32>
    %cst_42 = arith.constant dense<0.000000e+00> : vector<4xf32>
    %126 = vector.multi_reduction <add>, %125, %cst_42 [1] : vector<4x12xf32> to vector<4xf32>
    %127 = vector.shape_cast %126 : vector<4xf32> to vector<4x1xf32>
    %128 = tpu.reciprocal %127 {approx = true} : vector<4x1xf32> -> vector<4x1xf32>
    %129 = vector.broadcast %128 : vector<4x1xf32> to vector<4x12xf32>
    %130 = arith.mulf %125, %129 : vector<4x12xf32>
    %cst_43 = arith.constant dense<0.000000e+00> : vector<4x8xf32>
    %131 = tpu.matmul %130, %117, %cst_43 {dimension_numbers = #tpu.dot_dimension_numbers<[1], [0], [0], [1], [0, 0, 1, 1], [], []>} : vector<4x12xf32>, vector<12x8xf32>, vector<4x8xf32> -> vector<4x8xf32>
    %132 = vector.extract_strided_slice %10 {offsets = [0, 56], sizes = [4, 8], strides = [1, 1]} : vector<4x64xf32> to vector<4x8xf32>
    %133 = vector.extract_strided_slice %11 {offsets = [0, 56], sizes = [12, 8], strides = [1, 1]} : vector<12x64xf32> to vector<12x8xf32>
    %134 = vector.extract_strided_slice %12 {offsets = [0, 56], sizes = [12, 8], strides = [1, 1]} : vector<12x64xf32> to vector<12x8xf32>
    %cst_44 = arith.constant dense<0.000000e+00> : vector<4x12xf32>
    %135 = tpu.matmul %132, %133, %cst_44 {dimension_numbers = #tpu.dot_dimension_numbers<[1], [1], [0], [0], [0, 0, 1, 0], [], []>} : vector<4x8xf32>, vector<12x8xf32>, vector<4x12xf32> -> vector<4x12xf32>
    %cst_45 = arith.constant 0.353553385 : f32
    %136 = vector.broadcast %cst_45 : f32 to vector<4x12xf32>
    %137 = arith.mulf %135, %136 : vector<4x12xf32>
    %cst_46 = arith.constant dense<0xFF800000> : vector<4xf32>
    %138 = vector.multi_reduction <maximumf>, %137, %cst_46 [1] : vector<4x12xf32> to vector<4xf32>
    %139 = vector.shape_cast %138 : vector<4xf32> to vector<4x1xf32>
    %140 = vector.broadcast %139 : vector<4x1xf32> to vector<4x12xf32>
    %141 = arith.subf %137, %140 : vector<4x12xf32>
    %142 = math.exp %141 : vector<4x12xf32>
    %cst_47 = arith.constant dense<0.000000e+00> : vector<4xf32>
    %143 = vector.multi_reduction <add>, %142, %cst_47 [1] : vector<4x12xf32> to vector<4xf32>
    %144 = vector.shape_cast %143 : vector<4xf32> to vector<4x1xf32>
    %145 = tpu.reciprocal %144 {approx = true} : vector<4x1xf32> -> vector<4x1xf32>
    %146 = vector.broadcast %145 : vector<4x1xf32> to vector<4x12xf32>
    %147 = arith.mulf %142, %146 : vector<4x12xf32>
    %cst_48 = arith.constant dense<0.000000e+00> : vector<4x8xf32>
    %148 = tpu.matmul %147, %134, %cst_48 {dimension_numbers = #tpu.dot_dimension_numbers<[1], [0], [0], [1], [0, 0, 1, 1], [], []>} : vector<4x12xf32>, vector<12x8xf32>, vector<4x8xf32> -> vector<4x8xf32>
    %149 = tpu.concatenate %29, %46, %63, %80, %97, %114, %131, %148 in 1 : vector<4x8xf32>, vector<4x8xf32>, vector<4x8xf32>, vector<4x8xf32>, vector<4x8xf32>, vector<4x8xf32>, vector<4x8xf32>, vector<4x8xf32> -> vector<4x64xf32>
    %150 = arith.truncf %149 : vector<4x64xf32> to vector<4x64xbf16>
    %c0_49 = arith.constant 0 : index
    %c0_50 = arith.constant 0 : index
    %151 = vector.load %arg5[%c0_49, %c0_50] : memref<64x64xbf16, #tpu.memory_space<vmem>>, vector<64x64xbf16>
    %cst_51 = arith.constant dense<0.000000e+00> : vector<4x64xf32>
    %152 = tpu.matmul %150, %151, %cst_51 {dimension_numbers = #tpu.dot_dimension_numbers<[1], [0], [0], [1], [0, 0, 1, 1], [], []>} : vector<4x64xbf16>, vector<64x64xbf16>, vector<4x64xf32> -> vector<4x64xf32>
    %c0_52 = arith.constant 0 : index
    %c0_53 = arith.constant 0 : index
    %153 = vector.load %arg6[%c0_52, %c0_53] : memref<1x64xf32, #tpu.memory_space<vmem>>, vector<1x64xf32>
    %154 = vector.broadcast %153 : vector<1x64xf32> to vector<4x64xf32>
    %155 = arith.addf %152, %154 : vector<4x64xf32>
    %156 = vector.extract_strided_slice %1 {offsets = [8, 0], sizes = [4, 64], strides = [1, 1]} : vector<12x64xf32> to vector<4x64xf32>
    %157 = arith.addf %156, %155 : vector<4x64xf32>
    %c0_54 = arith.constant 0 : index
    %c0_55 = arith.constant 0 : index
    %158 = vector.load %arg13[%c0_54, %c0_55] : memref<1x64xf32, #tpu.memory_space<vmem>>, vector<1x64xf32>
    %c0_56 = arith.constant 0 : index
    %c0_57 = arith.constant 0 : index
    %159 = vector.load %arg14[%c0_56, %c0_57] : memref<1x64xf32, #tpu.memory_space<vmem>>, vector<1x64xf32>
    %cst_58 = arith.constant dense<0.000000e+00> : vector<4xf32>
    %160 = vector.multi_reduction <add>, %157, %cst_58 [1] : vector<4x64xf32> to vector<4xf32>
    %161 = vector.shape_cast %160 : vector<4xf32> to vector<4x1xf32>
    %cst_59 = arith.constant 6.400000e+01 : f32
    %162 = vector.broadcast %cst_59 : f32 to vector<4x1xf32>
    %163 = arith.divf %161, %162 : vector<4x1xf32>
    %164 = vector.broadcast %163 : vector<4x1xf32> to vector<4x64xf32>
    %165 = arith.subf %157, %164 : vector<4x64xf32>
    %166 = arith.mulf %165, %165 : vector<4x64xf32>
    %cst_60 = arith.constant dense<0.000000e+00> : vector<4xf32>
    %167 = vector.multi_reduction <add>, %166, %cst_60 [1] : vector<4x64xf32> to vector<4xf32>
    %168 = vector.shape_cast %167 : vector<4xf32> to vector<4x1xf32>
    %cst_61 = arith.constant 6.400000e+01 : f32
    %169 = vector.broadcast %cst_61 : f32 to vector<4x1xf32>
    %170 = arith.divf %168, %169 : vector<4x1xf32>
    %cst_62 = arith.constant 9.99999974E-6 : f32
    %171 = vector.broadcast %cst_62 : f32 to vector<4x1xf32>
    %172 = arith.addf %170, %171 : vector<4x1xf32>
    %173 = math.rsqrt %172 : vector<4x1xf32>
    %174 = vector.broadcast %173 : vector<4x1xf32> to vector<4x64xf32>
    %175 = arith.mulf %165, %174 : vector<4x64xf32>
    %176 = vector.broadcast %158 : vector<1x64xf32> to vector<4x64xf32>
    %177 = arith.mulf %175, %176 : vector<4x64xf32>
    %178 = vector.broadcast %159 : vector<1x64xf32> to vector<4x64xf32>
    %179 = arith.addf %177, %178 : vector<4x64xf32>
    %180 = arith.truncf %179 : vector<4x64xf32> to vector<4x64xbf16>
    %c0_63 = arith.constant 0 : index
    %c0_64 = arith.constant 0 : index
    %181 = vector.load %arg7[%c0_63, %c0_64] : memref<64x64xbf16, #tpu.memory_space<vmem>>, vector<64x64xbf16>
    %cst_65 = arith.constant dense<0.000000e+00> : vector<4x64xf32>
    %182 = tpu.matmul %180, %181, %cst_65 {dimension_numbers = #tpu.dot_dimension_numbers<[1], [0], [0], [1], [0, 0, 1, 1], [], []>} : vector<4x64xbf16>, vector<64x64xbf16>, vector<4x64xf32> -> vector<4x64xf32>
    %c0_66 = arith.constant 0 : index
    %c0_67 = arith.constant 0 : index
    %183 = vector.load %arg8[%c0_66, %c0_67] : memref<1x64xf32, #tpu.memory_space<vmem>>, vector<1x64xf32>
    %184 = vector.broadcast %183 : vector<1x64xf32> to vector<4x64xf32>
    %185 = arith.addf %182, %184 : vector<4x64xf32>
    %186 = arith.truncf %3 : vector<12x64xf32> to vector<12x64xbf16>
    %c0_68 = arith.constant 0 : index
    %c0_69 = arith.constant 0 : index
    %187 = vector.load %arg9[%c0_68, %c0_69] : memref<64x128xbf16, #tpu.memory_space<vmem>>, vector<64x128xbf16>
    %cst_70 = arith.constant dense<0.000000e+00> : vector<12x128xf32>
    %188 = tpu.matmul %186, %187, %cst_70 {dimension_numbers = #tpu.dot_dimension_numbers<[1], [0], [0], [1], [0, 0, 1, 1], [], []>} : vector<12x64xbf16>, vector<64x128xbf16>, vector<12x128xf32> -> vector<12x128xf32>
    %c0_71 = arith.constant 0 : index
    %c0_72 = arith.constant 0 : index
    %189 = vector.load %arg10[%c0_71, %c0_72] : memref<1x128xf32, #tpu.memory_space<vmem>>, vector<1x128xf32>
    %190 = vector.broadcast %189 : vector<1x128xf32> to vector<12x128xf32>
    %191 = arith.addf %188, %190 : vector<12x128xf32>
    %192 = vector.extract_strided_slice %191 {offsets = [0, 0], sizes = [12, 64], strides = [1, 1]} : vector<12x128xf32> to vector<12x64xf32>
    %193 = vector.extract_strided_slice %191 {offsets = [0, 64], sizes = [12, 64], strides = [1, 1]} : vector<12x128xf32> to vector<12x64xf32>
    %194 = vector.extract_strided_slice %185 {offsets = [0, 0], sizes = [4, 8], strides = [1, 1]} : vector<4x64xf32> to vector<4x8xf32>
    %195 = vector.extract_strided_slice %192 {offsets = [0, 0], sizes = [12, 8], strides = [1, 1]} : vector<12x64xf32> to vector<12x8xf32>
    %196 = vector.extract_strided_slice %193 {offsets = [0, 0], sizes = [12, 8], strides = [1, 1]} : vector<12x64xf32> to vector<12x8xf32>
    %cst_73 = arith.constant dense<0.000000e+00> : vector<4x12xf32>
    %197 = tpu.matmul %194, %195, %cst_73 {dimension_numbers = #tpu.dot_dimension_numbers<[1], [1], [0], [0], [0, 0, 1, 0], [], []>} : vector<4x8xf32>, vector<12x8xf32>, vector<4x12xf32> -> vector<4x12xf32>
    %cst_74 = arith.constant 0.353553385 : f32
    %198 = vector.broadcast %cst_74 : f32 to vector<4x12xf32>
    %199 = arith.mulf %197, %198 : vector<4x12xf32>
    %cst_75 = arith.constant dense<0xFF800000> : vector<4xf32>
    %200 = vector.multi_reduction <maximumf>, %199, %cst_75 [1] : vector<4x12xf32> to vector<4xf32>
    %201 = vector.shape_cast %200 : vector<4xf32> to vector<4x1xf32>
    %202 = vector.broadcast %201 : vector<4x1xf32> to vector<4x12xf32>
    %203 = arith.subf %199, %202 : vector<4x12xf32>
    %204 = math.exp %203 : vector<4x12xf32>
    %cst_76 = arith.constant dense<0.000000e+00> : vector<4xf32>
    %205 = vector.multi_reduction <add>, %204, %cst_76 [1] : vector<4x12xf32> to vector<4xf32>
    %206 = vector.shape_cast %205 : vector<4xf32> to vector<4x1xf32>
    %207 = tpu.reciprocal %206 {approx = true} : vector<4x1xf32> -> vector<4x1xf32>
    %208 = vector.broadcast %207 : vector<4x1xf32> to vector<4x12xf32>
    %209 = arith.mulf %204, %208 : vector<4x12xf32>
    %cst_77 = arith.constant dense<0.000000e+00> : vector<4x8xf32>
    %210 = tpu.matmul %209, %196, %cst_77 {dimension_numbers = #tpu.dot_dimension_numbers<[1], [0], [0], [1], [0, 0, 1, 1], [], []>} : vector<4x12xf32>, vector<12x8xf32>, vector<4x8xf32> -> vector<4x8xf32>
    %211 = vector.extract_strided_slice %185 {offsets = [0, 8], sizes = [4, 8], strides = [1, 1]} : vector<4x64xf32> to vector<4x8xf32>
    %212 = vector.extract_strided_slice %192 {offsets = [0, 8], sizes = [12, 8], strides = [1, 1]} : vector<12x64xf32> to vector<12x8xf32>
    %213 = vector.extract_strided_slice %193 {offsets = [0, 8], sizes = [12, 8], strides = [1, 1]} : vector<12x64xf32> to vector<12x8xf32>
    %cst_78 = arith.constant dense<0.000000e+00> : vector<4x12xf32>
    %214 = tpu.matmul %211, %212, %cst_78 {dimension_numbers = #tpu.dot_dimension_numbers<[1], [1], [0], [0], [0, 0, 1, 0], [], []>} : vector<4x8xf32>, vector<12x8xf32>, vector<4x12xf32> -> vector<4x12xf32>
    %cst_79 = arith.constant 0.353553385 : f32
    %215 = vector.broadcast %cst_79 : f32 to vector<4x12xf32>
    %216 = arith.mulf %214, %215 : vector<4x12xf32>
    %cst_80 = arith.constant dense<0xFF800000> : vector<4xf32>
    %217 = vector.multi_reduction <maximumf>, %216, %cst_80 [1] : vector<4x12xf32> to vector<4xf32>
    %218 = vector.shape_cast %217 : vector<4xf32> to vector<4x1xf32>
    %219 = vector.broadcast %218 : vector<4x1xf32> to vector<4x12xf32>
    %220 = arith.subf %216, %219 : vector<4x12xf32>
    %221 = math.exp %220 : vector<4x12xf32>
    %cst_81 = arith.constant dense<0.000000e+00> : vector<4xf32>
    %222 = vector.multi_reduction <add>, %221, %cst_81 [1] : vector<4x12xf32> to vector<4xf32>
    %223 = vector.shape_cast %222 : vector<4xf32> to vector<4x1xf32>
    %224 = tpu.reciprocal %223 {approx = true} : vector<4x1xf32> -> vector<4x1xf32>
    %225 = vector.broadcast %224 : vector<4x1xf32> to vector<4x12xf32>
    %226 = arith.mulf %221, %225 : vector<4x12xf32>
    %cst_82 = arith.constant dense<0.000000e+00> : vector<4x8xf32>
    %227 = tpu.matmul %226, %213, %cst_82 {dimension_numbers = #tpu.dot_dimension_numbers<[1], [0], [0], [1], [0, 0, 1, 1], [], []>} : vector<4x12xf32>, vector<12x8xf32>, vector<4x8xf32> -> vector<4x8xf32>
    %228 = vector.extract_strided_slice %185 {offsets = [0, 16], sizes = [4, 8], strides = [1, 1]} : vector<4x64xf32> to vector<4x8xf32>
    %229 = vector.extract_strided_slice %192 {offsets = [0, 16], sizes = [12, 8], strides = [1, 1]} : vector<12x64xf32> to vector<12x8xf32>
    %230 = vector.extract_strided_slice %193 {offsets = [0, 16], sizes = [12, 8], strides = [1, 1]} : vector<12x64xf32> to vector<12x8xf32>
    %cst_83 = arith.constant dense<0.000000e+00> : vector<4x12xf32>
    %231 = tpu.matmul %228, %229, %cst_83 {dimension_numbers = #tpu.dot_dimension_numbers<[1], [1], [0], [0], [0, 0, 1, 0], [], []>} : vector<4x8xf32>, vector<12x8xf32>, vector<4x12xf32> -> vector<4x12xf32>
    %cst_84 = arith.constant 0.353553385 : f32
    %232 = vector.broadcast %cst_84 : f32 to vector<4x12xf32>
    %233 = arith.mulf %231, %232 : vector<4x12xf32>
    %cst_85 = arith.constant dense<0xFF800000> : vector<4xf32>
    %234 = vector.multi_reduction <maximumf>, %233, %cst_85 [1] : vector<4x12xf32> to vector<4xf32>
    %235 = vector.shape_cast %234 : vector<4xf32> to vector<4x1xf32>
    %236 = vector.broadcast %235 : vector<4x1xf32> to vector<4x12xf32>
    %237 = arith.subf %233, %236 : vector<4x12xf32>
    %238 = math.exp %237 : vector<4x12xf32>
    %cst_86 = arith.constant dense<0.000000e+00> : vector<4xf32>
    %239 = vector.multi_reduction <add>, %238, %cst_86 [1] : vector<4x12xf32> to vector<4xf32>
    %240 = vector.shape_cast %239 : vector<4xf32> to vector<4x1xf32>
    %241 = tpu.reciprocal %240 {approx = true} : vector<4x1xf32> -> vector<4x1xf32>
    %242 = vector.broadcast %241 : vector<4x1xf32> to vector<4x12xf32>
    %243 = arith.mulf %238, %242 : vector<4x12xf32>
    %cst_87 = arith.constant dense<0.000000e+00> : vector<4x8xf32>
    %244 = tpu.matmul %243, %230, %cst_87 {dimension_numbers = #tpu.dot_dimension_numbers<[1], [0], [0], [1], [0, 0, 1, 1], [], []>} : vector<4x12xf32>, vector<12x8xf32>, vector<4x8xf32> -> vector<4x8xf32>
    %245 = vector.extract_strided_slice %185 {offsets = [0, 24], sizes = [4, 8], strides = [1, 1]} : vector<4x64xf32> to vector<4x8xf32>
    %246 = vector.extract_strided_slice %192 {offsets = [0, 24], sizes = [12, 8], strides = [1, 1]} : vector<12x64xf32> to vector<12x8xf32>
    %247 = vector.extract_strided_slice %193 {offsets = [0, 24], sizes = [12, 8], strides = [1, 1]} : vector<12x64xf32> to vector<12x8xf32>
    %cst_88 = arith.constant dense<0.000000e+00> : vector<4x12xf32>
    %248 = tpu.matmul %245, %246, %cst_88 {dimension_numbers = #tpu.dot_dimension_numbers<[1], [1], [0], [0], [0, 0, 1, 0], [], []>} : vector<4x8xf32>, vector<12x8xf32>, vector<4x12xf32> -> vector<4x12xf32>
    %cst_89 = arith.constant 0.353553385 : f32
    %249 = vector.broadcast %cst_89 : f32 to vector<4x12xf32>
    %250 = arith.mulf %248, %249 : vector<4x12xf32>
    %cst_90 = arith.constant dense<0xFF800000> : vector<4xf32>
    %251 = vector.multi_reduction <maximumf>, %250, %cst_90 [1] : vector<4x12xf32> to vector<4xf32>
    %252 = vector.shape_cast %251 : vector<4xf32> to vector<4x1xf32>
    %253 = vector.broadcast %252 : vector<4x1xf32> to vector<4x12xf32>
    %254 = arith.subf %250, %253 : vector<4x12xf32>
    %255 = math.exp %254 : vector<4x12xf32>
    %cst_91 = arith.constant dense<0.000000e+00> : vector<4xf32>
    %256 = vector.multi_reduction <add>, %255, %cst_91 [1] : vector<4x12xf32> to vector<4xf32>
    %257 = vector.shape_cast %256 : vector<4xf32> to vector<4x1xf32>
    %258 = tpu.reciprocal %257 {approx = true} : vector<4x1xf32> -> vector<4x1xf32>
    %259 = vector.broadcast %258 : vector<4x1xf32> to vector<4x12xf32>
    %260 = arith.mulf %255, %259 : vector<4x12xf32>
    %cst_92 = arith.constant dense<0.000000e+00> : vector<4x8xf32>
    %261 = tpu.matmul %260, %247, %cst_92 {dimension_numbers = #tpu.dot_dimension_numbers<[1], [0], [0], [1], [0, 0, 1, 1], [], []>} : vector<4x12xf32>, vector<12x8xf32>, vector<4x8xf32> -> vector<4x8xf32>
    %262 = vector.extract_strided_slice %185 {offsets = [0, 32], sizes = [4, 8], strides = [1, 1]} : vector<4x64xf32> to vector<4x8xf32>
    %263 = vector.extract_strided_slice %192 {offsets = [0, 32], sizes = [12, 8], strides = [1, 1]} : vector<12x64xf32> to vector<12x8xf32>
    %264 = vector.extract_strided_slice %193 {offsets = [0, 32], sizes = [12, 8], strides = [1, 1]} : vector<12x64xf32> to vector<12x8xf32>
    %cst_93 = arith.constant dense<0.000000e+00> : vector<4x12xf32>
    %265 = tpu.matmul %262, %263, %cst_93 {dimension_numbers = #tpu.dot_dimension_numbers<[1], [1], [0], [0], [0, 0, 1, 0], [], []>} : vector<4x8xf32>, vector<12x8xf32>, vector<4x12xf32> -> vector<4x12xf32>
    %cst_94 = arith.constant 0.353553385 : f32
    %266 = vector.broadcast %cst_94 : f32 to vector<4x12xf32>
    %267 = arith.mulf %265, %266 : vector<4x12xf32>
    %cst_95 = arith.constant dense<0xFF800000> : vector<4xf32>
    %268 = vector.multi_reduction <maximumf>, %267, %cst_95 [1] : vector<4x12xf32> to vector<4xf32>
    %269 = vector.shape_cast %268 : vector<4xf32> to vector<4x1xf32>
    %270 = vector.broadcast %269 : vector<4x1xf32> to vector<4x12xf32>
    %271 = arith.subf %267, %270 : vector<4x12xf32>
    %272 = math.exp %271 : vector<4x12xf32>
    %cst_96 = arith.constant dense<0.000000e+00> : vector<4xf32>
    %273 = vector.multi_reduction <add>, %272, %cst_96 [1] : vector<4x12xf32> to vector<4xf32>
    %274 = vector.shape_cast %273 : vector<4xf32> to vector<4x1xf32>
    %275 = tpu.reciprocal %274 {approx = true} : vector<4x1xf32> -> vector<4x1xf32>
    %276 = vector.broadcast %275 : vector<4x1xf32> to vector<4x12xf32>
    %277 = arith.mulf %272, %276 : vector<4x12xf32>
    %cst_97 = arith.constant dense<0.000000e+00> : vector<4x8xf32>
    %278 = tpu.matmul %277, %264, %cst_97 {dimension_numbers = #tpu.dot_dimension_numbers<[1], [0], [0], [1], [0, 0, 1, 1], [], []>} : vector<4x12xf32>, vector<12x8xf32>, vector<4x8xf32> -> vector<4x8xf32>
    %279 = vector.extract_strided_slice %185 {offsets = [0, 40], sizes = [4, 8], strides = [1, 1]} : vector<4x64xf32> to vector<4x8xf32>
    %280 = vector.extract_strided_slice %192 {offsets = [0, 40], sizes = [12, 8], strides = [1, 1]} : vector<12x64xf32> to vector<12x8xf32>
    %281 = vector.extract_strided_slice %193 {offsets = [0, 40], sizes = [12, 8], strides = [1, 1]} : vector<12x64xf32> to vector<12x8xf32>
    %cst_98 = arith.constant dense<0.000000e+00> : vector<4x12xf32>
    %282 = tpu.matmul %279, %280, %cst_98 {dimension_numbers = #tpu.dot_dimension_numbers<[1], [1], [0], [0], [0, 0, 1, 0], [], []>} : vector<4x8xf32>, vector<12x8xf32>, vector<4x12xf32> -> vector<4x12xf32>
    %cst_99 = arith.constant 0.353553385 : f32
    %283 = vector.broadcast %cst_99 : f32 to vector<4x12xf32>
    %284 = arith.mulf %282, %283 : vector<4x12xf32>
    %cst_100 = arith.constant dense<0xFF800000> : vector<4xf32>
    %285 = vector.multi_reduction <maximumf>, %284, %cst_100 [1] : vector<4x12xf32> to vector<4xf32>
    %286 = vector.shape_cast %285 : vector<4xf32> to vector<4x1xf32>
    %287 = vector.broadcast %286 : vector<4x1xf32> to vector<4x12xf32>
    %288 = arith.subf %284, %287 : vector<4x12xf32>
    %289 = math.exp %288 : vector<4x12xf32>
    %cst_101 = arith.constant dense<0.000000e+00> : vector<4xf32>
    %290 = vector.multi_reduction <add>, %289, %cst_101 [1] : vector<4x12xf32> to vector<4xf32>
    %291 = vector.shape_cast %290 : vector<4xf32> to vector<4x1xf32>
    %292 = tpu.reciprocal %291 {approx = true} : vector<4x1xf32> -> vector<4x1xf32>
    %293 = vector.broadcast %292 : vector<4x1xf32> to vector<4x12xf32>
    %294 = arith.mulf %289, %293 : vector<4x12xf32>
    %cst_102 = arith.constant dense<0.000000e+00> : vector<4x8xf32>
    %295 = tpu.matmul %294, %281, %cst_102 {dimension_numbers = #tpu.dot_dimension_numbers<[1], [0], [0], [1], [0, 0, 1, 1], [], []>} : vector<4x12xf32>, vector<12x8xf32>, vector<4x8xf32> -> vector<4x8xf32>
    %296 = vector.extract_strided_slice %185 {offsets = [0, 48], sizes = [4, 8], strides = [1, 1]} : vector<4x64xf32> to vector<4x8xf32>
    %297 = vector.extract_strided_slice %192 {offsets = [0, 48], sizes = [12, 8], strides = [1, 1]} : vector<12x64xf32> to vector<12x8xf32>
    %298 = vector.extract_strided_slice %193 {offsets = [0, 48], sizes = [12, 8], strides = [1, 1]} : vector<12x64xf32> to vector<12x8xf32>
    %cst_103 = arith.constant dense<0.000000e+00> : vector<4x12xf32>
    %299 = tpu.matmul %296, %297, %cst_103 {dimension_numbers = #tpu.dot_dimension_numbers<[1], [1], [0], [0], [0, 0, 1, 0], [], []>} : vector<4x8xf32>, vector<12x8xf32>, vector<4x12xf32> -> vector<4x12xf32>
    %cst_104 = arith.constant 0.353553385 : f32
    %300 = vector.broadcast %cst_104 : f32 to vector<4x12xf32>
    %301 = arith.mulf %299, %300 : vector<4x12xf32>
    %cst_105 = arith.constant dense<0xFF800000> : vector<4xf32>
    %302 = vector.multi_reduction <maximumf>, %301, %cst_105 [1] : vector<4x12xf32> to vector<4xf32>
    %303 = vector.shape_cast %302 : vector<4xf32> to vector<4x1xf32>
    %304 = vector.broadcast %303 : vector<4x1xf32> to vector<4x12xf32>
    %305 = arith.subf %301, %304 : vector<4x12xf32>
    %306 = math.exp %305 : vector<4x12xf32>
    %cst_106 = arith.constant dense<0.000000e+00> : vector<4xf32>
    %307 = vector.multi_reduction <add>, %306, %cst_106 [1] : vector<4x12xf32> to vector<4xf32>
    %308 = vector.shape_cast %307 : vector<4xf32> to vector<4x1xf32>
    %309 = tpu.reciprocal %308 {approx = true} : vector<4x1xf32> -> vector<4x1xf32>
    %310 = vector.broadcast %309 : vector<4x1xf32> to vector<4x12xf32>
    %311 = arith.mulf %306, %310 : vector<4x12xf32>
    %cst_107 = arith.constant dense<0.000000e+00> : vector<4x8xf32>
    %312 = tpu.matmul %311, %298, %cst_107 {dimension_numbers = #tpu.dot_dimension_numbers<[1], [0], [0], [1], [0, 0, 1, 1], [], []>} : vector<4x12xf32>, vector<12x8xf32>, vector<4x8xf32> -> vector<4x8xf32>
    %313 = vector.extract_strided_slice %185 {offsets = [0, 56], sizes = [4, 8], strides = [1, 1]} : vector<4x64xf32> to vector<4x8xf32>
    %314 = vector.extract_strided_slice %192 {offsets = [0, 56], sizes = [12, 8], strides = [1, 1]} : vector<12x64xf32> to vector<12x8xf32>
    %315 = vector.extract_strided_slice %193 {offsets = [0, 56], sizes = [12, 8], strides = [1, 1]} : vector<12x64xf32> to vector<12x8xf32>
    %cst_108 = arith.constant dense<0.000000e+00> : vector<4x12xf32>
    %316 = tpu.matmul %313, %314, %cst_108 {dimension_numbers = #tpu.dot_dimension_numbers<[1], [1], [0], [0], [0, 0, 1, 0], [], []>} : vector<4x8xf32>, vector<12x8xf32>, vector<4x12xf32> -> vector<4x12xf32>
    %cst_109 = arith.constant 0.353553385 : f32
    %317 = vector.broadcast %cst_109 : f32 to vector<4x12xf32>
    %318 = arith.mulf %316, %317 : vector<4x12xf32>
    %cst_110 = arith.constant dense<0xFF800000> : vector<4xf32>
    %319 = vector.multi_reduction <maximumf>, %318, %cst_110 [1] : vector<4x12xf32> to vector<4xf32>
    %320 = vector.shape_cast %319 : vector<4xf32> to vector<4x1xf32>
    %321 = vector.broadcast %320 : vector<4x1xf32> to vector<4x12xf32>
    %322 = arith.subf %318, %321 : vector<4x12xf32>
    %323 = math.exp %322 : vector<4x12xf32>
    %cst_111 = arith.constant dense<0.000000e+00> : vector<4xf32>
    %324 = vector.multi_reduction <add>, %323, %cst_111 [1] : vector<4x12xf32> to vector<4xf32>
    %325 = vector.shape_cast %324 : vector<4xf32> to vector<4x1xf32>
    %326 = tpu.reciprocal %325 {approx = true} : vector<4x1xf32> -> vector<4x1xf32>
    %327 = vector.broadcast %326 : vector<4x1xf32> to vector<4x12xf32>
    %328 = arith.mulf %323, %327 : vector<4x12xf32>
    %cst_112 = arith.constant dense<0.000000e+00> : vector<4x8xf32>
    %329 = tpu.matmul %328, %315, %cst_112 {dimension_numbers = #tpu.dot_dimension_numbers<[1], [0], [0], [1], [0, 0, 1, 1], [], []>} : vector<4x12xf32>, vector<12x8xf32>, vector<4x8xf32> -> vector<4x8xf32>
    %330 = tpu.concatenate %210, %227, %244, %261, %278, %295, %312, %329 in 1 : vector<4x8xf32>, vector<4x8xf32>, vector<4x8xf32>, vector<4x8xf32>, vector<4x8xf32>, vector<4x8xf32>, vector<4x8xf32>, vector<4x8xf32> -> vector<4x64xf32>
    %331 = arith.truncf %330 : vector<4x64xf32> to vector<4x64xbf16>
    %c0_113 = arith.constant 0 : index
    %c0_114 = arith.constant 0 : index
    %332 = vector.load %arg11[%c0_113, %c0_114] : memref<64x64xbf16, #tpu.memory_space<vmem>>, vector<64x64xbf16>
    %cst_115 = arith.constant dense<0.000000e+00> : vector<4x64xf32>
    %333 = tpu.matmul %331, %332, %cst_115 {dimension_numbers = #tpu.dot_dimension_numbers<[1], [0], [0], [1], [0, 0, 1, 1], [], []>} : vector<4x64xbf16>, vector<64x64xbf16>, vector<4x64xf32> -> vector<4x64xf32>
    %c0_116 = arith.constant 0 : index
    %c0_117 = arith.constant 0 : index
    %334 = vector.load %arg12[%c0_116, %c0_117] : memref<1x64xf32, #tpu.memory_space<vmem>>, vector<1x64xf32>
    %335 = vector.broadcast %334 : vector<1x64xf32> to vector<4x64xf32>
    %336 = arith.addf %333, %335 : vector<4x64xf32>
    %337 = arith.addf %179, %336 : vector<4x64xf32>
    %c0_118 = arith.constant 0 : index
    %c0_119 = arith.constant 0 : index
    %338 = vector.load %arg15[%c0_118, %c0_119] : memref<1x64xf32, #tpu.memory_space<vmem>>, vector<1x64xf32>
    %c0_120 = arith.constant 0 : index
    %c0_121 = arith.constant 0 : index
    %339 = vector.load %arg16[%c0_120, %c0_121] : memref<1x64xf32, #tpu.memory_space<vmem>>, vector<1x64xf32>
    %cst_122 = arith.constant dense<0.000000e+00> : vector<4xf32>
    %340 = vector.multi_reduction <add>, %337, %cst_122 [1] : vector<4x64xf32> to vector<4xf32>
    %341 = vector.shape_cast %340 : vector<4xf32> to vector<4x1xf32>
    %cst_123 = arith.constant 6.400000e+01 : f32
    %342 = vector.broadcast %cst_123 : f32 to vector<4x1xf32>
    %343 = arith.divf %341, %342 : vector<4x1xf32>
    %344 = vector.broadcast %343 : vector<4x1xf32> to vector<4x64xf32>
    %345 = arith.subf %337, %344 : vector<4x64xf32>
    %346 = arith.mulf %345, %345 : vector<4x64xf32>
    %cst_124 = arith.constant dense<0.000000e+00> : vector<4xf32>
    %347 = vector.multi_reduction <add>, %346, %cst_124 [1] : vector<4x64xf32> to vector<4xf32>
    %348 = vector.shape_cast %347 : vector<4xf32> to vector<4x1xf32>
    %cst_125 = arith.constant 6.400000e+01 : f32
    %349 = vector.broadcast %cst_125 : f32 to vector<4x1xf32>
    %350 = arith.divf %348, %349 : vector<4x1xf32>
    %cst_126 = arith.constant 9.99999974E-6 : f32
    %351 = vector.broadcast %cst_126 : f32 to vector<4x1xf32>
    %352 = arith.addf %350, %351 : vector<4x1xf32>
    %353 = math.rsqrt %352 : vector<4x1xf32>
    %354 = vector.broadcast %353 : vector<4x1xf32> to vector<4x64xf32>
    %355 = arith.mulf %345, %354 : vector<4x64xf32>
    %356 = vector.broadcast %338 : vector<1x64xf32> to vector<4x64xf32>
    %357 = arith.mulf %355, %356 : vector<4x64xf32>
    %358 = vector.broadcast %339 : vector<1x64xf32> to vector<4x64xf32>
    %359 = arith.addf %357, %358 : vector<4x64xf32>
    %360 = arith.truncf %359 : vector<4x64xf32> to vector<4x64xbf16>
    %c0_127 = arith.constant 0 : index
    %c0_128 = arith.constant 0 : index
    %361 = vector.load %arg19[%c0_127, %c0_128] : memref<64x128xbf16, #tpu.memory_space<vmem>>, vector<64x128xbf16>
    %cst_129 = arith.constant dense<0.000000e+00> : vector<4x128xf32>
    %362 = tpu.matmul %360, %361, %cst_129 {dimension_numbers = #tpu.dot_dimension_numbers<[1], [0], [0], [1], [0, 0, 1, 1], [], []>} : vector<4x64xbf16>, vector<64x128xbf16>, vector<4x128xf32> -> vector<4x128xf32>
    %c0_130 = arith.constant 0 : index
    %c0_131 = arith.constant 0 : index
    %363 = vector.load %arg20[%c0_130, %c0_131] : memref<1x128xf32, #tpu.memory_space<vmem>>, vector<1x128xf32>
    %364 = vector.broadcast %363 : vector<1x128xf32> to vector<4x128xf32>
    %365 = arith.addf %362, %364 : vector<4x128xf32>
    %cst_132 = arith.constant 0.000000e+00 : f32
    %366 = vector.broadcast %cst_132 : f32 to vector<4x128xf32>
    %367 = arith.maximumf %365, %366 : vector<4x128xf32>
    %368 = arith.truncf %367 : vector<4x128xf32> to vector<4x128xbf16>
    %c0_133 = arith.constant 0 : index
    %c0_134 = arith.constant 0 : index
    %369 = vector.load %arg21[%c0_133, %c0_134] : memref<128x64xbf16, #tpu.memory_space<vmem>>, vector<128x64xbf16>
    %cst_135 = arith.constant dense<0.000000e+00> : vector<4x64xf32>
    %370 = tpu.matmul %368, %369, %cst_135 {dimension_numbers = #tpu.dot_dimension_numbers<[1], [0], [0], [1], [0, 0, 1, 1], [], []>} : vector<4x128xbf16>, vector<128x64xbf16>, vector<4x64xf32> -> vector<4x64xf32>
    %c0_136 = arith.constant 0 : index
    %c0_137 = arith.constant 0 : index
    %371 = vector.load %arg22[%c0_136, %c0_137] : memref<1x64xf32, #tpu.memory_space<vmem>>, vector<1x64xf32>
    %372 = vector.broadcast %371 : vector<1x64xf32> to vector<4x64xf32>
    %373 = arith.addf %370, %372 : vector<4x64xf32>
    %374 = arith.addf %359, %373 : vector<4x64xf32>
    %c0_138 = arith.constant 0 : index
    %c0_139 = arith.constant 0 : index
    %375 = vector.load %arg17[%c0_138, %c0_139] : memref<1x64xf32, #tpu.memory_space<vmem>>, vector<1x64xf32>
    %c0_140 = arith.constant 0 : index
    %c0_141 = arith.constant 0 : index
    %376 = vector.load %arg18[%c0_140, %c0_141] : memref<1x64xf32, #tpu.memory_space<vmem>>, vector<1x64xf32>
    %cst_142 = arith.constant dense<0.000000e+00> : vector<4xf32>
    %377 = vector.multi_reduction <add>, %374, %cst_142 [1] : vector<4x64xf32> to vector<4xf32>
    %378 = vector.shape_cast %377 : vector<4xf32> to vector<4x1xf32>
    %cst_143 = arith.constant 6.400000e+01 : f32
    %379 = vector.broadcast %cst_143 : f32 to vector<4x1xf32>
    %380 = arith.divf %378, %379 : vector<4x1xf32>
    %381 = vector.broadcast %380 : vector<4x1xf32> to vector<4x64xf32>
    %382 = arith.subf %374, %381 : vector<4x64xf32>
    %383 = arith.mulf %382, %382 : vector<4x64xf32>
    %cst_144 = arith.constant dense<0.000000e+00> : vector<4xf32>
    %384 = vector.multi_reduction <add>, %383, %cst_144 [1] : vector<4x64xf32> to vector<4xf32>
    %385 = vector.shape_cast %384 : vector<4xf32> to vector<4x1xf32>
    %cst_145 = arith.constant 6.400000e+01 : f32
    %386 = vector.broadcast %cst_145 : f32 to vector<4x1xf32>
    %387 = arith.divf %385, %386 : vector<4x1xf32>
    %cst_146 = arith.constant 9.99999974E-6 : f32
    %388 = vector.broadcast %cst_146 : f32 to vector<4x1xf32>
    %389 = arith.addf %387, %388 : vector<4x1xf32>
    %390 = math.rsqrt %389 : vector<4x1xf32>
    %391 = vector.broadcast %390 : vector<4x1xf32> to vector<4x64xf32>
    %392 = arith.mulf %382, %391 : vector<4x64xf32>
    %393 = vector.broadcast %375 : vector<1x64xf32> to vector<4x64xf32>
    %394 = arith.mulf %392, %393 : vector<4x64xf32>
    %395 = vector.broadcast %376 : vector<1x64xf32> to vector<4x64xf32>
    %396 = arith.addf %394, %395 : vector<4x64xf32>
    %c0_147 = arith.constant 0 : index
    %c0_148 = arith.constant 0 : index
    %c0_149 = arith.constant 0 : index
    %397 = vector.load %arg23[%c0_147, %c0_148, %c0_149] : memref<1x4x64xf32, #tpu.memory_space<vmem>>, vector<1x4x64xf32>
    %398 = vector.shape_cast %397 : vector<1x4x64xf32> to vector<4x64xf32>
    %399 = vector.shape_cast %396 : vector<4x64xf32> to vector<1x4x64xf32>
    tpu.vector_store %arg23[%c0_147, %c0_148, %c0_149], %399 {strides = array<i32>} : memref<1x4x64xf32, #tpu.memory_space<vmem>>, vector<1x4x64xf32>,
    return
  }
  func.func @transform_0(%arg0: i32) -> (i32, i32, i32) {
    %c0_i32 = arith.constant 0 : i32
    %c0_i32_0 = arith.constant 0 : i32
    %c0_i32_1 = arith.constant 0 : i32
    return %arg0, %c0_i32, %c0_i32_0 : i32, i32, i32
  }
  func.func @transform_1(%arg0: i32) -> (i32, i32, i32) {
    %c0_i32 = arith.constant 0 : i32
    %c0_i32_0 = arith.constant 0 : i32
    %c0_i32_1 = arith.constant 0 : i32
    return %arg0, %c0_i32, %c0_i32_0 : i32, i32, i32
  }
  func.func @transform_2(%arg0: i32) -> (i32, i32) {
    %c0_i32 = arith.constant 0 : i32
    %c0_i32_0 = arith.constant 0 : i32
    %c0_i32_1 = arith.constant 0 : i32
    return %c0_i32, %c0_i32_0 : i32, i32
  }
  func.func @transform_3(%arg0: i32) -> (i32, i32) {
    %c0_i32 = arith.constant 0 : i32
    %c0_i32_0 = arith.constant 0 : i32
    %c0_i32_1 = arith.constant 0 : i32
    return %c0_i32, %c0_i32_0 : i32, i32
  }
  func.func @transform_4(%arg0: i32) -> (i32, i32) {
    %c0_i32 = arith.constant 0 : i32
    %c0_i32_0 = arith.constant 0 : i32
    %c0_i32_1 = arith.constant 0 : i32
    return %c0_i32, %c0_i32_0 : i32, i32
  }
  func.func @transform_5(%arg0: i32) -> (i32, i32) {
    %c0_i32 = arith.constant 0 : i32
    %c0_i32_0 = arith.constant 0 : i32
    %c0_i32_1 = arith.constant 0 : i32
    return %c0_i32, %c0_i32_0 : i32, i32
  }
  func.func @transform_6(%arg0: i32) -> (i32, i32) {
    %c0_i32 = arith.constant 0 : i32
    %c0_i32_0 = arith.constant 0 : i32
    %c0_i32_1 = arith.constant 0 : i32
    return %c0_i32, %c0_i32_0 : i32, i32
  }
  func.func @transform_7(%arg0: i32) -> (i32, i32) {
    %c0_i32 = arith.constant 0 : i32
    %c0_i32_0 = arith.constant 0 : i32
    %c0_i32_1 = arith.constant 0 : i32
    return %c0_i32, %c0_i32_0 : i32, i32
  }
  func.func @transform_8(%arg0: i32) -> (i32, i32) {
    %c0_i32 = arith.constant 0 : i32
    %c0_i32_0 = arith.constant 0 : i32
    %c0_i32_1 = arith.constant 0 : i32
    return %c0_i32, %c0_i32_0 : i32, i32
  }
  func.func @transform_9(%arg0: i32) -> (i32, i32) {
    %c0_i32 = arith.constant 0 : i32
    %c0_i32_0 = arith.constant 0 : i32
    %c0_i32_1 = arith.constant 0 : i32
    return %c0_i32, %c0_i32_0 : i32, i32
  }
  func.func @transform_10(%arg0: i32) -> (i32, i32) {
    %c0_i32 = arith.constant 0 : i32
    %c0_i32_0 = arith.constant 0 : i32
    %c0_i32_1 = arith.constant 0 : i32
    return %c0_i32, %c0_i32_0 : i32, i32
  }
  func.func @transform_11(%arg0: i32) -> (i32, i32) {
    %c0_i32 = arith.constant 0 : i32
    %c0_i32_0 = arith.constant 0 : i32
    %c0_i32_1 = arith.constant 0 : i32
    return %c0_i32, %c0_i32_0 : i32, i32
  }
  func.func @transform_12(%arg0: i32) -> (i32, i32) {
    %c0_i32 = arith.constant 0 : i32
    %c0_i32_0 = arith.constant 0 : i32
    %c0_i32_1 = arith.constant 0 : i32
    return %c0_i32, %c0_i32_0 : i32, i32
  }
  func.func @transform_13(%arg0: i32) -> (i32, i32) {
    %c0_i32 = arith.constant 0 : i32
    %c0_i32_0 = arith.constant 0 : i32
    %c0_i32_1 = arith.constant 0 : i32
    return %c0_i32, %c0_i32_0 : i32, i32
  }
  func.func @transform_14(%arg0: i32) -> (i32, i32) {
    %c0_i32 = arith.constant 0 : i32
    %c0_i32_0 = arith.constant 0 : i32
    %c0_i32_1 = arith.constant 0 : i32
    return %c0_i32, %c0_i32_0 : i32, i32
  }
  func.func @transform_15(%arg0: i32) -> (i32, i32) {
    %c0_i32 = arith.constant 0 : i32
    %c0_i32_0 = arith.constant 0 : i32
    %c0_i32_1 = arith.constant 0 : i32
    return %c0_i32, %c0_i32_0 : i32, i32
  }
  func.func @transform_16(%arg0: i32) -> (i32, i32) {
    %c0_i32 = arith.constant 0 : i32
    %c0_i32_0 = arith.constant 0 : i32
    %c0_i32_1 = arith.constant 0 : i32
    return %c0_i32, %c0_i32_0 : i32, i32
  }
  func.func @transform_17(%arg0: i32) -> (i32, i32) {
    %c0_i32 = arith.constant 0 : i32
    %c0_i32_0 = arith.constant 0 : i32
    %c0_i32_1 = arith.constant 0 : i32
    return %c0_i32, %c0_i32_0 : i32, i32
  }
  func.func @transform_18(%arg0: i32) -> (i32, i32) {
    %c0_i32 = arith.constant 0 : i32
    %c0_i32_0 = arith.constant 0 : i32
    %c0_i32_1 = arith.constant 0 : i32
    return %c0_i32, %c0_i32_0 : i32, i32
  }
  func.func @transform_19(%arg0: i32) -> (i32, i32) {
    %c0_i32 = arith.constant 0 : i32
    %c0_i32_0 = arith.constant 0 : i32
    %c0_i32_1 = arith.constant 0 : i32
    return %c0_i32, %c0_i32_0 : i32, i32
  }
  func.func @transform_20(%arg0: i32) -> (i32, i32) {
    %c0_i32 = arith.constant 0 : i32
    %c0_i32_0 = arith.constant 0 : i32
    %c0_i32_1 = arith.constant 0 : i32
    return %c0_i32, %c0_i32_0 : i32, i32
  }
  func.func @transform_21(%arg0: i32) -> (i32, i32) {
    %c0_i32 = arith.constant 0 : i32
    %c0_i32_0 = arith.constant 0 : i32
    %c0_i32_1 = arith.constant 0 : i32
    return %c0_i32, %c0_i32_0 : i32, i32
  }
  func.func @transform_22(%arg0: i32) -> (i32, i32, i32) {
    %c0_i32 = arith.constant 0 : i32
    %c0_i32_0 = arith.constant 0 : i32
    %c0_i32_1 = arith.constant 0 : i32
    return %arg0, %c0_i32, %c0_i32_0 : i32, i32, i32
  }
}

</mosaic_0001>

<llo_original>
// kernel: _lambda_.8
$region0: #{_lambda_.8}
  #allocation0 [shape = 'u32[]', space=smem, size = 0x4, offset = 0x4, fixed_abs, tag = 'smem constant byte address 0x4 - core index']
  #allocation1 [shape = 'u32[144,128]{1,0:T(1,128)}', space=vmem, size = 0x12000, scoped, tag = 'internal scratch']
  %s0 = inlined_call_operand.vmem [shape: f32[16,28], index: 0, kind: input, shape index: {}]
  %s1 = inlined_call_operand.vmem [shape: bf16[28,128], index: 1, kind: input, shape index: {}]
  %s2 = inlined_call_operand.vmem [shape: f32[16,128], index: 2, kind: output, shape index: {}]
  %s3 = sld [smem:[#allocation0]]
  $region18: #{_lambda_.8} parent=0
    _
  %s5 = ssub.s32 1, %s3
  %s6 = scalar_select 0, %s5, %s3
  // Predicated region
  $region2: #{_lambda_.8} parent=0 // pred_check
    _
  $region3: #{_lambda_.8} parent=0 // pred_check_branch
    %8 = sbr.rel (0) target = $region5
  $region4: #{_lambda_.8} parent=0 // pred_region
    _
  $region5: #{_lambda_.8} parent=0 // pred_fallthru
    _
  // Predicated region
  $region6: #{_lambda_.8} parent=0 // pred_check
    _
  $region7: #{_lambda_.8} parent=0 // pred_check_branch
    %10 = sbr.rel (0) target = $region9
  $region8: #{_lambda_.8} parent=0 // pred_region
    _
  $region9: #{_lambda_.8} parent=0 // pred_fallthru
    _
  %v12 = vld [vmem:[%s0] sm:$0xff]
  %v13 = vld [vmem:[%s0 + $0x8] sm:$0xff]
  %v14 = vpack.c.bf16 %v13, %v12
  %v15 = vld [vmem:[%s1] sm:$0xf]
  %v16 = vld [vmem:[%s1 + $0x4] sm:$0xf]
  %v17 = vld [vmem:[%s1 + $0x8] sm:$0xf]
  %v18 = vld [vmem:[%s1 + $0xc] sm:$0x3]
  %v23 = vunpack.c.l.b16 %v15
  %v24 = vunpack.c.l.b16 %v16
  %v25 = vunpack.c.l.b16 %v17
  %v26 = vunpack.c.l.b16 %v18
  %v27 = vpack.c.b16 %v24, %v23
  %v28 = vpack.c.b16 %v26, %v25
  %vm30 = vcmask 228352
  %v32 = vsel %vm30, %v14, 0
  %vm34 = vcmask 1045504
  %v36 = vsel %vm34, %v28, 0
  %38 = vmatprep.subr.bf16.mxu0 0
  %39 = vmatpush1.bf16.msra.mxu0 0
  %40 = vmatprep.subr.bf16.mxu0 0
  %41 = vmatpush1.bf16.msra.mxu0 0
  %42 = vmatprep.subr.bf16.mxu0 0
  %43 = vmatpush1.bf16.msra.mxu0 0
  %44 = vmatprep.subr.bf16.mxu0 0
  %45 = vmatpush1.bf16.msra.mxu0 0
  %46 = vmatprep.subr.bf16.mxu0 0
  %47 = vmatpush1.bf16.msra.mxu0 0
  %48 = vmatprep.subr.bf16.mxu0 0
  %49 = vmatpush1.bf16.msra.mxu0 0
  %50 = vmatprep.subr.bf16.mxu0 0
  %51 = vmatpush1.bf16.msra.mxu0 %v36
  %52 = vmatprep.subr.bf16.mxu0 0
  %53 = vmatpush1.bf16.msra.mxu0 %v27
  %54 = vmatprep.subr.bf16.mxu0 0
  %55 = vmatpush2.bf16.msra.mxu0 0
  %56 = vmatprep.subr.bf16.mxu0 0
  %57 = vmatpush2.bf16.msra.mxu0 0
  %58 = vmatprep.subr.bf16.mxu0 0
  %59 = vmatpush2.bf16.msra.mxu0 0
  %60 = vmatprep.subr.bf16.mxu0 0
  %61 = vmatpush2.bf16.msra.mxu0 0
  %62 = vmatprep.subr.bf16.mxu0 0
  %63 = vmatpush2.bf16.msra.mxu0 0
  %64 = vmatprep.subr.bf16.mxu0 0
  %65 = vmatpush2.bf16.msra.mxu0 0
  %66 = vmatprep.subr.bf16.mxu0 0
  %67 = vmatpush2.bf16.msra.mxu0 0
  %68 = vmatprep.subr.bf16.mxu0 0
  %69 = vmatpush2.bf16.msra.mxu0 0
  %70 = vmatprep.mubr.bf16.mxu0 0
  %71 = vmatmul.mubr.bf16.gmra.mxu0 %v32
  %v72 = vpop.f32.mrf.mxu0
  %v73 = vadd.f32 0.0, %v72
  %v74 = vpop.f32.mrf.mxu0
  %v75 = vpop.f32.mrf.mxu0
  %v76 = vadd.f32 0.0, %v75
  %v77 = vpop.f32.mrf.mxu0
  %78 = vdwg.mxu0
  %v79 = vmax.f32 %v73, 0.0
  %v80 = vmax.f32 %v76, 0.0
  %81 = vst [vmem:[%s2] sm:$0xff] %v79
  %82 = vst [vmem:[%s2 + $0x8] sm:$0xff] %v80
  // Predicated region
  $region10: #{_lambda_.8} parent=0 // pred_check
    _
  $region11: #{_lambda_.8} parent=0 // pred_check_branch
    %84 = sbr.rel (0) target = $region13
  $region12: #{_lambda_.8} parent=0 // pred_region
    _
  $region13: #{_lambda_.8} parent=0 // pred_fallthru
    _
  // Predicated region
  $region14: #{_lambda_.8} parent=0 // pred_check
    _
  $region15: #{_lambda_.8} parent=0 // pred_check_branch
    %86 = sbr.rel (0) target = $region17
  $region16: #{_lambda_.8} parent=0 // pred_region
    _
  $region17: #{_lambda_.8} parent=0 // pred_fallthru
    _

// kernel: _lambda_.9
$region0: #{_lambda_.9}
  #allocation0 [shape = 'u32[]', space=smem, size = 0x4, offset = 0x4, fixed_abs, tag = 'smem constant byte address 0x4 - core index']
  #allocation1 [shape = 'u32[144,128]{1,0:T(1,128)}', space=vmem, size = 0x12000, scoped, tag = 'internal scratch']
  %s0 = inlined_call_operand.vmem [shape: f32[2,8,128], index: 0, kind: input, shape index: {}]
  %s1 = inlined_call_operand.vmem [shape: f32[2,10,128], index: 1, kind: input, shape index: {}]
  %s2 = inlined_call_operand.vmem [shape: f32[3,128], index: 2, kind: input, shape index: {}]
  %s3 = inlined_call_operand.vmem [shape: f32[1,128], index: 3, kind: input, shape index: {}]
  %s4 = inlined_call_operand.vmem [shape: f32[1,128], index: 4, kind: input, shape index: {}]
  %s5 = inlined_call_operand.vmem [shape: f32[1,128], index: 5, kind: input, shape index: {}]
  %s6 = inlined_call_operand.vmem [shape: bf16[128,128], index: 6, kind: input, shape index: {}]
  %s7 = inlined_call_operand.vmem [shape: f32[1,128], index: 7, kind: input, shape index: {}]
  %s8 = inlined_call_operand.vmem [shape: f32[1,128], index: 8, kind: input, shape index: {}]
  %s9 = inlined_call_operand.vmem [shape: f32[1,128], index: 9, kind: input, shape index: {}]
  %s10 = inlined_call_operand.vmem [shape: f32[2,8,128], index: 10, kind: output, shape index: {}]
  %s11 = sld [smem:[#allocation0]]
  $region73: #{_lambda_.9} parent=0
    _
  %s13 = ssub.s32 1, %s11
  %s14 = scalar_select 0, %s13, %s11
  loop: start=0, step=1, limit=4
  $region2: #{_lambda_.9} parent=0 // loop_pre_header
    _
  $region3: #{_lambda_.9} parent=0 // loop_header
    %s16 = sphi 0, %s20
    %p17 = scmp.ge.s32.totalorder %s16, 4
    %s26 = sphi 0, %s28
    %s29 = sphi 0, %s26
    %s30 = sphi 0, %s29
    %s46 = sphi 0, %s30
    %s52 = sphi 0, %s54
    %s55 = sphi 0, %s52
    %s56 = sphi 0, %s55
    %s72 = sphi 0, %s56
    %s76 = sphi 0, %s76
    %s78 = sphi 0, %s76
    %s79 = sphi 0, %s78
    %s93 = sphi 0, %s79
    %s97 = sphi 0, %s97
    %s99 = sphi 0, %s97
    %s100 = sphi 0, %s99
    %s114 = sphi 0, %s100
    %s118 = sphi 0, %s118
    %s120 = sphi 0, %s118
    %s121 = sphi 0, %s120
    %s135 = sphi 0, %s121
    %s139 = sphi 0, %s139
    %s141 = sphi 0, %s139
    %s142 = sphi 0, %s141
    %s156 = sphi 0, %s142
    %s160 = sphi 0, %s160
    %s162 = sphi 0, %s160
    %s163 = sphi 0, %s162
    %s177 = sphi 0, %s163
    %s181 = sphi 0, %s181
    %s183 = sphi 0, %s181
    %s184 = sphi 0, %s183
    %s198 = sphi 0, %s184
    %s202 = sphi 0, %s202
    %s204 = sphi 0, %s202
    %s205 = sphi 0, %s204
    %s219 = sphi 0, %s205
    %s223 = sphi 0, %s223
    %s225 = sphi 0, %s223
    %s226 = sphi 0, %s225
    %s240 = sphi 0, %s226
    %s246 = sphi 0, %s248
    %s249 = sphi 0, %s246
    %s250 = sphi 0, %s249
    %s266 = sphi 0, %s250
  $region4: #{_lambda_.9} parent=0 // loop_header_branch
    %19 = sbr.rel (%p17) target = $region8
  $region5: #{_lambda_.9} parent=0 // loop_body
    %s21 = ssub.s32 %s16, 1
    %s22 = ssub.s32 %s16, 2
    %s23 = sadd.s32 %s16, 1
    %s24 = ssub.s32 %s16, %s23
    %p25 = scmp.eq.s32.totalorder %s24, 0
    %s27 = sadd.s32 %s26, 1
    %s28 = scalar_select %p25, %s26, %s27
    %p31 = pneg %p25
    %p32 = scmp.eq.s32.totalorder %s16, 1
    %p33 = por %p31, %p32
    %p34 = scmp.ne.s32.totalorder %s26, %s29
    %p35 = scmp.eq.s32.totalorder %s16, 0
    %p36 = por %p34, %p35
    %p37 = scmp.ne.s32.totalorder %s26, %s29
    %p38 = scmp.eq.s32.totalorder %s21, 1
    %p39 = por %p37, %p38
    %p40 = scmp.ne.s32.totalorder %s29, %s30
    %p41 = scmp.eq.s32.totalorder %s21, 0
    %p42 = por %p40, %p41
    %p43 = scmp.ne.s32.totalorder %s29, %s30
    %p44 = scmp.eq.s32.totalorder %s22, 1
    %p45 = por %p43, %p44
    %p47 = scmp.ne.s32.totalorder %s30, %s46
    %p48 = scmp.eq.s32.totalorder %s22, 0
    %p49 = por %p47, %p48
    %s50 = ssub.s32 %s16, %s23
    %p51 = scmp.eq.s32.totalorder %s50, 0
    %s53 = sadd.s32 %s52, 1
    %s54 = scalar_select %p51, %s52, %s53
    %p57 = pneg %p51
    %p58 = scmp.eq.s32.totalorder %s16, 1
    %p59 = por %p57, %p58
    %p60 = scmp.ne.s32.totalorder %s52, %s55
    %p61 = scmp.eq.s32.totalorder %s16, 0
    %p62 = por %p60, %p61
    %p63 = scmp.ne.s32.totalorder %s52, %s55
    %p64 = scmp.eq.s32.totalorder %s21, 1
    %p65 = por %p63, %p64
    %p66 = scmp.ne.s32.totalorder %s55, %s56
    %p67 = scmp.eq.s32.totalorder %s21, 0
    %p68 = por %p66, %p67
    %p69 = scmp.ne.s32.totalorder %s55, %s56
    %p70 = scmp.eq.s32.totalorder %s22, 1
    %p71 = por %p69, %p70
    %p73 = scmp.ne.s32.totalorder %s56, %s72
    %p74 = scmp.eq.s32.totalorder %s22, 0
    %p75 = por %p73, %p74
    %s77 = sadd.s32 %s76, 1
    %p80 = scmp.eq.s32.totalorder %s16, 1
    %p81 = scmp.ne.s32.totalorder %s76, %s78
    %p82 = scmp.eq.s32.totalorder %s16, 0
    %p83 = por %p81, %p82
    %p84 = scmp.ne.s32.totalorder %s76, %s78
    %p85 = scmp.eq.s32.totalorder %s21, 1
    %p86 = por %p84, %p85
    %p87 = scmp.ne.s32.totalorder %s78, %s79
    %p88 = scmp.eq.s32.totalorder %s21, 0
    %p89 = por %p87, %p88
    %p90 = scmp.ne.s32.totalorder %s78, %s79
    %p91 = scmp.eq.s32.totalorder %s22, 1
    %p92 = por %p90, %p91
    %p94 = scmp.ne.s32.totalorder %s79, %s93
    %p95 = scmp.eq.s32.totalorder %s22, 0
    %p96 = por %p94, %p95
    %s98 = sadd.s32 %s97, 1
    %p101 = scmp.eq.s32.totalorder %s16, 1
    %p102 = scmp.ne.s32.totalorder %s97, %s99
    %p103 = scmp.eq.s32.totalorder %s16, 0
    %p104 = por %p102, %p103
    %p105 = scmp.ne.s32.totalorder %s97, %s99
    %p106 = scmp.eq.s32.totalorder %s21, 1
    %p107 = por %p105, %p106
    %p108 = scmp.ne.s32.totalorder %s99, %s100
    %p109 = scmp.eq.s32.totalorder %s21, 0
    %p110 = por %p108, %p109
    %p111 = scmp.ne.s32.totalorder %s99, %s100
    %p112 = scmp.eq.s32.totalorder %s22, 1
    %p113 = por %p111, %p112
    %p115 = scmp.ne.s32.totalorder %s100, %s114
    %p116 = scmp.eq.s32.totalorder %s22, 0
    %p117 = por %p115, %p116
    %s119 = sadd.s32 %s118, 1
    %p122 = scmp.eq.s32.totalorder %s16, 1
    %p123 = scmp.ne.s32.totalorder %s118, %s120
    %p124 = scmp.eq.s32.totalorder %s16, 0
    %p125 = por %p123, %p124
    %p126 = scmp.ne.s32.totalorder %s118, %s120
    %p127 = scmp.eq.s32.totalorder %s21, 1
    %p128 = por %p126, %p127
    %p129 = scmp.ne.s32.totalorder %s120, %s121
    %p130 = scmp.eq.s32.totalorder %s21, 0
    %p131 = por %p129, %p130
    %p132 = scmp.ne.s32.totalorder %s120, %s121
    %p133 = scmp.eq.s32.totalorder %s22, 1
    %p134 = por %p132, %p133
    %p136 = scmp.ne.s32.totalorder %s121, %s135
    %p137 = scmp.eq.s32.totalorder %s22, 0
    %p138 = por %p136, %p137
    %s140 = sadd.s32 %s139, 1
    %p143 = scmp.eq.s32.totalorder %s16, 1
    %p144 = scmp.ne.s32.totalorder %s139, %s141
    %p145 = scmp.eq.s32.totalorder %s16, 0
    %p146 = por %p144, %p145
    %p147 = scmp.ne.s32.totalorder %s139, %s141
    %p148 = scmp.eq.s32.totalorder %s21, 1
    %p149 = por %p147, %p148
    %p150 = scmp.ne.s32.totalorder %s141, %s142
    %p151 = scmp.eq.s32.totalorder %s21, 0
    %p152 = por %p150, %p151
    %p153 = scmp.ne.s32.totalorder %s141, %s142
    %p154 = scmp.eq.s32.totalorder %s22, 1
    %p155 = por %p153, %p154
    %p157 = scmp.ne.s32.totalorder %s142, %s156
    %p158 = scmp.eq.s32.totalorder %s22, 0
    %p159 = por %p157, %p158
    %s161 = sadd.s32 %s160, 1
    %p164 = scmp.eq.s32.totalorder %s16, 1
    %p165 = scmp.ne.s32.totalorder %s160, %s162
    %p166 = scmp.eq.s32.totalorder %s16, 0
    %p167 = por %p165, %p166
    %p168 = scmp.ne.s32.totalorder %s160, %s162
    %p169 = scmp.eq.s32.totalorder %s21, 1
    %p170 = por %p168, %p169
    %p171 = scmp.ne.s32.totalorder %s162, %s163
    %p172 = scmp.eq.s32.totalorder %s21, 0
    %p173 = por %p171, %p172
    %p174 = scmp.ne.s32.totalorder %s162, %s163
    %p175 = scmp.eq.s32.totalorder %s22, 1
    %p176 = por %p174, %p175
    %p178 = scmp.ne.s32.totalorder %s163, %s177
    %p179 = scmp.eq.s32.totalorder %s22, 0
    %p180 = por %p178, %p179
    %s182 = sadd.s32 %s181, 1
    %p185 = scmp.eq.s32.totalorder %s16, 1
    %p186 = scmp.ne.s32.totalorder %s181, %s183
    %p187 = scmp.eq.s32.totalorder %s16, 0
    %p188 = por %p186, %p187
    %p189 = scmp.ne.s32.totalorder %s181, %s183
    %p190 = scmp.eq.s32.totalorder %s21, 1
    %p191 = por %p189, %p190
    %p192 = scmp.ne.s32.totalorder %s183, %s184
    %p193 = scmp.eq.s32.totalorder %s21, 0
    %p194 = por %p192, %p193
    %p195 = scmp.ne.s32.totalorder %s183, %s184
    %p196 = scmp.eq.s32.totalorder %s22, 1
    %p197 = por %p195, %p196
    %p199 = scmp.ne.s32.totalorder %s184, %s198
    %p200 = scmp.eq.s32.totalorder %s22, 0
    %p201 = por %p199, %p200
    %s203 = sadd.s32 %s202, 1
    %p206 = scmp.eq.s32.totalorder %s16, 1
    %p207 = scmp.ne.s32.totalorder %s202, %s204
    %p208 = scmp.eq.s32.totalorder %s16, 0
    %p209 = por %p207, %p208
    %p210 = scmp.ne.s32.totalorder %s202, %s204
    %p211 = scmp.eq.s32.totalorder %s21, 1
    %p212 = por %p210, %p211
    %p213 = scmp.ne.s32.totalorder %s204, %s205
    %p214 = scmp.eq.s32.totalorder %s21, 0
    %p215 = por %p213, %p214
    %p216 = scmp.ne.s32.totalorder %s204, %s205
    %p217 = scmp.eq.s32.totalorder %s22, 1
    %p218 = por %p216, %p217
    %p220 = scmp.ne.s32.totalorder %s205, %s219
    %p221 = scmp.eq.s32.totalorder %s22, 0
    %p222 = por %p220, %p221
    %s224 = sadd.s32 %s223, 1
    %p227 = scmp.eq.s32.totalorder %s16, 1
    %p228 = scmp.ne.s32.totalorder %s223, %s225
    %p229 = scmp.eq.s32.totalorder %s16, 0
    %p230 = por %p228, %p229
    %p231 = scmp.ne.s32.totalorder %s223, %s225
    %p232 = scmp.eq.s32.totalorder %s21, 1
    %p233 = por %p231, %p232
    %p234 = scmp.ne.s32.totalorder %s225, %s226
    %p235 = scmp.eq.s32.totalorder %s21, 0
    %p236 = por %p234, %p235
    %p237 = scmp.ne.s32.totalorder %s225, %s226
    %p238 = scmp.eq.s32.totalorder %s22, 1
    %p239 = por %p237, %p238
    %p241 = scmp.ne.s32.totalorder %s226, %s240
    %p242 = scmp.eq.s32.totalorder %s22, 0
    %p243 = por %p241, %p242
    %s244 = ssub.s32 %s16, %s23
    %p245 = scmp.eq.s32.totalorder %s244, 0
    %s247 = sadd.s32 %s246, 1
    %s248 = scalar_select %p245, %s246, %s247
    %p251 = pneg %p245
    %p252 = scmp.eq.s32.totalorder %s16, 1
    %p253 = por %p251, %p252
    %p254 = scmp.ne.s32.totalorder %s246, %s249
    %p255 = scmp.eq.s32.totalorder %s16, 0
    %p256 = por %p254, %p255
    %p257 = scmp.ne.s32.totalorder %s246, %s249
    %p258 = scmp.eq.s32.totalorder %s21, 1
    %p259 = por %p257, %p258
    %p260 = scmp.ne.s32.totalorder %s249, %s250
    %p261 = scmp.eq.s32.totalorder %s21, 0
    %p262 = por %p260, %p261
    %p263 = scmp.ne.s32.totalorder %s249, %s250
    %p264 = scmp.eq.s32.totalorder %s22, 1
    %p265 = por %p263, %p264
    %p267 = scmp.ne.s32.totalorder %s250, %s266
    %p268 = scmp.eq.s32.totalorder %s22, 0
    %p269 = por %p267, %p268
    %p270 = scmp.le.s32.totalorder 1, %s16
    %p271 = scmp.lt.s32.totalorder %s16, 3
    %p272 = pnand %p270, %p271
    %p273 = pneg %p272
    // Predicated region
    $region9: #{_lambda_.9} parent=5 // pred_check
      _
    $region10: #{_lambda_.9} parent=5 // pred_check_branch
      %275 = sbr.rel (%p272) target = $region12
    $region11: #{_lambda_.9} parent=5 // pred_region
      %s276 = ssub.s32 %s16, 1
      // Predicated region
      $region13: #{_lambda_.9} parent=11 // pred_check
        %p277 = pneg %p89
      $region14: #{_lambda_.9} parent=11 // pred_check_branch
        %279 = sbr.rel (%p277) target = $region16
      $region15: #{_lambda_.9} parent=11 // pred_region
        _
      $region16: #{_lambda_.9} parent=11 // pred_fallthru
        _
      // Predicated region
      $region17: #{_lambda_.9} parent=11 // pred_check
        %p280 = pneg %p110
      $region18: #{_lambda_.9} parent=11 // pred_check_branch
        %282 = sbr.rel (%p280) target = $region20
      $region19: #{_lambda_.9} parent=11 // pred_region
        _
      $region20: #{_lambda_.9} parent=11 // pred_fallthru
        _
      // Predicated region
      $region21: #{_lambda_.9} parent=11 // pred_check
        %p283 = pneg %p131
      $region22: #{_lambda_.9} parent=11 // pred_check_branch
        %285 = sbr.rel (%p283) target = $region24
      $region23: #{_lambda_.9} parent=11 // pred_region
        _
      $region24: #{_lambda_.9} parent=11 // pred_fallthru
        _
      // Predicated region
      $region25: #{_lambda_.9} parent=11 // pred_check
        %p286 = pneg %p152
      $region26: #{_lambda_.9} parent=11 // pred_check_branch
        %288 = sbr.rel (%p286) target = $region28
      $region27: #{_lambda_.9} parent=11 // pred_region
        _
      $region28: #{_lambda_.9} parent=11 // pred_fallthru
        _
      // Predicated region
      $region29: #{_lambda_.9} parent=11 // pred_check
        %p289 = pneg %p173
      $region30: #{_lambda_.9} parent=11 // pred_check_branch
        %291 = sbr.rel (%p289) target = $region32
      $region31: #{_lambda_.9} parent=11 // pred_region
        _
      $region32: #{_lambda_.9} parent=11 // pred_fallthru
        _
      // Predicated region
      $region33: #{_lambda_.9} parent=11 // pred_check
        %p292 = pneg %p194
      $region34: #{_lambda_.9} parent=11 // pred_check_branch
        %294 = sbr.rel (%p292) target = $region36
      $region35: #{_lambda_.9} parent=11 // pred_region
        _
      $region36: #{_lambda_.9} parent=11 // pred_fallthru
        _
      // Predicated region
      $region37: #{_lambda_.9} parent=11 // pred_check
        %p295 = pneg %p215
      $region38: #{_lambda_.9} parent=11 // pred_check_branch
        %297 = sbr.rel (%p295) target = $region40
      $region39: #{_lambda_.9} parent=11 // pred_region
        _
      $region40: #{_lambda_.9} parent=11 // pred_fallthru
        _
      // Predicated region
      $region41: #{_lambda_.9} parent=11 // pred_check
        %p298 = pneg %p236
      $region42: #{_lambda_.9} parent=11 // pred_check_branch
        %300 = sbr.rel (%p298) target = $region44
      $region43: #{_lambda_.9} parent=11 // pred_region
        _
      $region44: #{_lambda_.9} parent=11 // pred_fallthru
        _
    $region12: #{_lambda_.9} parent=5 // pred_fallthru
      _
    %p301 = scmp.lt.s32.totalorder %s16, 2
    // Predicated region
    $region45: #{_lambda_.9} parent=5 // pred_check
      %p302 = pneg %p301
    $region46: #{_lambda_.9} parent=5 // pred_check_branch
      %304 = sbr.rel (%p302) target = $region48
    $region47: #{_lambda_.9} parent=5 // pred_region
      // Predicated region
      $region49: #{_lambda_.9} parent=47 // pred_check
        %p305 = pneg %p36
      $region50: #{_lambda_.9} parent=47 // pred_check_branch
        %307 = sbr.rel (%p305) target = $region52
      $region51: #{_lambda_.9} parent=47 // pred_region
        %p308 = scmp.lt.s32.totalorder %s16, 1
        %s309 = scalar_select %p308, %s16, 1
        %s310 = smul.addr %s309, 8
        %s311 = scalar_lea.vmem %s0, %s310
      $region52: #{_lambda_.9} parent=47 // pred_fallthru
        _
      // Predicated region
      $region53: #{_lambda_.9} parent=47 // pred_check
        %p312 = pneg %p62
      $region54: #{_lambda_.9} parent=47 // pred_check_branch
        %314 = sbr.rel (%p312) target = $region56
      $region55: #{_lambda_.9} parent=47 // pred_region
        %p315 = scmp.lt.s32.totalorder %s16, 1
        %s316 = scalar_select %p315, %s16, 1
        %s317 = smul.addr %s316, 2
        %s318 = smul.addr %s317, 8
        %s319 = scalar_lea.vmem %s1, %s318
      $region56: #{_lambda_.9} parent=47 // pred_fallthru
        _
    $region48: #{_lambda_.9} parent=5 // pred_fallthru
      _
    %p320 = scmp.le.s32.totalorder 1, %s16
    %p321 = scmp.lt.s32.totalorder %s16, 3
    %p322 = pnand %p320, %p321
    %p323 = pneg %p322
    // Predicated region
    $region57: #{_lambda_.9} parent=5 // pred_check
      _
    $region58: #{_lambda_.9} parent=5 // pred_check_branch
      %325 = sbr.rel (%p322) target = $region60
    $region59: #{_lambda_.9} parent=5 // pred_region
      %s326 = ssub.s32 %s16, 1
      %p327 = scmp.lt.s32.totalorder %s21, 1
      %s328 = scalar_select %p327, %s21, 1
      %s329 = smul.addr %s328, 8
      %s330 = scalar_lea.vmem %s0, %s329
      %p331 = pneg %p42
      %p332 = pneg %p39
      %p333 = scmp.lt.s32.totalorder %s21, 1
      %s334 = scalar_select %p333, %s21, 1
      %s335 = smul.addr %s334, 2
      %s336 = smul.addr %s335, 8
      %s337 = scalar_lea.vmem %s1, %s336
      %p338 = pneg %p68
      %p339 = pneg %p65
      %p340 = pneg %p89
      %p341 = pneg %p86
      %p342 = pneg %p110
      %p343 = pneg %p107
      %p344 = pneg %p131
      %p345 = pneg %p128
      %p346 = pneg %p152
      %p347 = pneg %p149
      %p348 = pneg %p173
      %p349 = pneg %p170
      %p350 = pneg %p194
      %p351 = pneg %p191
      %p352 = pneg %p215
      %p353 = pneg %p212
      %p354 = pneg %p236
      %p355 = pneg %p233
      %p356 = pneg %p262
      %p357 = pneg %p259
      %p358 = scmp.lt.s32.totalorder %s21, 1
      %s359 = scalar_select %p358, %s21, 1
      %s360 = smul.addr %s359, 8
      %s361 = scalar_lea.vmem %s10, %s360
      %p362 = scmp.lt.s32.totalorder %s21, 1
      %s363 = scalar_select %p362, %s21, 1
      %s364 = smul.addr %s363, 8
      %s365 = scalar_lea.vmem %s0, %s364
      %p366 = scmp.lt.s32.totalorder %s21, 1
      %s367 = scalar_select %p366, %s21, 1
      %s368 = smul.addr %s367, 2
      %s369 = smul.addr %s368, 8
      %s370 = scalar_lea.vmem %s1, %s369
      %p371 = scmp.lt.s32.totalorder %s21, 1
      %s372 = scalar_select %p371, %s21, 1
      %s373 = smul.addr %s372, 8
      %s374 = scalar_lea.vmem %s10, %s373
      %v376 = vld [vmem:[%s370] sm:$0xff]
      %v377 = vld [vmem:[%s370 + $0x8] sm:$0x3]
      %v378 = vld [vmem:[%s2] sm:$0x7]
      %v379 = vlaneseq
      %v380 = vshrl.u32 %v379, 7
      %v381 = vsub.s32 0, %v380
      %v382 = vrot.slane %v378, %v381
      %v383 = vmul.f32 %v382, %v376
      %v384 = vlaneseq
      %v385 = vshrl.u32 %v384, 7
      %v386 = vsub.s32 1, %v385
      %v387 = vrot.slane %v378, %v386
      %v388 = vmul.f32 %v387, %v376
      %v389 = vmul.f32 %v387, %v377
      %vm392 = vcmask 1046528
      %v393 = vrot.slane %v388, 1
      %v394 = vrot.slane %v389, 1
      %v395 = vsel %vm392, %v393, %v394
      %v397 = vadd.f32 %v383, %v395
      %v398 = vlaneseq
      %v399 = vshrl.u32 %v398, 7
      %v400 = vsub.s32 2, %v399
      %v401 = vrot.slane %v378, %v400
      %v402 = vmul.f32 %v401, %v376
      %v403 = vmul.f32 %v401, %v377
      %vm406 = vcmask 1045504
      %v407 = vrot.slane %v402, 2
      %v408 = vrot.slane %v403, 2
      %v409 = vsel %vm406, %v407, %v408
      %v411 = vadd.f32 %v397, %v409
      %v412 = vld [vmem:[%s3] sm:$0x1]
      %v414 = vlaneseq
      %v415 = vshrl.u32 %v414, 7
      %v416 = vsub.s32 0, %v415
      %v417 = vrot.slane %v412, %v416
      %v419 = vadd.f32 %v411, %v417
      %v420 = vld [vmem:[%s4] sm:$0x1]
      %v421 = vld [vmem:[%s5] sm:$0x1]
      %422 = vadd.xlane.f32.xlu0 %v419
      %v423 = vpop.xlane.xlu0 %422
      %v424 = vrcp.pop 128.0
      %v425 = vmul.f32 %v423, %v424
      %v426 = vsub.f32 %v419, %v425
      %v427 = vmul.f32 %v426, %v426
      %428 = vadd.xlane.f32.xlu0 %v427
      %v429 = vpop.xlane.xlu0 %428
      %v430 = vmul.f32 %v429, %v424
      %v431 = vadd.f32 %v430, 1e-05
      %v432 = vrsqrt.pop %v431
      %v433 = vmul.f32 %v426, %v432
      %v435 = vlaneseq
      %v436 = vshrl.u32 %v435, 7
      %v437 = vsub.s32 0, %v436
      %v438 = vrot.slane %v420, %v437
      %v440 = vmul.f32 %v433, %v438
      %v442 = vlaneseq
      %v443 = vshrl.u32 %v442, 7
      %v444 = vsub.s32 0, %v443
      %v445 = vrot.slane %v421, %v444
      %v447 = vadd.f32 %v440, %v445
      %v448 = vmax.f32 %v447, 0.0
      %v449 = vpack.c.bf16 %v448, %v448
      %v450 = vld [vmem:[%s6] sm:$0xf]
      %v451 = vld [vmem:[%s6 + $0x4] sm:$0xf]
      %v452 = vld [vmem:[%s6 + $0x8] sm:$0xf]
      %v453 = vld [vmem:[%s6 + $0xc] sm:$0xf]
      %v454 = vld [vmem:[%s6 + $0x10] sm:$0xf]
      %v455 = vld [vmem:[%s6 + $0x14] sm:$0xf]
      %v456 = vld [vmem:[%s6 + $0x18] sm:$0xf]
      %v457 = vld [vmem:[%s6 + $0x1c] sm:$0xf]
      %v458 = vld [vmem:[%s6 + $0x20] sm:$0xf]
      %v459 = vld [vmem:[%s6 + $0x24] sm:$0xf]
      %v460 = vld [vmem:[%s6 + $0x28] sm:$0xf]
      %v461 = vld [vmem:[%s6 + $0x2c] sm:$0xf]
      %v462 = vld [vmem:[%s6 + $0x30] sm:$0xf]
      %v463 = vld [vmem:[%s6 + $0x34] sm:$0xf]
      %v464 = vld [vmem:[%s6 + $0x38] sm:$0xf]
      %v465 = vld [vmem:[%s6 + $0x3c] sm:$0xf]
      %v466 = vld [vmem:[%s7] sm:$0x1]
      %v468 = vlaneseq
      %v469 = vshrl.u32 %v468, 7
      %v470 = vsub.s32 0, %v469
      %v471 = vrot.slane %v466, %v470
      %v489 = vunpack.c.l.b16 %v450
      %v490 = vunpack.c.l.b16 %v451
      %v491 = vunpack.c.l.b16 %v452
      %v492 = vunpack.c.l.b16 %v453
      %v493 = vunpack.c.l.b16 %v454
      %v494 = vunpack.c.l.b16 %v455
      %v495 = vunpack.c.l.b16 %v456
      %v496 = vunpack.c.l.b16 %v457
      %v497 = vunpack.c.l.b16 %v458
      %v498 = vunpack.c.l.b16 %v459
      %v499 = vunpack.c.l.b16 %v460
      %v500 = vunpack.c.l.b16 %v461
      %v501 = vunpack.c.l.b16 %v462
      %v502 = vunpack.c.l.b16 %v463
      %v503 = vunpack.c.l.b16 %v464
      %v504 = vunpack.c.l.b16 %v465
      %v505 = vpack.c.b16 %v490, %v489
      %v506 = vpack.c.b16 %v492, %v491
      %v507 = vpack.c.b16 %v494, %v493
      %v508 = vpack.c.b16 %v496, %v495
      %v509 = vpack.c.b16 %v498, %v497
      %v510 = vpack.c.b16 %v500, %v499
      %v511 = vpack.c.b16 %v502, %v501
      %v512 = vpack.c.b16 %v504, %v503
      %521 = vmatprep.subr.bf16.mxu0 0
      %522 = vmatpush1.bf16.msra.mxu0 %v512
      %523 = vmatprep.subr.bf16.mxu0 0
      %524 = vmatpush1.bf16.msra.mxu0 %v511
      %525 = vmatprep.subr.bf16.mxu0 0
      %526 = vmatpush1.bf16.msra.mxu0 %v510
      %527 = vmatprep.subr.bf16.mxu0 0
      %528 = vmatpush1.bf16.msra.mxu0 %v509
      %529 = vmatprep.subr.bf16.mxu0 0
      %530 = vmatpush1.bf16.msra.mxu0 %v508
      %531 = vmatprep.subr.bf16.mxu0 0
      %532 = vmatpush1.bf16.msra.mxu0 %v507
      %533 = vmatprep.subr.bf16.mxu0 0
      %534 = vmatpush1.bf16.msra.mxu0 %v506
      %535 = vmatprep.subr.bf16.mxu0 0
      %536 = vmatpush1.bf16.msra.mxu0 %v505
      %537 = vmatprep.subr.bf16.mxu0 0
      %538 = vmatpush2.bf16.msra.mxu0 0
      %539 = vmatprep.subr.bf16.mxu0 0
      %540 = vmatpush2.bf16.msra.mxu0 0
      %541 = vmatprep.subr.bf16.mxu0 0
      %542 = vmatpush2.bf16.msra.mxu0 0
      %543 = vmatprep.subr.bf16.mxu0 0
      %544 = vmatpush2.bf16.msra.mxu0 0
      %545 = vmatprep.subr.bf16.mxu0 0
      %546 = vmatpush2.bf16.msra.mxu0 0
      %547 = vmatprep.subr.bf16.mxu0 0
      %548 = vmatpush2.bf16.msra.mxu0 0
      %549 = vmatprep.subr.bf16.mxu0 0
      %550 = vmatpush2.bf16.msra.mxu0 0
      %551 = vmatprep.subr.bf16.mxu0 0
      %552 = vmatpush2.bf16.msra.mxu0 0
      %553 = vmatprep.mubr.bf16.mxu0 0
      %554 = vmatmul.mubr.bf16.gmra.mxu0 %v449
      %v555 = vpop.f32.mrf.mxu0
      %v556 = vadd.f32 %v471, %v555
      %v557 = vpop.f32.mrf.mxu0
      %v558 = vpop.f32.mrf.mxu0
      %v559 = vpop.f32.mrf.mxu0
      %560 = vdwg.mxu0
      %v561 = vld [vmem:[%s8] sm:$0x1]
      %v562 = vld [vmem:[%s9] sm:$0x1]
      %563 = vadd.xlane.f32.xlu0 %v556
      %v564 = vpop.xlane.xlu0 %563
      %v565 = vmul.f32 %v564, %v424
      %v566 = vsub.f32 %v556, %v565
      %v567 = vmul.f32 %v566, %v566
      %568 = vadd.xlane.f32.xlu0 %v567
      %v569 = vpop.xlane.xlu0 %568
      %v570 = vmul.f32 %v569, %v424
      %v571 = vadd.f32 %v570, 1e-05
      %v572 = vrsqrt.pop %v571
      %v573 = vmul.f32 %v566, %v572
      %v575 = vlaneseq
      %v576 = vshrl.u32 %v575, 7
      %v577 = vsub.s32 0, %v576
      %v578 = vrot.slane %v561, %v577
      %v580 = vmul.f32 %v573, %v578
      %v582 = vlaneseq
      %v583 = vshrl.u32 %v582, 7
      %v584 = vsub.s32 0, %v583
      %v585 = vrot.slane %v562, %v584
      %v587 = vadd.f32 %v580, %v585
      %v588 = vmax.f32 %v587, 0.0
      %v589 = vld [vmem:[%s365] sm:$0xff]
      %v590 = vadd.f32 %v589, %v588
      %591 = vst [vmem:[%s374] sm:$0xff] %v590
      %p592 = scmp.lt.s32.totalorder %s21, 1
      %s593 = scalar_select %p592, %s21, 1
      %s594 = smul.addr %s593, 8
      %s595 = scalar_lea.vmem %s10, %s594
      // Predicated region
      $region61: #{_lambda_.9} parent=59 // pred_check
        %p596 = pneg %p259
      $region62: #{_lambda_.9} parent=59 // pred_check_branch
        %598 = sbr.rel (%p596) target = $region64
      $region63: #{_lambda_.9} parent=59 // pred_region
        _
      $region64: #{_lambda_.9} parent=59 // pred_fallthru
        _
    $region60: #{_lambda_.9} parent=5 // pred_fallthru
      _
    %p599 = scmp.le.s32.totalorder 2, %s16
    // Predicated region
    $region65: #{_lambda_.9} parent=5 // pred_check
      %p600 = pneg %p599
    $region66: #{_lambda_.9} parent=5 // pred_check_branch
      %602 = sbr.rel (%p600) target = $region68
    $region67: #{_lambda_.9} parent=5 // pred_region
      %s603 = ssub.s32 %s16, 2
      // Predicated region
      $region69: #{_lambda_.9} parent=67 // pred_check
        %p604 = pneg %p265
      $region70: #{_lambda_.9} parent=67 // pred_check_branch
        %606 = sbr.rel (%p604) target = $region72
      $region71: #{_lambda_.9} parent=67 // pred_region
        %p607 = scmp.lt.s32.totalorder %s22, 1
        %s608 = scalar_select %p607, %s22, 1
        %s609 = smul.addr %s608, 8
        %s610 = scalar_lea.vmem %s10, %s609
      $region72: #{_lambda_.9} parent=67 // pred_fallthru
        _
    $region68: #{_lambda_.9} parent=5 // pred_fallthru
      _
  $region6: #{_lambda_.9} parent=0 // loop_footer
    %s20 = sadd.s32 1, %s16
  $region7: #{_lambda_.9} parent=0 // loop_footer_branch
    %15 = sbr.rel target = $region3
  $region8: #{_lambda_.9} parent=0 // loop_exit
    _

// kernel: _lambda_.10
$region0: #{_lambda_.10}
  #allocation0 [shape = 'u32[]', space=smem, size = 0x4, offset = 0x4, fixed_abs, tag = 'smem constant byte address 0x4 - core index']
  #allocation1 [shape = 'u32[144,128]{1,0:T(1,128)}', space=vmem, size = 0x12000, scoped, tag = 'internal scratch']
  %s0 = inlined_call_operand.vmem [shape: f32[2,8,128], index: 0, kind: input, shape index: {}]
  %s1 = inlined_call_operand.vmem [shape: f32[2,12,128], index: 1, kind: input, shape index: {}]
  %s2 = inlined_call_operand.vmem [shape: f32[3,128], index: 2, kind: input, shape index: {}]
  %s3 = inlined_call_operand.vmem [shape: f32[1,128], index: 3, kind: input, shape index: {}]
  %s4 = inlined_call_operand.vmem [shape: f32[1,128], index: 4, kind: input, shape index: {}]
  %s5 = inlined_call_operand.vmem [shape: f32[1,128], index: 5, kind: input, shape index: {}]
  %s6 = inlined_call_operand.vmem [shape: bf16[128,128], index: 6, kind: input, shape index: {}]
  %s7 = inlined_call_operand.vmem [shape: f32[1,128], index: 7, kind: input, shape index: {}]
  %s8 = inlined_call_operand.vmem [shape: f32[1,128], index: 8, kind: input, shape index: {}]
  %s9 = inlined_call_operand.vmem [shape: f32[1,128], index: 9, kind: input, shape index: {}]
  %s10 = inlined_call_operand.vmem [shape: f32[2,8,128], index: 10, kind: output, shape index: {}]
  %s11 = sld [smem:[#allocation0]]
  $region73: #{_lambda_.10} parent=0
    _
  %s13 = ssub.s32 1, %s11
  %s14 = scalar_select 0, %s13, %s11
  loop: start=0, step=1, limit=4
  $region2: #{_lambda_.10} parent=0 // loop_pre_header
    _
  $region3: #{_lambda_.10} parent=0 // loop_header
    %s16 = sphi 0, %s20
    %p17 = scmp.ge.s32.totalorder %s16, 4
    %s26 = sphi 0, %s28
    %s29 = sphi 0, %s26
    %s30 = sphi 0, %s29
    %s46 = sphi 0, %s30
    %s52 = sphi 0, %s54
    %s55 = sphi 0, %s52
    %s56 = sphi 0, %s55
    %s72 = sphi 0, %s56
    %s76 = sphi 0, %s76
    %s78 = sphi 0, %s76
    %s79 = sphi 0, %s78
    %s93 = sphi 0, %s79
    %s97 = sphi 0, %s97
    %s99 = sphi 0, %s97
    %s100 = sphi 0, %s99
    %s114 = sphi 0, %s100
    %s118 = sphi 0, %s118
    %s120 = sphi 0, %s118
    %s121 = sphi 0, %s120
    %s135 = sphi 0, %s121
    %s139 = sphi 0, %s139
    %s141 = sphi 0, %s139
    %s142 = sphi 0, %s141
    %s156 = sphi 0, %s142
    %s160 = sphi 0, %s160
    %s162 = sphi 0, %s160
    %s163 = sphi 0, %s162
    %s177 = sphi 0, %s163
    %s181 = sphi 0, %s181
    %s183 = sphi 0, %s181
    %s184 = sphi 0, %s183
    %s198 = sphi 0, %s184
    %s202 = sphi 0, %s202
    %s204 = sphi 0, %s202
    %s205 = sphi 0, %s204
    %s219 = sphi 0, %s205
    %s223 = sphi 0, %s223
    %s225 = sphi 0, %s223
    %s226 = sphi 0, %s225
    %s240 = sphi 0, %s226
    %s246 = sphi 0, %s248
    %s249 = sphi 0, %s246
    %s250 = sphi 0, %s249
    %s266 = sphi 0, %s250
  $region4: #{_lambda_.10} parent=0 // loop_header_branch
    %19 = sbr.rel (%p17) target = $region8
  $region5: #{_lambda_.10} parent=0 // loop_body
    %s21 = ssub.s32 %s16, 1
    %s22 = ssub.s32 %s16, 2
    %s23 = sadd.s32 %s16, 1
    %s24 = ssub.s32 %s16, %s23
    %p25 = scmp.eq.s32.totalorder %s24, 0
    %s27 = sadd.s32 %s26, 1
    %s28 = scalar_select %p25, %s26, %s27
    %p31 = pneg %p25
    %p32 = scmp.eq.s32.totalorder %s16, 1
    %p33 = por %p31, %p32
    %p34 = scmp.ne.s32.totalorder %s26, %s29
    %p35 = scmp.eq.s32.totalorder %s16, 0
    %p36 = por %p34, %p35
    %p37 = scmp.ne.s32.totalorder %s26, %s29
    %p38 = scmp.eq.s32.totalorder %s21, 1
    %p39 = por %p37, %p38
    %p40 = scmp.ne.s32.totalorder %s29, %s30
    %p41 = scmp.eq.s32.totalorder %s21, 0
    %p42 = por %p40, %p41
    %p43 = scmp.ne.s32.totalorder %s29, %s30
    %p44 = scmp.eq.s32.totalorder %s22, 1
    %p45 = por %p43, %p44
    %p47 = scmp.ne.s32.totalorder %s30, %s46
    %p48 = scmp.eq.s32.totalorder %s22, 0
    %p49 = por %p47, %p48
    %s50 = ssub.s32 %s16, %s23
    %p51 = scmp.eq.s32.totalorder %s50, 0
    %s53 = sadd.s32 %s52, 1
    %s54 = scalar_select %p51, %s52, %s53
    %p57 = pneg %p51
    %p58 = scmp.eq.s32.totalorder %s16, 1
    %p59 = por %p57, %p58
    %p60 = scmp.ne.s32.totalorder %s52, %s55
    %p61 = scmp.eq.s32.totalorder %s16, 0
    %p62 = por %p60, %p61
    %p63 = scmp.ne.s32.totalorder %s52, %s55
    %p64 = scmp.eq.s32.totalorder %s21, 1
    %p65 = por %p63, %p64
    %p66 = scmp.ne.s32.totalorder %s55, %s56
    %p67 = scmp.eq.s32.totalorder %s21, 0
    %p68 = por %p66, %p67
    %p69 = scmp.ne.s32.totalorder %s55, %s56
    %p70 = scmp.eq.s32.totalorder %s22, 1
    %p71 = por %p69, %p70
    %p73 = scmp.ne.s32.totalorder %s56, %s72
    %p74 = scmp.eq.s32.totalorder %s22, 0
    %p75 = por %p73, %p74
    %s77 = sadd.s32 %s76, 1
    %p80 = scmp.eq.s32.totalorder %s16, 1
    %p81 = scmp.ne.s32.totalorder %s76, %s78
    %p82 = scmp.eq.s32.totalorder %s16, 0
    %p83 = por %p81, %p82
    %p84 = scmp.ne.s32.totalorder %s76, %s78
    %p85 = scmp.eq.s32.totalorder %s21, 1
    %p86 = por %p84, %p85
    %p87 = scmp.ne.s32.totalorder %s78, %s79
    %p88 = scmp.eq.s32.totalorder %s21, 0
    %p89 = por %p87, %p88
    %p90 = scmp.ne.s32.totalorder %s78, %s79
    %p91 = scmp.eq.s32.totalorder %s22, 1
    %p92 = por %p90, %p91
    %p94 = scmp.ne.s32.totalorder %s79, %s93
    %p95 = scmp.eq.s32.totalorder %s22, 0
    %p96 = por %p94, %p95
    %s98 = sadd.s32 %s97, 1
    %p101 = scmp.eq.s32.totalorder %s16, 1
    %p102 = scmp.ne.s32.totalorder %s97, %s99
    %p103 = scmp.eq.s32.totalorder %s16, 0
    %p104 = por %p102, %p103
    %p105 = scmp.ne.s32.totalorder %s97, %s99
    %p106 = scmp.eq.s32.totalorder %s21, 1
    %p107 = por %p105, %p106
    %p108 = scmp.ne.s32.totalorder %s99, %s100
    %p109 = scmp.eq.s32.totalorder %s21, 0
    %p110 = por %p108, %p109
    %p111 = scmp.ne.s32.totalorder %s99, %s100
    %p112 = scmp.eq.s32.totalorder %s22, 1
    %p113 = por %p111, %p112
    %p115 = scmp.ne.s32.totalorder %s100, %s114
    %p116 = scmp.eq.s32.totalorder %s22, 0
    %p117 = por %p115, %p116
    %s119 = sadd.s32 %s118, 1
    %p122 = scmp.eq.s32.totalorder %s16, 1
    %p123 = scmp.ne.s32.totalorder %s118, %s120
    %p124 = scmp.eq.s32.totalorder %s16, 0
    %p125 = por %p123, %p124
    %p126 = scmp.ne.s32.totalorder %s118, %s120
    %p127 = scmp.eq.s32.totalorder %s21, 1
    %p128 = por %p126, %p127
    %p129 = scmp.ne.s32.totalorder %s120, %s121
    %p130 = scmp.eq.s32.totalorder %s21, 0
    %p131 = por %p129, %p130
    %p132 = scmp.ne.s32.totalorder %s120, %s121
    %p133 = scmp.eq.s32.totalorder %s22, 1
    %p134 = por %p132, %p133
    %p136 = scmp.ne.s32.totalorder %s121, %s135
    %p137 = scmp.eq.s32.totalorder %s22, 0
    %p138 = por %p136, %p137
    %s140 = sadd.s32 %s139, 1
    %p143 = scmp.eq.s32.totalorder %s16, 1
    %p144 = scmp.ne.s32.totalorder %s139, %s141
    %p145 = scmp.eq.s32.totalorder %s16, 0
    %p146 = por %p144, %p145
    %p147 = scmp.ne.s32.totalorder %s139, %s141
    %p148 = scmp.eq.s32.totalorder %s21, 1
    %p149 = por %p147, %p148
    %p150 = scmp.ne.s32.totalorder %s141, %s142
    %p151 = scmp.eq.s32.totalorder %s21, 0
    %p152 = por %p150, %p151
    %p153 = scmp.ne.s32.totalorder %s141, %s142
    %p154 = scmp.eq.s32.totalorder %s22, 1
    %p155 = por %p153, %p154
    %p157 = scmp.ne.s32.totalorder %s142, %s156
    %p158 = scmp.eq.s32.totalorder %s22, 0
    %p159 = por %p157, %p158
    %s161 = sadd.s32 %s160, 1
    %p164 = scmp.eq.s32.totalorder %s16, 1
    %p165 = scmp.ne.s32.totalorder %s160, %s162
    %p166 = scmp.eq.s32.totalorder %s16, 0
    %p167 = por %p165, %p166
    %p168 = scmp.ne.s32.totalorder %s160, %s162
    %p169 = scmp.eq.s32.totalorder %s21, 1
    %p170 = por %p168, %p169
    %p171 = scmp.ne.s32.totalorder %s162, %s163
    %p172 = scmp.eq.s32.totalorder %s21, 0
    %p173 = por %p171, %p172
    %p174 = scmp.ne.s32.totalorder %s162, %s163
    %p175 = scmp.eq.s32.totalorder %s22, 1
    %p176 = por %p174, %p175
    %p178 = scmp.ne.s32.totalorder %s163, %s177
    %p179 = scmp.eq.s32.totalorder %s22, 0
    %p180 = por %p178, %p179
    %s182 = sadd.s32 %s181, 1
    %p185 = scmp.eq.s32.totalorder %s16, 1
    %p186 = scmp.ne.s32.totalorder %s181, %s183
    %p187 = scmp.eq.s32.totalorder %s16, 0
    %p188 = por %p186, %p187
    %p189 = scmp.ne.s32.totalorder %s181, %s183
    %p190 = scmp.eq.s32.totalorder %s21, 1
    %p191 = por %p189, %p190
    %p192 = scmp.ne.s32.totalorder %s183, %s184
    %p193 = scmp.eq.s32.totalorder %s21, 0
    %p194 = por %p192, %p193
    %p195 = scmp.ne.s32.totalorder %s183, %s184
    %p196 = scmp.eq.s32.totalorder %s22, 1
    %p197 = por %p195, %p196
    %p199 = scmp.ne.s32.totalorder %s184, %s198
    %p200 = scmp.eq.s32.totalorder %s22, 0
    %p201 = por %p199, %p200
    %s203 = sadd.s32 %s202, 1
    %p206 = scmp.eq.s32.totalorder %s16, 1
    %p207 = scmp.ne.s32.totalorder %s202, %s204
    %p208 = scmp.eq.s32.totalorder %s16, 0
    %p209 = por %p207, %p208
    %p210 = scmp.ne.s32.totalorder %s202, %s204
    %p211 = scmp.eq.s32.totalorder %s21, 1
    %p212 = por %p210, %p211
    %p213 = scmp.ne.s32.totalorder %s204, %s205
    %p214 = scmp.eq.s32.totalorder %s21, 0
    %p215 = por %p213, %p214
    %p216 = scmp.ne.s32.totalorder %s204, %s205
    %p217 = scmp.eq.s32.totalorder %s22, 1
    %p218 = por %p216, %p217
    %p220 = scmp.ne.s32.totalorder %s205, %s219
    %p221 = scmp.eq.s32.totalorder %s22, 0
    %p222 = por %p220, %p221
    %s224 = sadd.s32 %s223, 1
    %p227 = scmp.eq.s32.totalorder %s16, 1
    %p228 = scmp.ne.s32.totalorder %s223, %s225
    %p229 = scmp.eq.s32.totalorder %s16, 0
    %p230 = por %p228, %p229
    %p231 = scmp.ne.s32.totalorder %s223, %s225
    %p232 = scmp.eq.s32.totalorder %s21, 1
    %p233 = por %p231, %p232
    %p234 = scmp.ne.s32.totalorder %s225, %s226
    %p235 = scmp.eq.s32.totalorder %s21, 0
    %p236 = por %p234, %p235
    %p237 = scmp.ne.s32.totalorder %s225, %s226
    %p238 = scmp.eq.s32.totalorder %s22, 1
    %p239 = por %p237, %p238
    %p241 = scmp.ne.s32.totalorder %s226, %s240
    %p242 = scmp.eq.s32.totalorder %s22, 0
    %p243 = por %p241, %p242
    %s244 = ssub.s32 %s16, %s23
    %p245 = scmp.eq.s32.totalorder %s244, 0
    %s247 = sadd.s32 %s246, 1
    %s248 = scalar_select %p245, %s246, %s247
    %p251 = pneg %p245
    %p252 = scmp.eq.s32.totalorder %s16, 1
    %p253 = por %p251, %p252
    %p254 = scmp.ne.s32.totalorder %s246, %s249
    %p255 = scmp.eq.s32.totalorder %s16, 0
    %p256 = por %p254, %p255
    %p257 = scmp.ne.s32.totalorder %s246, %s249
    %p258 = scmp.eq.s32.totalorder %s21, 1
    %p259 = por %p257, %p258
    %p260 = scmp.ne.s32.totalorder %s249, %s250
    %p261 = scmp.eq.s32.totalorder %s21, 0
    %p262 = por %p260, %p261
    %p263 = scmp.ne.s32.totalorder %s249, %s250
    %p264 = scmp.eq.s32.totalorder %s22, 1
    %p265 = por %p263, %p264
    %p267 = scmp.ne.s32.totalorder %s250, %s266
    %p268 = scmp.eq.s32.totalorder %s22, 0
    %p269 = por %p267, %p268
    %p270 = scmp.le.s32.totalorder 1, %s16
    %p271 = scmp.lt.s32.totalorder %s16, 3
    %p272 = pnand %p270, %p271
    %p273 = pneg %p272
    // Predicated region
    $region9: #{_lambda_.10} parent=5 // pred_check
      _
    $region10: #{_lambda_.10} parent=5 // pred_check_branch
      %275 = sbr.rel (%p272) target = $region12
    $region11: #{_lambda_.10} parent=5 // pred_region
      %s276 = ssub.s32 %s16, 1
      // Predicated region
      $region13: #{_lambda_.10} parent=11 // pred_check
        %p277 = pneg %p89
      $region14: #{_lambda_.10} parent=11 // pred_check_branch
        %279 = sbr.rel (%p277) target = $region16
      $region15: #{_lambda_.10} parent=11 // pred_region
        _
      $region16: #{_lambda_.10} parent=11 // pred_fallthru
        _
      // Predicated region
      $region17: #{_lambda_.10} parent=11 // pred_check
        %p280 = pneg %p110
      $region18: #{_lambda_.10} parent=11 // pred_check_branch
        %282 = sbr.rel (%p280) target = $region20
      $region19: #{_lambda_.10} parent=11 // pred_region
        _
      $region20: #{_lambda_.10} parent=11 // pred_fallthru
        _
      // Predicated region
      $region21: #{_lambda_.10} parent=11 // pred_check
        %p283 = pneg %p131
      $region22: #{_lambda_.10} parent=11 // pred_check_branch
        %285 = sbr.rel (%p283) target = $region24
      $region23: #{_lambda_.10} parent=11 // pred_region
        _
      $region24: #{_lambda_.10} parent=11 // pred_fallthru
        _
      // Predicated region
      $region25: #{_lambda_.10} parent=11 // pred_check
        %p286 = pneg %p152
      $region26: #{_lambda_.10} parent=11 // pred_check_branch
        %288 = sbr.rel (%p286) target = $region28
      $region27: #{_lambda_.10} parent=11 // pred_region
        _
      $region28: #{_lambda_.10} parent=11 // pred_fallthru
        _
      // Predicated region
      $region29: #{_lambda_.10} parent=11 // pred_check
        %p289 = pneg %p173
      $region30: #{_lambda_.10} parent=11 // pred_check_branch
        %291 = sbr.rel (%p289) target = $region32
      $region31: #{_lambda_.10} parent=11 // pred_region
        _
      $region32: #{_lambda_.10} parent=11 // pred_fallthru
        _
      // Predicated region
      $region33: #{_lambda_.10} parent=11 // pred_check
        %p292 = pneg %p194
      $region34: #{_lambda_.10} parent=11 // pred_check_branch
        %294 = sbr.rel (%p292) target = $region36
      $region35: #{_lambda_.10} parent=11 // pred_region
        _
      $region36: #{_lambda_.10} parent=11 // pred_fallthru
        _
      // Predicated region
      $region37: #{_lambda_.10} parent=11 // pred_check
        %p295 = pneg %p215
      $region38: #{_lambda_.10} parent=11 // pred_check_branch
        %297 = sbr.rel (%p295) target = $region40
      $region39: #{_lambda_.10} parent=11 // pred_region
        _
      $region40: #{_lambda_.10} parent=11 // pred_fallthru
        _
      // Predicated region
      $region41: #{_lambda_.10} parent=11 // pred_check
        %p298 = pneg %p236
      $region42: #{_lambda_.10} parent=11 // pred_check_branch
        %300 = sbr.rel (%p298) target = $region44
      $region43: #{_lambda_.10} parent=11 // pred_region
        _
      $region44: #{_lambda_.10} parent=11 // pred_fallthru
        _
    $region12: #{_lambda_.10} parent=5 // pred_fallthru
      _
    %p301 = scmp.lt.s32.totalorder %s16, 2
    // Predicated region
    $region45: #{_lambda_.10} parent=5 // pred_check
      %p302 = pneg %p301
    $region46: #{_lambda_.10} parent=5 // pred_check_branch
      %304 = sbr.rel (%p302) target = $region48
    $region47: #{_lambda_.10} parent=5 // pred_region
      // Predicated region
      $region49: #{_lambda_.10} parent=47 // pred_check
        %p305 = pneg %p36
      $region50: #{_lambda_.10} parent=47 // pred_check_branch
        %307 = sbr.rel (%p305) target = $region52
      $region51: #{_lambda_.10} parent=47 // pred_region
        %p308 = scmp.lt.s32.totalorder %s16, 1
        %s309 = scalar_select %p308, %s16, 1
        %s310 = smul.addr %s309, 8
        %s311 = scalar_lea.vmem %s0, %s310
      $region52: #{_lambda_.10} parent=47 // pred_fallthru
        _
      // Predicated region
      $region53: #{_lambda_.10} parent=47 // pred_check
        %p312 = pneg %p62
      $region54: #{_lambda_.10} parent=47 // pred_check_branch
        %314 = sbr.rel (%p312) target = $region56
      $region55: #{_lambda_.10} parent=47 // pred_region
        %p315 = scmp.lt.s32.totalorder %s16, 1
        %s316 = scalar_select %p315, %s16, 1
        %s317 = smul.addr %s316, 2
        %s318 = smul.addr %s317, 8
        %s319 = scalar_lea.vmem %s1, %s318
      $region56: #{_lambda_.10} parent=47 // pred_fallthru
        _
    $region48: #{_lambda_.10} parent=5 // pred_fallthru
      _
    %p320 = scmp.le.s32.totalorder 1, %s16
    %p321 = scmp.lt.s32.totalorder %s16, 3
    %p322 = pnand %p320, %p321
    %p323 = pneg %p322
    // Predicated region
    $region57: #{_lambda_.10} parent=5 // pred_check
      _
    $region58: #{_lambda_.10} parent=5 // pred_check_branch
      %325 = sbr.rel (%p322) target = $region60
    $region59: #{_lambda_.10} parent=5 // pred_region
      %s326 = ssub.s32 %s16, 1
      %p327 = scmp.lt.s32.totalorder %s21, 1
      %s328 = scalar_select %p327, %s21, 1
      %s329 = smul.addr %s328, 8
      %s330 = scalar_lea.vmem %s0, %s329
      %p331 = pneg %p42
      %p332 = pneg %p39
      %p333 = scmp.lt.s32.totalorder %s21, 1
      %s334 = scalar_select %p333, %s21, 1
      %s335 = smul.addr %s334, 2
      %s336 = smul.addr %s335, 8
      %s337 = scalar_lea.vmem %s1, %s336
      %p338 = pneg %p68
      %p339 = pneg %p65
      %p340 = pneg %p89
      %p341 = pneg %p86
      %p342 = pneg %p110
      %p343 = pneg %p107
      %p344 = pneg %p131
      %p345 = pneg %p128
      %p346 = pneg %p152
      %p347 = pneg %p149
      %p348 = pneg %p173
      %p349 = pneg %p170
      %p350 = pneg %p194
      %p351 = pneg %p191
      %p352 = pneg %p215
      %p353 = pneg %p212
      %p354 = pneg %p236
      %p355 = pneg %p233
      %p356 = pneg %p262
      %p357 = pneg %p259
      %p358 = scmp.lt.s32.totalorder %s21, 1
      %s359 = scalar_select %p358, %s21, 1
      %s360 = smul.addr %s359, 8
      %s361 = scalar_lea.vmem %s10, %s360
      %p362 = scmp.lt.s32.totalorder %s21, 1
      %s363 = scalar_select %p362, %s21, 1
      %s364 = smul.addr %s363, 8
      %s365 = scalar_lea.vmem %s0, %s364
      %p366 = scmp.lt.s32.totalorder %s21, 1
      %s367 = scalar_select %p366, %s21, 1
      %s368 = smul.addr %s367, 2
      %s369 = smul.addr %s368, 8
      %s370 = scalar_lea.vmem %s1, %s369
      %p371 = scmp.lt.s32.totalorder %s21, 1
      %s372 = scalar_select %p371, %s21, 1
      %s373 = smul.addr %s372, 8
      %s374 = scalar_lea.vmem %s10, %s373
      %v376 = vld [vmem:[%s370] sm:$0xff]
      %v377 = vld [vmem:[%s370 + $0x8] sm:$0xf]
      %v378 = vld [vmem:[%s2] sm:$0x7]
      %v379 = vlaneseq
      %v380 = vshrl.u32 %v379, 7
      %v381 = vsub.s32 0, %v380
      %v382 = vrot.slane %v378, %v381
      %v383 = vmul.f32 %v382, %v376
      %v384 = vlaneseq
      %v385 = vshrl.u32 %v384, 7
      %v386 = vsub.s32 1, %v385
      %v387 = vrot.slane %v378, %v386
      %v388 = vmul.f32 %v387, %v376
      %v389 = vmul.f32 %v387, %v377
      %vm392 = vcmask 1045504
      %v393 = vrot.slane %v388, 2
      %v394 = vrot.slane %v389, 2
      %v395 = vsel %vm392, %v393, %v394
      %v397 = vadd.f32 %v383, %v395
      %v398 = vlaneseq
      %v399 = vshrl.u32 %v398, 7
      %v400 = vsub.s32 2, %v399
      %v401 = vrot.slane %v378, %v400
      %v402 = vmul.f32 %v401, %v376
      %v403 = vmul.f32 %v401, %v377
      %vm406 = vcmask 1043456
      %v407 = vrot.slane %v402, 4
      %v408 = vrot.slane %v403, 4
      %v409 = vsel %vm406, %v407, %v408
      %v411 = vadd.f32 %v397, %v409
      %v412 = vld [vmem:[%s3] sm:$0x1]
      %v414 = vlaneseq
      %v415 = vshrl.u32 %v414, 7
      %v416 = vsub.s32 0, %v415
      %v417 = vrot.slane %v412, %v416
      %v419 = vadd.f32 %v411, %v417
      %v420 = vld [vmem:[%s4] sm:$0x1]
      %v421 = vld [vmem:[%s5] sm:$0x1]
      %422 = vadd.xlane.f32.xlu0 %v419
      %v423 = vpop.xlane.xlu0 %422
      %v424 = vrcp.pop 128.0
      %v425 = vmul.f32 %v423, %v424
      %v426 = vsub.f32 %v419, %v425
      %v427 = vmul.f32 %v426, %v426
      %428 = vadd.xlane.f32.xlu0 %v427
      %v429 = vpop.xlane.xlu0 %428
      %v430 = vmul.f32 %v429, %v424
      %v431 = vadd.f32 %v430, 1e-05
      %v432 = vrsqrt.pop %v431
      %v433 = vmul.f32 %v426, %v432
      %v435 = vlaneseq
      %v436 = vshrl.u32 %v435, 7
      %v437 = vsub.s32 0, %v436
      %v438 = vrot.slane %v420, %v437
      %v440 = vmul.f32 %v433, %v438
      %v442 = vlaneseq
      %v443 = vshrl.u32 %v442, 7
      %v444 = vsub.s32 0, %v443
      %v445 = vrot.slane %v421, %v444
      %v447 = vadd.f32 %v440, %v445
      %v448 = vmax.f32 %v447, 0.0
      %v449 = vpack.c.bf16 %v448, %v448
      %v450 = vld [vmem:[%s6] sm:$0xf]
      %v451 = vld [vmem:[%s6 + $0x4] sm:$0xf]
      %v452 = vld [vmem:[%s6 + $0x8] sm:$0xf]
      %v453 = vld [vmem:[%s6 + $0xc] sm:$0xf]
      %v454 = vld [vmem:[%s6 + $0x10] sm:$0xf]
      %v455 = vld [vmem:[%s6 + $0x14] sm:$0xf]
      %v456 = vld [vmem:[%s6 + $0x18] sm:$0xf]
      %v457 = vld [vmem:[%s6 + $0x1c] sm:$0xf]
      %v458 = vld [vmem:[%s6 + $0x20] sm:$0xf]
      %v459 = vld [vmem:[%s6 + $0x24] sm:$0xf]
      %v460 = vld [vmem:[%s6 + $0x28] sm:$0xf]
      %v461 = vld [vmem:[%s6 + $0x2c] sm:$0xf]
      %v462 = vld [vmem:[%s6 + $0x30] sm:$0xf]
      %v463 = vld [vmem:[%s6 + $0x34] sm:$0xf]
      %v464 = vld [vmem:[%s6 + $0x38] sm:$0xf]
      %v465 = vld [vmem:[%s6 + $0x3c] sm:$0xf]
      %v466 = vld [vmem:[%s7] sm:$0x1]
      %v468 = vlaneseq
      %v469 = vshrl.u32 %v468, 7
      %v470 = vsub.s32 0, %v469
      %v471 = vrot.slane %v466, %v470
      %v489 = vunpack.c.l.b16 %v450
      %v490 = vunpack.c.l.b16 %v451
      %v491 = vunpack.c.l.b16 %v452
      %v492 = vunpack.c.l.b16 %v453
      %v493 = vunpack.c.l.b16 %v454
      %v494 = vunpack.c.l.b16 %v455
      %v495 = vunpack.c.l.b16 %v456
      %v496 = vunpack.c.l.b16 %v457
      %v497 = vunpack.c.l.b16 %v458
      %v498 = vunpack.c.l.b16 %v459
      %v499 = vunpack.c.l.b16 %v460
      %v500 = vunpack.c.l.b16 %v461
      %v501 = vunpack.c.l.b16 %v462
      %v502 = vunpack.c.l.b16 %v463
      %v503 = vunpack.c.l.b16 %v464
      %v504 = vunpack.c.l.b16 %v465
      %v505 = vpack.c.b16 %v490, %v489
      %v506 = vpack.c.b16 %v492, %v491
      %v507 = vpack.c.b16 %v494, %v493
      %v508 = vpack.c.b16 %v496, %v495
      %v509 = vpack.c.b16 %v498, %v497
      %v510 = vpack.c.b16 %v500, %v499
      %v511 = vpack.c.b16 %v502, %v501
      %v512 = vpack.c.b16 %v504, %v503
      %521 = vmatprep.subr.bf16.mxu0 0
      %522 = vmatpush1.bf16.msra.mxu0 %v512
      %523 = vmatprep.subr.bf16.mxu0 0
      %524 = vmatpush1.bf16.msra.mxu0 %v511
      %525 = vmatprep.subr.bf16.mxu0 0
      %526 = vmatpush1.bf16.msra.mxu0 %v510
      %527 = vmatprep.subr.bf16.mxu0 0
      %528 = vmatpush1.bf16.msra.mxu0 %v509
      %529 = vmatprep.subr.bf16.mxu0 0
      %530 = vmatpush1.bf16.msra.mxu0 %v508
      %531 = vmatprep.subr.bf16.mxu0 0
      %532 = vmatpush1.bf16.msra.mxu0 %v507
      %533 = vmatprep.subr.bf16.mxu0 0
      %534 = vmatpush1.bf16.msra.mxu0 %v506
      %535 = vmatprep.subr.bf16.mxu0 0
      %536 = vmatpush1.bf16.msra.mxu0 %v505
      %537 = vmatprep.subr.bf16.mxu0 0
      %538 = vmatpush2.bf16.msra.mxu0 0
      %539 = vmatprep.subr.bf16.mxu0 0
      %540 = vmatpush2.bf16.msra.mxu0 0
      %541 = vmatprep.subr.bf16.mxu0 0
      %542 = vmatpush2.bf16.msra.mxu0 0
      %543 = vmatprep.subr.bf16.mxu0 0
      %544 = vmatpush2.bf16.msra.mxu0 0
      %545 = vmatprep.subr.bf16.mxu0 0
      %546 = vmatpush2.bf16.msra.mxu0 0
      %547 = vmatprep.subr.bf16.mxu0 0
      %548 = vmatpush2.bf16.msra.mxu0 0
      %549 = vmatprep.subr.bf16.mxu0 0
      %550 = vmatpush2.bf16.msra.mxu0 0
      %551 = vmatprep.subr.bf16.mxu0 0
      %552 = vmatpush2.bf16.msra.mxu0 0
      %553 = vmatprep.mubr.bf16.mxu0 0
      %554 = vmatmul.mubr.bf16.gmra.mxu0 %v449
      %v555 = vpop.f32.mrf.mxu0
      %v556 = vadd.f32 %v471, %v555
      %v557 = vpop.f32.mrf.mxu0
      %v558 = vpop.f32.mrf.mxu0
      %v559 = vpop.f32.mrf.mxu0
      %560 = vdwg.mxu0
      %v561 = vld [vmem:[%s8] sm:$0x1]
      %v562 = vld [vmem:[%s9] sm:$0x1]
      %563 = vadd.xlane.f32.xlu0 %v556
      %v564 = vpop.xlane.xlu0 %563
      %v565 = vmul.f32 %v564, %v424
      %v566 = vsub.f32 %v556, %v565
      %v567 = vmul.f32 %v566, %v566
      %568 = vadd.xlane.f32.xlu0 %v567
      %v569 = vpop.xlane.xlu0 %568
      %v570 = vmul.f32 %v569, %v424
      %v571 = vadd.f32 %v570, 1e-05
      %v572 = vrsqrt.pop %v571
      %v573 = vmul.f32 %v566, %v572
      %v575 = vlaneseq
      %v576 = vshrl.u32 %v575, 7
      %v577 = vsub.s32 0, %v576
      %v578 = vrot.slane %v561, %v577
      %v580 = vmul.f32 %v573, %v578
      %v582 = vlaneseq
      %v583 = vshrl.u32 %v582, 7
      %v584 = vsub.s32 0, %v583
      %v585 = vrot.slane %v562, %v584
      %v587 = vadd.f32 %v580, %v585
      %v588 = vmax.f32 %v587, 0.0
      %v589 = vld [vmem:[%s365] sm:$0xff]
      %v590 = vadd.f32 %v589, %v588
      %591 = vst [vmem:[%s374] sm:$0xff] %v590
      %p592 = scmp.lt.s32.totalorder %s21, 1
      %s593 = scalar_select %p592, %s21, 1
      %s594 = smul.addr %s593, 8
      %s595 = scalar_lea.vmem %s10, %s594
      // Predicated region
      $region61: #{_lambda_.10} parent=59 // pred_check
        %p596 = pneg %p259
      $region62: #{_lambda_.10} parent=59 // pred_check_branch
        %598 = sbr.rel (%p596) target = $region64
      $region63: #{_lambda_.10} parent=59 // pred_region
        _
      $region64: #{_lambda_.10} parent=59 // pred_fallthru
        _
    $region60: #{_lambda_.10} parent=5 // pred_fallthru
      _
    %p599 = scmp.le.s32.totalorder 2, %s16
    // Predicated region
    $region65: #{_lambda_.10} parent=5 // pred_check
      %p600 = pneg %p599
    $region66: #{_lambda_.10} parent=5 // pred_check_branch
      %602 = sbr.rel (%p600) target = $region68
    $region67: #{_lambda_.10} parent=5 // pred_region
      %s603 = ssub.s32 %s16, 2
      // Predicated region
      $region69: #{_lambda_.10} parent=67 // pred_check
        %p604 = pneg %p265
      $region70: #{_lambda_.10} parent=67 // pred_check_branch
        %606 = sbr.rel (%p604) target = $region72
      $region71: #{_lambda_.10} parent=67 // pred_region
        %p607 = scmp.lt.s32.totalorder %s22, 1
        %s608 = scalar_select %p607, %s22, 1
        %s609 = smul.addr %s608, 8
        %s610 = scalar_lea.vmem %s10, %s609
      $region72: #{_lambda_.10} parent=67 // pred_fallthru
        _
    $region68: #{_lambda_.10} parent=5 // pred_fallthru
      _
  $region6: #{_lambda_.10} parent=0 // loop_footer
    %s20 = sadd.s32 1, %s16
  $region7: #{_lambda_.10} parent=0 // loop_footer_branch
    %15 = sbr.rel target = $region3
  $region8: #{_lambda_.10} parent=0 // loop_exit
    _

// kernel: _lambda_.11
$region0: #{_lambda_.11}
  #allocation0 [shape = 'u32[]', space=smem, size = 0x4, offset = 0x4, fixed_abs, tag = 'smem constant byte address 0x4 - core index']
  #allocation1 [shape = 'u32[144,128]{1,0:T(1,128)}', space=vmem, size = 0x12000, scoped, tag = 'internal scratch']
  %s0 = inlined_call_operand.vmem [shape: f32[16,128], index: 0, kind: input, shape index: {}]
  %s1 = inlined_call_operand.vmem [shape: bf16[128,64], index: 1, kind: input, shape index: {}]
  %s2 = inlined_call_operand.vmem [shape: f32[1,64], index: 2, kind: input, shape index: {}]
  %s3 = inlined_call_operand.vmem [shape: f32[16,64], index: 3, kind: output, shape index: {}]
  %s4 = sld [smem:[#allocation0]]
  $region22: #{_lambda_.11} parent=0
    _
  %s6 = ssub.s32 1, %s4
  %s7 = scalar_select 0, %s6, %s4
  // Predicated region
  $region2: #{_lambda_.11} parent=0 // pred_check
    _
  $region3: #{_lambda_.11} parent=0 // pred_check_branch
    %9 = sbr.rel (0) target = $region5
  $region4: #{_lambda_.11} parent=0 // pred_region
    _
  $region5: #{_lambda_.11} parent=0 // pred_fallthru
    _
  // Predicated region
  $region6: #{_lambda_.11} parent=0 // pred_check
    _
  $region7: #{_lambda_.11} parent=0 // pred_check_branch
    %11 = sbr.rel (0) target = $region9
  $region8: #{_lambda_.11} parent=0 // pred_region
    _
  $region9: #{_lambda_.11} parent=0 // pred_fallthru
    _
  // Predicated region
  $region10: #{_lambda_.11} parent=0 // pred_check
    _
  $region11: #{_lambda_.11} parent=0 // pred_check_branch
    %13 = sbr.rel (0) target = $region13
  $region12: #{_lambda_.11} parent=0 // pred_region
    _
  $region13: #{_lambda_.11} parent=0 // pred_fallthru
    _
  %v15 = vld [vmem:[%s0] sm:$0xff]
  %v16 = vld [vmem:[%s0 + $0x8] sm:$0xff]
  %v17 = vpack.c.bf16 %v16, %v15
  %v18 = vld [vmem:[%s1] sm:$0xf]
  %v19 = vld [vmem:[%s1 + $0x4] sm:$0xf]
  %v20 = vld [vmem:[%s1 + $0x8] sm:$0xf]
  %v21 = vld [vmem:[%s1 + $0xc] sm:$0xf]
  %v22 = vld [vmem:[%s1 + $0x10] sm:$0xf]
  %v23 = vld [vmem:[%s1 + $0x14] sm:$0xf]
  %v24 = vld [vmem:[%s1 + $0x18] sm:$0xf]
  %v25 = vld [vmem:[%s1 + $0x1c] sm:$0xf]
  %v26 = vld [vmem:[%s1 + $0x20] sm:$0xf]
  %v27 = vld [vmem:[%s1 + $0x24] sm:$0xf]
  %v28 = vld [vmem:[%s1 + $0x28] sm:$0xf]
  %v29 = vld [vmem:[%s1 + $0x2c] sm:$0xf]
  %v30 = vld [vmem:[%s1 + $0x30] sm:$0xf]
  %v31 = vld [vmem:[%s1 + $0x34] sm:$0xf]
  %v32 = vld [vmem:[%s1 + $0x38] sm:$0xf]
  %v33 = vld [vmem:[%s1 + $0x3c] sm:$0xf]
  %v34 = vld [vmem:[%s2] sm:$0x1]
  %v36 = vlaneseq
  %v37 = vshrl.u32 %v36, 7
  %v38 = vsub.s32 0, %v37
  %v39 = vrot.slane %v34, %v38
  %v57 = vunpack.c.l.b16 %v18
  %v58 = vunpack.c.l.b16 %v19
  %v59 = vunpack.c.l.b16 %v20
  %v60 = vunpack.c.l.b16 %v21
  %v61 = vunpack.c.l.b16 %v22
  %v62 = vunpack.c.l.b16 %v23
  %v63 = vunpack.c.l.b16 %v24
  %v64 = vunpack.c.l.b16 %v25
  %v65 = vunpack.c.l.b16 %v26
  %v66 = vunpack.c.l.b16 %v27
  %v67 = vunpack.c.l.b16 %v28
  %v68 = vunpack.c.l.b16 %v29
  %v69 = vunpack.c.l.b16 %v30
  %v70 = vunpack.c.l.b16 %v31
  %v71 = vunpack.c.l.b16 %v32
  %v72 = vunpack.c.l.b16 %v33
  %v73 = vpack.c.b16 %v58, %v57
  %v74 = vpack.c.b16 %v60, %v59
  %v75 = vpack.c.b16 %v62, %v61
  %v76 = vpack.c.b16 %v64, %v63
  %v77 = vpack.c.b16 %v66, %v65
  %v78 = vpack.c.b16 %v68, %v67
  %v79 = vpack.c.b16 %v70, %v69
  %v80 = vpack.c.b16 %v72, %v71
  %89 = vmatprep.subr.bf16.mxu0 0
  %90 = vmatpush1.bf16.msra.mxu0 %v80
  %91 = vmatprep.subr.bf16.mxu0 0
  %92 = vmatpush1.bf16.msra.mxu0 %v79
  %93 = vmatprep.subr.bf16.mxu0 0
  %94 = vmatpush1.bf16.msra.mxu0 %v78
  %95 = vmatprep.subr.bf16.mxu0 0
  %96 = vmatpush1.bf16.msra.mxu0 %v77
  %97 = vmatprep.subr.bf16.mxu0 0
  %98 = vmatpush1.bf16.msra.mxu0 %v76
  %99 = vmatprep.subr.bf16.mxu0 0
  %100 = vmatpush1.bf16.msra.mxu0 %v75
  %101 = vmatprep.subr.bf16.mxu0 0
  %102 = vmatpush1.bf16.msra.mxu0 %v74
  %103 = vmatprep.subr.bf16.mxu0 0
  %104 = vmatpush1.bf16.msra.mxu0 %v73
  %105 = vmatprep.subr.bf16.mxu0 0
  %106 = vmatpush2.bf16.msra.mxu0 0
  %107 = vmatprep.subr.bf16.mxu0 0
  %108 = vmatpush2.bf16.msra.mxu0 0
  %109 = vmatprep.subr.bf16.mxu0 0
  %110 = vmatpush2.bf16.msra.mxu0 0
  %111 = vmatprep.subr.bf16.mxu0 0
  %112 = vmatpush2.bf16.msra.mxu0 0
  %113 = vmatprep.subr.bf16.mxu0 0
  %114 = vmatpush2.bf16.msra.mxu0 0
  %115 = vmatprep.subr.bf16.mxu0 0
  %116 = vmatpush2.bf16.msra.mxu0 0
  %117 = vmatprep.subr.bf16.mxu0 0
  %118 = vmatpush2.bf16.msra.mxu0 0
  %119 = vmatprep.subr.bf16.mxu0 0
  %120 = vmatpush2.bf16.msra.mxu0 0
  %121 = vmatprep.mubr.bf16.mxu0 0
  %122 = vmatmul.mubr.bf16.gmra.mxu0 %v17
  %v123 = vpop.f32.mrf.mxu0
  %v124 = vadd.f32 %v39, %v123
  %v125 = vpop.f32.mrf.mxu0
  %v126 = vpop.f32.mrf.mxu0
  %v127 = vadd.f32 %v39, %v126
  %v128 = vpop.f32.mrf.mxu0
  %129 = vdwg.mxu0
  %v130 = vmax.f32 %v124, 0.0
  %v131 = vmax.f32 %v127, 0.0
  %vm132 = vcmask 523264
  %133 = vst.msk [vmem:[%s3] sm:$0xff] %vm132, %v130
  %134 = vst.msk [vmem:[%s3 + $0x8] sm:$0xff] %vm132, %v131
  // Predicated region
  $region14: #{_lambda_.11} parent=0 // pred_check
    _
  $region15: #{_lambda_.11} parent=0 // pred_check_branch
    %136 = sbr.rel (0) target = $region17
  $region16: #{_lambda_.11} parent=0 // pred_region
    _
  $region17: #{_lambda_.11} parent=0 // pred_fallthru
    _
  // Predicated region
  $region18: #{_lambda_.11} parent=0 // pred_check
    _
  $region19: #{_lambda_.11} parent=0 // pred_check_branch
    %138 = sbr.rel (0) target = $region21
  $region20: #{_lambda_.11} parent=0 // pred_region
    _
  $region21: #{_lambda_.11} parent=0 // pred_fallthru
    _

// kernel: _lambda_.14
$region0: #{_lambda_.14}
  #allocation0 [shape = 'u32[]', space=smem, size = 0x4, offset = 0x4, fixed_abs, tag = 'smem constant byte address 0x4 - core index']
  #allocation1 [shape = 'u32[144,128]{1,0:T(1,128)}', space=vmem, size = 0x12000, scoped, tag = 'internal scratch']
  %s0 = inlined_call_operand.vmem [shape: f32[16,64], index: 0, kind: input, shape index: {}]
  %s1 = inlined_call_operand.vmem [shape: bf16[64,128], index: 1, kind: input, shape index: {}]
  %s2 = inlined_call_operand.vmem [shape: f32[1,128], index: 2, kind: input, shape index: {}]
  %s3 = inlined_call_operand.vmem [shape: f32[16,128], index: 3, kind: input, shape index: {}]
  %s4 = inlined_call_operand.vmem [shape: f32[16,128], index: 4, kind: input, shape index: {}]
  %s5 = inlined_call_operand.vmem [shape: f32[16,128], index: 5, kind: output, shape index: {}]
  %s6 = sld [smem:[#allocation0]]
  $region30: #{_lambda_.14} parent=0
    _
  %s8 = ssub.s32 1, %s6
  %s9 = scalar_select 0, %s8, %s6
  // Predicated region
  $region2: #{_lambda_.14} parent=0 // pred_check
    _
  $region3: #{_lambda_.14} parent=0 // pred_check_branch
    %11 = sbr.rel (0) target = $region5
  $region4: #{_lambda_.14} parent=0 // pred_region
    _
  $region5: #{_lambda_.14} parent=0 // pred_fallthru
    _
  // Predicated region
  $region6: #{_lambda_.14} parent=0 // pred_check
    _
  $region7: #{_lambda_.14} parent=0 // pred_check_branch
    %13 = sbr.rel (0) target = $region9
  $region8: #{_lambda_.14} parent=0 // pred_region
    _
  $region9: #{_lambda_.14} parent=0 // pred_fallthru
    _
  // Predicated region
  $region10: #{_lambda_.14} parent=0 // pred_check
    _
  $region11: #{_lambda_.14} parent=0 // pred_check_branch
    %15 = sbr.rel (0) target = $region13
  $region12: #{_lambda_.14} parent=0 // pred_region
    _
  $region13: #{_lambda_.14} parent=0 // pred_fallthru
    _
  // Predicated region
  $region14: #{_lambda_.14} parent=0 // pred_check
    _
  $region15: #{_lambda_.14} parent=0 // pred_check_branch
    %17 = sbr.rel (0) target = $region17
  $region16: #{_lambda_.14} parent=0 // pred_region
    _
  $region17: #{_lambda_.14} parent=0 // pred_fallthru
    _
  // Predicated region
  $region18: #{_lambda_.14} parent=0 // pred_check
    _
  $region19: #{_lambda_.14} parent=0 // pred_check_branch
    %19 = sbr.rel (0) target = $region21
  $region20: #{_lambda_.14} parent=0 // pred_region
    _
  $region21: #{_lambda_.14} parent=0 // pred_fallthru
    _
  %v21 = vld [vmem:[%s0] sm:$0xff]
  %v22 = vld [vmem:[%s0 + $0x8] sm:$0xff]
  %v23 = vpack.c.bf16 %v22, %v21
  %v24 = vld [vmem:[%s1] sm:$0xf]
  %v25 = vld [vmem:[%s1 + $0x4] sm:$0xf]
  %v26 = vld [vmem:[%s1 + $0x8] sm:$0xf]
  %v27 = vld [vmem:[%s1 + $0xc] sm:$0xf]
  %v28 = vld [vmem:[%s1 + $0x10] sm:$0xf]
  %v29 = vld [vmem:[%s1 + $0x14] sm:$0xf]
  %v30 = vld [vmem:[%s1 + $0x18] sm:$0xf]
  %v31 = vld [vmem:[%s1 + $0x1c] sm:$0xf]
  %v32 = vld [vmem:[%s2] sm:$0x1]
  %v34 = vlaneseq
  %v35 = vshrl.u32 %v34, 7
  %v36 = vsub.s32 0, %v35
  %v37 = vrot.slane %v32, %v36
  %v47 = vunpack.c.l.b16 %v24
  %v48 = vunpack.c.l.b16 %v25
  %v49 = vunpack.c.l.b16 %v26
  %v50 = vunpack.c.l.b16 %v27
  %v51 = vunpack.c.l.b16 %v28
  %v52 = vunpack.c.l.b16 %v29
  %v53 = vunpack.c.l.b16 %v30
  %v54 = vunpack.c.l.b16 %v31
  %v55 = vpack.c.b16 %v48, %v47
  %v56 = vpack.c.b16 %v50, %v49
  %v57 = vpack.c.b16 %v52, %v51
  %v58 = vpack.c.b16 %v54, %v53
  %vm63 = vcmask 523264
  %v65 = vsel %vm63, %v23, 0
  %67 = vmatprep.subr.bf16.mxu0 0
  %68 = vmatpush1.bf16.msra.mxu0 0
  %69 = vmatprep.subr.bf16.mxu0 0
  %70 = vmatpush1.bf16.msra.mxu0 0
  %71 = vmatprep.subr.bf16.mxu0 0
  %72 = vmatpush1.bf16.msra.mxu0 0
  %73 = vmatprep.subr.bf16.mxu0 0
  %74 = vmatpush1.bf16.msra.mxu0 0
  %75 = vmatprep.subr.bf16.mxu0 0
  %76 = vmatpush1.bf16.msra.mxu0 %v58
  %77 = vmatprep.subr.bf16.mxu0 0
  %78 = vmatpush1.bf16.msra.mxu0 %v57
  %79 = vmatprep.subr.bf16.mxu0 0
  %80 = vmatpush1.bf16.msra.mxu0 %v56
  %81 = vmatprep.subr.bf16.mxu0 0
  %82 = vmatpush1.bf16.msra.mxu0 %v55
  %83 = vmatprep.subr.bf16.mxu0 0
  %84 = vmatpush2.bf16.msra.mxu0 0
  %85 = vmatprep.subr.bf16.mxu0 0
  %86 = vmatpush2.bf16.msra.mxu0 0
  %87 = vmatprep.subr.bf16.mxu0 0
  %88 = vmatpush2.bf16.msra.mxu0 0
  %89 = vmatprep.subr.bf16.mxu0 0
  %90 = vmatpush2.bf16.msra.mxu0 0
  %91 = vmatprep.subr.bf16.mxu0 0
  %92 = vmatpush2.bf16.msra.mxu0 0
  %93 = vmatprep.subr.bf16.mxu0 0
  %94 = vmatpush2.bf16.msra.mxu0 0
  %95 = vmatprep.subr.bf16.mxu0 0
  %96 = vmatpush2.bf16.msra.mxu0 0
  %97 = vmatprep.subr.bf16.mxu0 0
  %98 = vmatpush2.bf16.msra.mxu0 0
  %99 = vmatprep.mubr.bf16.mxu0 0
  %100 = vmatmul.mubr.bf16.gmra.mxu0 %v65
  %v101 = vpop.f32.mrf.mxu0
  %v102 = vadd.f32 %v37, %v101
  %v103 = vpop.f32.mrf.mxu0
  %v104 = vpop.f32.mrf.mxu0
  %v105 = vadd.f32 %v37, %v104
  %v106 = vpop.f32.mrf.mxu0
  %107 = vdwg.mxu0
  %v108 = vmax.f32 %v102, 0.0
  %v109 = vmax.f32 %v105, 0.0
  %v110 = vld [vmem:[%s4] sm:$0xff]
  %v111 = vld [vmem:[%s4 + $0x8] sm:$0xff]
  %v112 = vld [vmem:[%s3] sm:$0xff]
  %v113 = vld [vmem:[%s3 + $0x8] sm:$0xff]
  %v114 = vadd.f32 %v112, %v108
  %v115 = vadd.f32 %v113, %v109
  %v116 = vmul.f32 %v110, %v114
  %v117 = vmul.f32 %v111, %v115
  %118 = vst [vmem:[%s5] sm:$0xff] %v116
  %119 = vst [vmem:[%s5 + $0x8] sm:$0xff] %v117
  // Predicated region
  $region22: #{_lambda_.14} parent=0 // pred_check
    _
  $region23: #{_lambda_.14} parent=0 // pred_check_branch
    %121 = sbr.rel (0) target = $region25
  $region24: #{_lambda_.14} parent=0 // pred_region
    _
  $region25: #{_lambda_.14} parent=0 // pred_fallthru
    _
  // Predicated region
  $region26: #{_lambda_.14} parent=0 // pred_check
    _
  $region27: #{_lambda_.14} parent=0 // pred_check_branch
    %123 = sbr.rel (0) target = $region29
  $region28: #{_lambda_.14} parent=0 // pred_region
    _
  $region29: #{_lambda_.14} parent=0 // pred_fallthru
    _

// kernel: _lambda_.15
$region0: #{_lambda_.15}
  #allocation0 [shape = 'u32[]', space=smem, size = 0x4, offset = 0x4, fixed_abs, tag = 'smem constant byte address 0x4 - core index']
  #allocation1 [shape = 'u32[144,128]{1,0:T(1,128)}', space=vmem, size = 0x12000, scoped, tag = 'internal scratch']
  %s0 = inlined_call_operand.vmem [shape: f32[2,10,128], index: 0, kind: input, shape index: {}]
  %s1 = inlined_call_operand.vmem [shape: bf16[128,12], index: 1, kind: input, shape index: {}]
  %s2 = inlined_call_operand.vmem [shape: f32[2,12,4], index: 2, kind: output, shape index: {}]
  %s3 = sld [smem:[#allocation0]]
  $region41: #{_lambda_.15} parent=0
    _
  %s5 = ssub.s32 1, %s3
  %s6 = scalar_select 0, %s5, %s3
  loop: start=0, step=1, limit=4
  $region2: #{_lambda_.15} parent=0 // loop_pre_header
    _
  $region3: #{_lambda_.15} parent=0 // loop_header
    %s8 = sphi 0, %s12
    %p9 = scmp.ge.s32.totalorder %s8, 4
    %s18 = sphi 0, %s20
    %s21 = sphi 0, %s18
    %s22 = sphi 0, %s21
    %s38 = sphi 0, %s22
    %s42 = sphi 0, %s42
    %s44 = sphi 0, %s42
    %s45 = sphi 0, %s44
    %s59 = sphi 0, %s45
    %s65 = sphi 0, %s67
    %s68 = sphi 0, %s65
    %s69 = sphi 0, %s68
    %s85 = sphi 0, %s69
  $region4: #{_lambda_.15} parent=0 // loop_header_branch
    %11 = sbr.rel (%p9) target = $region8
  $region5: #{_lambda_.15} parent=0 // loop_body
    %s13 = ssub.s32 %s8, 1
    %s14 = ssub.s32 %s8, 2
    %s15 = sadd.s32 %s8, 1
    %s16 = ssub.s32 %s8, %s15
    %p17 = scmp.eq.s32.totalorder %s16, 0
    %s19 = sadd.s32 %s18, 1
    %s20 = scalar_select %p17, %s18, %s19
    %p23 = pneg %p17
    %p24 = scmp.eq.s32.totalorder %s8, 1
    %p25 = por %p23, %p24
    %p26 = scmp.ne.s32.totalorder %s18, %s21
    %p27 = scmp.eq.s32.totalorder %s8, 0
    %p28 = por %p26, %p27
    %p29 = scmp.ne.s32.totalorder %s18, %s21
    %p30 = scmp.eq.s32.totalorder %s13, 1
    %p31 = por %p29, %p30
    %p32 = scmp.ne.s32.totalorder %s21, %s22
    %p33 = scmp.eq.s32.totalorder %s13, 0
    %p34 = por %p32, %p33
    %p35 = scmp.ne.s32.totalorder %s21, %s22
    %p36 = scmp.eq.s32.totalorder %s14, 1
    %p37 = por %p35, %p36
    %p39 = scmp.ne.s32.totalorder %s22, %s38
    %p40 = scmp.eq.s32.totalorder %s14, 0
    %p41 = por %p39, %p40
    %s43 = sadd.s32 %s42, 1
    %p46 = scmp.eq.s32.totalorder %s8, 1
    %p47 = scmp.ne.s32.totalorder %s42, %s44
    %p48 = scmp.eq.s32.totalorder %s8, 0
    %p49 = por %p47, %p48
    %p50 = scmp.ne.s32.totalorder %s42, %s44
    %p51 = scmp.eq.s32.totalorder %s13, 1
    %p52 = por %p50, %p51
    %p53 = scmp.ne.s32.totalorder %s44, %s45
    %p54 = scmp.eq.s32.totalorder %s13, 0
    %p55 = por %p53, %p54
    %p56 = scmp.ne.s32.totalorder %s44, %s45
    %p57 = scmp.eq.s32.totalorder %s14, 1
    %p58 = por %p56, %p57
    %p60 = scmp.ne.s32.totalorder %s45, %s59
    %p61 = scmp.eq.s32.totalorder %s14, 0
    %p62 = por %p60, %p61
    %s63 = ssub.s32 %s8, %s15
    %p64 = scmp.eq.s32.totalorder %s63, 0
    %s66 = sadd.s32 %s65, 1
    %s67 = scalar_select %p64, %s65, %s66
    %p70 = pneg %p64
    %p71 = scmp.eq.s32.totalorder %s8, 1
    %p72 = por %p70, %p71
    %p73 = scmp.ne.s32.totalorder %s65, %s68
    %p74 = scmp.eq.s32.totalorder %s8, 0
    %p75 = por %p73, %p74
    %p76 = scmp.ne.s32.totalorder %s65, %s68
    %p77 = scmp.eq.s32.totalorder %s13, 1
    %p78 = por %p76, %p77
    %p79 = scmp.ne.s32.totalorder %s68, %s69
    %p80 = scmp.eq.s32.totalorder %s13, 0
    %p81 = por %p79, %p80
    %p82 = scmp.ne.s32.totalorder %s68, %s69
    %p83 = scmp.eq.s32.totalorder %s14, 1
    %p84 = por %p82, %p83
    %p86 = scmp.ne.s32.totalorder %s69, %s85
    %p87 = scmp.eq.s32.totalorder %s14, 0
    %p88 = por %p86, %p87
    %p89 = scmp.le.s32.totalorder 1, %s8
    %p90 = scmp.lt.s32.totalorder %s8, 3
    %p91 = pnand %p89, %p90
    %p92 = pneg %p91
    // Predicated region
    $region9: #{_lambda_.15} parent=5 // pred_check
      _
    $region10: #{_lambda_.15} parent=5 // pred_check_branch
      %94 = sbr.rel (%p91) target = $region12
    $region11: #{_lambda_.15} parent=5 // pred_region
      %s95 = ssub.s32 %s8, 1
      // Predicated region
      $region13: #{_lambda_.15} parent=11 // pred_check
        %p96 = pneg %p55
      $region14: #{_lambda_.15} parent=11 // pred_check_branch
        %98 = sbr.rel (%p96) target = $region16
      $region15: #{_lambda_.15} parent=11 // pred_region
        _
      $region16: #{_lambda_.15} parent=11 // pred_fallthru
        _
    $region12: #{_lambda_.15} parent=5 // pred_fallthru
      _
    %p99 = scmp.lt.s32.totalorder %s8, 2
    // Predicated region
    $region17: #{_lambda_.15} parent=5 // pred_check
      %p100 = pneg %p99
    $region18: #{_lambda_.15} parent=5 // pred_check_branch
      %102 = sbr.rel (%p100) target = $region20
    $region19: #{_lambda_.15} parent=5 // pred_region
      // Predicated region
      $region21: #{_lambda_.15} parent=19 // pred_check
        %p103 = pneg %p28
      $region22: #{_lambda_.15} parent=19 // pred_check_branch
        %105 = sbr.rel (%p103) target = $region24
      $region23: #{_lambda_.15} parent=19 // pred_region
        %p106 = scmp.lt.s32.totalorder %s8, 1
        %s107 = scalar_select %p106, %s8, 1
        %s108 = smul.addr %s107, 2
        %s109 = smul.addr %s108, 8
        %s110 = scalar_lea.vmem %s0, %s109
      $region24: #{_lambda_.15} parent=19 // pred_fallthru
        _
    $region20: #{_lambda_.15} parent=5 // pred_fallthru
      _
    %p111 = scmp.le.s32.totalorder 1, %s8
    %p112 = scmp.lt.s32.totalorder %s8, 3
    %p113 = pnand %p111, %p112
    %p114 = pneg %p113
    // Predicated region
    $region25: #{_lambda_.15} parent=5 // pred_check
      _
    $region26: #{_lambda_.15} parent=5 // pred_check_branch
      %116 = sbr.rel (%p113) target = $region28
    $region27: #{_lambda_.15} parent=5 // pred_region
      %s117 = ssub.s32 %s8, 1
      %p118 = scmp.lt.s32.totalorder %s13, 1
      %s119 = scalar_select %p118, %s13, 1
      %s120 = smul.addr %s119, 2
      %s121 = smul.addr %s120, 8
      %s122 = scalar_lea.vmem %s0, %s121
      %p123 = pneg %p34
      %p124 = pneg %p31
      %p125 = pneg %p55
      %p126 = pneg %p52
      %p127 = pneg %p81
      %p128 = pneg %p78
      %p129 = scmp.lt.s32.totalorder %s13, 1
      %s130 = scalar_select %p129, %s13, 1
      %s131 = smul.addr %s130, 2
      %s132 = smul.addr %s131, 8
      %s133 = scalar_lea.vmem %s2, %s132
      %p134 = scmp.lt.s32.totalorder %s13, 1
      %s135 = scalar_select %p134, %s13, 1
      %s136 = smul.addr %s135, 2
      %s137 = smul.addr %s136, 8
      %s138 = scalar_lea.vmem %s0, %s137
      %p139 = scmp.lt.s32.totalorder %s13, 1
      %s140 = scalar_select %p139, %s13, 1
      %s141 = smul.addr %s140, 2
      %s142 = smul.addr %s141, 8
      %s143 = scalar_lea.vmem %s2, %s142
      %v145 = vld [vmem:[%s138] sm:$0xff]
      %v146 = vld [vmem:[%s138 + $0x8] sm:$0x3]
      %v147 = vpack.c.bf16 %v146, %v145
      %v148 = vld [vmem:[%s1] sm:$0xf]
      %v149 = vld [vmem:[%s1 + $0x4] sm:$0xf]
      %v150 = vld [vmem:[%s1 + $0x8] sm:$0xf]
      %v151 = vld [vmem:[%s1 + $0xc] sm:$0xf]
      %v152 = vld [vmem:[%s1 + $0x10] sm:$0xf]
      %v153 = vld [vmem:[%s1 + $0x14] sm:$0xf]
      %v154 = vld [vmem:[%s1 + $0x18] sm:$0xf]
      %v155 = vld [vmem:[%s1 + $0x1c] sm:$0xf]
      %v156 = vld [vmem:[%s1 + $0x20] sm:$0xf]
      %v157 = vld [vmem:[%s1 + $0x24] sm:$0xf]
      %v158 = vld [vmem:[%s1 + $0x28] sm:$0xf]
      %v159 = vld [vmem:[%s1 + $0x2c] sm:$0xf]
      %v160 = vld [vmem:[%s1 + $0x30] sm:$0xf]
      %v161 = vld [vmem:[%s1 + $0x34] sm:$0xf]
      %v162 = vld [vmem:[%s1 + $0x38] sm:$0xf]
      %v163 = vld [vmem:[%s1 + $0x3c] sm:$0xf]
      %v180 = vunpack.c.l.b16 %v148
      %v181 = vunpack.c.l.b16 %v149
      %v182 = vunpack.c.l.b16 %v150
      %v183 = vunpack.c.l.b16 %v151
      %v184 = vunpack.c.l.b16 %v152
      %v185 = vunpack.c.l.b16 %v153
      %v186 = vunpack.c.l.b16 %v154
      %v187 = vunpack.c.l.b16 %v155
      %v188 = vunpack.c.l.b16 %v156
      %v189 = vunpack.c.l.b16 %v157
      %v190 = vunpack.c.l.b16 %v158
      %v191 = vunpack.c.l.b16 %v159
      %v192 = vunpack.c.l.b16 %v160
      %v193 = vunpack.c.l.b16 %v161
      %v194 = vunpack.c.l.b16 %v162
      %v195 = vunpack.c.l.b16 %v163
      %v196 = vpack.c.b16 %v181, %v180
      %v197 = vpack.c.b16 %v183, %v182
      %v198 = vpack.c.b16 %v185, %v184
      %v199 = vpack.c.b16 %v187, %v186
      %v200 = vpack.c.b16 %v189, %v188
      %v201 = vpack.c.b16 %v191, %v190
      %v202 = vpack.c.b16 %v193, %v192
      %v203 = vpack.c.b16 %v195, %v194
      %212 = vmatprep.subr.bf16.mxu0 0
      %213 = vmatpush1.bf16.msra.mxu0 %v203
      %214 = vmatprep.subr.bf16.mxu0 0
      %215 = vmatpush1.bf16.msra.mxu0 %v202
      %216 = vmatprep.subr.bf16.mxu0 0
      %217 = vmatpush1.bf16.msra.mxu0 %v201
      %218 = vmatprep.subr.bf16.mxu0 0
      %219 = vmatpush1.bf16.msra.mxu0 %v200
      %220 = vmatprep.subr.bf16.mxu0 0
      %221 = vmatpush1.bf16.msra.mxu0 %v199
      %222 = vmatprep.subr.bf16.mxu0 0
      %223 = vmatpush1.bf16.msra.mxu0 %v198
      %224 = vmatprep.subr.bf16.mxu0 0
      %225 = vmatpush1.bf16.msra.mxu0 %v197
      %226 = vmatprep.subr.bf16.mxu0 0
      %227 = vmatpush1.bf16.msra.mxu0 %v196
      %228 = vmatprep.subr.bf16.mxu0 0
      %229 = vmatpush2.bf16.msra.mxu0 0
      %230 = vmatprep.subr.bf16.mxu0 0
      %231 = vmatpush2.bf16.msra.mxu0 0
      %232 = vmatprep.subr.bf16.mxu0 0
      %233 = vmatpush2.bf16.msra.mxu0 0
      %234 = vmatprep.subr.bf16.mxu0 0
      %235 = vmatpush2.bf16.msra.mxu0 0
      %236 = vmatprep.subr.bf16.mxu0 0
      %237 = vmatpush2.bf16.msra.mxu0 0
      %238 = vmatprep.subr.bf16.mxu0 0
      %239 = vmatpush2.bf16.msra.mxu0 0
      %240 = vmatprep.subr.bf16.mxu0 0
      %241 = vmatpush2.bf16.msra.mxu0 0
      %242 = vmatprep.subr.bf16.mxu0 0
      %243 = vmatpush2.bf16.msra.mxu0 0
      %244 = vmatprep.mubr.bf16.mxu0 0
      %245 = vmatmul.mubr.bf16.gmra.mxu0 %v147
      %v246 = vpop.f32.mrf.mxu0
      %v247 = vadd.f32 0.0, %v246
      %v248 = vpop.f32.mrf.mxu0
      %v249 = vpop.f32.mrf.mxu0
      %v250 = vadd.f32 0.0, %v249
      %v251 = vpop.f32.mrf.mxu0
      %252 = vdwg.mxu0
      %vm253 = vcmask 1041408
      %v254 = vsel %vm253, %v250, 0.0
      %vm257 = vcmask 1040384
      %v258 = vrot.slane %v247, 7
      %v259 = vrot.slane %v250, 7
      %v260 = vsel %vm257, %v258, %v259
      %261 = vrot.lane.b32.xlu0 %v258, 124
      %v262 = vpop.permute.xlu0 %261
      %263 = vrot.lane.b32.xlu0 %v260, 124
      %v264 = vpop.permute.xlu0 %263
      %v267 = vsel %vm257, 0.0, %v262
      %vm268 = vcmask 1042432
      %v269 = vsel %vm268, %v264, 0.0
      %v270 = vadd.f32 %v247, %v267
      %v271 = vadd.f32 %v254, %v269
      %v272 = vrot.slane %v247, 6
      %v273 = vrot.slane %v250, 6
      %v274 = vsel %vm253, %v272, %v273
      %275 = vrot.lane.b32.xlu0 %v272, 120
      %v276 = vpop.permute.xlu0 %275
      %277 = vrot.lane.b32.xlu0 %v274, 120
      %v278 = vpop.permute.xlu0 %277
      %v281 = vsel %vm253, 0.0, %v276
      %v282 = vadd.f32 %v270, %v281
      %v283 = vadd.f32 %v271, %v278
      %vm284 = vcmask 31744
      %285 = vst.msk [vmem:[%s143] sm:$0xff] %vm284, %v282
      %vm286 = vcmask 27648
      %287 = vst.msk [vmem:[%s143 + $0x8] sm:$0xf] %vm286, %v283
      %p288 = scmp.lt.s32.totalorder %s13, 1
      %s289 = scalar_select %p288, %s13, 1
      %s290 = smul.addr %s289, 2
      %s291 = smul.addr %s290, 8
      %s292 = scalar_lea.vmem %s2, %s291
      // Predicated region
      $region29: #{_lambda_.15} parent=27 // pred_check
        %p293 = pneg %p78
      $region30: #{_lambda_.15} parent=27 // pred_check_branch
        %295 = sbr.rel (%p293) target = $region32
      $region31: #{_lambda_.15} parent=27 // pred_region
        _
      $region32: #{_lambda_.15} parent=27 // pred_fallthru
        _
    $region28: #{_lambda_.15} parent=5 // pred_fallthru
      _
    %p296 = scmp.le.s32.totalorder 2, %s8
    // Predicated region
    $region33: #{_lambda_.15} parent=5 // pred_check
      %p297 = pneg %p296
    $region34: #{_lambda_.15} parent=5 // pred_check_branch
      %299 = sbr.rel (%p297) target = $region36
    $region35: #{_lambda_.15} parent=5 // pred_region
      %s300 = ssub.s32 %s8, 2
      // Predicated region
      $region37: #{_lambda_.15} parent=35 // pred_check
        %p301 = pneg %p84
      $region38: #{_lambda_.15} parent=35 // pred_check_branch
        %303 = sbr.rel (%p301) target = $region40
      $region39: #{_lambda_.15} parent=35 // pred_region
        %p304 = scmp.lt.s32.totalorder %s14, 1
        %s305 = scalar_select %p304, %s14, 1
        %s306 = smul.addr %s305, 2
        %s307 = smul.addr %s306, 8
        %s308 = scalar_lea.vmem %s2, %s307
      $region40: #{_lambda_.15} parent=35 // pred_fallthru
        _
    $region36: #{_lambda_.15} parent=5 // pred_fallthru
      _
  $region6: #{_lambda_.15} parent=0 // loop_footer
    %s12 = sadd.s32 1, %s8
  $region7: #{_lambda_.15} parent=0 // loop_footer_branch
    %7 = sbr.rel target = $region3
  $region8: #{_lambda_.15} parent=0 // loop_exit
    _

// kernel: _lambda_.12
$region0: #{_lambda_.12}
  #allocation0 [shape = 'u32[]', space=smem, size = 0x4, offset = 0x4, fixed_abs, tag = 'smem constant byte address 0x4 - core index']
  #allocation1 [shape = 'u32[144,128]{1,0:T(1,128)}', space=vmem, size = 0x12000, scoped, tag = 'internal scratch']
  %s0 = inlined_call_operand.vmem [shape: f32[4,12,64], index: 0, kind: input, shape index: {}, may-alias: {0,1}]
  %s1 = inlined_call_operand.vmem [shape: f32[4,12,64], index: 1, kind: input, shape index: {}, may-alias: {0,1}]
  %s2 = inlined_call_operand.vmem [shape: bf16[64,192], index: 2, kind: input, shape index: {}]
  %s3 = inlined_call_operand.vmem [shape: f32[1,192], index: 3, kind: input, shape index: {}]
  %s4 = inlined_call_operand.vmem [shape: bf16[64,64], index: 4, kind: input, shape index: {}]
  %s5 = inlined_call_operand.vmem [shape: f32[1,64], index: 5, kind: input, shape index: {}]
  %s6 = inlined_call_operand.vmem [shape: bf16[64,64], index: 6, kind: input, shape index: {}]
  %s7 = inlined_call_operand.vmem [shape: f32[1,64], index: 7, kind: input, shape index: {}]
  %s8 = inlined_call_operand.vmem [shape: bf16[64,128], index: 8, kind: input, shape index: {}]
  %s9 = inlined_call_operand.vmem [shape: f32[1,128], index: 9, kind: input, shape index: {}]
  %s10 = inlined_call_operand.vmem [shape: bf16[64,64], index: 10, kind: input, shape index: {}]
  %s11 = inlined_call_operand.vmem [shape: f32[1,64], index: 11, kind: input, shape index: {}]
  %s12 = inlined_call_operand.vmem [shape: f32[1,64], index: 12, kind: input, shape index: {}]
  %s13 = inlined_call_operand.vmem [shape: f32[1,64], index: 13, kind: input, shape index: {}]
  %s14 = inlined_call_operand.vmem [shape: f32[1,64], index: 14, kind: input, shape index: {}]
  %s15 = inlined_call_operand.vmem [shape: f32[1,64], index: 15, kind: input, shape index: {}]
  %s16 = inlined_call_operand.vmem [shape: f32[1,64], index: 16, kind: input, shape index: {}]
  %s17 = inlined_call_operand.vmem [shape: f32[1,64], index: 17, kind: input, shape index: {}]
  %s18 = inlined_call_operand.vmem [shape: bf16[64,128], index: 18, kind: input, shape index: {}]
  %s19 = inlined_call_operand.vmem [shape: f32[1,128], index: 19, kind: input, shape index: {}]
  %s20 = inlined_call_operand.vmem [shape: bf16[128,64], index: 20, kind: input, shape index: {}]
  %s21 = inlined_call_operand.vmem [shape: f32[1,64], index: 21, kind: input, shape index: {}]
  %s22 = inlined_call_operand.vmem [shape: f32[4,4,64], index: 22, kind: output, shape index: {}]
  %s23 = sld [smem:[#allocation0]]
  $region121: #{_lambda_.12} parent=0
    _
  %s25 = ssub.s32 1, %s23
  %s26 = scalar_select 0, %s25, %s23
  loop: start=0, step=1, limit=6
  $region2: #{_lambda_.12} parent=0 // loop_pre_header
    _
  $region3: #{_lambda_.12} parent=0 // loop_header
    %s28 = sphi 0, %s32
    %p29 = scmp.ge.s32.totalorder %s28, 6
    %s38 = sphi 0, %s40
    %s41 = sphi 0, %s38
    %s42 = sphi 0, %s41
    %s58 = sphi 0, %s42
    %s64 = sphi 0, %s66
    %s67 = sphi 0, %s64
    %s68 = sphi 0, %s67
    %s84 = sphi 0, %s68
    %s88 = sphi 0, %s88
    %s90 = sphi 0, %s88
    %s91 = sphi 0, %s90
    %s105 = sphi 0, %s91
    %s109 = sphi 0, %s109
    %s111 = sphi 0, %s109
    %s112 = sphi 0, %s111
    %s126 = sphi 0, %s112
    %s130 = sphi 0, %s130
    %s132 = sphi 0, %s130
    %s133 = sphi 0, %s132
    %s147 = sphi 0, %s133
    %s151 = sphi 0, %s151
    %s153 = sphi 0, %s151
    %s154 = sphi 0, %s153
    %s168 = sphi 0, %s154
    %s172 = sphi 0, %s172
    %s174 = sphi 0, %s172
    %s175 = sphi 0, %s174
    %s189 = sphi 0, %s175
    %s193 = sphi 0, %s193
    %s195 = sphi 0, %s193
    %s196 = sphi 0, %s195
    %s210 = sphi 0, %s196
    %s214 = sphi 0, %s214
    %s216 = sphi 0, %s214
    %s217 = sphi 0, %s216
    %s231 = sphi 0, %s217
    %s235 = sphi 0, %s235
    %s237 = sphi 0, %s235
    %s238 = sphi 0, %s237
    %s252 = sphi 0, %s238
    %s256 = sphi 0, %s256
    %s258 = sphi 0, %s256
    %s259 = sphi 0, %s258
    %s273 = sphi 0, %s259
    %s277 = sphi 0, %s277
    %s279 = sphi 0, %s277
    %s280 = sphi 0, %s279
    %s294 = sphi 0, %s280
    %s298 = sphi 0, %s298
    %s300 = sphi 0, %s298
    %s301 = sphi 0, %s300
    %s315 = sphi 0, %s301
    %s319 = sphi 0, %s319
    %s321 = sphi 0, %s319
    %s322 = sphi 0, %s321
    %s336 = sphi 0, %s322
    %s340 = sphi 0, %s340
    %s342 = sphi 0, %s340
    %s343 = sphi 0, %s342
    %s357 = sphi 0, %s343
    %s361 = sphi 0, %s361
    %s363 = sphi 0, %s361
    %s364 = sphi 0, %s363
    %s378 = sphi 0, %s364
    %s382 = sphi 0, %s382
    %s384 = sphi 0, %s382
    %s385 = sphi 0, %s384
    %s399 = sphi 0, %s385
    %s403 = sphi 0, %s403
    %s405 = sphi 0, %s403
    %s406 = sphi 0, %s405
    %s420 = sphi 0, %s406
    %s424 = sphi 0, %s424
    %s426 = sphi 0, %s424
    %s427 = sphi 0, %s426
    %s441 = sphi 0, %s427
    %s445 = sphi 0, %s445
    %s447 = sphi 0, %s445
    %s448 = sphi 0, %s447
    %s462 = sphi 0, %s448
    %s466 = sphi 0, %s466
    %s468 = sphi 0, %s466
    %s469 = sphi 0, %s468
    %s483 = sphi 0, %s469
    %s487 = sphi 0, %s487
    %s489 = sphi 0, %s487
    %s490 = sphi 0, %s489
    %s504 = sphi 0, %s490
    %s510 = sphi 0, %s512
    %s513 = sphi 0, %s510
    %s514 = sphi 0, %s513
    %s530 = sphi 0, %s514
  $region4: #{_lambda_.12} parent=0 // loop_header_branch
    %31 = sbr.rel (%p29) target = $region8
  $region5: #{_lambda_.12} parent=0 // loop_body
    %s33 = ssub.s32 %s28, 1
    %s34 = ssub.s32 %s28, 2
    %s35 = sadd.s32 %s28, 1
    %s36 = ssub.s32 %s28, %s35
    %p37 = scmp.eq.s32.totalorder %s36, 0
    %s39 = sadd.s32 %s38, 1
    %s40 = scalar_select %p37, %s38, %s39
    %p43 = pneg %p37
    %p44 = scmp.eq.s32.totalorder %s28, 3
    %p45 = por %p43, %p44
    %p46 = scmp.ne.s32.totalorder %s38, %s41
    %p47 = scmp.eq.s32.totalorder %s28, 0
    %p48 = por %p46, %p47
    %p49 = scmp.ne.s32.totalorder %s38, %s41
    %p50 = scmp.eq.s32.totalorder %s33, 3
    %p51 = por %p49, %p50
    %p52 = scmp.ne.s32.totalorder %s41, %s42
    %p53 = scmp.eq.s32.totalorder %s33, 0
    %p54 = por %p52, %p53
    %p55 = scmp.ne.s32.totalorder %s41, %s42
    %p56 = scmp.eq.s32.totalorder %s34, 3
    %p57 = por %p55, %p56
    %p59 = scmp.ne.s32.totalorder %s42, %s58
    %p60 = scmp.eq.s32.totalorder %s34, 0
    %p61 = por %p59, %p60
    %s62 = ssub.s32 %s28, %s35
    %p63 = scmp.eq.s32.totalorder %s62, 0
    %s65 = sadd.s32 %s64, 1
    %s66 = scalar_select %p63, %s64, %s65
    %p69 = pneg %p63
    %p70 = scmp.eq.s32.totalorder %s28, 3
    %p71 = por %p69, %p70
    %p72 = scmp.ne.s32.totalorder %s64, %s67
    %p73 = scmp.eq.s32.totalorder %s28, 0
    %p74 = por %p72, %p73
    %p75 = scmp.ne.s32.totalorder %s64, %s67
    %p76 = scmp.eq.s32.totalorder %s33, 3
    %p77 = por %p75, %p76
    %p78 = scmp.ne.s32.totalorder %s67, %s68
    %p79 = scmp.eq.s32.totalorder %s33, 0
    %p80 = por %p78, %p79
    %p81 = scmp.ne.s32.totalorder %s67, %s68
    %p82 = scmp.eq.s32.totalorder %s34, 3
    %p83 = por %p81, %p82
    %p85 = scmp.ne.s32.totalorder %s68, %s84
    %p86 = scmp.eq.s32.totalorder %s34, 0
    %p87 = por %p85, %p86
    %s89 = sadd.s32 %s88, 1
    %p92 = scmp.eq.s32.totalorder %s28, 3
    %p93 = scmp.ne.s32.totalorder %s88, %s90
    %p94 = scmp.eq.s32.totalorder %s28, 0
    %p95 = por %p93, %p94
    %p96 = scmp.ne.s32.totalorder %s88, %s90
    %p97 = scmp.eq.s32.totalorder %s33, 3
    %p98 = por %p96, %p97
    %p99 = scmp.ne.s32.totalorder %s90, %s91
    %p100 = scmp.eq.s32.totalorder %s33, 0
    %p101 = por %p99, %p100
    %p102 = scmp.ne.s32.totalorder %s90, %s91
    %p103 = scmp.eq.s32.totalorder %s34, 3
    %p104 = por %p102, %p103
    %p106 = scmp.ne.s32.totalorder %s91, %s105
    %p107 = scmp.eq.s32.totalorder %s34, 0
    %p108 = por %p106, %p107
    %s110 = sadd.s32 %s109, 1
    %p113 = scmp.eq.s32.totalorder %s28, 3
    %p114 = scmp.ne.s32.totalorder %s109, %s111
    %p115 = scmp.eq.s32.totalorder %s28, 0
    %p116 = por %p114, %p115
    %p117 = scmp.ne.s32.totalorder %s109, %s111
    %p118 = scmp.eq.s32.totalorder %s33, 3
    %p119 = por %p117, %p118
    %p120 = scmp.ne.s32.totalorder %s111, %s112
    %p121 = scmp.eq.s32.totalorder %s33, 0
    %p122 = por %p120, %p121
    %p123 = scmp.ne.s32.totalorder %s111, %s112
    %p124 = scmp.eq.s32.totalorder %s34, 3
    %p125 = por %p123, %p124
    %p127 = scmp.ne.s32.totalorder %s112, %s126
    %p128 = scmp.eq.s32.totalorder %s34, 0
    %p129 = por %p127, %p128
    %s131 = sadd.s32 %s130, 1
    %p134 = scmp.eq.s32.totalorder %s28, 3
    %p135 = scmp.ne.s32.totalorder %s130, %s132
    %p136 = scmp.eq.s32.totalorder %s28, 0
    %p137 = por %p135, %p136
    %p138 = scmp.ne.s32.totalorder %s130, %s132
    %p139 = scmp.eq.s32.totalorder %s33, 3
    %p140 = por %p138, %p139
    %p141 = scmp.ne.s32.totalorder %s132, %s133
    %p142 = scmp.eq.s32.totalorder %s33, 0
    %p143 = por %p141, %p142
    %p144 = scmp.ne.s32.totalorder %s132, %s133
    %p145 = scmp.eq.s32.totalorder %s34, 3
    %p146 = por %p144, %p145
    %p148 = scmp.ne.s32.totalorder %s133, %s147
    %p149 = scmp.eq.s32.totalorder %s34, 0
    %p150 = por %p148, %p149
    %s152 = sadd.s32 %s151, 1
    %p155 = scmp.eq.s32.totalorder %s28, 3
    %p156 = scmp.ne.s32.totalorder %s151, %s153
    %p157 = scmp.eq.s32.totalorder %s28, 0
    %p158 = por %p156, %p157
    %p159 = scmp.ne.s32.totalorder %s151, %s153
    %p160 = scmp.eq.s32.totalorder %s33, 3
    %p161 = por %p159, %p160
    %p162 = scmp.ne.s32.totalorder %s153, %s154
    %p163 = scmp.eq.s32.totalorder %s33, 0
    %p164 = por %p162, %p163
    %p165 = scmp.ne.s32.totalorder %s153, %s154
    %p166 = scmp.eq.s32.totalorder %s34, 3
    %p167 = por %p165, %p166
    %p169 = scmp.ne.s32.totalorder %s154, %s168
    %p170 = scmp.eq.s32.totalorder %s34, 0
    %p171 = por %p169, %p170
    %s173 = sadd.s32 %s172, 1
    %p176 = scmp.eq.s32.totalorder %s28, 3
    %p177 = scmp.ne.s32.totalorder %s172, %s174
    %p178 = scmp.eq.s32.totalorder %s28, 0
    %p179 = por %p177, %p178
    %p180 = scmp.ne.s32.totalorder %s172, %s174
    %p181 = scmp.eq.s32.totalorder %s33, 3
    %p182 = por %p180, %p181
    %p183 = scmp.ne.s32.totalorder %s174, %s175
    %p184 = scmp.eq.s32.totalorder %s33, 0
    %p185 = por %p183, %p184
    %p186 = scmp.ne.s32.totalorder %s174, %s175
    %p187 = scmp.eq.s32.totalorder %s34, 3
    %p188 = por %p186, %p187
    %p190 = scmp.ne.s32.totalorder %s175, %s189
    %p191 = scmp.eq.s32.totalorder %s34, 0
    %p192 = por %p190, %p191
    %s194 = sadd.s32 %s193, 1
    %p197 = scmp.eq.s32.totalorder %s28, 3
    %p198 = scmp.ne.s32.totalorder %s193, %s195
    %p199 = scmp.eq.s32.totalorder %s28, 0
    %p200 = por %p198, %p199
    %p201 = scmp.ne.s32.totalorder %s193, %s195
    %p202 = scmp.eq.s32.totalorder %s33, 3
    %p203 = por %p201, %p202
    %p204 = scmp.ne.s32.totalorder %s195, %s196
    %p205 = scmp.eq.s32.totalorder %s33, 0
    %p206 = por %p204, %p205
    %p207 = scmp.ne.s32.totalorder %s195, %s196
    %p208 = scmp.eq.s32.totalorder %s34, 3
    %p209 = por %p207, %p208
    %p211 = scmp.ne.s32.totalorder %s196, %s210
    %p212 = scmp.eq.s32.totalorder %s34, 0
    %p213 = por %p211, %p212
    %s215 = sadd.s32 %s214, 1
    %p218 = scmp.eq.s32.totalorder %s28, 3
    %p219 = scmp.ne.s32.totalorder %s214, %s216
    %p220 = scmp.eq.s32.totalorder %s28, 0
    %p221 = por %p219, %p220
    %p222 = scmp.ne.s32.totalorder %s214, %s216
    %p223 = scmp.eq.s32.totalorder %s33, 3
    %p224 = por %p222, %p223
    %p225 = scmp.ne.s32.totalorder %s216, %s217
    %p226 = scmp.eq.s32.totalorder %s33, 0
    %p227 = por %p225, %p226
    %p228 = scmp.ne.s32.totalorder %s216, %s217
    %p229 = scmp.eq.s32.totalorder %s34, 3
    %p230 = por %p228, %p229
    %p232 = scmp.ne.s32.totalorder %s217, %s231
    %p233 = scmp.eq.s32.totalorder %s34, 0
    %p234 = por %p232, %p233
    %s236 = sadd.s32 %s235, 1
    %p239 = scmp.eq.s32.totalorder %s28, 3
    %p240 = scmp.ne.s32.totalorder %s235, %s237
    %p241 = scmp.eq.s32.totalorder %s28, 0
    %p242 = por %p240, %p241
    %p243 = scmp.ne.s32.totalorder %s235, %s237
    %p244 = scmp.eq.s32.totalorder %s33, 3
    %p245 = por %p243, %p244
    %p246 = scmp.ne.s32.totalorder %s237, %s238
    %p247 = scmp.eq.s32.totalorder %s33, 0
    %p248 = por %p246, %p247
    %p249 = scmp.ne.s32.totalorder %s237, %s238
    %p250 = scmp.eq.s32.totalorder %s34, 3
    %p251 = por %p249, %p250
    %p253 = scmp.ne.s32.totalorder %s238, %s252
    %p254 = scmp.eq.s32.totalorder %s34, 0
    %p255 = por %p253, %p254
    %s257 = sadd.s32 %s256, 1
    %p260 = scmp.eq.s32.totalorder %s28, 3
    %p261 = scmp.ne.s32.totalorder %s256, %s258
    %p262 = scmp.eq.s32.totalorder %s28, 0
    %p263 = por %p261, %p262
    %p264 = scmp.ne.s32.totalorder %s256, %s258
    %p265 = scmp.eq.s32.totalorder %s33, 3
    %p266 = por %p264, %p265
    %p267 = scmp.ne.s32.totalorder %s258, %s259
    %p268 = scmp.eq.s32.totalorder %s33, 0
    %p269 = por %p267, %p268
    %p270 = scmp.ne.s32.totalorder %s258, %s259
    %p271 = scmp.eq.s32.totalorder %s34, 3
    %p272 = por %p270, %p271
    %p274 = scmp.ne.s32.totalorder %s259, %s273
    %p275 = scmp.eq.s32.totalorder %s34, 0
    %p276 = por %p274, %p275
    %s278 = sadd.s32 %s277, 1
    %p281 = scmp.eq.s32.totalorder %s28, 3
    %p282 = scmp.ne.s32.totalorder %s277, %s279
    %p283 = scmp.eq.s32.totalorder %s28, 0
    %p284 = por %p282, %p283
    %p285 = scmp.ne.s32.totalorder %s277, %s279
    %p286 = scmp.eq.s32.totalorder %s33, 3
    %p287 = por %p285, %p286
    %p288 = scmp.ne.s32.totalorder %s279, %s280
    %p289 = scmp.eq.s32.totalorder %s33, 0
    %p290 = por %p288, %p289
    %p291 = scmp.ne.s32.totalorder %s279, %s280
    %p292 = scmp.eq.s32.totalorder %s34, 3
    %p293 = por %p291, %p292
    %p295 = scmp.ne.s32.totalorder %s280, %s294
    %p296 = scmp.eq.s32.totalorder %s34, 0
    %p297 = por %p295, %p296
    %s299 = sadd.s32 %s298, 1
    %p302 = scmp.eq.s32.totalorder %s28, 3
    %p303 = scmp.ne.s32.totalorder %s298, %s300
    %p304 = scmp.eq.s32.totalorder %s28, 0
    %p305 = por %p303, %p304
    %p306 = scmp.ne.s32.totalorder %s298, %s300
    %p307 = scmp.eq.s32.totalorder %s33, 3
    %p308 = por %p306, %p307
    %p309 = scmp.ne.s32.totalorder %s300, %s301
    %p310 = scmp.eq.s32.totalorder %s33, 0
    %p311 = por %p309, %p310
    %p312 = scmp.ne.s32.totalorder %s300, %s301
    %p313 = scmp.eq.s32.totalorder %s34, 3
    %p314 = por %p312, %p313
    %p316 = scmp.ne.s32.totalorder %s301, %s315
    %p317 = scmp.eq.s32.totalorder %s34, 0
    %p318 = por %p316, %p317
    %s320 = sadd.s32 %s319, 1
    %p323 = scmp.eq.s32.totalorder %s28, 3
    %p324 = scmp.ne.s32.totalorder %s319, %s321
    %p325 = scmp.eq.s32.totalorder %s28, 0
    %p326 = por %p324, %p325
    %p327 = scmp.ne.s32.totalorder %s319, %s321
    %p328 = scmp.eq.s32.totalorder %s33, 3
    %p329 = por %p327, %p328
    %p330 = scmp.ne.s32.totalorder %s321, %s322
    %p331 = scmp.eq.s32.totalorder %s33, 0
    %p332 = por %p330, %p331
    %p333 = scmp.ne.s32.totalorder %s321, %s322
    %p334 = scmp.eq.s32.totalorder %s34, 3
    %p335 = por %p333, %p334
    %p337 = scmp.ne.s32.totalorder %s322, %s336
    %p338 = scmp.eq.s32.totalorder %s34, 0
    %p339 = por %p337, %p338
    %s341 = sadd.s32 %s340, 1
    %p344 = scmp.eq.s32.totalorder %s28, 3
    %p345 = scmp.ne.s32.totalorder %s340, %s342
    %p346 = scmp.eq.s32.totalorder %s28, 0
    %p347 = por %p345, %p346
    %p348 = scmp.ne.s32.totalorder %s340, %s342
    %p349 = scmp.eq.s32.totalorder %s33, 3
    %p350 = por %p348, %p349
    %p351 = scmp.ne.s32.totalorder %s342, %s343
    %p352 = scmp.eq.s32.totalorder %s33, 0
    %p353 = por %p351, %p352
    %p354 = scmp.ne.s32.totalorder %s342, %s343
    %p355 = scmp.eq.s32.totalorder %s34, 3
    %p356 = por %p354, %p355
    %p358 = scmp.ne.s32.totalorder %s343, %s357
    %p359 = scmp.eq.s32.totalorder %s34, 0
    %p360 = por %p358, %p359
    %s362 = sadd.s32 %s361, 1
    %p365 = scmp.eq.s32.totalorder %s28, 3
    %p366 = scmp.ne.s32.totalorder %s361, %s363
    %p367 = scmp.eq.s32.totalorder %s28, 0
    %p368 = por %p366, %p367
    %p369 = scmp.ne.s32.totalorder %s361, %s363
    %p370 = scmp.eq.s32.totalorder %s33, 3
    %p371 = por %p369, %p370
    %p372 = scmp.ne.s32.totalorder %s363, %s364
    %p373 = scmp.eq.s32.totalorder %s33, 0
    %p374 = por %p372, %p373
    %p375 = scmp.ne.s32.totalorder %s363, %s364
    %p376 = scmp.eq.s32.totalorder %s34, 3
    %p377 = por %p375, %p376
    %p379 = scmp.ne.s32.totalorder %s364, %s378
    %p380 = scmp.eq.s32.totalorder %s34, 0
    %p381 = por %p379, %p380
    %s383 = sadd.s32 %s382, 1
    %p386 = scmp.eq.s32.totalorder %s28, 3
    %p387 = scmp.ne.s32.totalorder %s382, %s384
    %p388 = scmp.eq.s32.totalorder %s28, 0
    %p389 = por %p387, %p388
    %p390 = scmp.ne.s32.totalorder %s382, %s384
    %p391 = scmp.eq.s32.totalorder %s33, 3
    %p392 = por %p390, %p391
    %p393 = scmp.ne.s32.totalorder %s384, %s385
    %p394 = scmp.eq.s32.totalorder %s33, 0
    %p395 = por %p393, %p394
    %p396 = scmp.ne.s32.totalorder %s384, %s385
    %p397 = scmp.eq.s32.totalorder %s34, 3
    %p398 = por %p396, %p397
    %p400 = scmp.ne.s32.totalorder %s385, %s399
    %p401 = scmp.eq.s32.totalorder %s34, 0
    %p402 = por %p400, %p401
    %s404 = sadd.s32 %s403, 1
    %p407 = scmp.eq.s32.totalorder %s28, 3
    %p408 = scmp.ne.s32.totalorder %s403, %s405
    %p409 = scmp.eq.s32.totalorder %s28, 0
    %p410 = por %p408, %p409
    %p411 = scmp.ne.s32.totalorder %s403, %s405
    %p412 = scmp.eq.s32.totalorder %s33, 3
    %p413 = por %p411, %p412
    %p414 = scmp.ne.s32.totalorder %s405, %s406
    %p415 = scmp.eq.s32.totalorder %s33, 0
    %p416 = por %p414, %p415
    %p417 = scmp.ne.s32.totalorder %s405, %s406
    %p418 = scmp.eq.s32.totalorder %s34, 3
    %p419 = por %p417, %p418
    %p421 = scmp.ne.s32.totalorder %s406, %s420
    %p422 = scmp.eq.s32.totalorder %s34, 0
    %p423 = por %p421, %p422
    %s425 = sadd.s32 %s424, 1
    %p428 = scmp.eq.s32.totalorder %s28, 3
    %p429 = scmp.ne.s32.totalorder %s424, %s426
    %p430 = scmp.eq.s32.totalorder %s28, 0
    %p431 = por %p429, %p430
    %p432 = scmp.ne.s32.totalorder %s424, %s426
    %p433 = scmp.eq.s32.totalorder %s33, 3
    %p434 = por %p432, %p433
    %p435 = scmp.ne.s32.totalorder %s426, %s427
    %p436 = scmp.eq.s32.totalorder %s33, 0
    %p437 = por %p435, %p436
    %p438 = scmp.ne.s32.totalorder %s426, %s427
    %p439 = scmp.eq.s32.totalorder %s34, 3
    %p440 = por %p438, %p439
    %p442 = scmp.ne.s32.totalorder %s427, %s441
    %p443 = scmp.eq.s32.totalorder %s34, 0
    %p444 = por %p442, %p443
    %s446 = sadd.s32 %s445, 1
    %p449 = scmp.eq.s32.totalorder %s28, 3
    %p450 = scmp.ne.s32.totalorder %s445, %s447
    %p451 = scmp.eq.s32.totalorder %s28, 0
    %p452 = por %p450, %p451
    %p453 = scmp.ne.s32.totalorder %s445, %s447
    %p454 = scmp.eq.s32.totalorder %s33, 3
    %p455 = por %p453, %p454
    %p456 = scmp.ne.s32.totalorder %s447, %s448
    %p457 = scmp.eq.s32.totalorder %s33, 0
    %p458 = por %p456, %p457
    %p459 = scmp.ne.s32.totalorder %s447, %s448
    %p460 = scmp.eq.s32.totalorder %s34, 3
    %p461 = por %p459, %p460
    %p463 = scmp.ne.s32.totalorder %s448, %s462
    %p464 = scmp.eq.s32.totalorder %s34, 0
    %p465 = por %p463, %p464
    %s467 = sadd.s32 %s466, 1
    %p470 = scmp.eq.s32.totalorder %s28, 3
    %p471 = scmp.ne.s32.totalorder %s466, %s468
    %p472 = scmp.eq.s32.totalorder %s28, 0
    %p473 = por %p471, %p472
    %p474 = scmp.ne.s32.totalorder %s466, %s468
    %p475 = scmp.eq.s32.totalorder %s33, 3
    %p476 = por %p474, %p475
    %p477 = scmp.ne.s32.totalorder %s468, %s469
    %p478 = scmp.eq.s32.totalorder %s33, 0
    %p479 = por %p477, %p478
    %p480 = scmp.ne.s32.totalorder %s468, %s469
    %p481 = scmp.eq.s32.totalorder %s34, 3
    %p482 = por %p480, %p481
    %p484 = scmp.ne.s32.totalorder %s469, %s483
    %p485 = scmp.eq.s32.totalorder %s34, 0
    %p486 = por %p484, %p485
    %s488 = sadd.s32 %s487, 1
    %p491 = scmp.eq.s32.totalorder %s28, 3
    %p492 = scmp.ne.s32.totalorder %s487, %s489
    %p493 = scmp.eq.s32.totalorder %s28, 0
    %p494 = por %p492, %p493
    %p495 = scmp.ne.s32.totalorder %s487, %s489
    %p496 = scmp.eq.s32.totalorder %s33, 3
    %p497 = por %p495, %p496
    %p498 = scmp.ne.s32.totalorder %s489, %s490
    %p499 = scmp.eq.s32.totalorder %s33, 0
    %p500 = por %p498, %p499
    %p501 = scmp.ne.s32.totalorder %s489, %s490
    %p502 = scmp.eq.s32.totalorder %s34, 3
    %p503 = por %p501, %p502
    %p505 = scmp.ne.s32.totalorder %s490, %s504
    %p506 = scmp.eq.s32.totalorder %s34, 0
    %p507 = por %p505, %p506
    %s508 = ssub.s32 %s28, %s35
    %p509 = scmp.eq.s32.totalorder %s508, 0
    %s511 = sadd.s32 %s510, 1
    %s512 = scalar_select %p509, %s510, %s511
    %p515 = pneg %p509
    %p516 = scmp.eq.s32.totalorder %s28, 3
    %p517 = por %p515, %p516
    %p518 = scmp.ne.s32.totalorder %s510, %s513
    %p519 = scmp.eq.s32.totalorder %s28, 0
    %p520 = por %p518, %p519
    %p521 = scmp.ne.s32.totalorder %s510, %s513
    %p522 = scmp.eq.s32.totalorder %s33, 3
    %p523 = por %p521, %p522
    %p524 = scmp.ne.s32.totalorder %s513, %s514
    %p525 = scmp.eq.s32.totalorder %s33, 0
    %p526 = por %p524, %p525
    %p527 = scmp.ne.s32.totalorder %s513, %s514
    %p528 = scmp.eq.s32.totalorder %s34, 3
    %p529 = por %p527, %p528
    %p531 = scmp.ne.s32.totalorder %s514, %s530
    %p532 = scmp.eq.s32.totalorder %s34, 0
    %p533 = por %p531, %p532
    %p534 = scmp.le.s32.totalorder 1, %s28
    %p535 = scmp.lt.s32.totalorder %s28, 5
    %p536 = pnand %p534, %p535
    %p537 = pneg %p536
    // Predicated region
    $region9: #{_lambda_.12} parent=5 // pred_check
      _
    $region10: #{_lambda_.12} parent=5 // pred_check_branch
      %539 = sbr.rel (%p536) target = $region12
    $region11: #{_lambda_.12} parent=5 // pred_region
      %s540 = ssub.s32 %s28, 1
      // Predicated region
      $region13: #{_lambda_.12} parent=11 // pred_check
        %p541 = pneg %p101
      $region14: #{_lambda_.12} parent=11 // pred_check_branch
        %543 = sbr.rel (%p541) target = $region16
      $region15: #{_lambda_.12} parent=11 // pred_region
        _
      $region16: #{_lambda_.12} parent=11 // pred_fallthru
        _
      // Predicated region
      $region17: #{_lambda_.12} parent=11 // pred_check
        %p544 = pneg %p122
      $region18: #{_lambda_.12} parent=11 // pred_check_branch
        %546 = sbr.rel (%p544) target = $region20
      $region19: #{_lambda_.12} parent=11 // pred_region
        _
      $region20: #{_lambda_.12} parent=11 // pred_fallthru
        _
      // Predicated region
      $region21: #{_lambda_.12} parent=11 // pred_check
        %p547 = pneg %p143
      $region22: #{_lambda_.12} parent=11 // pred_check_branch
        %549 = sbr.rel (%p547) target = $region24
      $region23: #{_lambda_.12} parent=11 // pred_region
        _
      $region24: #{_lambda_.12} parent=11 // pred_fallthru
        _
      // Predicated region
      $region25: #{_lambda_.12} parent=11 // pred_check
        %p550 = pneg %p164
      $region26: #{_lambda_.12} parent=11 // pred_check_branch
        %552 = sbr.rel (%p550) target = $region28
      $region27: #{_lambda_.12} parent=11 // pred_region
        _
      $region28: #{_lambda_.12} parent=11 // pred_fallthru
        _
      // Predicated region
      $region29: #{_lambda_.12} parent=11 // pred_check
        %p553 = pneg %p185
      $region30: #{_lambda_.12} parent=11 // pred_check_branch
        %555 = sbr.rel (%p553) target = $region32
      $region31: #{_lambda_.12} parent=11 // pred_region
        _
      $region32: #{_lambda_.12} parent=11 // pred_fallthru
        _
      // Predicated region
      $region33: #{_lambda_.12} parent=11 // pred_check
        %p556 = pneg %p206
      $region34: #{_lambda_.12} parent=11 // pred_check_branch
        %558 = sbr.rel (%p556) target = $region36
      $region35: #{_lambda_.12} parent=11 // pred_region
        _
      $region36: #{_lambda_.12} parent=11 // pred_fallthru
        _
      // Predicated region
      $region37: #{_lambda_.12} parent=11 // pred_check
        %p559 = pneg %p227
      $region38: #{_lambda_.12} parent=11 // pred_check_branch
        %561 = sbr.rel (%p559) target = $region40
      $region39: #{_lambda_.12} parent=11 // pred_region
        _
      $region40: #{_lambda_.12} parent=11 // pred_fallthru
        _
      // Predicated region
      $region41: #{_lambda_.12} parent=11 // pred_check
        %p562 = pneg %p248
      $region42: #{_lambda_.12} parent=11 // pred_check_branch
        %564 = sbr.rel (%p562) target = $region44
      $region43: #{_lambda_.12} parent=11 // pred_region
        _
      $region44: #{_lambda_.12} parent=11 // pred_fallthru
        _
      // Predicated region
      $region45: #{_lambda_.12} parent=11 // pred_check
        %p565 = pneg %p269
      $region46: #{_lambda_.12} parent=11 // pred_check_branch
        %567 = sbr.rel (%p565) target = $region48
      $region47: #{_lambda_.12} parent=11 // pred_region
        _
      $region48: #{_lambda_.12} parent=11 // pred_fallthru
        _
      // Predicated region
      $region49: #{_lambda_.12} parent=11 // pred_check
        %p568 = pneg %p290
      $region50: #{_lambda_.12} parent=11 // pred_check_branch
        %570 = sbr.rel (%p568) target = $region52
      $region51: #{_lambda_.12} parent=11 // pred_region
        _
      $region52: #{_lambda_.12} parent=11 // pred_fallthru
        _
      // Predicated region
      $region53: #{_lambda_.12} parent=11 // pred_check
        %p571 = pneg %p311
      $region54: #{_lambda_.12} parent=11 // pred_check_branch
        %573 = sbr.rel (%p571) target = $region56
      $region55: #{_lambda_.12} parent=11 // pred_region
        _
      $region56: #{_lambda_.12} parent=11 // pred_fallthru
        _
      // Predicated region
      $region57: #{_lambda_.12} parent=11 // pred_check
        %p574 = pneg %p332
      $region58: #{_lambda_.12} parent=11 // pred_check_branch
        %576 = sbr.rel (%p574) target = $region60
      $region59: #{_lambda_.12} parent=11 // pred_region
        _
      $region60: #{_lambda_.12} parent=11 // pred_fallthru
        _
      // Predicated region
      $region61: #{_lambda_.12} parent=11 // pred_check
        %p577 = pneg %p353
      $region62: #{_lambda_.12} parent=11 // pred_check_branch
        %579 = sbr.rel (%p577) target = $region64
      $region63: #{_lambda_.12} parent=11 // pred_region
        _
      $region64: #{_lambda_.12} parent=11 // pred_fallthru
        _
      // Predicated region
      $region65: #{_lambda_.12} parent=11 // pred_check
        %p580 = pneg %p374
      $region66: #{_lambda_.12} parent=11 // pred_check_branch
        %582 = sbr.rel (%p580) target = $region68
      $region67: #{_lambda_.12} parent=11 // pred_region
        _
      $region68: #{_lambda_.12} parent=11 // pred_fallthru
        _
      // Predicated region
      $region69: #{_lambda_.12} parent=11 // pred_check
        %p583 = pneg %p395
      $region70: #{_lambda_.12} parent=11 // pred_check_branch
        %585 = sbr.rel (%p583) target = $region72
      $region71: #{_lambda_.12} parent=11 // pred_region
        _
      $region72: #{_lambda_.12} parent=11 // pred_fallthru
        _
      // Predicated region
      $region73: #{_lambda_.12} parent=11 // pred_check
        %p586 = pneg %p416
      $region74: #{_lambda_.12} parent=11 // pred_check_branch
        %588 = sbr.rel (%p586) target = $region76
      $region75: #{_lambda_.12} parent=11 // pred_region
        _
      $region76: #{_lambda_.12} parent=11 // pred_fallthru
        _
      // Predicated region
      $region77: #{_lambda_.12} parent=11 // pred_check
        %p589 = pneg %p437
      $region78: #{_lambda_.12} parent=11 // pred_check_branch
        %591 = sbr.rel (%p589) target = $region80
      $region79: #{_lambda_.12} parent=11 // pred_region
        _
      $region80: #{_lambda_.12} parent=11 // pred_fallthru
        _
      // Predicated region
      $region81: #{_lambda_.12} parent=11 // pred_check
        %p592 = pneg %p458
      $region82: #{_lambda_.12} parent=11 // pred_check_branch
        %594 = sbr.rel (%p592) target = $region84
      $region83: #{_lambda_.12} parent=11 // pred_region
        _
      $region84: #{_lambda_.12} parent=11 // pred_fallthru
        _
      // Predicated region
      $region85: #{_lambda_.12} parent=11 // pred_check
        %p595 = pneg %p479
      $region86: #{_lambda_.12} parent=11 // pred_check_branch
        %597 = sbr.rel (%p595) target = $region88
      $region87: #{_lambda_.12} parent=11 // pred_region
        _
      $region88: #{_lambda_.12} parent=11 // pred_fallthru
        _
      // Predicated region
      $region89: #{_lambda_.12} parent=11 // pred_check
        %p598 = pneg %p500
      $region90: #{_lambda_.12} parent=11 // pred_check_branch
        %600 = sbr.rel (%p598) target = $region92
      $region91: #{_lambda_.12} parent=11 // pred_region
        _
      $region92: #{_lambda_.12} parent=11 // pred_fallthru
        _
    $region12: #{_lambda_.12} parent=5 // pred_fallthru
      _
    %p601 = scmp.lt.s32.totalorder %s28, 4
    // Predicated region
    $region93: #{_lambda_.12} parent=5 // pred_check
      %p602 = pneg %p601
    $region94: #{_lambda_.12} parent=5 // pred_check_branch
      %604 = sbr.rel (%p602) target = $region96
    $region95: #{_lambda_.12} parent=5 // pred_region
      // Predicated region
      $region97: #{_lambda_.12} parent=95 // pred_check
        %p605 = pneg %p48
      $region98: #{_lambda_.12} parent=95 // pred_check_branch
        %607 = sbr.rel (%p605) target = $region100
      $region99: #{_lambda_.12} parent=95 // pred_region
        %p608 = scmp.lt.s32.totalorder %s28, 3
        %s609 = scalar_select %p608, %s28, 3
        %s610 = smul.addr %s609, 2
        %s611 = smul.addr %s610, 8
        %s612 = scalar_lea.vmem %s0, %s611
      $region100: #{_lambda_.12} parent=95 // pred_fallthru
        _
      // Predicated region
      $region101: #{_lambda_.12} parent=95 // pred_check
        %p613 = pneg %p74
      $region102: #{_lambda_.12} parent=95 // pred_check_branch
        %615 = sbr.rel (%p613) target = $region104
      $region103: #{_lambda_.12} parent=95 // pred_region
        %p616 = scmp.lt.s32.totalorder %s28, 3
        %s617 = scalar_select %p616, %s28, 3
        %s618 = smul.addr %s617, 2
        %s619 = smul.addr %s618, 8
        %s620 = scalar_lea.vmem %s1, %s619
      $region104: #{_lambda_.12} parent=95 // pred_fallthru
        _
    $region96: #{_lambda_.12} parent=5 // pred_fallthru
      _
    %p621 = scmp.le.s32.totalorder 1, %s28
    %p622 = scmp.lt.s32.totalorder %s28, 5
    %p623 = pnand %p621, %p622
    %p624 = pneg %p623
    // Predicated region
    $region105: #{_lambda_.12} parent=5 // pred_check
      _
    $region106: #{_lambda_.12} parent=5 // pred_check_branch
      %626 = sbr.rel (%p623) target = $region108
    $region107: #{_lambda_.12} parent=5 // pred_region
      %s627 = ssub.s32 %s28, 1
      %p628 = scmp.lt.s32.totalorder %s33, 3
      %s629 = scalar_select %p628, %s33, 3
      %s630 = smul.addr %s629, 2
      %s631 = smul.addr %s630, 8
      %s632 = scalar_lea.vmem %s0, %s631
      %p633 = pneg %p54
      %p634 = pneg %p51
      %p635 = scmp.lt.s32.totalorder %s33, 3
      %s636 = scalar_select %p635, %s33, 3
      %s637 = smul.addr %s636, 2
      %s638 = smul.addr %s637, 8
      %s639 = scalar_lea.vmem %s1, %s638
      %p640 = pneg %p80
      %p641 = pneg %p77
      %p642 = pneg %p101
      %p643 = pneg %p98
      %p644 = pneg %p122
      %p645 = pneg %p119
      %p646 = pneg %p143
      %p647 = pneg %p140
      %p648 = pneg %p164
      %p649 = pneg %p161
      %p650 = pneg %p185
      %p651 = pneg %p182
      %p652 = pneg %p206
      %p653 = pneg %p203
      %p654 = pneg %p227
      %p655 = pneg %p224
      %p656 = pneg %p248
      %p657 = pneg %p245
      %p658 = pneg %p269
      %p659 = pneg %p266
      %p660 = pneg %p290
      %p661 = pneg %p287
      %p662 = pneg %p311
      %p663 = pneg %p308
      %p664 = pneg %p332
      %p665 = pneg %p329
      %p666 = pneg %p353
      %p667 = pneg %p350
      %p668 = pneg %p374
      %p669 = pneg %p371
      %p670 = pneg %p395
      %p671 = pneg %p392
      %p672 = pneg %p416
      %p673 = pneg %p413
      %p674 = pneg %p437
      %p675 = pneg %p434
      %p676 = pneg %p458
      %p677 = pneg %p455
      %p678 = pneg %p479
      %p679 = pneg %p476
      %p680 = pneg %p500
      %p681 = pneg %p497
      %p682 = pneg %p526
      %p683 = pneg %p523
      %p684 = scmp.lt.s32.totalorder %s33, 3
      %s685 = scalar_select %p684, %s33, 3
      %s686 = smul.addr %s685, 4
      %s687 = scalar_lea.vmem %s22, %s686
      %p688 = scmp.lt.s32.totalorder %s33, 3
      %s689 = scalar_select %p688, %s33, 3
      %s690 = smul.addr %s689, 2
      %s691 = smul.addr %s690, 8
      %s692 = scalar_lea.vmem %s0, %s691
      %p693 = scmp.lt.s32.totalorder %s33, 3
      %s694 = scalar_select %p693, %s33, 3
      %s695 = smul.addr %s694, 2
      %s696 = smul.addr %s695, 8
      %s697 = scalar_lea.vmem %s1, %s696
      %p698 = scmp.lt.s32.totalorder %s33, 3
      %s699 = scalar_select %p698, %s33, 3
      %s700 = smul.addr %s699, 4
      %s701 = scalar_lea.vmem %s22, %s700
      %v703 = vld [vmem:[%s692] sm:$0xff]
      %v704 = vld [vmem:[%s692 + $0x8] sm:$0xf]
      %v705 = vld [vmem:[%s697] sm:$0xff]
      %v706 = vld [vmem:[%s697 + $0x8] sm:$0xf]
      %v707 = vpack.c.bf16 %v704, %v703
      %v708 = vld [vmem:[%s2] sm:$0xff]
      %v709 = vld [vmem:[%s2 + $0x8] sm:$0xff]
      %v710 = vld [vmem:[%s2 + $0x10] sm:$0xff]
      %v711 = vld [vmem:[%s2 + $0x18] sm:$0xff]
      %v712 = vld [vmem:[%s2 + $0x20] sm:$0xff]
      %v713 = vld [vmem:[%s2 + $0x28] sm:$0xff]
      %v714 = vld [vmem:[%s2 + $0x30] sm:$0xff]
      %v715 = vld [vmem:[%s2 + $0x38] sm:$0xff]
      %v716 = vld [vmem:[%s3] sm:$0x3]
      %v718 = vlaneseq
      %v719 = vshrl.u32 %v718, 7
      %v720 = vsub.s32 0, %v719
      %v721 = vrot.slane %v716, %v720
      %v722 = vlaneseq
      %v723 = vshrl.u32 %v722, 7
      %v724 = vsub.s32 1, %v723
      %v725 = vrot.slane %v716, %v724
      %v736 = vunpack.c.l.b16 %v708
      %v737 = vunpack.c.h.b16 %v708
      %v738 = vunpack.c.l.b16 %v709
      %v739 = vunpack.c.h.b16 %v709
      %v740 = vunpack.c.l.b16 %v710
      %v741 = vunpack.c.h.b16 %v710
      %v742 = vunpack.c.l.b16 %v711
      %v743 = vunpack.c.h.b16 %v711
      %v744 = vunpack.c.l.b16 %v712
      %v745 = vunpack.c.h.b16 %v712
      %v746 = vunpack.c.l.b16 %v713
      %v747 = vunpack.c.h.b16 %v713
      %v748 = vunpack.c.l.b16 %v714
      %v749 = vunpack.c.h.b16 %v714
      %v750 = vunpack.c.l.b16 %v715
      %v751 = vunpack.c.h.b16 %v715
      %v752 = vpack.c.b16 %v738, %v736
      %v753 = vpack.c.b16 %v739, %v737
      %v754 = vpack.c.b16 %v742, %v740
      %v755 = vpack.c.b16 %v743, %v741
      %v756 = vpack.c.b16 %v746, %v744
      %v757 = vpack.c.b16 %v747, %v745
      %v758 = vpack.c.b16 %v750, %v748
      %v759 = vpack.c.b16 %v751, %v749
      %vm768 = vcmask 523264
      %v770 = vsel %vm768, %v707, 0
      %772 = vmatprep.subr.bf16.mxu0 0
      %773 = vmatpush1.bf16.msra.mxu0 0
      %774 = vmatprep.subr.bf16.mxu0 0
      %775 = vmatpush1.bf16.msra.mxu0 0
      %776 = vmatprep.subr.bf16.mxu0 0
      %777 = vmatpush1.bf16.msra.mxu0 0
      %778 = vmatprep.subr.bf16.mxu0 0
      %779 = vmatpush1.bf16.msra.mxu0 0
      %780 = vmatprep.subr.bf16.mxu0 %v759
      %781 = vmatpush1.bf16.msra.mxu0 %v758
      %782 = vmatprep.subr.bf16.mxu0 %v757
      %783 = vmatpush1.bf16.msra.mxu0 %v756
      %784 = vmatprep.subr.bf16.mxu0 %v755
      %785 = vmatpush1.bf16.msra.mxu0 %v754
      %786 = vmatprep.subr.bf16.mxu0 %v753
      %787 = vmatpush1.bf16.msra.mxu0 %v752
      %788 = vmatprep.subr.bf16.mxu0 0
      %789 = vmatpush2.bf16.msra.mxu0 0
      %790 = vmatprep.subr.bf16.mxu0 0
      %791 = vmatpush2.bf16.msra.mxu0 0
      %792 = vmatprep.subr.bf16.mxu0 0
      %793 = vmatpush2.bf16.msra.mxu0 0
      %794 = vmatprep.subr.bf16.mxu0 0
      %795 = vmatpush2.bf16.msra.mxu0 0
      %796 = vmatprep.subr.bf16.mxu0 0
      %797 = vmatpush2.bf16.msra.mxu0 0
      %798 = vmatprep.subr.bf16.mxu0 0
      %799 = vmatpush2.bf16.msra.mxu0 0
      %800 = vmatprep.subr.bf16.mxu0 0
      %801 = vmatpush2.bf16.msra.mxu0 0
      %802 = vmatprep.subr.bf16.mxu0 0
      %803 = vmatpush2.bf16.msra.mxu0 0
      %804 = vmatprep.mubr.bf16.mxu0 0
      %805 = vmatmul.mubr.bf16.gmra.mxu0 %v770
      %v806 = vpop.f32.mrf.mxu0
      %v807 = vadd.f32 %v721, %v806
      %v808 = vpop.f32.mrf.mxu0
      %v809 = vadd.f32 %v725, %v808
      %v810 = vpop.f32.mrf.mxu0
      %v811 = vadd.f32 %v721, %v810
      %v812 = vpop.f32.mrf.mxu0
      %v813 = vadd.f32 %v725, %v812
      %814 = vdwg.mxu0
      %817 = vrot.lane.b32.xlu0 %v807, 64
      %v818 = vpop.permute.xlu0 %817
      %819 = vrot.lane.b32.xlu0 %v811, 64
      %v820 = vpop.permute.xlu0 %819
      %vm821 = vcmask 64512
      %v822 = vsel %vm821, %v811, 0
      %v824 = vsel %vm821, %v818, 0
      %v826 = vsel %vm821, %v820, 0
      %828 = vmatprep.subr.mxu0 0.0
      %829 = vmatpush1.xpose.msra.mxu0 0.0
      %830 = vmatprep.subr.mxu0 0.0
      %831 = vmatpush1.xpose.msra.mxu0 0.0
      %832 = vmatprep.subr.mxu0 0.0
      %833 = vmatpush1.xpose.msra.mxu0 0.0
      %834 = vmatprep.subr.mxu0 0.0
      %835 = vmatpush1.xpose.msra.mxu0 0.0
      %836 = vmatprep.subr.mxu0 0.0
      %837 = vmatpush1.xpose.msra.mxu0 0.0
      %838 = vmatprep.subr.mxu0 0.0
      %839 = vmatpush1.xpose.msra.mxu0 0.0
      %840 = vmatprep.subr.mxu0 0.0
      %841 = vmatpush1.xpose.msra.mxu0 0.0
      %842 = vmatprep.subr.mxu0 0.0
      %843 = vmatpush1.xpose.msra.mxu0 0.0
      %844 = vmatprep.subr.mxu0 0.0
      %845 = vmatpush1.xpose.msra.mxu0 0.0
      %846 = vmatprep.subr.mxu0 0.0
      %847 = vmatpush1.xpose.msra.mxu0 0.0
      %848 = vmatprep.subr.mxu0 0.0
      %849 = vmatpush1.xpose.msra.mxu0 0.0
      %850 = vmatprep.subr.mxu0 0.0
      %851 = vmatpush1.xpose.msra.mxu0 0.0
      %852 = vmatprep.subr.mxu0 0.0
      %853 = vmatpush1.xpose.msra.mxu0 0.0
      %854 = vmatprep.subr.mxu0 0.0
      %855 = vmatpush1.xpose.msra.mxu0 0.0
      %856 = vmatprep.subr.mxu0 0.0
      %857 = vmatpush1.xpose.msra.mxu0 %v826
      %858 = vmatprep.subr.mxu0 0.0
      %859 = vmatpush1.xpose.msra.mxu0 %v824
      %860 = vmatprep.subr.mxu0 0.0
      %861 = vmatpush2.xpose.msra.mxu0 0.0
      %862 = vmatprep.subr.mxu0 0.0
      %863 = vmatpush2.xpose.msra.mxu0 0.0
      %864 = vmatprep.subr.mxu0 0.0
      %865 = vmatpush2.xpose.msra.mxu0 0.0
      %866 = vmatprep.subr.mxu0 0.0
      %867 = vmatpush2.xpose.msra.mxu0 0.0
      %868 = vmatprep.subr.mxu0 0.0
      %869 = vmatpush2.xpose.msra.mxu0 0.0
      %870 = vmatprep.subr.mxu0 0.0
      %871 = vmatpush2.xpose.msra.mxu0 0.0
      %872 = vmatprep.subr.mxu0 0.0
      %873 = vmatpush2.xpose.msra.mxu0 0.0
      %874 = vmatprep.subr.mxu0 0.0
      %875 = vmatpush2.xpose.msra.mxu0 0.0
      %876 = vmatprep.subr.mxu0 0.0
      %877 = vmatpush2.xpose.msra.mxu0 0.0
      %878 = vmatprep.subr.mxu0 0.0
      %879 = vmatpush2.xpose.msra.mxu0 0.0
      %880 = vmatprep.subr.mxu0 0.0
      %881 = vmatpush2.xpose.msra.mxu0 0.0
      %882 = vmatprep.subr.mxu0 0.0
      %883 = vmatpush2.xpose.msra.mxu0 0.0
      %884 = vmatprep.subr.mxu0 0.0
      %885 = vmatpush2.xpose.msra.mxu0 0.0
      %886 = vmatprep.subr.mxu0 0.0
      %887 = vmatpush2.xpose.msra.mxu0 0.0
      %888 = vmatprep.subr.mxu0 0.0
      %889 = vmatpush2.xpose.msra.mxu0 0.0
      %890 = vmatprep.subr.mxu0 0.0
      %891 = vmatpush2.xpose.msra.mxu0 0.0
      %892 = vmatprep.mubr.f32.mxu0 0.0
      %893 = vmatmul.mubr.f32.gmra.mxu0 %v822
      %v894 = vpop.f32.mrf.mxu0
      %v895 = vadd.f32 0.0, %v894
      %v896 = vpop.f32.mrf.mxu0
      %897 = vdwg.mxu0
      %v898 = vmul.f32 %v895, 0.35355338
      %vm899 = vcmask 93184
      %v900 = vsel %vm899, %v898, -inf
      %901 = vmax.xlane.f32.xlu0 %v900
      %v902 = vpop.xlane.xlu0 %901
      %v903 = vsub.f32 %v898, %v902
      %v904 = vmul.f32 %v903, 1.442695
      %v905 = vpow.pop %v904
      %v906 = vsel %vm899, %v905, 0.0
      %907 = vadd.xlane.f32.xlu0 %v906
      %v908 = vpop.xlane.xlu0 %907
      %v909 = vrcp.pop %v908
      %v910 = vmul.f32 %v905, %v909
      %vm911 = vcmask 97280
      %v913 = vsel %vm911, %v910, 0
      %vm915 = vcmask 1043456
      %v917 = vsel %vm915, %v813, 0
      %919 = vmatprep.subr.mxu0 0.0
      %920 = vmatpush1.msra.mxu0 0.0
      %921 = vmatprep.subr.mxu0 0.0
      %922 = vmatpush1.msra.mxu0 0.0
      %923 = vmatprep.subr.mxu0 0.0
      %924 = vmatpush1.msra.mxu0 0.0
      %925 = vmatprep.subr.mxu0 0.0
      %926 = vmatpush1.msra.mxu0 0.0
      %927 = vmatprep.subr.mxu0 0.0
      %928 = vmatpush1.msra.mxu0 0.0
      %929 = vmatprep.subr.mxu0 0.0
      %930 = vmatpush1.msra.mxu0 0.0
      %931 = vmatprep.subr.mxu0 0.0
      %932 = vmatpush1.msra.mxu0 0.0
      %933 = vmatprep.subr.mxu0 0.0
      %934 = vmatpush1.msra.mxu0 0.0
      %935 = vmatprep.subr.mxu0 0.0
      %936 = vmatpush1.msra.mxu0 0.0
      %937 = vmatprep.subr.mxu0 0.0
      %938 = vmatpush1.msra.mxu0 0.0
      %939 = vmatprep.subr.mxu0 0.0
      %940 = vmatpush1.msra.mxu0 0.0
      %941 = vmatprep.subr.mxu0 0.0
      %942 = vmatpush1.msra.mxu0 0.0
      %943 = vmatprep.subr.mxu0 0.0
      %944 = vmatpush1.msra.mxu0 0.0
      %945 = vmatprep.subr.mxu0 0.0
      %946 = vmatpush1.msra.mxu0 0.0
      %947 = vmatprep.subr.mxu0 0.0
      %948 = vmatpush1.msra.mxu0 %v917
      %949 = vmatprep.subr.mxu0 0.0
      %950 = vmatpush1.msra.mxu0 %v809
      %951 = vmatprep.subr.mxu0 0.0
      %952 = vmatpush2.msra.mxu0 0.0
      %953 = vmatprep.subr.mxu0 0.0
      %954 = vmatpush2.msra.mxu0 0.0
      %955 = vmatprep.subr.mxu0 0.0
      %956 = vmatpush2.msra.mxu0 0.0
      %957 = vmatprep.subr.mxu0 0.0
      %958 = vmatpush2.msra.mxu0 0.0
      %959 = vmatprep.subr.mxu0 0.0
      %960 = vmatpush2.msra.mxu0 0.0
      %961 = vmatprep.subr.mxu0 0.0
      %962 = vmatpush2.msra.mxu0 0.0
      %963 = vmatprep.subr.mxu0 0.0
      %964 = vmatpush2.msra.mxu0 0.0
      %965 = vmatprep.subr.mxu0 0.0
      %966 = vmatpush2.msra.mxu0 0.0
      %967 = vmatprep.subr.mxu0 0.0
      %968 = vmatpush2.msra.mxu0 0.0
      %969 = vmatprep.subr.mxu0 0.0
      %970 = vmatpush2.msra.mxu0 0.0
      %971 = vmatprep.subr.mxu0 0.0
      %972 = vmatpush2.msra.mxu0 0.0
      %973 = vmatprep.subr.mxu0 0.0
      %974 = vmatpush2.msra.mxu0 0.0
      %975 = vmatprep.subr.mxu0 0.0
      %976 = vmatpush2.msra.mxu0 0.0
      %977 = vmatprep.subr.mxu0 0.0
      %978 = vmatpush2.msra.mxu0 0.0
      %979 = vmatprep.subr.mxu0 0.0
      %980 = vmatpush2.msra.mxu0 0.0
      %981 = vmatprep.subr.mxu0 0.0
      %982 = vmatpush2.msra.mxu0 0.0
      %983 = vmatprep.mubr.f32.mxu0 0.0
      %984 = vmatmul.mubr.f32.gmra.mxu0 %v913
      %v985 = vpop.f32.mrf.mxu0
      %v986 = vadd.f32 0.0, %v985
      %v987 = vpop.f32.mrf.mxu0
      %988 = vdwg.mxu0
      %989 = vrot.lane.b32.xlu0 %v811, 120
      %v990 = vpop.permute.xlu0 %989
      %991 = vrot.lane.b32.xlu0 %v807, 56
      %v992 = vpop.permute.xlu0 %991
      %993 = vrot.lane.b32.xlu0 %v811, 56
      %v994 = vpop.permute.xlu0 %993
      %v995 = vsel %vm821, %v990, 0
      %v997 = vsel %vm821, %v992, 0
      %v999 = vsel %vm821, %v994, 0
      %1001 = vmatprep.subr.mxu0 0.0
      %1002 = vmatpush1.xpose.msra.mxu0 0.0
      %1003 = vmatprep.subr.mxu0 0.0
      %1004 = vmatpush1.xpose.msra.mxu0 0.0
      %1005 = vmatprep.subr.mxu0 0.0
      %1006 = vmatpush1.xpose.msra.mxu0 0.0
      %1007 = vmatprep.subr.mxu0 0.0
      %1008 = vmatpush1.xpose.msra.mxu0 0.0
      %1009 = vmatprep.subr.mxu0 0.0
      %1010 = vmatpush1.xpose.msra.mxu0 0.0
      %1011 = vmatprep.subr.mxu0 0.0
      %1012 = vmatpush1.xpose.msra.mxu0 0.0
      %1013 = vmatprep.subr.mxu0 0.0
      %1014 = vmatpush1.xpose.msra.mxu0 0.0
      %1015 = vmatprep.subr.mxu0 0.0
      %1016 = vmatpush1.xpose.msra.mxu0 0.0
      %1017 = vmatprep.subr.mxu0 0.0
      %1018 = vmatpush1.xpose.msra.mxu0 0.0
      %1019 = vmatprep.subr.mxu0 0.0
      %1020 = vmatpush1.xpose.msra.mxu0 0.0
      %1021 = vmatprep.subr.mxu0 0.0
      %1022 = vmatpush1.xpose.msra.mxu0 0.0
      %1023 = vmatprep.subr.mxu0 0.0
      %1024 = vmatpush1.xpose.msra.mxu0 0.0
      %1025 = vmatprep.subr.mxu0 0.0
      %1026 = vmatpush1.xpose.msra.mxu0 0.0
      %1027 = vmatprep.subr.mxu0 0.0
      %1028 = vmatpush1.xpose.msra.mxu0 0.0
      %1029 = vmatprep.subr.mxu0 0.0
      %1030 = vmatpush1.xpose.msra.mxu0 %v999
      %1031 = vmatprep.subr.mxu0 0.0
      %1032 = vmatpush1.xpose.msra.mxu0 %v997
      %1033 = vmatprep.subr.mxu0 0.0
      %1034 = vmatpush2.xpose.msra.mxu0 0.0
      %1035 = vmatprep.subr.mxu0 0.0
      %1036 = vmatpush2.xpose.msra.mxu0 0.0
      %1037 = vmatprep.subr.mxu0 0.0
      %1038 = vmatpush2.xpose.msra.mxu0 0.0
      %1039 = vmatprep.subr.mxu0 0.0
      %1040 = vmatpush2.xpose.msra.mxu0 0.0
      %1041 = vmatprep.subr.mxu0 0.0
      %1042 = vmatpush2.xpose.msra.mxu0 0.0
      %1043 = vmatprep.subr.mxu0 0.0
      %1044 = vmatpush2.xpose.msra.mxu0 0.0
      %1045 = vmatprep.subr.mxu0 0.0
      %1046 = vmatpush2.xpose.msra.mxu0 0.0
      %1047 = vmatprep.subr.mxu0 0.0
      %1048 = vmatpush2.xpose.msra.mxu0 0.0
      %1049 = vmatprep.subr.mxu0 0.0
      %1050 = vmatpush2.xpose.msra.mxu0 0.0
      %1051 = vmatprep.subr.mxu0 0.0
      %1052 = vmatpush2.xpose.msra.mxu0 0.0
      %1053 = vmatprep.subr.mxu0 0.0
      %1054 = vmatpush2.xpose.msra.mxu0 0.0
      %1055 = vmatprep.subr.mxu0 0.0
      %1056 = vmatpush2.xpose.msra.mxu0 0.0
      %1057 = vmatprep.subr.mxu0 0.0
      %1058 = vmatpush2.xpose.msra.mxu0 0.0
      %1059 = vmatprep.subr.mxu0 0.0
      %1060 = vmatpush2.xpose.msra.mxu0 0.0
      %1061 = vmatprep.subr.mxu0 0.0
      %1062 = vmatpush2.xpose.msra.mxu0 0.0
      %1063 = vmatprep.subr.mxu0 0.0
      %1064 = vmatpush2.xpose.msra.mxu0 0.0
      %1065 = vmatprep.mubr.f32.mxu0 0.0
      %1066 = vmatmul.mubr.f32.gmra.mxu0 %v995
      %v1067 = vpop.f32.mrf.mxu0
      %v1068 = vadd.f32 0.0, %v1067
      %v1069 = vpop.f32.mrf.mxu0
      %1070 = vdwg.mxu0
      %v1071 = vmul.f32 %v1068, 0.35355338
      %v1072 = vsel %vm899, %v1071, -inf
      %1073 = vmax.xlane.f32.xlu0 %v1072
      %v1074 = vpop.xlane.xlu0 %1073
      %v1075 = vsub.f32 %v1071, %v1074
      %v1076 = vmul.f32 %v1075, 1.442695
      %v1077 = vpow.pop %v1076
      %v1078 = vsel %vm899, %v1077, 0.0
      %1079 = vadd.xlane.f32.xlu0 %v1078
      %v1080 = vpop.xlane.xlu0 %1079
      %v1081 = vrcp.pop %v1080
      %v1082 = vmul.f32 %v1077, %v1081
      %1084 = vrot.lane.b32.xlu0 %v809, 120
      %v1085 = vpop.permute.xlu0 %1084
      %1086 = vrot.lane.b32.xlu0 %v813, 120
      %v1087 = vpop.permute.xlu0 %1086
      %v1090 = vsel %vm911, %v1082, 0
      %v1092 = vsel %vm915, %v1087, 0
      %1094 = vmatprep.subr.mxu0 0.0
      %1095 = vmatpush1.msra.mxu0 0.0
      %1096 = vmatprep.subr.mxu0 0.0
      %1097 = vmatpush1.msra.mxu0 0.0
      %1098 = vmatprep.subr.mxu0 0.0
      %1099 = vmatpush1.msra.mxu0 0.0
      %1100 = vmatprep.subr.mxu0 0.0
      %1101 = vmatpush1.msra.mxu0 0.0
      %1102 = vmatprep.subr.mxu0 0.0
      %1103 = vmatpush1.msra.mxu0 0.0
      %1104 = vmatprep.subr.mxu0 0.0
      %1105 = vmatpush1.msra.mxu0 0.0
      %1106 = vmatprep.subr.mxu0 0.0
      %1107 = vmatpush1.msra.mxu0 0.0
      %1108 = vmatprep.subr.mxu0 0.0
      %1109 = vmatpush1.msra.mxu0 0.0
      %1110 = vmatprep.subr.mxu0 0.0
      %1111 = vmatpush1.msra.mxu0 0.0
      %1112 = vmatprep.subr.mxu0 0.0
      %1113 = vmatpush1.msra.mxu0 0.0
      %1114 = vmatprep.subr.mxu0 0.0
      %1115 = vmatpush1.msra.mxu0 0.0
      %1116 = vmatprep.subr.mxu0 0.0
      %1117 = vmatpush1.msra.mxu0 0.0
      %1118 = vmatprep.subr.mxu0 0.0
      %1119 = vmatpush1.msra.mxu0 0.0
      %1120 = vmatprep.subr.mxu0 0.0
      %1121 = vmatpush1.msra.mxu0 0.0
      %1122 = vmatprep.subr.mxu0 0.0
      %1123 = vmatpush1.msra.mxu0 %v1092
      %1124 = vmatprep.subr.mxu0 0.0
      %1125 = vmatpush1.msra.mxu0 %v1085
      %1126 = vmatprep.subr.mxu0 0.0
      %1127 = vmatpush2.msra.mxu0 0.0
      %1128 = vmatprep.subr.mxu0 0.0
      %1129 = vmatpush2.msra.mxu0 0.0
      %1130 = vmatprep.subr.mxu0 0.0
      %1131 = vmatpush2.msra.mxu0 0.0
      %1132 = vmatprep.subr.mxu0 0.0
      %1133 = vmatpush2.msra.mxu0 0.0
      %1134 = vmatprep.subr.mxu0 0.0
      %1135 = vmatpush2.msra.mxu0 0.0
      %1136 = vmatprep.subr.mxu0 0.0
      %1137 = vmatpush2.msra.mxu0 0.0
      %1138 = vmatprep.subr.mxu0 0.0
      %1139 = vmatpush2.msra.mxu0 0.0
      %1140 = vmatprep.subr.mxu0 0.0
      %1141 = vmatpush2.msra.mxu0 0.0
      %1142 = vmatprep.subr.mxu0 0.0
      %1143 = vmatpush2.msra.mxu0 0.0
      %1144 = vmatprep.subr.mxu0 0.0
      %1145 = vmatpush2.msra.mxu0 0.0
      %1146 = vmatprep.subr.mxu0 0.0
      %1147 = vmatpush2.msra.mxu0 0.0
      %1148 = vmatprep.subr.mxu0 0.0
      %1149 = vmatpush2.msra.mxu0 0.0
      %1150 = vmatprep.subr.mxu0 0.0
      %1151 = vmatpush2.msra.mxu0 0.0
      %1152 = vmatprep.subr.mxu0 0.0
      %1153 = vmatpush2.msra.mxu0 0.0
      %1154 = vmatprep.subr.mxu0 0.0
      %1155 = vmatpush2.msra.mxu0 0.0
      %1156 = vmatprep.subr.mxu0 0.0
      %1157 = vmatpush2.msra.mxu0 0.0
      %1158 = vmatprep.mubr.f32.mxu0 0.0
      %1159 = vmatmul.mubr.f32.gmra.mxu0 %v1090
      %v1160 = vpop.f32.mrf.mxu0
      %v1161 = vadd.f32 0.0, %v1160
      %v1162 = vpop.f32.mrf.mxu0
      %1163 = vdwg.mxu0
      %1164 = vrot.lane.b32.xlu0 %v811, 112
      %v1165 = vpop.permute.xlu0 %1164
      %1166 = vrot.lane.b32.xlu0 %v807, 48
      %v1167 = vpop.permute.xlu0 %1166
      %1168 = vrot.lane.b32.xlu0 %v811, 48
      %v1169 = vpop.permute.xlu0 %1168
      %v1170 = vsel %vm821, %v1165, 0
      %v1172 = vsel %vm821, %v1167, 0
      %v1174 = vsel %vm821, %v1169, 0
      %1176 = vmatprep.subr.mxu0 0.0
      %1177 = vmatpush1.xpose.msra.mxu0 0.0
      %1178 = vmatprep.subr.mxu0 0.0
      %1179 = vmatpush1.xpose.msra.mxu0 0.0
      %1180 = vmatprep.subr.mxu0 0.0
      %1181 = vmatpush1.xpose.msra.mxu0 0.0
      %1182 = vmatprep.subr.mxu0 0.0
      %1183 = vmatpush1.xpose.msra.mxu0 0.0
      %1184 = vmatprep.subr.mxu0 0.0
      %1185 = vmatpush1.xpose.msra.mxu0 0.0
      %1186 = vmatprep.subr.mxu0 0.0
      %1187 = vmatpush1.xpose.msra.mxu0 0.0
      %1188 = vmatprep.subr.mxu0 0.0
      %1189 = vmatpush1.xpose.msra.mxu0 0.0
      %1190 = vmatprep.subr.mxu0 0.0
      %1191 = vmatpush1.xpose.msra.mxu0 0.0
      %1192 = vmatprep.subr.mxu0 0.0
      %1193 = vmatpush1.xpose.msra.mxu0 0.0
      %1194 = vmatprep.subr.mxu0 0.0
      %1195 = vmatpush1.xpose.msra.mxu0 0.0
      %1196 = vmatprep.subr.mxu0 0.0
      %1197 = vmatpush1.xpose.msra.mxu0 0.0
      %1198 = vmatprep.subr.mxu0 0.0
      %1199 = vmatpush1.xpose.msra.mxu0 0.0
      %1200 = vmatprep.subr.mxu0 0.0
      %1201 = vmatpush1.xpose.msra.mxu0 0.0
      %1202 = vmatprep.subr.mxu0 0.0
      %1203 = vmatpush1.xpose.msra.mxu0 0.0
      %1204 = vmatprep.subr.mxu0 0.0
      %1205 = vmatpush1.xpose.msra.mxu0 %v1174
      %1206 = vmatprep.subr.mxu0 0.0
      %1207 = vmatpush1.xpose.msra.mxu0 %v1172
      %1208 = vmatprep.subr.mxu0 0.0
      %1209 = vmatpush2.xpose.msra.mxu0 0.0
      %1210 = vmatprep.subr.mxu0 0.0
      %1211 = vmatpush2.xpose.msra.mxu0 0.0
      %1212 = vmatprep.subr.mxu0 0.0
      %1213 = vmatpush2.xpose.msra.mxu0 0.0
      %1214 = vmatprep.subr.mxu0 0.0
      %1215 = vmatpush2.xpose.msra.mxu0 0.0
      %1216 = vmatprep.subr.mxu0 0.0
      %1217 = vmatpush2.xpose.msra.mxu0 0.0
      %1218 = vmatprep.subr.mxu0 0.0
      %1219 = vmatpush2.xpose.msra.mxu0 0.0
      %1220 = vmatprep.subr.mxu0 0.0
      %1221 = vmatpush2.xpose.msra.mxu0 0.0
      %1222 = vmatprep.subr.mxu0 0.0
      %1223 = vmatpush2.xpose.msra.mxu0 0.0
      %1224 = vmatprep.subr.mxu0 0.0
      %1225 = vmatpush2.xpose.msra.mxu0 0.0
      %1226 = vmatprep.subr.mxu0 0.0
      %1227 = vmatpush2.xpose.msra.mxu0 0.0
      %1228 = vmatprep.subr.mxu0 0.0
      %1229 = vmatpush2.xpose.msra.mxu0 0.0
      %1230 = vmatprep.subr.mxu0 0.0
      %1231 = vmatpush2.xpose.msra.mxu0 0.0
      %1232 = vmatprep.subr.mxu0 0.0
      %1233 = vmatpush2.xpose.msra.mxu0 0.0
      %1234 = vmatprep.subr.mxu0 0.0
      %1235 = vmatpush2.xpose.msra.mxu0 0.0
      %1236 = vmatprep.subr.mxu0 0.0
      %1237 = vmatpush2.xpose.msra.mxu0 0.0
      %1238 = vmatprep.subr.mxu0 0.0
      %1239 = vmatpush2.xpose.msra.mxu0 0.0
      %1240 = vmatprep.mubr.f32.mxu0 0.0
      %1241 = vmatmul.mubr.f32.gmra.mxu0 %v1170
      %v1242 = vpop.f32.mrf.mxu0
      %v1243 = vadd.f32 0.0, %v1242
      %v1244 = vpop.f32.mrf.mxu0
      %1245 = vdwg.mxu0
      %v1246 = vmul.f32 %v1243, 0.35355338
      %v1247 = vsel %vm899, %v1246, -inf
      %1248 = vmax.xlane.f32.xlu0 %v1247
      %v1249 = vpop.xlane.xlu0 %1248
      %v1250 = vsub.f32 %v1246, %v1249
      %v1251 = vmul.f32 %v1250, 1.442695
      %v1252 = vpow.pop %v1251
      %v1253 = vsel %vm899, %v1252, 0.0
      %1254 = vadd.xlane.f32.xlu0 %v1253
      %v1255 = vpop.xlane.xlu0 %1254
      %v1256 = vrcp.pop %v1255
      %v1257 = vmul.f32 %v1252, %v1256
      %1258 = vrot.lane.b32.xlu0 %v809, 112
      %v1259 = vpop.permute.xlu0 %1258
      %1260 = vrot.lane.b32.xlu0 %v813, 112
      %v1261 = vpop.permute.xlu0 %1260
      %v1264 = vsel %vm911, %v1257, 0
      %v1266 = vsel %vm915, %v1261, 0
      %1268 = vmatprep.subr.mxu0 0.0
      %1269 = vmatpush1.msra.mxu0 0.0
      %1270 = vmatprep.subr.mxu0 0.0
      %1271 = vmatpush1.msra.mxu0 0.0
      %1272 = vmatprep.subr.mxu0 0.0
      %1273 = vmatpush1.msra.mxu0 0.0
      %1274 = vmatprep.subr.mxu0 0.0
      %1275 = vmatpush1.msra.mxu0 0.0
      %1276 = vmatprep.subr.mxu0 0.0
      %1277 = vmatpush1.msra.mxu0 0.0
      %1278 = vmatprep.subr.mxu0 0.0
      %1279 = vmatpush1.msra.mxu0 0.0
      %1280 = vmatprep.subr.mxu0 0.0
      %1281 = vmatpush1.msra.mxu0 0.0
      %1282 = vmatprep.subr.mxu0 0.0
      %1283 = vmatpush1.msra.mxu0 0.0
      %1284 = vmatprep.subr.mxu0 0.0
      %1285 = vmatpush1.msra.mxu0 0.0
      %1286 = vmatprep.subr.mxu0 0.0
      %1287 = vmatpush1.msra.mxu0 0.0
      %1288 = vmatprep.subr.mxu0 0.0
      %1289 = vmatpush1.msra.mxu0 0.0
      %1290 = vmatprep.subr.mxu0 0.0
      %1291 = vmatpush1.msra.mxu0 0.0
      %1292 = vmatprep.subr.mxu0 0.0
      %1293 = vmatpush1.msra.mxu0 0.0
      %1294 = vmatprep.subr.mxu0 0.0
      %1295 = vmatpush1.msra.mxu0 0.0
      %1296 = vmatprep.subr.mxu0 0.0
      %1297 = vmatpush1.msra.mxu0 %v1266
      %1298 = vmatprep.subr.mxu0 0.0
      %1299 = vmatpush1.msra.mxu0 %v1259
      %1300 = vmatprep.subr.mxu0 0.0
      %1301 = vmatpush2.msra.mxu0 0.0
      %1302 = vmatprep.subr.mxu0 0.0
      %1303 = vmatpush2.msra.mxu0 0.0
      %1304 = vmatprep.subr.mxu0 0.0
      %1305 = vmatpush2.msra.mxu0 0.0
      %1306 = vmatprep.subr.mxu0 0.0
      %1307 = vmatpush2.msra.mxu0 0.0
      %1308 = vmatprep.subr.mxu0 0.0
      %1309 = vmatpush2.msra.mxu0 0.0
      %1310 = vmatprep.subr.mxu0 0.0
      %1311 = vmatpush2.msra.mxu0 0.0
      %1312 = vmatprep.subr.mxu0 0.0
      %1313 = vmatpush2.msra.mxu0 0.0
      %1314 = vmatprep.subr.mxu0 0.0
      %1315 = vmatpush2.msra.mxu0 0.0
      %1316 = vmatprep.subr.mxu0 0.0
      %1317 = vmatpush2.msra.mxu0 0.0
      %1318 = vmatprep.subr.mxu0 0.0
      %1319 = vmatpush2.msra.mxu0 0.0
      %1320 = vmatprep.subr.mxu0 0.0
      %1321 = vmatpush2.msra.mxu0 0.0
      %1322 = vmatprep.subr.mxu0 0.0
      %1323 = vmatpush2.msra.mxu0 0.0
      %1324 = vmatprep.subr.mxu0 0.0
      %1325 = vmatpush2.msra.mxu0 0.0
      %1326 = vmatprep.subr.mxu0 0.0
      %1327 = vmatpush2.msra.mxu0 0.0
      %1328 = vmatprep.subr.mxu0 0.0
      %1329 = vmatpush2.msra.mxu0 0.0
      %1330 = vmatprep.subr.mxu0 0.0
      %1331 = vmatpush2.msra.mxu0 0.0
      %1332 = vmatprep.mubr.f32.mxu0 0.0
      %1333 = vmatmul.mubr.f32.gmra.mxu0 %v1264
      %v1334 = vpop.f32.mrf.mxu0
      %v1335 = vadd.f32 0.0, %v1334
      %v1336 = vpop.f32.mrf.mxu0
      %1337 = vdwg.mxu0
      %1338 = vrot.lane.b32.xlu0 %v811, 104
      %v1339 = vpop.permute.xlu0 %1338
      %1340 = vrot.lane.b32.xlu0 %v807, 40
      %v1341 = vpop.permute.xlu0 %1340
      %1342 = vrot.lane.b32.xlu0 %v811, 40
      %v1343 = vpop.permute.xlu0 %1342
      %v1344 = vsel %vm821, %v1339, 0
      %v1346 = vsel %vm821, %v1341, 0
      %v1348 = vsel %vm821, %v1343, 0
      %1350 = vmatprep.subr.mxu0 0.0
      %1351 = vmatpush1.xpose.msra.mxu0 0.0
      %1352 = vmatprep.subr.mxu0 0.0
      %1353 = vmatpush1.xpose.msra.mxu0 0.0
      %1354 = vmatprep.subr.mxu0 0.0
      %1355 = vmatpush1.xpose.msra.mxu0 0.0
      %1356 = vmatprep.subr.mxu0 0.0
      %1357 = vmatpush1.xpose.msra.mxu0 0.0
      %1358 = vmatprep.subr.mxu0 0.0
      %1359 = vmatpush1.xpose.msra.mxu0 0.0
      %1360 = vmatprep.subr.mxu0 0.0
      %1361 = vmatpush1.xpose.msra.mxu0 0.0
      %1362 = vmatprep.subr.mxu0 0.0
      %1363 = vmatpush1.xpose.msra.mxu0 0.0
      %1364 = vmatprep.subr.mxu0 0.0
      %1365 = vmatpush1.xpose.msra.mxu0 0.0
      %1366 = vmatprep.subr.mxu0 0.0
      %1367 = vmatpush1.xpose.msra.mxu0 0.0
      %1368 = vmatprep.subr.mxu0 0.0
      %1369 = vmatpush1.xpose.msra.mxu0 0.0
      %1370 = vmatprep.subr.mxu0 0.0
      %1371 = vmatpush1.xpose.msra.mxu0 0.0
      %1372 = vmatprep.subr.mxu0 0.0
      %1373 = vmatpush1.xpose.msra.mxu0 0.0
      %1374 = vmatprep.subr.mxu0 0.0
      %1375 = vmatpush1.xpose.msra.mxu0 0.0
      %1376 = vmatprep.subr.mxu0 0.0
      %1377 = vmatpush1.xpose.msra.mxu0 0.0
      %1378 = vmatprep.subr.mxu0 0.0
      %1379 = vmatpush1.xpose.msra.mxu0 %v1348
      %1380 = vmatprep.subr.mxu0 0.0
      %1381 = vmatpush1.xpose.msra.mxu0 %v1346
      %1382 = vmatprep.subr.mxu0 0.0
      %1383 = vmatpush2.xpose.msra.mxu0 0.0
      %1384 = vmatprep.subr.mxu0 0.0
      %1385 = vmatpush2.xpose.msra.mxu0 0.0
      %1386 = vmatprep.subr.mxu0 0.0
      %1387 = vmatpush2.xpose.msra.mxu0 0.0
      %1388 = vmatprep.subr.mxu0 0.0
      %1389 = vmatpush2.xpose.msra.mxu0 0.0
      %1390 = vmatprep.subr.mxu0 0.0
      %1391 = vmatpush2.xpose.msra.mxu0 0.0
      %1392 = vmatprep.subr.mxu0 0.0
      %1393 = vmatpush2.xpose.msra.mxu0 0.0
      %1394 = vmatprep.subr.mxu0 0.0
      %1395 = vmatpush2.xpose.msra.mxu0 0.0
      %1396 = vmatprep.subr.mxu0 0.0
      %1397 = vmatpush2.xpose.msra.mxu0 0.0
      %1398 = vmatprep.subr.mxu0 0.0
      %1399 = vmatpush2.xpose.msra.mxu0 0.0
      %1400 = vmatprep.subr.mxu0 0.0
      %1401 = vmatpush2.xpose.msra.mxu0 0.0
      %1402 = vmatprep.subr.mxu0 0.0
      %1403 = vmatpush2.xpose.msra.mxu0 0.0
      %1404 = vmatprep.subr.mxu0 0.0
      %1405 = vmatpush2.xpose.msra.mxu0 0.0
      %1406 = vmatprep.subr.mxu0 0.0
      %1407 = vmatpush2.xpose.msra.mxu0 0.0
      %1408 = vmatprep.subr.mxu0 0.0
      %1409 = vmatpush2.xpose.msra.mxu0 0.0
      %1410 = vmatprep.subr.mxu0 0.0
      %1411 = vmatpush2.xpose.msra.mxu0 0.0
      %1412 = vmatprep.subr.mxu0 0.0
      %1413 = vmatpush2.xpose.msra.mxu0 0.0
      %1414 = vmatprep.mubr.f32.mxu0 0.0
      %1415 = vmatmul.mubr.f32.gmra.mxu0 %v1344
      %v1416 = vpop.f32.mrf.mxu0
      %v1417 = vadd.f32 0.0, %v1416
      %v1418 = vpop.f32.mrf.mxu0
      %1419 = vdwg.mxu0
      %v1420 = vmul.f32 %v1417, 0.35355338
      %v1421 = vsel %vm899, %v1420, -inf
      %1422 = vmax.xlane.f32.xlu0 %v1421
      %v1423 = vpop.xlane.xlu0 %1422
      %v1424 = vsub.f32 %v1420, %v1423
      %v1425 = vmul.f32 %v1424, 1.442695
      %v1426 = vpow.pop %v1425
      %v1427 = vsel %vm899, %v1426, 0.0
      %1428 = vadd.xlane.f32.xlu0 %v1427
      %v1429 = vpop.xlane.xlu0 %1428
      %v1430 = vrcp.pop %v1429
      %v1431 = vmul.f32 %v1426, %v1430
      %1432 = vrot.lane.b32.xlu0 %v809, 104
      %v1433 = vpop.permute.xlu0 %1432
      %1434 = vrot.lane.b32.xlu0 %v813, 104
      %v1435 = vpop.permute.xlu0 %1434
      %v1438 = vsel %vm911, %v1431, 0
      %v1440 = vsel %vm915, %v1435, 0
      %1442 = vmatprep.subr.mxu0 0.0
      %1443 = vmatpush1.msra.mxu0 0.0
      %1444 = vmatprep.subr.mxu0 0.0
      %1445 = vmatpush1.msra.mxu0 0.0
      %1446 = vmatprep.subr.mxu0 0.0
      %1447 = vmatpush1.msra.mxu0 0.0
      %1448 = vmatprep.subr.mxu0 0.0
      %1449 = vmatpush1.msra.mxu0 0.0
      %1450 = vmatprep.subr.mxu0 0.0
      %1451 = vmatpush1.msra.mxu0 0.0
      %1452 = vmatprep.subr.mxu0 0.0
      %1453 = vmatpush1.msra.mxu0 0.0
      %1454 = vmatprep.subr.mxu0 0.0
      %1455 = vmatpush1.msra.mxu0 0.0
      %1456 = vmatprep.subr.mxu0 0.0
      %1457 = vmatpush1.msra.mxu0 0.0
      %1458 = vmatprep.subr.mxu0 0.0
      %1459 = vmatpush1.msra.mxu0 0.0
      %1460 = vmatprep.subr.mxu0 0.0
      %1461 = vmatpush1.msra.mxu0 0.0
      %1462 = vmatprep.subr.mxu0 0.0
      %1463 = vmatpush1.msra.mxu0 0.0
      %1464 = vmatprep.subr.mxu0 0.0
      %1465 = vmatpush1.msra.mxu0 0.0
      %1466 = vmatprep.subr.mxu0 0.0
      %1467 = vmatpush1.msra.mxu0 0.0
      %1468 = vmatprep.subr.mxu0 0.0
      %1469 = vmatpush1.msra.mxu0 0.0
      %1470 = vmatprep.subr.mxu0 0.0
      %1471 = vmatpush1.msra.mxu0 %v1440
      %1472 = vmatprep.subr.mxu0 0.0
      %1473 = vmatpush1.msra.mxu0 %v1433
      %1474 = vmatprep.subr.mxu0 0.0
      %1475 = vmatpush2.msra.mxu0 0.0
      %1476 = vmatprep.subr.mxu0 0.0
      %1477 = vmatpush2.msra.mxu0 0.0
      %1478 = vmatprep.subr.mxu0 0.0
      %1479 = vmatpush2.msra.mxu0 0.0
      %1480 = vmatprep.subr.mxu0 0.0
      %1481 = vmatpush2.msra.mxu0 0.0
      %1482 = vmatprep.subr.mxu0 0.0
      %1483 = vmatpush2.msra.mxu0 0.0
      %1484 = vmatprep.subr.mxu0 0.0
      %1485 = vmatpush2.msra.mxu0 0.0
      %1486 = vmatprep.subr.mxu0 0.0
      %1487 = vmatpush2.msra.mxu0 0.0
      %1488 = vmatprep.subr.mxu0 0.0
      %1489 = vmatpush2.msra.mxu0 0.0
      %1490 = vmatprep.subr.mxu0 0.0
      %1491 = vmatpush2.msra.mxu0 0.0
      %1492 = vmatprep.subr.mxu0 0.0
      %1493 = vmatpush2.msra.mxu0 0.0
      %1494 = vmatprep.subr.mxu0 0.0
      %1495 = vmatpush2.msra.mxu0 0.0
      %1496 = vmatprep.subr.mxu0 0.0
      %1497 = vmatpush2.msra.mxu0 0.0
      %1498 = vmatprep.subr.mxu0 0.0
      %1499 = vmatpush2.msra.mxu0 0.0
      %1500 = vmatprep.subr.mxu0 0.0
      %1501 = vmatpush2.msra.mxu0 0.0
      %1502 = vmatprep.subr.mxu0 0.0
      %1503 = vmatpush2.msra.mxu0 0.0
      %1504 = vmatprep.subr.mxu0 0.0
      %1505 = vmatpush2.msra.mxu0 0.0
      %1506 = vmatprep.mubr.f32.mxu0 0.0
      %1507 = vmatmul.mubr.f32.gmra.mxu0 %v1438
      %v1508 = vpop.f32.mrf.mxu0
      %v1509 = vadd.f32 0.0, %v1508
      %v1510 = vpop.f32.mrf.mxu0
      %1511 = vdwg.mxu0
      %1512 = vrot.lane.b32.xlu0 %v811, 96
      %v1513 = vpop.permute.xlu0 %1512
      %1514 = vrot.lane.b32.xlu0 %v807, 32
      %v1515 = vpop.permute.xlu0 %1514
      %1516 = vrot.lane.b32.xlu0 %v811, 32
      %v1517 = vpop.permute.xlu0 %1516
      %v1518 = vsel %vm821, %v1513, 0
      %v1520 = vsel %vm821, %v1515, 0
      %v1522 = vsel %vm821, %v1517, 0
      %1524 = vmatprep.subr.mxu0 0.0
      %1525 = vmatpush1.xpose.msra.mxu0 0.0
      %1526 = vmatprep.subr.mxu0 0.0
      %1527 = vmatpush1.xpose.msra.mxu0 0.0
      %1528 = vmatprep.subr.mxu0 0.0
      %1529 = vmatpush1.xpose.msra.mxu0 0.0
      %1530 = vmatprep.subr.mxu0 0.0
      %1531 = vmatpush1.xpose.msra.mxu0 0.0
      %1532 = vmatprep.subr.mxu0 0.0
      %1533 = vmatpush1.xpose.msra.mxu0 0.0
      %1534 = vmatprep.subr.mxu0 0.0
      %1535 = vmatpush1.xpose.msra.mxu0 0.0
      %1536 = vmatprep.subr.mxu0 0.0
      %1537 = vmatpush1.xpose.msra.mxu0 0.0
      %1538 = vmatprep.subr.mxu0 0.0
      %1539 = vmatpush1.xpose.msra.mxu0 0.0
      %1540 = vmatprep.subr.mxu0 0.0
      %1541 = vmatpush1.xpose.msra.mxu0 0.0
      %1542 = vmatprep.subr.mxu0 0.0
      %1543 = vmatpush1.xpose.msra.mxu0 0.0
      %1544 = vmatprep.subr.mxu0 0.0
      %1545 = vmatpush1.xpose.msra.mxu0 0.0
      %1546 = vmatprep.subr.mxu0 0.0
      %1547 = vmatpush1.xpose.msra.mxu0 0.0
      %1548 = vmatprep.subr.mxu0 0.0
      %1549 = vmatpush1.xpose.msra.mxu0 0.0
      %1550 = vmatprep.subr.mxu0 0.0
      %1551 = vmatpush1.xpose.msra.mxu0 0.0
      %1552 = vmatprep.subr.mxu0 0.0
      %1553 = vmatpush1.xpose.msra.mxu0 %v1522
      %1554 = vmatprep.subr.mxu0 0.0
      %1555 = vmatpush1.xpose.msra.mxu0 %v1520
      %1556 = vmatprep.subr.mxu0 0.0
      %1557 = vmatpush2.xpose.msra.mxu0 0.0
      %1558 = vmatprep.subr.mxu0 0.0
      %1559 = vmatpush2.xpose.msra.mxu0 0.0
      %1560 = vmatprep.subr.mxu0 0.0
      %1561 = vmatpush2.xpose.msra.mxu0 0.0
      %1562 = vmatprep.subr.mxu0 0.0
      %1563 = vmatpush2.xpose.msra.mxu0 0.0
      %1564 = vmatprep.subr.mxu0 0.0
      %1565 = vmatpush2.xpose.msra.mxu0 0.0
      %1566 = vmatprep.subr.mxu0 0.0
      %1567 = vmatpush2.xpose.msra.mxu0 0.0
      %1568 = vmatprep.subr.mxu0 0.0
      %1569 = vmatpush2.xpose.msra.mxu0 0.0
      %1570 = vmatprep.subr.mxu0 0.0
      %1571 = vmatpush2.xpose.msra.mxu0 0.0
      %1572 = vmatprep.subr.mxu0 0.0
      %1573 = vmatpush2.xpose.msra.mxu0 0.0
      %1574 = vmatprep.subr.mxu0 0.0
      %1575 = vmatpush2.xpose.msra.mxu0 0.0
      %1576 = vmatprep.subr.mxu0 0.0
      %1577 = vmatpush2.xpose.msra.mxu0 0.0
      %1578 = vmatprep.subr.mxu0 0.0
      %1579 = vmatpush2.xpose.msra.mxu0 0.0
      %1580 = vmatprep.subr.mxu0 0.0
      %1581 = vmatpush2.xpose.msra.mxu0 0.0
      %1582 = vmatprep.subr.mxu0 0.0
      %1583 = vmatpush2.xpose.msra.mxu0 0.0
      %1584 = vmatprep.subr.mxu0 0.0
      %1585 = vmatpush2.xpose.msra.mxu0 0.0
      %1586 = vmatprep.subr.mxu0 0.0
      %1587 = vmatpush2.xpose.msra.mxu0 0.0
      %1588 = vmatprep.mubr.f32.mxu0 0.0
      %1589 = vmatmul.mubr.f32.gmra.mxu0 %v1518
      %v1590 = vpop.f32.mrf.mxu0
      %v1591 = vadd.f32 0.0, %v1590
      %v1592 = vpop.f32.mrf.mxu0
      %1593 = vdwg.mxu0
      %v1594 = vmul.f32 %v1591, 0.35355338
      %v1595 = vsel %vm899, %v1594, -inf
      %1596 = vmax.xlane.f32.xlu0 %v1595
      %v1597 = vpop.xlane.xlu0 %1596
      %v1598 = vsub.f32 %v1594, %v1597
      %v1599 = vmul.f32 %v1598, 1.442695
      %v1600 = vpow.pop %v1599
      %v1601 = vsel %vm899, %v1600, 0.0
      %1602 = vadd.xlane.f32.xlu0 %v1601
      %v1603 = vpop.xlane.xlu0 %1602
      %v1604 = vrcp.pop %v1603
      %v1605 = vmul.f32 %v1600, %v1604
      %1606 = vrot.lane.b32.xlu0 %v809, 96
      %v1607 = vpop.permute.xlu0 %1606
      %1608 = vrot.lane.b32.xlu0 %v813, 96
      %v1609 = vpop.permute.xlu0 %1608
      %v1612 = vsel %vm911, %v1605, 0
      %v1614 = vsel %vm915, %v1609, 0
      %1616 = vmatprep.subr.mxu0 0.0
      %1617 = vmatpush1.msra.mxu0 0.0
      %1618 = vmatprep.subr.mxu0 0.0
      %1619 = vmatpush1.msra.mxu0 0.0
      %1620 = vmatprep.subr.mxu0 0.0
      %1621 = vmatpush1.msra.mxu0 0.0
      %1622 = vmatprep.subr.mxu0 0.0
      %1623 = vmatpush1.msra.mxu0 0.0
      %1624 = vmatprep.subr.mxu0 0.0
      %1625 = vmatpush1.msra.mxu0 0.0
      %1626 = vmatprep.subr.mxu0 0.0
      %1627 = vmatpush1.msra.mxu0 0.0
      %1628 = vmatprep.subr.mxu0 0.0
      %1629 = vmatpush1.msra.mxu0 0.0
      %1630 = vmatprep.subr.mxu0 0.0
      %1631 = vmatpush1.msra.mxu0 0.0
      %1632 = vmatprep.subr.mxu0 0.0
      %1633 = vmatpush1.msra.mxu0 0.0
      %1634 = vmatprep.subr.mxu0 0.0
      %1635 = vmatpush1.msra.mxu0 0.0
      %1636 = vmatprep.subr.mxu0 0.0
      %1637 = vmatpush1.msra.mxu0 0.0
      %1638 = vmatprep.subr.mxu0 0.0
      %1639 = vmatpush1.msra.mxu0 0.0
      %1640 = vmatprep.subr.mxu0 0.0
      %1641 = vmatpush1.msra.mxu0 0.0
      %1642 = vmatprep.subr.mxu0 0.0
      %1643 = vmatpush1.msra.mxu0 0.0
      %1644 = vmatprep.subr.mxu0 0.0
      %1645 = vmatpush1.msra.mxu0 %v1614
      %1646 = vmatprep.subr.mxu0 0.0
      %1647 = vmatpush1.msra.mxu0 %v1607
      %1648 = vmatprep.subr.mxu0 0.0
      %1649 = vmatpush2.msra.mxu0 0.0
      %1650 = vmatprep.subr.mxu0 0.0
      %1651 = vmatpush2.msra.mxu0 0.0
      %1652 = vmatprep.subr.mxu0 0.0
      %1653 = vmatpush2.msra.mxu0 0.0
      %1654 = vmatprep.subr.mxu0 0.0
      %1655 = vmatpush2.msra.mxu0 0.0
      %1656 = vmatprep.subr.mxu0 0.0
      %1657 = vmatpush2.msra.mxu0 0.0
      %1658 = vmatprep.subr.mxu0 0.0
      %1659 = vmatpush2.msra.mxu0 0.0
      %1660 = vmatprep.subr.mxu0 0.0
      %1661 = vmatpush2.msra.mxu0 0.0
      %1662 = vmatprep.subr.mxu0 0.0
      %1663 = vmatpush2.msra.mxu0 0.0
      %1664 = vmatprep.subr.mxu0 0.0
      %1665 = vmatpush2.msra.mxu0 0.0
      %1666 = vmatprep.subr.mxu0 0.0
      %1667 = vmatpush2.msra.mxu0 0.0
      %1668 = vmatprep.subr.mxu0 0.0
      %1669 = vmatpush2.msra.mxu0 0.0
      %1670 = vmatprep.subr.mxu0 0.0
      %1671 = vmatpush2.msra.mxu0 0.0
      %1672 = vmatprep.subr.mxu0 0.0
      %1673 = vmatpush2.msra.mxu0 0.0
      %1674 = vmatprep.subr.mxu0 0.0
      %1675 = vmatpush2.msra.mxu0 0.0
      %1676 = vmatprep.subr.mxu0 0.0
      %1677 = vmatpush2.msra.mxu0 0.0
      %1678 = vmatprep.subr.mxu0 0.0
      %1679 = vmatpush2.msra.mxu0 0.0
      %1680 = vmatprep.mubr.f32.mxu0 0.0
      %1681 = vmatmul.mubr.f32.gmra.mxu0 %v1612
      %v1682 = vpop.f32.mrf.mxu0
      %v1683 = vadd.f32 0.0, %v1682
      %v1684 = vpop.f32.mrf.mxu0
      %1685 = vdwg.mxu0
      %1686 = vrot.lane.b32.xlu0 %v811, 88
      %v1687 = vpop.permute.xlu0 %1686
      %1688 = vrot.lane.b32.xlu0 %v807, 24
      %v1689 = vpop.permute.xlu0 %1688
      %1690 = vrot.lane.b32.xlu0 %v811, 24
      %v1691 = vpop.permute.xlu0 %1690
      %v1692 = vsel %vm821, %v1687, 0
      %v1694 = vsel %vm821, %v1689, 0
      %v1696 = vsel %vm821, %v1691, 0
      %1698 = vmatprep.subr.mxu0 0.0
      %1699 = vmatpush1.xpose.msra.mxu0 0.0
      %1700 = vmatprep.subr.mxu0 0.0
      %1701 = vmatpush1.xpose.msra.mxu0 0.0
      %1702 = vmatprep.subr.mxu0 0.0
      %1703 = vmatpush1.xpose.msra.mxu0 0.0
      %1704 = vmatprep.subr.mxu0 0.0
      %1705 = vmatpush1.xpose.msra.mxu0 0.0
      %1706 = vmatprep.subr.mxu0 0.0
      %1707 = vmatpush1.xpose.msra.mxu0 0.0
      %1708 = vmatprep.subr.mxu0 0.0
      %1709 = vmatpush1.xpose.msra.mxu0 0.0
      %1710 = vmatprep.subr.mxu0 0.0
      %1711 = vmatpush1.xpose.msra.mxu0 0.0
      %1712 = vmatprep.subr.mxu0 0.0
      %1713 = vmatpush1.xpose.msra.mxu0 0.0
      %1714 = vmatprep.subr.mxu0 0.0
      %1715 = vmatpush1.xpose.msra.mxu0 0.0
      %1716 = vmatprep.subr.mxu0 0.0
      %1717 = vmatpush1.xpose.msra.mxu0 0.0
      %1718 = vmatprep.subr.mxu0 0.0
      %1719 = vmatpush1.xpose.msra.mxu0 0.0
      %1720 = vmatprep.subr.mxu0 0.0
      %1721 = vmatpush1.xpose.msra.mxu0 0.0
      %1722 = vmatprep.subr.mxu0 0.0
      %1723 = vmatpush1.xpose.msra.mxu0 0.0
      %1724 = vmatprep.subr.mxu0 0.0
      %1725 = vmatpush1.xpose.msra.mxu0 0.0
      %1726 = vmatprep.subr.mxu0 0.0
      %1727 = vmatpush1.xpose.msra.mxu0 %v1696
      %1728 = vmatprep.subr.mxu0 0.0
      %1729 = vmatpush1.xpose.msra.mxu0 %v1694
      %1730 = vmatprep.subr.mxu0 0.0
      %1731 = vmatpush2.xpose.msra.mxu0 0.0
      %1732 = vmatprep.subr.mxu0 0.0
      %1733 = vmatpush2.xpose.msra.mxu0 0.0
      %1734 = vmatprep.subr.mxu0 0.0
      %1735 = vmatpush2.xpose.msra.mxu0 0.0
      %1736 = vmatprep.subr.mxu0 0.0
      %1737 = vmatpush2.xpose.msra.mxu0 0.0
      %1738 = vmatprep.subr.mxu0 0.0
      %1739 = vmatpush2.xpose.msra.mxu0 0.0
      %1740 = vmatprep.subr.mxu0 0.0
      %1741 = vmatpush2.xpose.msra.mxu0 0.0
      %1742 = vmatprep.subr.mxu0 0.0
      %1743 = vmatpush2.xpose.msra.mxu0 0.0
      %1744 = vmatprep.subr.mxu0 0.0
      %1745 = vmatpush2.xpose.msra.mxu0 0.0
      %1746 = vmatprep.subr.mxu0 0.0
      %1747 = vmatpush2.xpose.msra.mxu0 0.0
      %1748 = vmatprep.subr.mxu0 0.0
      %1749 = vmatpush2.xpose.msra.mxu0 0.0
      %1750 = vmatprep.subr.mxu0 0.0
      %1751 = vmatpush2.xpose.msra.mxu0 0.0
      %1752 = vmatprep.subr.mxu0 0.0
      %1753 = vmatpush2.xpose.msra.mxu0 0.0
      %1754 = vmatprep.subr.mxu0 0.0
      %1755 = vmatpush2.xpose.msra.mxu0 0.0
      %1756 = vmatprep.subr.mxu0 0.0
      %1757 = vmatpush2.xpose.msra.mxu0 0.0
      %1758 = vmatprep.subr.mxu0 0.0
      %1759 = vmatpush2.xpose.msra.mxu0 0.0
      %1760 = vmatprep.subr.mxu0 0.0
      %1761 = vmatpush2.xpose.msra.mxu0 0.0
      %1762 = vmatprep.mubr.f32.mxu0 0.0
      %1763 = vmatmul.mubr.f32.gmra.mxu0 %v1692
      %v1764 = vpop.f32.mrf.mxu0
      %v1765 = vadd.f32 0.0, %v1764
      %v1766 = vpop.f32.mrf.mxu0
      %1767 = vdwg.mxu0
      %v1768 = vmul.f32 %v1765, 0.35355338
      %v1769 = vsel %vm899, %v1768, -inf
      %1770 = vmax.xlane.f32.xlu0 %v1769
      %v1771 = vpop.xlane.xlu0 %1770
      %v1772 = vsub.f32 %v1768, %v1771
      %v1773 = vmul.f32 %v1772, 1.442695
      %v1774 = vpow.pop %v1773
      %v1775 = vsel %vm899, %v1774, 0.0
      %1776 = vadd.xlane.f32.xlu0 %v1775
      %v1777 = vpop.xlane.xlu0 %1776
      %v1778 = vrcp.pop %v1777
      %v1779 = vmul.f32 %v1774, %v1778
      %1780 = vrot.lane.b32.xlu0 %v809, 88
      %v1781 = vpop.permute.xlu0 %1780
      %1782 = vrot.lane.b32.xlu0 %v813, 88
      %v1783 = vpop.permute.xlu0 %1782
      %v1786 = vsel %vm911, %v1779, 0
      %v1788 = vsel %vm915, %v1783, 0
      %1790 = vmatprep.subr.mxu0 0.0
      %1791 = vmatpush1.msra.mxu0 0.0
      %1792 = vmatprep.subr.mxu0 0.0
      %1793 = vmatpush1.msra.mxu0 0.0
      %1794 = vmatprep.subr.mxu0 0.0
      %1795 = vmatpush1.msra.mxu0 0.0
      %1796 = vmatprep.subr.mxu0 0.0
      %1797 = vmatpush1.msra.mxu0 0.0
      %1798 = vmatprep.subr.mxu0 0.0
      %1799 = vmatpush1.msra.mxu0 0.0
      %1800 = vmatprep.subr.mxu0 0.0
      %1801 = vmatpush1.msra.mxu0 0.0
      %1802 = vmatprep.subr.mxu0 0.0
      %1803 = vmatpush1.msra.mxu0 0.0
      %1804 = vmatprep.subr.mxu0 0.0
      %1805 = vmatpush1.msra.mxu0 0.0
      %1806 = vmatprep.subr.mxu0 0.0
      %1807 = vmatpush1.msra.mxu0 0.0
      %1808 = vmatprep.subr.mxu0 0.0
      %1809 = vmatpush1.msra.mxu0 0.0
      %1810 = vmatprep.subr.mxu0 0.0
      %1811 = vmatpush1.msra.mxu0 0.0
      %1812 = vmatprep.subr.mxu0 0.0
      %1813 = vmatpush1.msra.mxu0 0.0
      %1814 = vmatprep.subr.mxu0 0.0
      %1815 = vmatpush1.msra.mxu0 0.0
      %1816 = vmatprep.subr.mxu0 0.0
      %1817 = vmatpush1.msra.mxu0 0.0
      %1818 = vmatprep.subr.mxu0 0.0
      %1819 = vmatpush1.msra.mxu0 %v1788
      %1820 = vmatprep.subr.mxu0 0.0
      %1821 = vmatpush1.msra.mxu0 %v1781
      %1822 = vmatprep.subr.mxu0 0.0
      %1823 = vmatpush2.msra.mxu0 0.0
      %1824 = vmatprep.subr.mxu0 0.0
      %1825 = vmatpush2.msra.mxu0 0.0
      %1826 = vmatprep.subr.mxu0 0.0
      %1827 = vmatpush2.msra.mxu0 0.0
      %1828 = vmatprep.subr.mxu0 0.0
      %1829 = vmatpush2.msra.mxu0 0.0
      %1830 = vmatprep.subr.mxu0 0.0
      %1831 = vmatpush2.msra.mxu0 0.0
      %1832 = vmatprep.subr.mxu0 0.0
      %1833 = vmatpush2.msra.mxu0 0.0
      %1834 = vmatprep.subr.mxu0 0.0
      %1835 = vmatpush2.msra.mxu0 0.0
      %1836 = vmatprep.subr.mxu0 0.0
      %1837 = vmatpush2.msra.mxu0 0.0
      %1838 = vmatprep.subr.mxu0 0.0
      %1839 = vmatpush2.msra.mxu0 0.0
      %1840 = vmatprep.subr.mxu0 0.0
      %1841 = vmatpush2.msra.mxu0 0.0
      %1842 = vmatprep.subr.mxu0 0.0
      %1843 = vmatpush2.msra.mxu0 0.0
      %1844 = vmatprep.subr.mxu0 0.0
      %1845 = vmatpush2.msra.mxu0 0.0
      %1846 = vmatprep.subr.mxu0 0.0
      %1847 = vmatpush2.msra.mxu0 0.0
      %1848 = vmatprep.subr.mxu0 0.0
      %1849 = vmatpush2.msra.mxu0 0.0
      %1850 = vmatprep.subr.mxu0 0.0
      %1851 = vmatpush2.msra.mxu0 0.0
      %1852 = vmatprep.subr.mxu0 0.0
      %1853 = vmatpush2.msra.mxu0 0.0
      %1854 = vmatprep.mubr.f32.mxu0 0.0
      %1855 = vmatmul.mubr.f32.gmra.mxu0 %v1786
      %v1856 = vpop.f32.mrf.mxu0
      %v1857 = vadd.f32 0.0, %v1856
      %v1858 = vpop.f32.mrf.mxu0
      %1859 = vdwg.mxu0
      %1860 = vrot.lane.b32.xlu0 %v811, 80
      %v1861 = vpop.permute.xlu0 %1860
      %1862 = vrot.lane.b32.xlu0 %v807, 16
      %v1863 = vpop.permute.xlu0 %1862
      %1864 = vrot.lane.b32.xlu0 %v811, 16
      %v1865 = vpop.permute.xlu0 %1864
      %v1866 = vsel %vm821, %v1861, 0
      %v1868 = vsel %vm821, %v1863, 0
      %v1870 = vsel %vm821, %v1865, 0
      %1872 = vmatprep.subr.mxu0 0.0
      %1873 = vmatpush1.xpose.msra.mxu0 0.0
      %1874 = vmatprep.subr.mxu0 0.0
      %1875 = vmatpush1.xpose.msra.mxu0 0.0
      %1876 = vmatprep.subr.mxu0 0.0
      %1877 = vmatpush1.xpose.msra.mxu0 0.0
      %1878 = vmatprep.subr.mxu0 0.0
      %1879 = vmatpush1.xpose.msra.mxu0 0.0
      %1880 = vmatprep.subr.mxu0 0.0
      %1881 = vmatpush1.xpose.msra.mxu0 0.0
      %1882 = vmatprep.subr.mxu0 0.0
      %1883 = vmatpush1.xpose.msra.mxu0 0.0
      %1884 = vmatprep.subr.mxu0 0.0
      %1885 = vmatpush1.xpose.msra.mxu0 0.0
      %1886 = vmatprep.subr.mxu0 0.0
      %1887 = vmatpush1.xpose.msra.mxu0 0.0
      %1888 = vmatprep.subr.mxu0 0.0
      %1889 = vmatpush1.xpose.msra.mxu0 0.0
      %1890 = vmatprep.subr.mxu0 0.0
      %1891 = vmatpush1.xpose.msra.mxu0 0.0
      %1892 = vmatprep.subr.mxu0 0.0
      %1893 = vmatpush1.xpose.msra.mxu0 0.0
      %1894 = vmatprep.subr.mxu0 0.0
      %1895 = vmatpush1.xpose.msra.mxu0 0.0
      %1896 = vmatprep.subr.mxu0 0.0
      %1897 = vmatpush1.xpose.msra.mxu0 0.0
      %1898 = vmatprep.subr.mxu0 0.0
      %1899 = vmatpush1.xpose.msra.mxu0 0.0
      %1900 = vmatprep.subr.mxu0 0.0
      %1901 = vmatpush1.xpose.msra.mxu0 %v1870
      %1902 = vmatprep.subr.mxu0 0.0
      %1903 = vmatpush1.xpose.msra.mxu0 %v1868
      %1904 = vmatprep.subr.mxu0 0.0
      %1905 = vmatpush2.xpose.msra.mxu0 0.0
      %1906 = vmatprep.subr.mxu0 0.0
      %1907 = vmatpush2.xpose.msra.mxu0 0.0
      %1908 = vmatprep.subr.mxu0 0.0
      %1909 = vmatpush2.xpose.msra.mxu0 0.0
      %1910 = vmatprep.subr.mxu0 0.0
      %1911 = vmatpush2.xpose.msra.mxu0 0.0
      %1912 = vmatprep.subr.mxu0 0.0
      %1913 = vmatpush2.xpose.msra.mxu0 0.0
      %1914 = vmatprep.subr.mxu0 0.0
      %1915 = vmatpush2.xpose.msra.mxu0 0.0
      %1916 = vmatprep.subr.mxu0 0.0
      %1917 = vmatpush2.xpose.msra.mxu0 0.0
      %1918 = vmatprep.subr.mxu0 0.0
      %1919 = vmatpush2.xpose.msra.mxu0 0.0
      %1920 = vmatprep.subr.mxu0 0.0
      %1921 = vmatpush2.xpose.msra.mxu0 0.0
      %1922 = vmatprep.subr.mxu0 0.0
      %1923 = vmatpush2.xpose.msra.mxu0 0.0
      %1924 = vmatprep.subr.mxu0 0.0
      %1925 = vmatpush2.xpose.msra.mxu0 0.0
      %1926 = vmatprep.subr.mxu0 0.0
      %1927 = vmatpush2.xpose.msra.mxu0 0.0
      %1928 = vmatprep.subr.mxu0 0.0
      %1929 = vmatpush2.xpose.msra.mxu0 0.0
      %1930 = vmatprep.subr.mxu0 0.0
      %1931 = vmatpush2.xpose.msra.mxu0 0.0
      %1932 = vmatprep.subr.mxu0 0.0
      %1933 = vmatpush2.xpose.msra.mxu0 0.0
      %1934 = vmatprep.subr.mxu0 0.0
      %1935 = vmatpush2.xpose.msra.mxu0 0.0
      %1936 = vmatprep.mubr.f32.mxu0 0.0
      %1937 = vmatmul.mubr.f32.gmra.mxu0 %v1866
      %v1938 = vpop.f32.mrf.mxu0
      %v1939 = vadd.f32 0.0, %v1938
      %v1940 = vpop.f32.mrf.mxu0
      %1941 = vdwg.mxu0
      %v1942 = vmul.f32 %v1939, 0.35355338
      %v1943 = vsel %vm899, %v1942, -inf
      %1944 = vmax.xlane.f32.xlu0 %v1943
      %v1945 = vpop.xlane.xlu0 %1944
      %v1946 = vsub.f32 %v1942, %v1945
      %v1947 = vmul.f32 %v1946, 1.442695
      %v1948 = vpow.pop %v1947
      %v1949 = vsel %vm899, %v1948, 0.0
      %1950 = vadd.xlane.f32.xlu0 %v1949
      %v1951 = vpop.xlane.xlu0 %1950
      %v1952 = vrcp.pop %v1951
      %v1953 = vmul.f32 %v1948, %v1952
      %1954 = vrot.lane.b32.xlu0 %v809, 80
      %v1955 = vpop.permute.xlu0 %1954
      %1956 = vrot.lane.b32.xlu0 %v813, 80
      %v1957 = vpop.permute.xlu0 %1956
      %v1960 = vsel %vm911, %v1953, 0
      %v1962 = vsel %vm915, %v1957, 0
      %1964 = vmatprep.subr.mxu0 0.0
      %1965 = vmatpush1.msra.mxu0 0.0
      %1966 = vmatprep.subr.mxu0 0.0
      %1967 = vmatpush1.msra.mxu0 0.0
      %1968 = vmatprep.subr.mxu0 0.0
      %1969 = vmatpush1.msra.mxu0 0.0
      %1970 = vmatprep.subr.mxu0 0.0
      %1971 = vmatpush1.msra.mxu0 0.0
      %1972 = vmatprep.subr.mxu0 0.0
      %1973 = vmatpush1.msra.mxu0 0.0
      %1974 = vmatprep.subr.mxu0 0.0
      %1975 = vmatpush1.msra.mxu0 0.0
      %1976 = vmatprep.subr.mxu0 0.0
      %1977 = vmatpush1.msra.mxu0 0.0
      %1978 = vmatprep.subr.mxu0 0.0
      %1979 = vmatpush1.msra.mxu0 0.0
      %1980 = vmatprep.subr.mxu0 0.0
      %1981 = vmatpush1.msra.mxu0 0.0
      %1982 = vmatprep.subr.mxu0 0.0
      %1983 = vmatpush1.msra.mxu0 0.0
      %1984 = vmatprep.subr.mxu0 0.0
      %1985 = vmatpush1.msra.mxu0 0.0
      %1986 = vmatprep.subr.mxu0 0.0
      %1987 = vmatpush1.msra.mxu0 0.0
      %1988 = vmatprep.subr.mxu0 0.0
      %1989 = vmatpush1.msra.mxu0 0.0
      %1990 = vmatprep.subr.mxu0 0.0
      %1991 = vmatpush1.msra.mxu0 0.0
      %1992 = vmatprep.subr.mxu0 0.0
      %1993 = vmatpush1.msra.mxu0 %v1962
      %1994 = vmatprep.subr.mxu0 0.0
      %1995 = vmatpush1.msra.mxu0 %v1955
      %1996 = vmatprep.subr.mxu0 0.0
      %1997 = vmatpush2.msra.mxu0 0.0
      %1998 = vmatprep.subr.mxu0 0.0
      %1999 = vmatpush2.msra.mxu0 0.0
      %2000 = vmatprep.subr.mxu0 0.0
      %2001 = vmatpush2.msra.mxu0 0.0
      %2002 = vmatprep.subr.mxu0 0.0
      %2003 = vmatpush2.msra.mxu0 0.0
      %2004 = vmatprep.subr.mxu0 0.0
      %2005 = vmatpush2.msra.mxu0 0.0
      %2006 = vmatprep.subr.mxu0 0.0
      %2007 = vmatpush2.msra.mxu0 0.0
      %2008 = vmatprep.subr.mxu0 0.0
      %2009 = vmatpush2.msra.mxu0 0.0
      %2010 = vmatprep.subr.mxu0 0.0
      %2011 = vmatpush2.msra.mxu0 0.0
      %2012 = vmatprep.subr.mxu0 0.0
      %2013 = vmatpush2.msra.mxu0 0.0
      %2014 = vmatprep.subr.mxu0 0.0
      %2015 = vmatpush2.msra.mxu0 0.0
      %2016 = vmatprep.subr.mxu0 0.0
      %2017 = vmatpush2.msra.mxu0 0.0
      %2018 = vmatprep.subr.mxu0 0.0
      %2019 = vmatpush2.msra.mxu0 0.0
      %2020 = vmatprep.subr.mxu0 0.0
      %2021 = vmatpush2.msra.mxu0 0.0
      %2022 = vmatprep.subr.mxu0 0.0
      %2023 = vmatpush2.msra.mxu0 0.0
      %2024 = vmatprep.subr.mxu0 0.0
      %2025 = vmatpush2.msra.mxu0 0.0
      %2026 = vmatprep.subr.mxu0 0.0
      %2027 = vmatpush2.msra.mxu0 0.0
      %2028 = vmatprep.mubr.f32.mxu0 0.0
      %2029 = vmatmul.mubr.f32.gmra.mxu0 %v1960
      %v2030 = vpop.f32.mrf.mxu0
      %v2031 = vadd.f32 0.0, %v2030
      %v2032 = vpop.f32.mrf.mxu0
      %2033 = vdwg.mxu0
      %2034 = vrot.lane.b32.xlu0 %v811, 72
      %v2035 = vpop.permute.xlu0 %2034
      %2036 = vrot.lane.b32.xlu0 %v807, 8
      %v2037 = vpop.permute.xlu0 %2036
      %2038 = vrot.lane.b32.xlu0 %v811, 8
      %v2039 = vpop.permute.xlu0 %2038
      %v2040 = vsel %vm821, %v2035, 0
      %v2042 = vsel %vm821, %v2037, 0
      %v2044 = vsel %vm821, %v2039, 0
      %2046 = vmatprep.subr.mxu0 0.0
      %2047 = vmatpush1.xpose.msra.mxu0 0.0
      %2048 = vmatprep.subr.mxu0 0.0
      %2049 = vmatpush1.xpose.msra.mxu0 0.0
      %2050 = vmatprep.subr.mxu0 0.0
      %2051 = vmatpush1.xpose.msra.mxu0 0.0
      %2052 = vmatprep.subr.mxu0 0.0
      %2053 = vmatpush1.xpose.msra.mxu0 0.0
      %2054 = vmatprep.subr.mxu0 0.0
      %2055 = vmatpush1.xpose.msra.mxu0 0.0
      %2056 = vmatprep.subr.mxu0 0.0
      %2057 = vmatpush1.xpose.msra.mxu0 0.0
      %2058 = vmatprep.subr.mxu0 0.0
      %2059 = vmatpush1.xpose.msra.mxu0 0.0
      %2060 = vmatprep.subr.mxu0 0.0
      %2061 = vmatpush1.xpose.msra.mxu0 0.0
      %2062 = vmatprep.subr.mxu0 0.0
      %2063 = vmatpush1.xpose.msra.mxu0 0.0
      %2064 = vmatprep.subr.mxu0 0.0
      %2065 = vmatpush1.xpose.msra.mxu0 0.0
      %2066 = vmatprep.subr.mxu0 0.0
      %2067 = vmatpush1.xpose.msra.mxu0 0.0
      %2068 = vmatprep.subr.mxu0 0.0
      %2069 = vmatpush1.xpose.msra.mxu0 0.0
      %2070 = vmatprep.subr.mxu0 0.0
      %2071 = vmatpush1.xpose.msra.mxu0 0.0
      %2072 = vmatprep.subr.mxu0 0.0
      %2073 = vmatpush1.xpose.msra.mxu0 0.0
      %2074 = vmatprep.subr.mxu0 0.0
      %2075 = vmatpush1.xpose.msra.mxu0 %v2044
      %2076 = vmatprep.subr.mxu0 0.0
      %2077 = vmatpush1.xpose.msra.mxu0 %v2042
      %2078 = vmatprep.subr.mxu0 0.0
      %2079 = vmatpush2.xpose.msra.mxu0 0.0
      %2080 = vmatprep.subr.mxu0 0.0
      %2081 = vmatpush2.xpose.msra.mxu0 0.0
      %2082 = vmatprep.subr.mxu0 0.0
      %2083 = vmatpush2.xpose.msra.mxu0 0.0
      %2084 = vmatprep.subr.mxu0 0.0
      %2085 = vmatpush2.xpose.msra.mxu0 0.0
      %2086 = vmatprep.subr.mxu0 0.0
      %2087 = vmatpush2.xpose.msra.mxu0 0.0
      %2088 = vmatprep.subr.mxu0 0.0
      %2089 = vmatpush2.xpose.msra.mxu0 0.0
      %2090 = vmatprep.subr.mxu0 0.0
      %2091 = vmatpush2.xpose.msra.mxu0 0.0
      %2092 = vmatprep.subr.mxu0 0.0
      %2093 = vmatpush2.xpose.msra.mxu0 0.0
      %2094 = vmatprep.subr.mxu0 0.0
      %2095 = vmatpush2.xpose.msra.mxu0 0.0
      %2096 = vmatprep.subr.mxu0 0.0
      %2097 = vmatpush2.xpose.msra.mxu0 0.0
      %2098 = vmatprep.subr.mxu0 0.0
      %2099 = vmatpush2.xpose.msra.mxu0 0.0
      %2100 = vmatprep.subr.mxu0 0.0
      %2101 = vmatpush2.xpose.msra.mxu0 0.0
      %2102 = vmatprep.subr.mxu0 0.0
      %2103 = vmatpush2.xpose.msra.mxu0 0.0
      %2104 = vmatprep.subr.mxu0 0.0
      %2105 = vmatpush2.xpose.msra.mxu0 0.0
      %2106 = vmatprep.subr.mxu0 0.0
      %2107 = vmatpush2.xpose.msra.mxu0 0.0
      %2108 = vmatprep.subr.mxu0 0.0
      %2109 = vmatpush2.xpose.msra.mxu0 0.0
      %2110 = vmatprep.mubr.f32.mxu0 0.0
      %2111 = vmatmul.mubr.f32.gmra.mxu0 %v2040
      %v2112 = vpop.f32.mrf.mxu0
      %v2113 = vadd.f32 0.0, %v2112
      %v2114 = vpop.f32.mrf.mxu0
      %2115 = vdwg.mxu0
      %v2116 = vmul.f32 %v2113, 0.35355338
      %v2117 = vsel %vm899, %v2116, -inf
      %2118 = vmax.xlane.f32.xlu0 %v2117
      %v2119 = vpop.xlane.xlu0 %2118
      %v2120 = vsub.f32 %v2116, %v2119
      %v2121 = vmul.f32 %v2120, 1.442695
      %v2122 = vpow.pop %v2121
      %v2123 = vsel %vm899, %v2122, 0.0
      %2124 = vadd.xlane.f32.xlu0 %v2123
      %v2125 = vpop.xlane.xlu0 %2124
      %v2126 = vrcp.pop %v2125
      %v2127 = vmul.f32 %v2122, %v2126
      %2128 = vrot.lane.b32.xlu0 %v809, 72
      %v2129 = vpop.permute.xlu0 %2128
      %2130 = vrot.lane.b32.xlu0 %v813, 72
      %v2131 = vpop.permute.xlu0 %2130
      %v2134 = vsel %vm911, %v2127, 0
      %v2136 = vsel %vm915, %v2131, 0
      %2138 = vmatprep.subr.mxu0 0.0
      %2139 = vmatpush1.msra.mxu0 0.0
      %2140 = vmatprep.subr.mxu0 0.0
      %2141 = vmatpush1.msra.mxu0 0.0
      %2142 = vmatprep.subr.mxu0 0.0
      %2143 = vmatpush1.msra.mxu0 0.0
      %2144 = vmatprep.subr.mxu0 0.0
      %2145 = vmatpush1.msra.mxu0 0.0
      %2146 = vmatprep.subr.mxu0 0.0
      %2147 = vmatpush1.msra.mxu0 0.0
      %2148 = vmatprep.subr.mxu0 0.0
      %2149 = vmatpush1.msra.mxu0 0.0
      %2150 = vmatprep.subr.mxu0 0.0
      %2151 = vmatpush1.msra.mxu0 0.0
      %2152 = vmatprep.subr.mxu0 0.0
      %2153 = vmatpush1.msra.mxu0 0.0
      %2154 = vmatprep.subr.mxu0 0.0
      %2155 = vmatpush1.msra.mxu0 0.0
      %2156 = vmatprep.subr.mxu0 0.0
      %2157 = vmatpush1.msra.mxu0 0.0
      %2158 = vmatprep.subr.mxu0 0.0
      %2159 = vmatpush1.msra.mxu0 0.0
      %2160 = vmatprep.subr.mxu0 0.0
      %2161 = vmatpush1.msra.mxu0 0.0
      %2162 = vmatprep.subr.mxu0 0.0
      %2163 = vmatpush1.msra.mxu0 0.0
      %2164 = vmatprep.subr.mxu0 0.0
      %2165 = vmatpush1.msra.mxu0 0.0
      %2166 = vmatprep.subr.mxu0 0.0
      %2167 = vmatpush1.msra.mxu0 %v2136
      %2168 = vmatprep.subr.mxu0 0.0
      %2169 = vmatpush1.msra.mxu0 %v2129
      %2170 = vmatprep.subr.mxu0 0.0
      %2171 = vmatpush2.msra.mxu0 0.0
      %2172 = vmatprep.subr.mxu0 0.0
      %2173 = vmatpush2.msra.mxu0 0.0
      %2174 = vmatprep.subr.mxu0 0.0
      %2175 = vmatpush2.msra.mxu0 0.0
      %2176 = vmatprep.subr.mxu0 0.0
      %2177 = vmatpush2.msra.mxu0 0.0
      %2178 = vmatprep.subr.mxu0 0.0
      %2179 = vmatpush2.msra.mxu0 0.0
      %2180 = vmatprep.subr.mxu0 0.0
      %2181 = vmatpush2.msra.mxu0 0.0
      %2182 = vmatprep.subr.mxu0 0.0
      %2183 = vmatpush2.msra.mxu0 0.0
      %2184 = vmatprep.subr.mxu0 0.0
      %2185 = vmatpush2.msra.mxu0 0.0
      %2186 = vmatprep.subr.mxu0 0.0
      %2187 = vmatpush2.msra.mxu0 0.0
      %2188 = vmatprep.subr.mxu0 0.0
      %2189 = vmatpush2.msra.mxu0 0.0
      %2190 = vmatprep.subr.mxu0 0.0
      %2191 = vmatpush2.msra.mxu0 0.0
      %2192 = vmatprep.subr.mxu0 0.0
      %2193 = vmatpush2.msra.mxu0 0.0
      %2194 = vmatprep.subr.mxu0 0.0
      %2195 = vmatpush2.msra.mxu0 0.0
      %2196 = vmatprep.subr.mxu0 0.0
      %2197 = vmatpush2.msra.mxu0 0.0
      %2198 = vmatprep.subr.mxu0 0.0
      %2199 = vmatpush2.msra.mxu0 0.0
      %2200 = vmatprep.subr.mxu0 0.0
      %2201 = vmatpush2.msra.mxu0 0.0
      %2202 = vmatprep.mubr.f32.mxu0 0.0
      %2203 = vmatmul.mubr.f32.gmra.mxu0 %v2134
      %v2204 = vpop.f32.mrf.mxu0
      %v2205 = vadd.f32 0.0, %v2204
      %v2206 = vpop.f32.mrf.mxu0
      %2207 = vdwg.mxu0
      %2209 = vrot.lane.b32.xlu0 %v1161, 8
      %v2210 = vpop.permute.xlu0 %2209
      %2213 = vrot.lane.b32.xlu0 %v1335, 16
      %v2214 = vpop.permute.xlu0 %2213
      %2217 = vrot.lane.b32.xlu0 %v1509, 24
      %v2218 = vpop.permute.xlu0 %2217
      %2221 = vrot.lane.b32.xlu0 %v1683, 32
      %v2222 = vpop.permute.xlu0 %2221
      %2225 = vrot.lane.b32.xlu0 %v1857, 40
      %v2226 = vpop.permute.xlu0 %2225
      %2229 = vrot.lane.b32.xlu0 %v2031, 48
      %v2230 = vpop.permute.xlu0 %2229
      %2233 = vrot.lane.b32.xlu0 %v2205, 56
      %v2234 = vpop.permute.xlu0 %2233
      %v2236 = vsel %vm821, %v986, %v2210
      %vm2237 = vcmask 130048
      %v2238 = vsel %vm2237, %v2236, %v2214
      %vm2239 = vcmask 195584
      %v2240 = vsel %vm2239, %v2238, %v2218
      %vm2241 = vcmask 261120
      %v2242 = vsel %vm2241, %v2240, %v2222
      %vm2243 = vcmask 326656
      %v2244 = vsel %vm2243, %v2242, %v2226
      %vm2245 = vcmask 392192
      %v2246 = vsel %vm2245, %v2244, %v2230
      %vm2247 = vcmask 457728
      %v2248 = vsel %vm2247, %v2246, %v2234
      %v2249 = vpack.c.bf16 %v2248, %v2248
      %v2250 = vld [vmem:[%s4] sm:$0xf]
      %v2251 = vld [vmem:[%s4 + $0x4] sm:$0xf]
      %v2252 = vld [vmem:[%s4 + $0x8] sm:$0xf]
      %v2253 = vld [vmem:[%s4 + $0xc] sm:$0xf]
      %v2254 = vld [vmem:[%s4 + $0x10] sm:$0xf]
      %v2255 = vld [vmem:[%s4 + $0x14] sm:$0xf]
      %v2256 = vld [vmem:[%s4 + $0x18] sm:$0xf]
      %v2257 = vld [vmem:[%s4 + $0x1c] sm:$0xf]
      %v2258 = vld [vmem:[%s5] sm:$0x1]
      %v2260 = vlaneseq
      %v2261 = vshrl.u32 %v2260, 7
      %v2262 = vsub.s32 0, %v2261
      %v2263 = vrot.slane %v2258, %v2262
      %v2273 = vunpack.c.l.b16 %v2250
      %v2274 = vunpack.c.l.b16 %v2251
      %v2275 = vunpack.c.l.b16 %v2252
      %v2276 = vunpack.c.l.b16 %v2253
      %v2277 = vunpack.c.l.b16 %v2254
      %v2278 = vunpack.c.l.b16 %v2255
      %v2279 = vunpack.c.l.b16 %v2256
      %v2280 = vunpack.c.l.b16 %v2257
      %v2281 = vpack.c.b16 %v2274, %v2273
      %v2282 = vpack.c.b16 %v2276, %v2275
      %v2283 = vpack.c.b16 %v2278, %v2277
      %v2284 = vpack.c.b16 %v2280, %v2279
      %v2290 = vsel %vm768, %v2249, 0
      %2292 = vmatprep.subr.bf16.mxu0 0
      %2293 = vmatpush1.bf16.msra.mxu0 0
      %2294 = vmatprep.subr.bf16.mxu0 0
      %2295 = vmatpush1.bf16.msra.mxu0 0
      %2296 = vmatprep.subr.bf16.mxu0 0
      %2297 = vmatpush1.bf16.msra.mxu0 0
      %2298 = vmatprep.subr.bf16.mxu0 0
      %2299 = vmatpush1.bf16.msra.mxu0 0
      %2300 = vmatprep.subr.bf16.mxu0 0
      %2301 = vmatpush1.bf16.msra.mxu0 %v2284
      %2302 = vmatprep.subr.bf16.mxu0 0
      %2303 = vmatpush1.bf16.msra.mxu0 %v2283
      %2304 = vmatprep.subr.bf16.mxu0 0
      %2305 = vmatpush1.bf16.msra.mxu0 %v2282
      %2306 = vmatprep.subr.bf16.mxu0 0
      %2307 = vmatpush1.bf16.msra.mxu0 %v2281
      %2308 = vmatprep.subr.bf16.mxu0 0
      %2309 = vmatpush2.bf16.msra.mxu0 0
      %2310 = vmatprep.subr.bf16.mxu0 0
      %2311 = vmatpush2.bf16.msra.mxu0 0
      %2312 = vmatprep.subr.bf16.mxu0 0
      %2313 = vmatpush2.bf16.msra.mxu0 0
      %2314 = vmatprep.subr.bf16.mxu0 0
      %2315 = vmatpush2.bf16.msra.mxu0 0
      %2316 = vmatprep.subr.bf16.mxu0 0
      %2317 = vmatpush2.bf16.msra.mxu0 0
      %2318 = vmatprep.subr.bf16.mxu0 0
      %2319 = vmatpush2.bf16.msra.mxu0 0
      %2320 = vmatprep.subr.bf16.mxu0 0
      %2321 = vmatpush2.bf16.msra.mxu0 0
      %2322 = vmatprep.subr.bf16.mxu0 0
      %2323 = vmatpush2.bf16.msra.mxu0 0
      %2324 = vmatprep.mubr.bf16.mxu0 0
      %2325 = vmatmul.mubr.bf16.gmra.mxu0 %v2290
      %v2326 = vpop.f32.mrf.mxu0
      %v2327 = vadd.f32 %v2263, %v2326
      %v2328 = vpop.f32.mrf.mxu0
      %v2329 = vpop.f32.mrf.mxu0
      %v2330 = vpop.f32.mrf.mxu0
      %2331 = vdwg.mxu0
      %v2332 = vadd.f32 %v704, %v2327
      %v2333 = vld [vmem:[%s12] sm:$0x1]
      %v2334 = vld [vmem:[%s13] sm:$0x1]
      %vm2335 = vcmask 519168
      %v2336 = vsel %vm2335, %v2332, 0.0
      %2337 = vadd.xlane.f32.xlu0 %v2336
      %v2338 = vpop.xlane.xlu0 %2337
      %v2339 = vrcp.pop 64.0
      %v2340 = vmul.f32 %v2338, %v2339
      %v2341 = vsub.f32 %v2332, %v2340
      %v2342 = vmul.f32 %v2341, %v2341
      %v2343 = vsel %vm2335, %v2342, 0.0
      %2344 = vadd.xlane.f32.xlu0 %v2343
      %v2345 = vpop.xlane.xlu0 %2344
      %v2346 = vmul.f32 %v2345, %v2339
      %v2347 = vadd.f32 %v2346, 1e-05
      %v2348 = vrsqrt.pop %v2347
      %v2349 = vmul.f32 %v2341, %v2348
      %v2351 = vlaneseq
      %v2352 = vshrl.u32 %v2351, 7
      %v2353 = vsub.s32 0, %v2352
      %v2354 = vrot.slane %v2333, %v2353
      %v2356 = vmul.f32 %v2349, %v2354
      %v2358 = vlaneseq
      %v2359 = vshrl.u32 %v2358, 7
      %v2360 = vsub.s32 0, %v2359
      %v2361 = vrot.slane %v2334, %v2360
      %v2363 = vadd.f32 %v2356, %v2361
      %v2364 = vpack.c.bf16 %v2363, %v2363
      %v2365 = vld [vmem:[%s6] sm:$0xf]
      %v2366 = vld [vmem:[%s6 + $0x4] sm:$0xf]
      %v2367 = vld [vmem:[%s6 + $0x8] sm:$0xf]
      %v2368 = vld [vmem:[%s6 + $0xc] sm:$0xf]
      %v2369 = vld [vmem:[%s6 + $0x10] sm:$0xf]
      %v2370 = vld [vmem:[%s6 + $0x14] sm:$0xf]
      %v2371 = vld [vmem:[%s6 + $0x18] sm:$0xf]
      %v2372 = vld [vmem:[%s6 + $0x1c] sm:$0xf]
      %v2373 = vld [vmem:[%s7] sm:$0x1]
      %v2375 = vlaneseq
      %v2376 = vshrl.u32 %v2375, 7
      %v2377 = vsub.s32 0, %v2376
      %v2378 = vrot.slane %v2373, %v2377
      %v2388 = vunpack.c.l.b16 %v2365
      %v2389 = vunpack.c.l.b16 %v2366
      %v2390 = vunpack.c.l.b16 %v2367
      %v2391 = vunpack.c.l.b16 %v2368
      %v2392 = vunpack.c.l.b16 %v2369
      %v2393 = vunpack.c.l.b16 %v2370
      %v2394 = vunpack.c.l.b16 %v2371
      %v2395 = vunpack.c.l.b16 %v2372
      %v2396 = vpack.c.b16 %v2389, %v2388
      %v2397 = vpack.c.b16 %v2391, %v2390
      %v2398 = vpack.c.b16 %v2393, %v2392
      %v2399 = vpack.c.b16 %v2395, %v2394
      %v2405 = vsel %vm768, %v2364, 0
      %2407 = vmatprep.subr.bf16.mxu0 0
      %2408 = vmatpush1.bf16.msra.mxu0 0
      %2409 = vmatprep.subr.bf16.mxu0 0
      %2410 = vmatpush1.bf16.msra.mxu0 0
      %2411 = vmatprep.subr.bf16.mxu0 0
      %2412 = vmatpush1.bf16.msra.mxu0 0
      %2413 = vmatprep.subr.bf16.mxu0 0
      %2414 = vmatpush1.bf16.msra.mxu0 0
      %2415 = vmatprep.subr.bf16.mxu0 0
      %2416 = vmatpush1.bf16.msra.mxu0 %v2399
      %2417 = vmatprep.subr.bf16.mxu0 0
      %2418 = vmatpush1.bf16.msra.mxu0 %v2398
      %2419 = vmatprep.subr.bf16.mxu0 0
      %2420 = vmatpush1.bf16.msra.mxu0 %v2397
      %2421 = vmatprep.subr.bf16.mxu0 0
      %2422 = vmatpush1.bf16.msra.mxu0 %v2396
      %2423 = vmatprep.subr.bf16.mxu0 0
      %2424 = vmatpush2.bf16.msra.mxu0 0
      %2425 = vmatprep.subr.bf16.mxu0 0
      %2426 = vmatpush2.bf16.msra.mxu0 0
      %2427 = vmatprep.subr.bf16.mxu0 0
      %2428 = vmatpush2.bf16.msra.mxu0 0
      %2429 = vmatprep.subr.bf16.mxu0 0
      %2430 = vmatpush2.bf16.msra.mxu0 0
      %2431 = vmatprep.subr.bf16.mxu0 0
      %2432 = vmatpush2.bf16.msra.mxu0 0
      %2433 = vmatprep.subr.bf16.mxu0 0
      %2434 = vmatpush2.bf16.msra.mxu0 0
      %2435 = vmatprep.subr.bf16.mxu0 0
      %2436 = vmatpush2.bf16.msra.mxu0 0
      %2437 = vmatprep.subr.bf16.mxu0 0
      %2438 = vmatpush2.bf16.msra.mxu0 0
      %2439 = vmatprep.mubr.bf16.mxu0 0
      %2440 = vmatmul.mubr.bf16.gmra.mxu0 %v2405
      %v2441 = vpop.f32.mrf.mxu0
      %v2442 = vadd.f32 %v2378, %v2441
      %v2443 = vpop.f32.mrf.mxu0
      %v2444 = vpop.f32.mrf.mxu0
      %v2445 = vpop.f32.mrf.mxu0
      %2446 = vdwg.mxu0
      %v2447 = vpack.c.bf16 %v706, %v705
      %v2448 = vld [vmem:[%s8] sm:$0xf]
      %v2449 = vld [vmem:[%s8 + $0x4] sm:$0xf]
      %v2450 = vld [vmem:[%s8 + $0x8] sm:$0xf]
      %v2451 = vld [vmem:[%s8 + $0xc] sm:$0xf]
      %v2452 = vld [vmem:[%s8 + $0x10] sm:$0xf]
      %v2453 = vld [vmem:[%s8 + $0x14] sm:$0xf]
      %v2454 = vld [vmem:[%s8 + $0x18] sm:$0xf]
      %v2455 = vld [vmem:[%s8 + $0x1c] sm:$0xf]
      %v2456 = vld [vmem:[%s9] sm:$0x1]
      %v2458 = vlaneseq
      %v2459 = vshrl.u32 %v2458, 7
      %v2460 = vsub.s32 0, %v2459
      %v2461 = vrot.slane %v2456, %v2460
      %v2471 = vunpack.c.l.b16 %v2448
      %v2472 = vunpack.c.l.b16 %v2449
      %v2473 = vunpack.c.l.b16 %v2450
      %v2474 = vunpack.c.l.b16 %v2451
      %v2475 = vunpack.c.l.b16 %v2452
      %v2476 = vunpack.c.l.b16 %v2453
      %v2477 = vunpack.c.l.b16 %v2454
      %v2478 = vunpack.c.l.b16 %v2455
      %v2479 = vpack.c.b16 %v2472, %v2471
      %v2480 = vpack.c.b16 %v2474, %v2473
      %v2481 = vpack.c.b16 %v2476, %v2475
      %v2482 = vpack.c.b16 %v2478, %v2477
      %v2488 = vsel %vm768, %v2447, 0
      %2490 = vmatprep.subr.bf16.mxu0 0
      %2491 = vmatpush1.bf16.msra.mxu0 0
      %2492 = vmatprep.subr.bf16.mxu0 0
      %2493 = vmatpush1.bf16.msra.mxu0 0
      %2494 = vmatprep.subr.bf16.mxu0 0
      %2495 = vmatpush1.bf16.msra.mxu0 0
      %2496 = vmatprep.subr.bf16.mxu0 0
      %2497 = vmatpush1.bf16.msra.mxu0 0
      %2498 = vmatprep.subr.bf16.mxu0 0
      %2499 = vmatpush1.bf16.msra.mxu0 %v2482
      %2500 = vmatprep.subr.bf16.mxu0 0
      %2501 = vmatpush1.bf16.msra.mxu0 %v2481
      %2502 = vmatprep.subr.bf16.mxu0 0
      %2503 = vmatpush1.bf16.msra.mxu0 %v2480
      %2504 = vmatprep.subr.bf16.mxu0 0
      %2505 = vmatpush1.bf16.msra.mxu0 %v2479
      %2506 = vmatprep.subr.bf16.mxu0 0
      %2507 = vmatpush2.bf16.msra.mxu0 0
      %2508 = vmatprep.subr.bf16.mxu0 0
      %2509 = vmatpush2.bf16.msra.mxu0 0
      %2510 = vmatprep.subr.bf16.mxu0 0
      %2511 = vmatpush2.bf16.msra.mxu0 0
      %2512 = vmatprep.subr.bf16.mxu0 0
      %2513 = vmatpush2.bf16.msra.mxu0 0
      %2514 = vmatprep.subr.bf16.mxu0 0
      %2515 = vmatpush2.bf16.msra.mxu0 0
      %2516 = vmatprep.subr.bf16.mxu0 0
      %2517 = vmatpush2.bf16.msra.mxu0 0
      %2518 = vmatprep.subr.bf16.mxu0 0
      %2519 = vmatpush2.bf16.msra.mxu0 0
      %2520 = vmatprep.subr.bf16.mxu0 0
      %2521 = vmatpush2.bf16.msra.mxu0 0
      %2522 = vmatprep.mubr.bf16.mxu0 0
      %2523 = vmatmul.mubr.bf16.gmra.mxu0 %v2488
      %v2524 = vpop.f32.mrf.mxu0
      %v2525 = vadd.f32 %v2461, %v2524
      %v2526 = vpop.f32.mrf.mxu0
      %v2527 = vpop.f32.mrf.mxu0
      %v2528 = vadd.f32 %v2461, %v2527
      %v2529 = vpop.f32.mrf.mxu0
      %2530 = vdwg.mxu0
      %v2532 = vsel %vm821, %v2442, 0
      %v2535 = vsel %vm821, %v2525, 0
      %v2538 = vsel %vm821, %v2528, 0
      %2540 = vmatprep.subr.mxu0 0.0
      %2541 = vmatpush1.xpose.msra.mxu0 0.0
      %2542 = vmatprep.subr.mxu0 0.0
      %2543 = vmatpush1.xpose.msra.mxu0 0.0
      %2544 = vmatprep.subr.mxu0 0.0
      %2545 = vmatpush1.xpose.msra.mxu0 0.0
      %2546 = vmatprep.subr.mxu0 0.0
      %2547 = vmatpush1.xpose.msra.mxu0 0.0
      %2548 = vmatprep.subr.mxu0 0.0
      %2549 = vmatpush1.xpose.msra.mxu0 0.0
      %2550 = vmatprep.subr.mxu0 0.0
      %2551 = vmatpush1.xpose.msra.mxu0 0.0
      %2552 = vmatprep.subr.mxu0 0.0
      %2553 = vmatpush1.xpose.msra.mxu0 0.0
      %2554 = vmatprep.subr.mxu0 0.0
      %2555 = vmatpush1.xpose.msra.mxu0 0.0
      %2556 = vmatprep.subr.mxu0 0.0
      %2557 = vmatpush1.xpose.msra.mxu0 0.0
      %2558 = vmatprep.subr.mxu0 0.0
      %2559 = vmatpush1.xpose.msra.mxu0 0.0
      %2560 = vmatprep.subr.mxu0 0.0
      %2561 = vmatpush1.xpose.msra.mxu0 0.0
      %2562 = vmatprep.subr.mxu0 0.0
      %2563 = vmatpush1.xpose.msra.mxu0 0.0
      %2564 = vmatprep.subr.mxu0 0.0
      %2565 = vmatpush1.xpose.msra.mxu0 0.0
      %2566 = vmatprep.subr.mxu0 0.0
      %2567 = vmatpush1.xpose.msra.mxu0 0.0
      %2568 = vmatprep.subr.mxu0 0.0
      %2569 = vmatpush1.xpose.msra.mxu0 %v2538
      %2570 = vmatprep.subr.mxu0 0.0
      %2571 = vmatpush1.xpose.msra.mxu0 %v2535
      %2572 = vmatprep.subr.mxu0 0.0
      %2573 = vmatpush2.xpose.msra.mxu0 0.0
      %2574 = vmatprep.subr.mxu0 0.0
      %2575 = vmatpush2.xpose.msra.mxu0 0.0
      %2576 = vmatprep.subr.mxu0 0.0
      %2577 = vmatpush2.xpose.msra.mxu0 0.0
      %2578 = vmatprep.subr.mxu0 0.0
      %2579 = vmatpush2.xpose.msra.mxu0 0.0
      %2580 = vmatprep.subr.mxu0 0.0
      %2581 = vmatpush2.xpose.msra.mxu0 0.0
      %2582 = vmatprep.subr.mxu0 0.0
      %2583 = vmatpush2.xpose.msra.mxu0 0.0
      %2584 = vmatprep.subr.mxu0 0.0
      %2585 = vmatpush2.xpose.msra.mxu0 0.0
      %2586 = vmatprep.subr.mxu0 0.0
      %2587 = vmatpush2.xpose.msra.mxu0 0.0
      %2588 = vmatprep.subr.mxu0 0.0
      %2589 = vmatpush2.xpose.msra.mxu0 0.0
      %2590 = vmatprep.subr.mxu0 0.0
      %2591 = vmatpush2.xpose.msra.mxu0 0.0
      %2592 = vmatprep.subr.mxu0 0.0
      %2593 = vmatpush2.xpose.msra.mxu0 0.0
      %2594 = vmatprep.subr.mxu0 0.0
      %2595 = vmatpush2.xpose.msra.mxu0 0.0
      %2596 = vmatprep.subr.mxu0 0.0
      %2597 = vmatpush2.xpose.msra.mxu0 0.0
      %2598 = vmatprep.subr.mxu0 0.0
      %2599 = vmatpush2.xpose.msra.mxu0 0.0
      %2600 = vmatprep.subr.mxu0 0.0
      %2601 = vmatpush2.xpose.msra.mxu0 0.0
      %2602 = vmatprep.subr.mxu0 0.0
      %2603 = vmatpush2.xpose.msra.mxu0 0.0
      %2604 = vmatprep.mubr.f32.mxu0 0.0
      %2605 = vmatmul.mubr.f32.gmra.mxu0 %v2532
      %v2606 = vpop.f32.mrf.mxu0
      %v2607 = vadd.f32 0.0, %v2606
      %v2608 = vpop.f32.mrf.mxu0
      %2609 = vdwg.mxu0
      %v2610 = vmul.f32 %v2607, 0.35355338
      %v2611 = vsel %vm899, %v2610, -inf
      %2612 = vmax.xlane.f32.xlu0 %v2611
      %v2613 = vpop.xlane.xlu0 %2612
      %v2614 = vsub.f32 %v2610, %v2613
      %v2615 = vmul.f32 %v2614, 1.442695
      %v2616 = vpow.pop %v2615
      %v2617 = vsel %vm899, %v2616, 0.0
      %2618 = vadd.xlane.f32.xlu0 %v2617
      %v2619 = vpop.xlane.xlu0 %2618
      %v2620 = vrcp.pop %v2619
      %v2621 = vmul.f32 %v2616, %v2620
      %2622 = vrot.lane.b32.xlu0 %v2525, 64
      %v2623 = vpop.permute.xlu0 %2622
      %2624 = vrot.lane.b32.xlu0 %v2528, 64
      %v2625 = vpop.permute.xlu0 %2624
      %v2628 = vsel %vm911, %v2621, 0
      %v2630 = vsel %vm915, %v2625, 0
      %2632 = vmatprep.subr.mxu0 0.0
      %2633 = vmatpush1.msra.mxu0 0.0
      %2634 = vmatprep.subr.mxu0 0.0
      %2635 = vmatpush1.msra.mxu0 0.0
      %2636 = vmatprep.subr.mxu0 0.0
      %2637 = vmatpush1.msra.mxu0 0.0
      %2638 = vmatprep.subr.mxu0 0.0
      %2639 = vmatpush1.msra.mxu0 0.0
      %2640 = vmatprep.subr.mxu0 0.0
      %2641 = vmatpush1.msra.mxu0 0.0
      %2642 = vmatprep.subr.mxu0 0.0
      %2643 = vmatpush1.msra.mxu0 0.0
      %2644 = vmatprep.subr.mxu0 0.0
      %2645 = vmatpush1.msra.mxu0 0.0
      %2646 = vmatprep.subr.mxu0 0.0
      %2647 = vmatpush1.msra.mxu0 0.0
      %2648 = vmatprep.subr.mxu0 0.0
      %2649 = vmatpush1.msra.mxu0 0.0
      %2650 = vmatprep.subr.mxu0 0.0
      %2651 = vmatpush1.msra.mxu0 0.0
      %2652 = vmatprep.subr.mxu0 0.0
      %2653 = vmatpush1.msra.mxu0 0.0
      %2654 = vmatprep.subr.mxu0 0.0
      %2655 = vmatpush1.msra.mxu0 0.0
      %2656 = vmatprep.subr.mxu0 0.0
      %2657 = vmatpush1.msra.mxu0 0.0
      %2658 = vmatprep.subr.mxu0 0.0
      %2659 = vmatpush1.msra.mxu0 0.0
      %2660 = vmatprep.subr.mxu0 0.0
      %2661 = vmatpush1.msra.mxu0 %v2630
      %2662 = vmatprep.subr.mxu0 0.0
      %2663 = vmatpush1.msra.mxu0 %v2623
      %2664 = vmatprep.subr.mxu0 0.0
      %2665 = vmatpush2.msra.mxu0 0.0
      %2666 = vmatprep.subr.mxu0 0.0
      %2667 = vmatpush2.msra.mxu0 0.0
      %2668 = vmatprep.subr.mxu0 0.0
      %2669 = vmatpush2.msra.mxu0 0.0
      %2670 = vmatprep.subr.mxu0 0.0
      %2671 = vmatpush2.msra.mxu0 0.0
      %2672 = vmatprep.subr.mxu0 0.0
      %2673 = vmatpush2.msra.mxu0 0.0
      %2674 = vmatprep.subr.mxu0 0.0
      %2675 = vmatpush2.msra.mxu0 0.0
      %2676 = vmatprep.subr.mxu0 0.0
      %2677 = vmatpush2.msra.mxu0 0.0
      %2678 = vmatprep.subr.mxu0 0.0
      %2679 = vmatpush2.msra.mxu0 0.0
      %2680 = vmatprep.subr.mxu0 0.0
      %2681 = vmatpush2.msra.mxu0 0.0
      %2682 = vmatprep.subr.mxu0 0.0
      %2683 = vmatpush2.msra.mxu0 0.0
      %2684 = vmatprep.subr.mxu0 0.0
      %2685 = vmatpush2.msra.mxu0 0.0
      %2686 = vmatprep.subr.mxu0 0.0
      %2687 = vmatpush2.msra.mxu0 0.0
      %2688 = vmatprep.subr.mxu0 0.0
      %2689 = vmatpush2.msra.mxu0 0.0
      %2690 = vmatprep.subr.mxu0 0.0
      %2691 = vmatpush2.msra.mxu0 0.0
      %2692 = vmatprep.subr.mxu0 0.0
      %2693 = vmatpush2.msra.mxu0 0.0
      %2694 = vmatprep.subr.mxu0 0.0
      %2695 = vmatpush2.msra.mxu0 0.0
      %2696 = vmatprep.mubr.f32.mxu0 0.0
      %2697 = vmatmul.mubr.f32.gmra.mxu0 %v2628
      %v2698 = vpop.f32.mrf.mxu0
      %v2699 = vadd.f32 0.0, %v2698
      %v2700 = vpop.f32.mrf.mxu0
      %2701 = vdwg.mxu0
      %2702 = vrot.lane.b32.xlu0 %v2442, 120
      %v2703 = vpop.permute.xlu0 %2702
      %2704 = vrot.lane.b32.xlu0 %v2525, 120
      %v2705 = vpop.permute.xlu0 %2704
      %2706 = vrot.lane.b32.xlu0 %v2528, 120
      %v2707 = vpop.permute.xlu0 %2706
      %v2708 = vsel %vm821, %v2703, 0
      %v2710 = vsel %vm821, %v2705, 0
      %v2712 = vsel %vm821, %v2707, 0
      %2714 = vmatprep.subr.mxu0 0.0
      %2715 = vmatpush1.xpose.msra.mxu0 0.0
      %2716 = vmatprep.subr.mxu0 0.0
      %2717 = vmatpush1.xpose.msra.mxu0 0.0
      %2718 = vmatprep.subr.mxu0 0.0
      %2719 = vmatpush1.xpose.msra.mxu0 0.0
      %2720 = vmatprep.subr.mxu0 0.0
      %2721 = vmatpush1.xpose.msra.mxu0 0.0
      %2722 = vmatprep.subr.mxu0 0.0
      %2723 = vmatpush1.xpose.msra.mxu0 0.0
      %2724 = vmatprep.subr.mxu0 0.0
      %2725 = vmatpush1.xpose.msra.mxu0 0.0
      %2726 = vmatprep.subr.mxu0 0.0
      %2727 = vmatpush1.xpose.msra.mxu0 0.0
      %2728 = vmatprep.subr.mxu0 0.0
      %2729 = vmatpush1.xpose.msra.mxu0 0.0
      %2730 = vmatprep.subr.mxu0 0.0
      %2731 = vmatpush1.xpose.msra.mxu0 0.0
      %2732 = vmatprep.subr.mxu0 0.0
      %2733 = vmatpush1.xpose.msra.mxu0 0.0
      %2734 = vmatprep.subr.mxu0 0.0
      %2735 = vmatpush1.xpose.msra.mxu0 0.0
      %2736 = vmatprep.subr.mxu0 0.0
      %2737 = vmatpush1.xpose.msra.mxu0 0.0
      %2738 = vmatprep.subr.mxu0 0.0
      %2739 = vmatpush1.xpose.msra.mxu0 0.0
      %2740 = vmatprep.subr.mxu0 0.0
      %2741 = vmatpush1.xpose.msra.mxu0 0.0
      %2742 = vmatprep.subr.mxu0 0.0
      %2743 = vmatpush1.xpose.msra.mxu0 %v2712
      %2744 = vmatprep.subr.mxu0 0.0
      %2745 = vmatpush1.xpose.msra.mxu0 %v2710
      %2746 = vmatprep.subr.mxu0 0.0
      %2747 = vmatpush2.xpose.msra.mxu0 0.0
      %2748 = vmatprep.subr.mxu0 0.0
      %2749 = vmatpush2.xpose.msra.mxu0 0.0
      %2750 = vmatprep.subr.mxu0 0.0
      %2751 = vmatpush2.xpose.msra.mxu0 0.0
      %2752 = vmatprep.subr.mxu0 0.0
      %2753 = vmatpush2.xpose.msra.mxu0 0.0
      %2754 = vmatprep.subr.mxu0 0.0
      %2755 = vmatpush2.xpose.msra.mxu0 0.0
      %2756 = vmatprep.subr.mxu0 0.0
      %2757 = vmatpush2.xpose.msra.mxu0 0.0
      %2758 = vmatprep.subr.mxu0 0.0
      %2759 = vmatpush2.xpose.msra.mxu0 0.0
      %2760 = vmatprep.subr.mxu0 0.0
      %2761 = vmatpush2.xpose.msra.mxu0 0.0
      %2762 = vmatprep.subr.mxu0 0.0
      %2763 = vmatpush2.xpose.msra.mxu0 0.0
      %2764 = vmatprep.subr.mxu0 0.0
      %2765 = vmatpush2.xpose.msra.mxu0 0.0
      %2766 = vmatprep.subr.mxu0 0.0
      %2767 = vmatpush2.xpose.msra.mxu0 0.0
      %2768 = vmatprep.subr.mxu0 0.0
      %2769 = vmatpush2.xpose.msra.mxu0 0.0
      %2770 = vmatprep.subr.mxu0 0.0
      %2771 = vmatpush2.xpose.msra.mxu0 0.0
      %2772 = vmatprep.subr.mxu0 0.0
      %2773 = vmatpush2.xpose.msra.mxu0 0.0
      %2774 = vmatprep.subr.mxu0 0.0
      %2775 = vmatpush2.xpose.msra.mxu0 0.0
      %2776 = vmatprep.subr.mxu0 0.0
      %2777 = vmatpush2.xpose.msra.mxu0 0.0
      %2778 = vmatprep.mubr.f32.mxu0 0.0
      %2779 = vmatmul.mubr.f32.gmra.mxu0 %v2708
      %v2780 = vpop.f32.mrf.mxu0
      %v2781 = vadd.f32 0.0, %v2780
      %v2782 = vpop.f32.mrf.mxu0
      %2783 = vdwg.mxu0
      %v2784 = vmul.f32 %v2781, 0.35355338
      %v2785 = vsel %vm899, %v2784, -inf
      %2786 = vmax.xlane.f32.xlu0 %v2785
      %v2787 = vpop.xlane.xlu0 %2786
      %v2788 = vsub.f32 %v2784, %v2787
      %v2789 = vmul.f32 %v2788, 1.442695
      %v2790 = vpow.pop %v2789
      %v2791 = vsel %vm899, %v2790, 0.0
      %2792 = vadd.xlane.f32.xlu0 %v2791
      %v2793 = vpop.xlane.xlu0 %2792
      %v2794 = vrcp.pop %v2793
      %v2795 = vmul.f32 %v2790, %v2794
      %2796 = vrot.lane.b32.xlu0 %v2525, 56
      %v2797 = vpop.permute.xlu0 %2796
      %2798 = vrot.lane.b32.xlu0 %v2528, 56
      %v2799 = vpop.permute.xlu0 %2798
      %v2802 = vsel %vm911, %v2795, 0
      %v2804 = vsel %vm915, %v2799, 0
      %2806 = vmatprep.subr.mxu0 0.0
      %2807 = vmatpush1.msra.mxu0 0.0
      %2808 = vmatprep.subr.mxu0 0.0
      %2809 = vmatpush1.msra.mxu0 0.0
      %2810 = vmatprep.subr.mxu0 0.0
      %2811 = vmatpush1.msra.mxu0 0.0
      %2812 = vmatprep.subr.mxu0 0.0
      %2813 = vmatpush1.msra.mxu0 0.0
      %2814 = vmatprep.subr.mxu0 0.0
      %2815 = vmatpush1.msra.mxu0 0.0
      %2816 = vmatprep.subr.mxu0 0.0
      %2817 = vmatpush1.msra.mxu0 0.0
      %2818 = vmatprep.subr.mxu0 0.0
      %2819 = vmatpush1.msra.mxu0 0.0
      %2820 = vmatprep.subr.mxu0 0.0
      %2821 = vmatpush1.msra.mxu0 0.0
      %2822 = vmatprep.subr.mxu0 0.0
      %2823 = vmatpush1.msra.mxu0 0.0
      %2824 = vmatprep.subr.mxu0 0.0
      %2825 = vmatpush1.msra.mxu0 0.0
      %2826 = vmatprep.subr.mxu0 0.0
      %2827 = vmatpush1.msra.mxu0 0.0
      %2828 = vmatprep.subr.mxu0 0.0
      %2829 = vmatpush1.msra.mxu0 0.0
      %2830 = vmatprep.subr.mxu0 0.0
      %2831 = vmatpush1.msra.mxu0 0.0
      %2832 = vmatprep.subr.mxu0 0.0
      %2833 = vmatpush1.msra.mxu0 0.0
      %2834 = vmatprep.subr.mxu0 0.0
      %2835 = vmatpush1.msra.mxu0 %v2804
      %2836 = vmatprep.subr.mxu0 0.0
      %2837 = vmatpush1.msra.mxu0 %v2797
      %2838 = vmatprep.subr.mxu0 0.0
      %2839 = vmatpush2.msra.mxu0 0.0
      %2840 = vmatprep.subr.mxu0 0.0
      %2841 = vmatpush2.msra.mxu0 0.0
      %2842 = vmatprep.subr.mxu0 0.0
      %2843 = vmatpush2.msra.mxu0 0.0
      %2844 = vmatprep.subr.mxu0 0.0
      %2845 = vmatpush2.msra.mxu0 0.0
      %2846 = vmatprep.subr.mxu0 0.0
      %2847 = vmatpush2.msra.mxu0 0.0
      %2848 = vmatprep.subr.mxu0 0.0
      %2849 = vmatpush2.msra.mxu0 0.0
      %2850 = vmatprep.subr.mxu0 0.0
      %2851 = vmatpush2.msra.mxu0 0.0
      %2852 = vmatprep.subr.mxu0 0.0
      %2853 = vmatpush2.msra.mxu0 0.0
      %2854 = vmatprep.subr.mxu0 0.0
      %2855 = vmatpush2.msra.mxu0 0.0
      %2856 = vmatprep.subr.mxu0 0.0
      %2857 = vmatpush2.msra.mxu0 0.0
      %2858 = vmatprep.subr.mxu0 0.0
      %2859 = vmatpush2.msra.mxu0 0.0
      %2860 = vmatprep.subr.mxu0 0.0
      %2861 = vmatpush2.msra.mxu0 0.0
      %2862 = vmatprep.subr.mxu0 0.0
      %2863 = vmatpush2.msra.mxu0 0.0
      %2864 = vmatprep.subr.mxu0 0.0
      %2865 = vmatpush2.msra.mxu0 0.0
      %2866 = vmatprep.subr.mxu0 0.0
      %2867 = vmatpush2.msra.mxu0 0.0
      %2868 = vmatprep.subr.mxu0 0.0
      %2869 = vmatpush2.msra.mxu0 0.0
      %2870 = vmatprep.mubr.f32.mxu0 0.0
      %2871 = vmatmul.mubr.f32.gmra.mxu0 %v2802
      %v2872 = vpop.f32.mrf.mxu0
      %v2873 = vadd.f32 0.0, %v2872
      %v2874 = vpop.f32.mrf.mxu0
      %2875 = vdwg.mxu0
      %2876 = vrot.lane.b32.xlu0 %v2442, 112
      %v2877 = vpop.permute.xlu0 %2876
      %2878 = vrot.lane.b32.xlu0 %v2525, 112
      %v2879 = vpop.permute.xlu0 %2878
      %2880 = vrot.lane.b32.xlu0 %v2528, 112
      %v2881 = vpop.permute.xlu0 %2880
      %v2882 = vsel %vm821, %v2877, 0
      %v2884 = vsel %vm821, %v2879, 0
      %v2886 = vsel %vm821, %v2881, 0
      %2888 = vmatprep.subr.mxu0 0.0
      %2889 = vmatpush1.xpose.msra.mxu0 0.0
      %2890 = vmatprep.subr.mxu0 0.0
      %2891 = vmatpush1.xpose.msra.mxu0 0.0
      %2892 = vmatprep.subr.mxu0 0.0
      %2893 = vmatpush1.xpose.msra.mxu0 0.0
      %2894 = vmatprep.subr.mxu0 0.0
      %2895 = vmatpush1.xpose.msra.mxu0 0.0
      %2896 = vmatprep.subr.mxu0 0.0
      %2897 = vmatpush1.xpose.msra.mxu0 0.0
      %2898 = vmatprep.subr.mxu0 0.0
      %2899 = vmatpush1.xpose.msra.mxu0 0.0
      %2900 = vmatprep.subr.mxu0 0.0
      %2901 = vmatpush1.xpose.msra.mxu0 0.0
      %2902 = vmatprep.subr.mxu0 0.0
      %2903 = vmatpush1.xpose.msra.mxu0 0.0
      %2904 = vmatprep.subr.mxu0 0.0
      %2905 = vmatpush1.xpose.msra.mxu0 0.0
      %2906 = vmatprep.subr.mxu0 0.0
      %2907 = vmatpush1.xpose.msra.mxu0 0.0
      %2908 = vmatprep.subr.mxu0 0.0
      %2909 = vmatpush1.xpose.msra.mxu0 0.0
      %2910 = vmatprep.subr.mxu0 0.0
      %2911 = vmatpush1.xpose.msra.mxu0 0.0
      %2912 = vmatprep.subr.mxu0 0.0
      %2913 = vmatpush1.xpose.msra.mxu0 0.0
      %2914 = vmatprep.subr.mxu0 0.0
      %2915 = vmatpush1.xpose.msra.mxu0 0.0
      %2916 = vmatprep.subr.mxu0 0.0
      %2917 = vmatpush1.xpose.msra.mxu0 %v2886
      %2918 = vmatprep.subr.mxu0 0.0
      %2919 = vmatpush1.xpose.msra.mxu0 %v2884
      %2920 = vmatprep.subr.mxu0 0.0
      %2921 = vmatpush2.xpose.msra.mxu0 0.0
      %2922 = vmatprep.subr.mxu0 0.0
      %2923 = vmatpush2.xpose.msra.mxu0 0.0
      %2924 = vmatprep.subr.mxu0 0.0
      %2925 = vmatpush2.xpose.msra.mxu0 0.0
      %2926 = vmatprep.subr.mxu0 0.0
      %2927 = vmatpush2.xpose.msra.mxu0 0.0
      %2928 = vmatprep.subr.mxu0 0.0
      %2929 = vmatpush2.xpose.msra.mxu0 0.0
      %2930 = vmatprep.subr.mxu0 0.0
      %2931 = vmatpush2.xpose.msra.mxu0 0.0
      %2932 = vmatprep.subr.mxu0 0.0
      %2933 = vmatpush2.xpose.msra.mxu0 0.0
      %2934 = vmatprep.subr.mxu0 0.0
      %2935 = vmatpush2.xpose.msra.mxu0 0.0
      %2936 = vmatprep.subr.mxu0 0.0
      %2937 = vmatpush2.xpose.msra.mxu0 0.0
      %2938 = vmatprep.subr.mxu0 0.0
      %2939 = vmatpush2.xpose.msra.mxu0 0.0
      %2940 = vmatprep.subr.mxu0 0.0
      %2941 = vmatpush2.xpose.msra.mxu0 0.0
      %2942 = vmatprep.subr.mxu0 0.0
      %2943 = vmatpush2.xpose.msra.mxu0 0.0
      %2944 = vmatprep.subr.mxu0 0.0
      %2945 = vmatpush2.xpose.msra.mxu0 0.0
      %2946 = vmatprep.subr.mxu0 0.0
      %2947 = vmatpush2.xpose.msra.mxu0 0.0
      %2948 = vmatprep.subr.mxu0 0.0
      %2949 = vmatpush2.xpose.msra.mxu0 0.0
      %2950 = vmatprep.subr.mxu0 0.0
      %2951 = vmatpush2.xpose.msra.mxu0 0.0
      %2952 = vmatprep.mubr.f32.mxu0 0.0
      %2953 = vmatmul.mubr.f32.gmra.mxu0 %v2882
      %v2954 = vpop.f32.mrf.mxu0
      %v2955 = vadd.f32 0.0, %v2954
      %v2956 = vpop.f32.mrf.mxu0
      %2957 = vdwg.mxu0
      %v2958 = vmul.f32 %v2955, 0.35355338
      %v2959 = vsel %vm899, %v2958, -inf
      %2960 = vmax.xlane.f32.xlu0 %v2959
      %v2961 = vpop.xlane.xlu0 %2960
      %v2962 = vsub.f32 %v2958, %v2961
      %v2963 = vmul.f32 %v2962, 1.442695
      %v2964 = vpow.pop %v2963
      %v2965 = vsel %vm899, %v2964, 0.0
      %2966 = vadd.xlane.f32.xlu0 %v2965
      %v2967 = vpop.xlane.xlu0 %2966
      %v2968 = vrcp.pop %v2967
      %v2969 = vmul.f32 %v2964, %v2968
      %2970 = vrot.lane.b32.xlu0 %v2525, 48
      %v2971 = vpop.permute.xlu0 %2970
      %2972 = vrot.lane.b32.xlu0 %v2528, 48
      %v2973 = vpop.permute.xlu0 %2972
      %v2976 = vsel %vm911, %v2969, 0
      %v2978 = vsel %vm915, %v2973, 0
      %2980 = vmatprep.subr.mxu0 0.0
      %2981 = vmatpush1.msra.mxu0 0.0
      %2982 = vmatprep.subr.mxu0 0.0
      %2983 = vmatpush1.msra.mxu0 0.0
      %2984 = vmatprep.subr.mxu0 0.0
      %2985 = vmatpush1.msra.mxu0 0.0
      %2986 = vmatprep.subr.mxu0 0.0
      %2987 = vmatpush1.msra.mxu0 0.0
      %2988 = vmatprep.subr.mxu0 0.0
      %2989 = vmatpush1.msra.mxu0 0.0
      %2990 = vmatprep.subr.mxu0 0.0
      %2991 = vmatpush1.msra.mxu0 0.0
      %2992 = vmatprep.subr.mxu0 0.0
      %2993 = vmatpush1.msra.mxu0 0.0
      %2994 = vmatprep.subr.mxu0 0.0
      %2995 = vmatpush1.msra.mxu0 0.0
      %2996 = vmatprep.subr.mxu0 0.0
      %2997 = vmatpush1.msra.mxu0 0.0
      %2998 = vmatprep.subr.mxu0 0.0
      %2999 = vmatpush1.msra.mxu0 0.0
      %3000 = vmatprep.subr.mxu0 0.0
      %3001 = vmatpush1.msra.mxu0 0.0
      %3002 = vmatprep.subr.mxu0 0.0
      %3003 = vmatpush1.msra.mxu0 0.0
      %3004 = vmatprep.subr.mxu0 0.0
      %3005 = vmatpush1.msra.mxu0 0.0
      %3006 = vmatprep.subr.mxu0 0.0
      %3007 = vmatpush1.msra.mxu0 0.0
      %3008 = vmatprep.subr.mxu0 0.0
      %3009 = vmatpush1.msra.mxu0 %v2978
      %3010 = vmatprep.subr.mxu0 0.0
      %3011 = vmatpush1.msra.mxu0 %v2971
      %3012 = vmatprep.subr.mxu0 0.0
      %3013 = vmatpush2.msra.mxu0 0.0
      %3014 = vmatprep.subr.mxu0 0.0
      %3015 = vmatpush2.msra.mxu0 0.0
      %3016 = vmatprep.subr.mxu0 0.0
      %3017 = vmatpush2.msra.mxu0 0.0
      %3018 = vmatprep.subr.mxu0 0.0
      %3019 = vmatpush2.msra.mxu0 0.0
      %3020 = vmatprep.subr.mxu0 0.0
      %3021 = vmatpush2.msra.mxu0 0.0
      %3022 = vmatprep.subr.mxu0 0.0
      %3023 = vmatpush2.msra.mxu0 0.0
      %3024 = vmatprep.subr.mxu0 0.0
      %3025 = vmatpush2.msra.mxu0 0.0
      %3026 = vmatprep.subr.mxu0 0.0
      %3027 = vmatpush2.msra.mxu0 0.0
      %3028 = vmatprep.subr.mxu0 0.0
      %3029 = vmatpush2.msra.mxu0 0.0
      %3030 = vmatprep.subr.mxu0 0.0
      %3031 = vmatpush2.msra.mxu0 0.0
      %3032 = vmatprep.subr.mxu0 0.0
      %3033 = vmatpush2.msra.mxu0 0.0
      %3034 = vmatprep.subr.mxu0 0.0
      %3035 = vmatpush2.msra.mxu0 0.0
      %3036 = vmatprep.subr.mxu0 0.0
      %3037 = vmatpush2.msra.mxu0 0.0
      %3038 = vmatprep.subr.mxu0 0.0
      %3039 = vmatpush2.msra.mxu0 0.0
      %3040 = vmatprep.subr.mxu0 0.0
      %3041 = vmatpush2.msra.mxu0 0.0
      %3042 = vmatprep.subr.mxu0 0.0
      %3043 = vmatpush2.msra.mxu0 0.0
      %3044 = vmatprep.mubr.f32.mxu0 0.0
      %3045 = vmatmul.mubr.f32.gmra.mxu0 %v2976
      %v3046 = vpop.f32.mrf.mxu0
      %v3047 = vadd.f32 0.0, %v3046
      %v3048 = vpop.f32.mrf.mxu0
      %3049 = vdwg.mxu0
      %3050 = vrot.lane.b32.xlu0 %v2442, 104
      %v3051 = vpop.permute.xlu0 %3050
      %3052 = vrot.lane.b32.xlu0 %v2525, 104
      %v3053 = vpop.permute.xlu0 %3052
      %3054 = vrot.lane.b32.xlu0 %v2528, 104
      %v3055 = vpop.permute.xlu0 %3054
      %v3056 = vsel %vm821, %v3051, 0
      %v3058 = vsel %vm821, %v3053, 0
      %v3060 = vsel %vm821, %v3055, 0
      %3062 = vmatprep.subr.mxu0 0.0
      %3063 = vmatpush1.xpose.msra.mxu0 0.0
      %3064 = vmatprep.subr.mxu0 0.0
      %3065 = vmatpush1.xpose.msra.mxu0 0.0
      %3066 = vmatprep.subr.mxu0 0.0
      %3067 = vmatpush1.xpose.msra.mxu0 0.0
      %3068 = vmatprep.subr.mxu0 0.0
      %3069 = vmatpush1.xpose.msra.mxu0 0.0
      %3070 = vmatprep.subr.mxu0 0.0
      %3071 = vmatpush1.xpose.msra.mxu0 0.0
      %3072 = vmatprep.subr.mxu0 0.0
      %3073 = vmatpush1.xpose.msra.mxu0 0.0
      %3074 = vmatprep.subr.mxu0 0.0
      %3075 = vmatpush1.xpose.msra.mxu0 0.0
      %3076 = vmatprep.subr.mxu0 0.0
      %3077 = vmatpush1.xpose.msra.mxu0 0.0
      %3078 = vmatprep.subr.mxu0 0.0
      %3079 = vmatpush1.xpose.msra.mxu0 0.0
      %3080 = vmatprep.subr.mxu0 0.0
      %3081 = vmatpush1.xpose.msra.mxu0 0.0
      %3082 = vmatprep.subr.mxu0 0.0
      %3083 = vmatpush1.xpose.msra.mxu0 0.0
      %3084 = vmatprep.subr.mxu0 0.0
      %3085 = vmatpush1.xpose.msra.mxu0 0.0
      %3086 = vmatprep.subr.mxu0 0.0
      %3087 = vmatpush1.xpose.msra.mxu0 0.0
      %3088 = vmatprep.subr.mxu0 0.0
      %3089 = vmatpush1.xpose.msra.mxu0 0.0
      %3090 = vmatprep.subr.mxu0 0.0
      %3091 = vmatpush1.xpose.msra.mxu0 %v3060
      %3092 = vmatprep.subr.mxu0 0.0
      %3093 = vmatpush1.xpose.msra.mxu0 %v3058
      %3094 = vmatprep.subr.mxu0 0.0
      %3095 = vmatpush2.xpose.msra.mxu0 0.0
      %3096 = vmatprep.subr.mxu0 0.0
      %3097 = vmatpush2.xpose.msra.mxu0 0.0
      %3098 = vmatprep.subr.mxu0 0.0
      %3099 = vmatpush2.xpose.msra.mxu0 0.0
      %3100 = vmatprep.subr.mxu0 0.0
      %3101 = vmatpush2.xpose.msra.mxu0 0.0
      %3102 = vmatprep.subr.mxu0 0.0
      %3103 = vmatpush2.xpose.msra.mxu0 0.0
      %3104 = vmatprep.subr.mxu0 0.0
      %3105 = vmatpush2.xpose.msra.mxu0 0.0
      %3106 = vmatprep.subr.mxu0 0.0
      %3107 = vmatpush2.xpose.msra.mxu0 0.0
      %3108 = vmatprep.subr.mxu0 0.0
      %3109 = vmatpush2.xpose.msra.mxu0 0.0
      %3110 = vmatprep.subr.mxu0 0.0
      %3111 = vmatpush2.xpose.msra.mxu0 0.0
      %3112 = vmatprep.subr.mxu0 0.0
      %3113 = vmatpush2.xpose.msra.mxu0 0.0
      %3114 = vmatprep.subr.mxu0 0.0
      %3115 = vmatpush2.xpose.msra.mxu0 0.0
      %3116 = vmatprep.subr.mxu0 0.0
      %3117 = vmatpush2.xpose.msra.mxu0 0.0
      %3118 = vmatprep.subr.mxu0 0.0
      %3119 = vmatpush2.xpose.msra.mxu0 0.0
      %3120 = vmatprep.subr.mxu0 0.0
      %3121 = vmatpush2.xpose.msra.mxu0 0.0
      %3122 = vmatprep.subr.mxu0 0.0
      %3123 = vmatpush2.xpose.msra.mxu0 0.0
      %3124 = vmatprep.subr.mxu0 0.0
      %3125 = vmatpush2.xpose.msra.mxu0 0.0
      %3126 = vmatprep.mubr.f32.mxu0 0.0
      %3127 = vmatmul.mubr.f32.gmra.mxu0 %v3056
      %v3128 = vpop.f32.mrf.mxu0
      %v3129 = vadd.f32 0.0, %v3128
      %v3130 = vpop.f32.mrf.mxu0
      %3131 = vdwg.mxu0
      %v3132 = vmul.f32 %v3129, 0.35355338
      %v3133 = vsel %vm899, %v3132, -inf
      %3134 = vmax.xlane.f32.xlu0 %v3133
      %v3135 = vpop.xlane.xlu0 %3134
      %v3136 = vsub.f32 %v3132, %v3135
      %v3137 = vmul.f32 %v3136, 1.442695
      %v3138 = vpow.pop %v3137
      %v3139 = vsel %vm899, %v3138, 0.0
      %3140 = vadd.xlane.f32.xlu0 %v3139
      %v3141 = vpop.xlane.xlu0 %3140
      %v3142 = vrcp.pop %v3141
      %v3143 = vmul.f32 %v3138, %v3142
      %3144 = vrot.lane.b32.xlu0 %v2525, 40
      %v3145 = vpop.permute.xlu0 %3144
      %3146 = vrot.lane.b32.xlu0 %v2528, 40
      %v3147 = vpop.permute.xlu0 %3146
      %v3150 = vsel %vm911, %v3143, 0
      %v3152 = vsel %vm915, %v3147, 0
      %3154 = vmatprep.subr.mxu0 0.0
      %3155 = vmatpush1.msra.mxu0 0.0
      %3156 = vmatprep.subr.mxu0 0.0
      %3157 = vmatpush1.msra.mxu0 0.0
      %3158 = vmatprep.subr.mxu0 0.0
      %3159 = vmatpush1.msra.mxu0 0.0
      %3160 = vmatprep.subr.mxu0 0.0
      %3161 = vmatpush1.msra.mxu0 0.0
      %3162 = vmatprep.subr.mxu0 0.0
      %3163 = vmatpush1.msra.mxu0 0.0
      %3164 = vmatprep.subr.mxu0 0.0
      %3165 = vmatpush1.msra.mxu0 0.0
      %3166 = vmatprep.subr.mxu0 0.0
      %3167 = vmatpush1.msra.mxu0 0.0
      %3168 = vmatprep.subr.mxu0 0.0
      %3169 = vmatpush1.msra.mxu0 0.0
      %3170 = vmatprep.subr.mxu0 0.0
      %3171 = vmatpush1.msra.mxu0 0.0
      %3172 = vmatprep.subr.mxu0 0.0
      %3173 = vmatpush1.msra.mxu0 0.0
      %3174 = vmatprep.subr.mxu0 0.0
      %3175 = vmatpush1.msra.mxu0 0.0
      %3176 = vmatprep.subr.mxu0 0.0
      %3177 = vmatpush1.msra.mxu0 0.0
      %3178 = vmatprep.subr.mxu0 0.0
      %3179 = vmatpush1.msra.mxu0 0.0
      %3180 = vmatprep.subr.mxu0 0.0
      %3181 = vmatpush1.msra.mxu0 0.0
      %3182 = vmatprep.subr.mxu0 0.0
      %3183 = vmatpush1.msra.mxu0 %v3152
      %3184 = vmatprep.subr.mxu0 0.0
      %3185 = vmatpush1.msra.mxu0 %v3145
      %3186 = vmatprep.subr.mxu0 0.0
      %3187 = vmatpush2.msra.mxu0 0.0
      %3188 = vmatprep.subr.mxu0 0.0
      %3189 = vmatpush2.msra.mxu0 0.0
      %3190 = vmatprep.subr.mxu0 0.0
      %3191 = vmatpush2.msra.mxu0 0.0
      %3192 = vmatprep.subr.mxu0 0.0
      %3193 = vmatpush2.msra.mxu0 0.0
      %3194 = vmatprep.subr.mxu0 0.0
      %3195 = vmatpush2.msra.mxu0 0.0
      %3196 = vmatprep.subr.mxu0 0.0
      %3197 = vmatpush2.msra.mxu0 0.0
      %3198 = vmatprep.subr.mxu0 0.0
      %3199 = vmatpush2.msra.mxu0 0.0
      %3200 = vmatprep.subr.mxu0 0.0
      %3201 = vmatpush2.msra.mxu0 0.0
      %3202 = vmatprep.subr.mxu0 0.0
      %3203 = vmatpush2.msra.mxu0 0.0
      %3204 = vmatprep.subr.mxu0 0.0
      %3205 = vmatpush2.msra.mxu0 0.0
      %3206 = vmatprep.subr.mxu0 0.0
      %3207 = vmatpush2.msra.mxu0 0.0
      %3208 = vmatprep.subr.mxu0 0.0
      %3209 = vmatpush2.msra.mxu0 0.0
      %3210 = vmatprep.subr.mxu0 0.0
      %3211 = vmatpush2.msra.mxu0 0.0
      %3212 = vmatprep.subr.mxu0 0.0
      %3213 = vmatpush2.msra.mxu0 0.0
      %3214 = vmatprep.subr.mxu0 0.0
      %3215 = vmatpush2.msra.mxu0 0.0
      %3216 = vmatprep.subr.mxu0 0.0
      %3217 = vmatpush2.msra.mxu0 0.0
      %3218 = vmatprep.mubr.f32.mxu0 0.0
      %3219 = vmatmul.mubr.f32.gmra.mxu0 %v3150
      %v3220 = vpop.f32.mrf.mxu0
      %v3221 = vadd.f32 0.0, %v3220
      %v3222 = vpop.f32.mrf.mxu0
      %3223 = vdwg.mxu0
      %3224 = vrot.lane.b32.xlu0 %v2442, 96
      %v3225 = vpop.permute.xlu0 %3224
      %3226 = vrot.lane.b32.xlu0 %v2525, 96
      %v3227 = vpop.permute.xlu0 %3226
      %3228 = vrot.lane.b32.xlu0 %v2528, 96
      %v3229 = vpop.permute.xlu0 %3228
      %v3230 = vsel %vm821, %v3225, 0
      %v3232 = vsel %vm821, %v3227, 0
      %v3234 = vsel %vm821, %v3229, 0
      %3236 = vmatprep.subr.mxu0 0.0
      %3237 = vmatpush1.xpose.msra.mxu0 0.0
      %3238 = vmatprep.subr.mxu0 0.0
      %3239 = vmatpush1.xpose.msra.mxu0 0.0
      %3240 = vmatprep.subr.mxu0 0.0
      %3241 = vmatpush1.xpose.msra.mxu0 0.0
      %3242 = vmatprep.subr.mxu0 0.0
      %3243 = vmatpush1.xpose.msra.mxu0 0.0
      %3244 = vmatprep.subr.mxu0 0.0
      %3245 = vmatpush1.xpose.msra.mxu0 0.0
      %3246 = vmatprep.subr.mxu0 0.0
      %3247 = vmatpush1.xpose.msra.mxu0 0.0
      %3248 = vmatprep.subr.mxu0 0.0
      %3249 = vmatpush1.xpose.msra.mxu0 0.0
      %3250 = vmatprep.subr.mxu0 0.0
      %3251 = vmatpush1.xpose.msra.mxu0 0.0
      %3252 = vmatprep.subr.mxu0 0.0
      %3253 = vmatpush1.xpose.msra.mxu0 0.0
      %3254 = vmatprep.subr.mxu0 0.0
      %3255 = vmatpush1.xpose.msra.mxu0 0.0
      %3256 = vmatprep.subr.mxu0 0.0
      %3257 = vmatpush1.xpose.msra.mxu0 0.0
      %3258 = vmatprep.subr.mxu0 0.0
      %3259 = vmatpush1.xpose.msra.mxu0 0.0
      %3260 = vmatprep.subr.mxu0 0.0
      %3261 = vmatpush1.xpose.msra.mxu0 0.0
      %3262 = vmatprep.subr.mxu0 0.0
      %3263 = vmatpush1.xpose.msra.mxu0 0.0
      %3264 = vmatprep.subr.mxu0 0.0
      %3265 = vmatpush1.xpose.msra.mxu0 %v3234
      %3266 = vmatprep.subr.mxu0 0.0
      %3267 = vmatpush1.xpose.msra.mxu0 %v3232
      %3268 = vmatprep.subr.mxu0 0.0
      %3269 = vmatpush2.xpose.msra.mxu0 0.0
      %3270 = vmatprep.subr.mxu0 0.0
      %3271 = vmatpush2.xpose.msra.mxu0 0.0
      %3272 = vmatprep.subr.mxu0 0.0
      %3273 = vmatpush2.xpose.msra.mxu0 0.0
      %3274 = vmatprep.subr.mxu0 0.0
      %3275 = vmatpush2.xpose.msra.mxu0 0.0
      %3276 = vmatprep.subr.mxu0 0.0
      %3277 = vmatpush2.xpose.msra.mxu0 0.0
      %3278 = vmatprep.subr.mxu0 0.0
      %3279 = vmatpush2.xpose.msra.mxu0 0.0
      %3280 = vmatprep.subr.mxu0 0.0
      %3281 = vmatpush2.xpose.msra.mxu0 0.0
      %3282 = vmatprep.subr.mxu0 0.0
      %3283 = vmatpush2.xpose.msra.mxu0 0.0
      %3284 = vmatprep.subr.mxu0 0.0
      %3285 = vmatpush2.xpose.msra.mxu0 0.0
      %3286 = vmatprep.subr.mxu0 0.0
      %3287 = vmatpush2.xpose.msra.mxu0 0.0
      %3288 = vmatprep.subr.mxu0 0.0
      %3289 = vmatpush2.xpose.msra.mxu0 0.0
      %3290 = vmatprep.subr.mxu0 0.0
      %3291 = vmatpush2.xpose.msra.mxu0 0.0
      %3292 = vmatprep.subr.mxu0 0.0
      %3293 = vmatpush2.xpose.msra.mxu0 0.0
      %3294 = vmatprep.subr.mxu0 0.0
      %3295 = vmatpush2.xpose.msra.mxu0 0.0
      %3296 = vmatprep.subr.mxu0 0.0
      %3297 = vmatpush2.xpose.msra.mxu0 0.0
      %3298 = vmatprep.subr.mxu0 0.0
      %3299 = vmatpush2.xpose.msra.mxu0 0.0
      %3300 = vmatprep.mubr.f32.mxu0 0.0
      %3301 = vmatmul.mubr.f32.gmra.mxu0 %v3230
      %v3302 = vpop.f32.mrf.mxu0
      %v3303 = vadd.f32 0.0, %v3302
      %v3304 = vpop.f32.mrf.mxu0
      %3305 = vdwg.mxu0
      %v3306 = vmul.f32 %v3303, 0.35355338
      %v3307 = vsel %vm899, %v3306, -inf
      %3308 = vmax.xlane.f32.xlu0 %v3307
      %v3309 = vpop.xlane.xlu0 %3308
      %v3310 = vsub.f32 %v3306, %v3309
      %v3311 = vmul.f32 %v3310, 1.442695
      %v3312 = vpow.pop %v3311
      %v3313 = vsel %vm899, %v3312, 0.0
      %3314 = vadd.xlane.f32.xlu0 %v3313
      %v3315 = vpop.xlane.xlu0 %3314
      %v3316 = vrcp.pop %v3315
      %v3317 = vmul.f32 %v3312, %v3316
      %3318 = vrot.lane.b32.xlu0 %v2525, 32
      %v3319 = vpop.permute.xlu0 %3318
      %3320 = vrot.lane.b32.xlu0 %v2528, 32
      %v3321 = vpop.permute.xlu0 %3320
      %v3324 = vsel %vm911, %v3317, 0
      %v3326 = vsel %vm915, %v3321, 0
      %3328 = vmatprep.subr.mxu0 0.0
      %3329 = vmatpush1.msra.mxu0 0.0
      %3330 = vmatprep.subr.mxu0 0.0
      %3331 = vmatpush1.msra.mxu0 0.0
      %3332 = vmatprep.subr.mxu0 0.0
      %3333 = vmatpush1.msra.mxu0 0.0
      %3334 = vmatprep.subr.mxu0 0.0
      %3335 = vmatpush1.msra.mxu0 0.0
      %3336 = vmatprep.subr.mxu0 0.0
      %3337 = vmatpush1.msra.mxu0 0.0
      %3338 = vmatprep.subr.mxu0 0.0
      %3339 = vmatpush1.msra.mxu0 0.0
      %3340 = vmatprep.subr.mxu0 0.0
      %3341 = vmatpush1.msra.mxu0 0.0
      %3342 = vmatprep.subr.mxu0 0.0
      %3343 = vmatpush1.msra.mxu0 0.0
      %3344 = vmatprep.subr.mxu0 0.0
      %3345 = vmatpush1.msra.mxu0 0.0
      %3346 = vmatprep.subr.mxu0 0.0
      %3347 = vmatpush1.msra.mxu0 0.0
      %3348 = vmatprep.subr.mxu0 0.0
      %3349 = vmatpush1.msra.mxu0 0.0
      %3350 = vmatprep.subr.mxu0 0.0
      %3351 = vmatpush1.msra.mxu0 0.0
      %3352 = vmatprep.subr.mxu0 0.0
      %3353 = vmatpush1.msra.mxu0 0.0
      %3354 = vmatprep.subr.mxu0 0.0
      %3355 = vmatpush1.msra.mxu0 0.0
      %3356 = vmatprep.subr.mxu0 0.0
      %3357 = vmatpush1.msra.mxu0 %v3326
      %3358 = vmatprep.subr.mxu0 0.0
      %3359 = vmatpush1.msra.mxu0 %v3319
      %3360 = vmatprep.subr.mxu0 0.0
      %3361 = vmatpush2.msra.mxu0 0.0
      %3362 = vmatprep.subr.mxu0 0.0
      %3363 = vmatpush2.msra.mxu0 0.0
      %3364 = vmatprep.subr.mxu0 0.0
      %3365 = vmatpush2.msra.mxu0 0.0
      %3366 = vmatprep.subr.mxu0 0.0
      %3367 = vmatpush2.msra.mxu0 0.0
      %3368 = vmatprep.subr.mxu0 0.0
      %3369 = vmatpush2.msra.mxu0 0.0
      %3370 = vmatprep.subr.mxu0 0.0
      %3371 = vmatpush2.msra.mxu0 0.0
      %3372 = vmatprep.subr.mxu0 0.0
      %3373 = vmatpush2.msra.mxu0 0.0
      %3374 = vmatprep.subr.mxu0 0.0
      %3375 = vmatpush2.msra.mxu0 0.0
      %3376 = vmatprep.subr.mxu0 0.0
      %3377 = vmatpush2.msra.mxu0 0.0
      %3378 = vmatprep.subr.mxu0 0.0
      %3379 = vmatpush2.msra.mxu0 0.0
      %3380 = vmatprep.subr.mxu0 0.0
      %3381 = vmatpush2.msra.mxu0 0.0
      %3382 = vmatprep.subr.mxu0 0.0
      %3383 = vmatpush2.msra.mxu0 0.0
      %3384 = vmatprep.subr.mxu0 0.0
      %3385 = vmatpush2.msra.mxu0 0.0
      %3386 = vmatprep.subr.mxu0 0.0
      %3387 = vmatpush2.msra.mxu0 0.0
      %3388 = vmatprep.subr.mxu0 0.0
      %3389 = vmatpush2.msra.mxu0 0.0
      %3390 = vmatprep.subr.mxu0 0.0
      %3391 = vmatpush2.msra.mxu0 0.0
      %3392 = vmatprep.mubr.f32.mxu0 0.0
      %3393 = vmatmul.mubr.f32.gmra.mxu0 %v3324
      %v3394 = vpop.f32.mrf.mxu0
      %v3395 = vadd.f32 0.0, %v3394
      %v3396 = vpop.f32.mrf.mxu0
      %3397 = vdwg.mxu0
      %3398 = vrot.lane.b32.xlu0 %v2442, 88
      %v3399 = vpop.permute.xlu0 %3398
      %3400 = vrot.lane.b32.xlu0 %v2525, 88
      %v3401 = vpop.permute.xlu0 %3400
      %3402 = vrot.lane.b32.xlu0 %v2528, 88
      %v3403 = vpop.permute.xlu0 %3402
      %v3404 = vsel %vm821, %v3399, 0
      %v3406 = vsel %vm821, %v3401, 0
      %v3408 = vsel %vm821, %v3403, 0
      %3410 = vmatprep.subr.mxu0 0.0
      %3411 = vmatpush1.xpose.msra.mxu0 0.0
      %3412 = vmatprep.subr.mxu0 0.0
      %3413 = vmatpush1.xpose.msra.mxu0 0.0
      %3414 = vmatprep.subr.mxu0 0.0
      %3415 = vmatpush1.xpose.msra.mxu0 0.0
      %3416 = vmatprep.subr.mxu0 0.0
      %3417 = vmatpush1.xpose.msra.mxu0 0.0
      %3418 = vmatprep.subr.mxu0 0.0
      %3419 = vmatpush1.xpose.msra.mxu0 0.0
      %3420 = vmatprep.subr.mxu0 0.0
      %3421 = vmatpush1.xpose.msra.mxu0 0.0
      %3422 = vmatprep.subr.mxu0 0.0
      %3423 = vmatpush1.xpose.msra.mxu0 0.0
      %3424 = vmatprep.subr.mxu0 0.0
      %3425 = vmatpush1.xpose.msra.mxu0 0.0
      %3426 = vmatprep.subr.mxu0 0.0
      %3427 = vmatpush1.xpose.msra.mxu0 0.0
      %3428 = vmatprep.subr.mxu0 0.0
      %3429 = vmatpush1.xpose.msra.mxu0 0.0
      %3430 = vmatprep.subr.mxu0 0.0
      %3431 = vmatpush1.xpose.msra.mxu0 0.0
      %3432 = vmatprep.subr.mxu0 0.0
      %3433 = vmatpush1.xpose.msra.mxu0 0.0
      %3434 = vmatprep.subr.mxu0 0.0
      %3435 = vmatpush1.xpose.msra.mxu0 0.0
      %3436 = vmatprep.subr.mxu0 0.0
      %3437 = vmatpush1.xpose.msra.mxu0 0.0
      %3438 = vmatprep.subr.mxu0 0.0
      %3439 = vmatpush1.xpose.msra.mxu0 %v3408
      %3440 = vmatprep.subr.mxu0 0.0
      %3441 = vmatpush1.xpose.msra.mxu0 %v3406
      %3442 = vmatprep.subr.mxu0 0.0
      %3443 = vmatpush2.xpose.msra.mxu0 0.0
      %3444 = vmatprep.subr.mxu0 0.0
      %3445 = vmatpush2.xpose.msra.mxu0 0.0
      %3446 = vmatprep.subr.mxu0 0.0
      %3447 = vmatpush2.xpose.msra.mxu0 0.0
      %3448 = vmatprep.subr.mxu0 0.0
      %3449 = vmatpush2.xpose.msra.mxu0 0.0
      %3450 = vmatprep.subr.mxu0 0.0
      %3451 = vmatpush2.xpose.msra.mxu0 0.0
      %3452 = vmatprep.subr.mxu0 0.0
      %3453 = vmatpush2.xpose.msra.mxu0 0.0
      %3454 = vmatprep.subr.mxu0 0.0
      %3455 = vmatpush2.xpose.msra.mxu0 0.0
      %3456 = vmatprep.subr.mxu0 0.0
      %3457 = vmatpush2.xpose.msra.mxu0 0.0
      %3458 = vmatprep.subr.mxu0 0.0
      %3459 = vmatpush2.xpose.msra.mxu0 0.0
      %3460 = vmatprep.subr.mxu0 0.0
      %3461 = vmatpush2.xpose.msra.mxu0 0.0
      %3462 = vmatprep.subr.mxu0 0.0
      %3463 = vmatpush2.xpose.msra.mxu0 0.0
      %3464 = vmatprep.subr.mxu0 0.0
      %3465 = vmatpush2.xpose.msra.mxu0 0.0
      %3466 = vmatprep.subr.mxu0 0.0
      %3467 = vmatpush2.xpose.msra.mxu0 0.0
      %3468 = vmatprep.subr.mxu0 0.0
      %3469 = vmatpush2.xpose.msra.mxu0 0.0
      %3470 = vmatprep.subr.mxu0 0.0
      %3471 = vmatpush2.xpose.msra.mxu0 0.0
      %3472 = vmatprep.subr.mxu0 0.0
      %3473 = vmatpush2.xpose.msra.mxu0 0.0
      %3474 = vmatprep.mubr.f32.mxu0 0.0
      %3475 = vmatmul.mubr.f32.gmra.mxu0 %v3404
      %v3476 = vpop.f32.mrf.mxu0
      %v3477 = vadd.f32 0.0, %v3476
      %v3478 = vpop.f32.mrf.mxu0
      %3479 = vdwg.mxu0
      %v3480 = vmul.f32 %v3477, 0.35355338
      %v3481 = vsel %vm899, %v3480, -inf
      %3482 = vmax.xlane.f32.xlu0 %v3481
      %v3483 = vpop.xlane.xlu0 %3482
      %v3484 = vsub.f32 %v3480, %v3483
      %v3485 = vmul.f32 %v3484, 1.442695
      %v3486 = vpow.pop %v3485
      %v3487 = vsel %vm899, %v3486, 0.0
      %3488 = vadd.xlane.f32.xlu0 %v3487
      %v3489 = vpop.xlane.xlu0 %3488
      %v3490 = vrcp.pop %v3489
      %v3491 = vmul.f32 %v3486, %v3490
      %3492 = vrot.lane.b32.xlu0 %v2525, 24
      %v3493 = vpop.permute.xlu0 %3492
      %3494 = vrot.lane.b32.xlu0 %v2528, 24
      %v3495 = vpop.permute.xlu0 %3494
      %v3498 = vsel %vm911, %v3491, 0
      %v3500 = vsel %vm915, %v3495, 0
      %3502 = vmatprep.subr.mxu0 0.0
      %3503 = vmatpush1.msra.mxu0 0.0
      %3504 = vmatprep.subr.mxu0 0.0
      %3505 = vmatpush1.msra.mxu0 0.0
      %3506 = vmatprep.subr.mxu0 0.0
      %3507 = vmatpush1.msra.mxu0 0.0
      %3508 = vmatprep.subr.mxu0 0.0
      %3509 = vmatpush1.msra.mxu0 0.0
      %3510 = vmatprep.subr.mxu0 0.0
      %3511 = vmatpush1.msra.mxu0 0.0
      %3512 = vmatprep.subr.mxu0 0.0
      %3513 = vmatpush1.msra.mxu0 0.0
      %3514 = vmatprep.subr.mxu0 0.0
      %3515 = vmatpush1.msra.mxu0 0.0
      %3516 = vmatprep.subr.mxu0 0.0
      %3517 = vmatpush1.msra.mxu0 0.0
      %3518 = vmatprep.subr.mxu0 0.0
      %3519 = vmatpush1.msra.mxu0 0.0
      %3520 = vmatprep.subr.mxu0 0.0
      %3521 = vmatpush1.msra.mxu0 0.0
      %3522 = vmatprep.subr.mxu0 0.0
      %3523 = vmatpush1.msra.mxu0 0.0
      %3524 = vmatprep.subr.mxu0 0.0
      %3525 = vmatpush1.msra.mxu0 0.0
      %3526 = vmatprep.subr.mxu0 0.0
      %3527 = vmatpush1.msra.mxu0 0.0
      %3528 = vmatprep.subr.mxu0 0.0
      %3529 = vmatpush1.msra.mxu0 0.0
      %3530 = vmatprep.subr.mxu0 0.0
      %3531 = vmatpush1.msra.mxu0 %v3500
      %3532 = vmatprep.subr.mxu0 0.0
      %3533 = vmatpush1.msra.mxu0 %v3493
      %3534 = vmatprep.subr.mxu0 0.0
      %3535 = vmatpush2.msra.mxu0 0.0
      %3536 = vmatprep.subr.mxu0 0.0
      %3537 = vmatpush2.msra.mxu0 0.0
      %3538 = vmatprep.subr.mxu0 0.0
      %3539 = vmatpush2.msra.mxu0 0.0
      %3540 = vmatprep.subr.mxu0 0.0
      %3541 = vmatpush2.msra.mxu0 0.0
      %3542 = vmatprep.subr.mxu0 0.0
      %3543 = vmatpush2.msra.mxu0 0.0
      %3544 = vmatprep.subr.mxu0 0.0
      %3545 = vmatpush2.msra.mxu0 0.0
      %3546 = vmatprep.subr.mxu0 0.0
      %3547 = vmatpush2.msra.mxu0 0.0
      %3548 = vmatprep.subr.mxu0 0.0
      %3549 = vmatpush2.msra.mxu0 0.0
      %3550 = vmatprep.subr.mxu0 0.0
      %3551 = vmatpush2.msra.mxu0 0.0
      %3552 = vmatprep.subr.mxu0 0.0
      %3553 = vmatpush2.msra.mxu0 0.0
      %3554 = vmatprep.subr.mxu0 0.0
      %3555 = vmatpush2.msra.mxu0 0.0
      %3556 = vmatprep.subr.mxu0 0.0
      %3557 = vmatpush2.msra.mxu0 0.0
      %3558 = vmatprep.subr.mxu0 0.0
      %3559 = vmatpush2.msra.mxu0 0.0
      %3560 = vmatprep.subr.mxu0 0.0
      %3561 = vmatpush2.msra.mxu0 0.0
      %3562 = vmatprep.subr.mxu0 0.0
      %3563 = vmatpush2.msra.mxu0 0.0
      %3564 = vmatprep.subr.mxu0 0.0
      %3565 = vmatpush2.msra.mxu0 0.0
      %3566 = vmatprep.mubr.f32.mxu0 0.0
      %3567 = vmatmul.mubr.f32.gmra.mxu0 %v3498
      %v3568 = vpop.f32.mrf.mxu0
      %v3569 = vadd.f32 0.0, %v3568
      %v3570 = vpop.f32.mrf.mxu0
      %3571 = vdwg.mxu0
      %3572 = vrot.lane.b32.xlu0 %v2442, 80
      %v3573 = vpop.permute.xlu0 %3572
      %3574 = vrot.lane.b32.xlu0 %v2525, 80
      %v3575 = vpop.permute.xlu0 %3574
      %3576 = vrot.lane.b32.xlu0 %v2528, 80
      %v3577 = vpop.permute.xlu0 %3576
      %v3578 = vsel %vm821, %v3573, 0
      %v3580 = vsel %vm821, %v3575, 0
      %v3582 = vsel %vm821, %v3577, 0
      %3584 = vmatprep.subr.mxu0 0.0
      %3585 = vmatpush1.xpose.msra.mxu0 0.0
      %3586 = vmatprep.subr.mxu0 0.0
      %3587 = vmatpush1.xpose.msra.mxu0 0.0
      %3588 = vmatprep.subr.mxu0 0.0
      %3589 = vmatpush1.xpose.msra.mxu0 0.0
      %3590 = vmatprep.subr.mxu0 0.0
      %3591 = vmatpush1.xpose.msra.mxu0 0.0
      %3592 = vmatprep.subr.mxu0 0.0
      %3593 = vmatpush1.xpose.msra.mxu0 0.0
      %3594 = vmatprep.subr.mxu0 0.0
      %3595 = vmatpush1.xpose.msra.mxu0 0.0
      %3596 = vmatprep.subr.mxu0 0.0
      %3597 = vmatpush1.xpose.msra.mxu0 0.0
      %3598 = vmatprep.subr.mxu0 0.0
      %3599 = vmatpush1.xpose.msra.mxu0 0.0
      %3600 = vmatprep.subr.mxu0 0.0
      %3601 = vmatpush1.xpose.msra.mxu0 0.0
      %3602 = vmatprep.subr.mxu0 0.0
      %3603 = vmatpush1.xpose.msra.mxu0 0.0
      %3604 = vmatprep.subr.mxu0 0.0
      %3605 = vmatpush1.xpose.msra.mxu0 0.0
      %3606 = vmatprep.subr.mxu0 0.0
      %3607 = vmatpush1.xpose.msra.mxu0 0.0
      %3608 = vmatprep.subr.mxu0 0.0
      %3609 = vmatpush1.xpose.msra.mxu0 0.0
      %3610 = vmatprep.subr.mxu0 0.0
      %3611 = vmatpush1.xpose.msra.mxu0 0.0
      %3612 = vmatprep.subr.mxu0 0.0
      %3613 = vmatpush1.xpose.msra.mxu0 %v3582
      %3614 = vmatprep.subr.mxu0 0.0
      %3615 = vmatpush1.xpose.msra.mxu0 %v3580
      %3616 = vmatprep.subr.mxu0 0.0
      %3617 = vmatpush2.xpose.msra.mxu0 0.0
      %3618 = vmatprep.subr.mxu0 0.0
      %3619 = vmatpush2.xpose.msra.mxu0 0.0
      %3620 = vmatprep.subr.mxu0 0.0
      %3621 = vmatpush2.xpose.msra.mxu0 0.0
      %3622 = vmatprep.subr.mxu0 0.0
      %3623 = vmatpush2.xpose.msra.mxu0 0.0
      %3624 = vmatprep.subr.mxu0 0.0
      %3625 = vmatpush2.xpose.msra.mxu0 0.0
      %3626 = vmatprep.subr.mxu0 0.0
      %3627 = vmatpush2.xpose.msra.mxu0 0.0
      %3628 = vmatprep.subr.mxu0 0.0
      %3629 = vmatpush2.xpose.msra.mxu0 0.0
      %3630 = vmatprep.subr.mxu0 0.0
      %3631 = vmatpush2.xpose.msra.mxu0 0.0
      %3632 = vmatprep.subr.mxu0 0.0
      %3633 = vmatpush2.xpose.msra.mxu0 0.0
      %3634 = vmatprep.subr.mxu0 0.0
      %3635 = vmatpush2.xpose.msra.mxu0 0.0
      %3636 = vmatprep.subr.mxu0 0.0
      %3637 = vmatpush2.xpose.msra.mxu0 0.0
      %3638 = vmatprep.subr.mxu0 0.0
      %3639 = vmatpush2.xpose.msra.mxu0 0.0
      %3640 = vmatprep.subr.mxu0 0.0
      %3641 = vmatpush2.xpose.msra.mxu0 0.0
      %3642 = vmatprep.subr.mxu0 0.0
      %3643 = vmatpush2.xpose.msra.mxu0 0.0
      %3644 = vmatprep.subr.mxu0 0.0
      %3645 = vmatpush2.xpose.msra.mxu0 0.0
      %3646 = vmatprep.subr.mxu0 0.0
      %3647 = vmatpush2.xpose.msra.mxu0 0.0
      %3648 = vmatprep.mubr.f32.mxu0 0.0
      %3649 = vmatmul.mubr.f32.gmra.mxu0 %v3578
      %v3650 = vpop.f32.mrf.mxu0
      %v3651 = vadd.f32 0.0, %v3650
      %v3652 = vpop.f32.mrf.mxu0
      %3653 = vdwg.mxu0
      %v3654 = vmul.f32 %v3651, 0.35355338
      %v3655 = vsel %vm899, %v3654, -inf
      %3656 = vmax.xlane.f32.xlu0 %v3655
      %v3657 = vpop.xlane.xlu0 %3656
      %v3658 = vsub.f32 %v3654, %v3657
      %v3659 = vmul.f32 %v3658, 1.442695
      %v3660 = vpow.pop %v3659
      %v3661 = vsel %vm899, %v3660, 0.0
      %3662 = vadd.xlane.f32.xlu0 %v3661
      %v3663 = vpop.xlane.xlu0 %3662
      %v3664 = vrcp.pop %v3663
      %v3665 = vmul.f32 %v3660, %v3664
      %3666 = vrot.lane.b32.xlu0 %v2525, 16
      %v3667 = vpop.permute.xlu0 %3666
      %3668 = vrot.lane.b32.xlu0 %v2528, 16
      %v3669 = vpop.permute.xlu0 %3668
      %v3672 = vsel %vm911, %v3665, 0
      %v3674 = vsel %vm915, %v3669, 0
      %3676 = vmatprep.subr.mxu0 0.0
      %3677 = vmatpush1.msra.mxu0 0.0
      %3678 = vmatprep.subr.mxu0 0.0
      %3679 = vmatpush1.msra.mxu0 0.0
      %3680 = vmatprep.subr.mxu0 0.0
      %3681 = vmatpush1.msra.mxu0 0.0
      %3682 = vmatprep.subr.mxu0 0.0
      %3683 = vmatpush1.msra.mxu0 0.0
      %3684 = vmatprep.subr.mxu0 0.0
      %3685 = vmatpush1.msra.mxu0 0.0
      %3686 = vmatprep.subr.mxu0 0.0
      %3687 = vmatpush1.msra.mxu0 0.0
      %3688 = vmatprep.subr.mxu0 0.0
      %3689 = vmatpush1.msra.mxu0 0.0
      %3690 = vmatprep.subr.mxu0 0.0
      %3691 = vmatpush1.msra.mxu0 0.0
      %3692 = vmatprep.subr.mxu0 0.0
      %3693 = vmatpush1.msra.mxu0 0.0
      %3694 = vmatprep.subr.mxu0 0.0
      %3695 = vmatpush1.msra.mxu0 0.0
      %3696 = vmatprep.subr.mxu0 0.0
      %3697 = vmatpush1.msra.mxu0 0.0
      %3698 = vmatprep.subr.mxu0 0.0
      %3699 = vmatpush1.msra.mxu0 0.0
      %3700 = vmatprep.subr.mxu0 0.0
      %3701 = vmatpush1.msra.mxu0 0.0
      %3702 = vmatprep.subr.mxu0 0.0
      %3703 = vmatpush1.msra.mxu0 0.0
      %3704 = vmatprep.subr.mxu0 0.0
      %3705 = vmatpush1.msra.mxu0 %v3674
      %3706 = vmatprep.subr.mxu0 0.0
      %3707 = vmatpush1.msra.mxu0 %v3667
      %3708 = vmatprep.subr.mxu0 0.0
      %3709 = vmatpush2.msra.mxu0 0.0
      %3710 = vmatprep.subr.mxu0 0.0
      %3711 = vmatpush2.msra.mxu0 0.0
      %3712 = vmatprep.subr.mxu0 0.0
      %3713 = vmatpush2.msra.mxu0 0.0
      %3714 = vmatprep.subr.mxu0 0.0
      %3715 = vmatpush2.msra.mxu0 0.0
      %3716 = vmatprep.subr.mxu0 0.0
      %3717 = vmatpush2.msra.mxu0 0.0
      %3718 = vmatprep.subr.mxu0 0.0
      %3719 = vmatpush2.msra.mxu0 0.0
      %3720 = vmatprep.subr.mxu0 0.0
      %3721 = vmatpush2.msra.mxu0 0.0
      %3722 = vmatprep.subr.mxu0 0.0
      %3723 = vmatpush2.msra.mxu0 0.0
      %3724 = vmatprep.subr.mxu0 0.0
      %3725 = vmatpush2.msra.mxu0 0.0
      %3726 = vmatprep.subr.mxu0 0.0
      %3727 = vmatpush2.msra.mxu0 0.0
      %3728 = vmatprep.subr.mxu0 0.0
      %3729 = vmatpush2.msra.mxu0 0.0
      %3730 = vmatprep.subr.mxu0 0.0
      %3731 = vmatpush2.msra.mxu0 0.0
      %3732 = vmatprep.subr.mxu0 0.0
      %3733 = vmatpush2.msra.mxu0 0.0
      %3734 = vmatprep.subr.mxu0 0.0
      %3735 = vmatpush2.msra.mxu0 0.0
      %3736 = vmatprep.subr.mxu0 0.0
      %3737 = vmatpush2.msra.mxu0 0.0
      %3738 = vmatprep.subr.mxu0 0.0
      %3739 = vmatpush2.msra.mxu0 0.0
      %3740 = vmatprep.mubr.f32.mxu0 0.0
      %3741 = vmatmul.mubr.f32.gmra.mxu0 %v3672
      %v3742 = vpop.f32.mrf.mxu0
      %v3743 = vadd.f32 0.0, %v3742
      %v3744 = vpop.f32.mrf.mxu0
      %3745 = vdwg.mxu0
      %3746 = vrot.lane.b32.xlu0 %v2442, 72
      %v3747 = vpop.permute.xlu0 %3746
      %3748 = vrot.lane.b32.xlu0 %v2525, 72
      %v3749 = vpop.permute.xlu0 %3748
      %3750 = vrot.lane.b32.xlu0 %v2528, 72
      %v3751 = vpop.permute.xlu0 %3750
      %v3752 = vsel %vm821, %v3747, 0
      %v3754 = vsel %vm821, %v3749, 0
      %v3756 = vsel %vm821, %v3751, 0
      %3758 = vmatprep.subr.mxu0 0.0
      %3759 = vmatpush1.xpose.msra.mxu0 0.0
      %3760 = vmatprep.subr.mxu0 0.0
      %3761 = vmatpush1.xpose.msra.mxu0 0.0
      %3762 = vmatprep.subr.mxu0 0.0
      %3763 = vmatpush1.xpose.msra.mxu0 0.0
      %3764 = vmatprep.subr.mxu0 0.0
      %3765 = vmatpush1.xpose.msra.mxu0 0.0
      %3766 = vmatprep.subr.mxu0 0.0
      %3767 = vmatpush1.xpose.msra.mxu0 0.0
      %3768 = vmatprep.subr.mxu0 0.0
      %3769 = vmatpush1.xpose.msra.mxu0 0.0
      %3770 = vmatprep.subr.mxu0 0.0
      %3771 = vmatpush1.xpose.msra.mxu0 0.0
      %3772 = vmatprep.subr.mxu0 0.0
      %3773 = vmatpush1.xpose.msra.mxu0 0.0
      %3774 = vmatprep.subr.mxu0 0.0
      %3775 = vmatpush1.xpose.msra.mxu0 0.0
      %3776 = vmatprep.subr.mxu0 0.0
      %3777 = vmatpush1.xpose.msra.mxu0 0.0
      %3778 = vmatprep.subr.mxu0 0.0
      %3779 = vmatpush1.xpose.msra.mxu0 0.0
      %3780 = vmatprep.subr.mxu0 0.0
      %3781 = vmatpush1.xpose.msra.mxu0 0.0
      %3782 = vmatprep.subr.mxu0 0.0
      %3783 = vmatpush1.xpose.msra.mxu0 0.0
      %3784 = vmatprep.subr.mxu0 0.0
      %3785 = vmatpush1.xpose.msra.mxu0 0.0
      %3786 = vmatprep.subr.mxu0 0.0
      %3787 = vmatpush1.xpose.msra.mxu0 %v3756
      %3788 = vmatprep.subr.mxu0 0.0
      %3789 = vmatpush1.xpose.msra.mxu0 %v3754
      %3790 = vmatprep.subr.mxu0 0.0
      %3791 = vmatpush2.xpose.msra.mxu0 0.0
      %3792 = vmatprep.subr.mxu0 0.0
      %3793 = vmatpush2.xpose.msra.mxu0 0.0
      %3794 = vmatprep.subr.mxu0 0.0
      %3795 = vmatpush2.xpose.msra.mxu0 0.0
      %3796 = vmatprep.subr.mxu0 0.0
      %3797 = vmatpush2.xpose.msra.mxu0 0.0
      %3798 = vmatprep.subr.mxu0 0.0
      %3799 = vmatpush2.xpose.msra.mxu0 0.0
      %3800 = vmatprep.subr.mxu0 0.0
      %3801 = vmatpush2.xpose.msra.mxu0 0.0
      %3802 = vmatprep.subr.mxu0 0.0
      %3803 = vmatpush2.xpose.msra.mxu0 0.0
      %3804 = vmatprep.subr.mxu0 0.0
      %3805 = vmatpush2.xpose.msra.mxu0 0.0
      %3806 = vmatprep.subr.mxu0 0.0
      %3807 = vmatpush2.xpose.msra.mxu0 0.0
      %3808 = vmatprep.subr.mxu0 0.0
      %3809 = vmatpush2.xpose.msra.mxu0 0.0
      %3810 = vmatprep.subr.mxu0 0.0
      %3811 = vmatpush2.xpose.msra.mxu0 0.0
      %3812 = vmatprep.subr.mxu0 0.0
      %3813 = vmatpush2.xpose.msra.mxu0 0.0
      %3814 = vmatprep.subr.mxu0 0.0
      %3815 = vmatpush2.xpose.msra.mxu0 0.0
      %3816 = vmatprep.subr.mxu0 0.0
      %3817 = vmatpush2.xpose.msra.mxu0 0.0
      %3818 = vmatprep.subr.mxu0 0.0
      %3819 = vmatpush2.xpose.msra.mxu0 0.0
      %3820 = vmatprep.subr.mxu0 0.0
      %3821 = vmatpush2.xpose.msra.mxu0 0.0
      %3822 = vmatprep.mubr.f32.mxu0 0.0
      %3823 = vmatmul.mubr.f32.gmra.mxu0 %v3752
      %v3824 = vpop.f32.mrf.mxu0
      %v3825 = vadd.f32 0.0, %v3824
      %v3826 = vpop.f32.mrf.mxu0
      %3827 = vdwg.mxu0
      %v3828 = vmul.f32 %v3825, 0.35355338
      %v3829 = vsel %vm899, %v3828, -inf
      %3830 = vmax.xlane.f32.xlu0 %v3829
      %v3831 = vpop.xlane.xlu0 %3830
      %v3832 = vsub.f32 %v3828, %v3831
      %v3833 = vmul.f32 %v3832, 1.442695
      %v3834 = vpow.pop %v3833
      %v3835 = vsel %vm899, %v3834, 0.0
      %3836 = vadd.xlane.f32.xlu0 %v3835
      %v3837 = vpop.xlane.xlu0 %3836
      %v3838 = vrcp.pop %v3837
      %v3839 = vmul.f32 %v3834, %v3838
      %3840 = vrot.lane.b32.xlu0 %v2525, 8
      %v3841 = vpop.permute.xlu0 %3840
      %3842 = vrot.lane.b32.xlu0 %v2528, 8
      %v3843 = vpop.permute.xlu0 %3842
      %v3846 = vsel %vm911, %v3839, 0
      %v3848 = vsel %vm915, %v3843, 0
      %3850 = vmatprep.subr.mxu0 0.0
      %3851 = vmatpush1.msra.mxu0 0.0
      %3852 = vmatprep.subr.mxu0 0.0
      %3853 = vmatpush1.msra.mxu0 0.0
      %3854 = vmatprep.subr.mxu0 0.0
      %3855 = vmatpush1.msra.mxu0 0.0
      %3856 = vmatprep.subr.mxu0 0.0
      %3857 = vmatpush1.msra.mxu0 0.0
      %3858 = vmatprep.subr.mxu0 0.0
      %3859 = vmatpush1.msra.mxu0 0.0
      %3860 = vmatprep.subr.mxu0 0.0
      %3861 = vmatpush1.msra.mxu0 0.0
      %3862 = vmatprep.subr.mxu0 0.0
      %3863 = vmatpush1.msra.mxu0 0.0
      %3864 = vmatprep.subr.mxu0 0.0
      %3865 = vmatpush1.msra.mxu0 0.0
      %3866 = vmatprep.subr.mxu0 0.0
      %3867 = vmatpush1.msra.mxu0 0.0
      %3868 = vmatprep.subr.mxu0 0.0
      %3869 = vmatpush1.msra.mxu0 0.0
      %3870 = vmatprep.subr.mxu0 0.0
      %3871 = vmatpush1.msra.mxu0 0.0
      %3872 = vmatprep.subr.mxu0 0.0
      %3873 = vmatpush1.msra.mxu0 0.0
      %3874 = vmatprep.subr.mxu0 0.0
      %3875 = vmatpush1.msra.mxu0 0.0
      %3876 = vmatprep.subr.mxu0 0.0
      %3877 = vmatpush1.msra.mxu0 0.0
      %3878 = vmatprep.subr.mxu0 0.0
      %3879 = vmatpush1.msra.mxu0 %v3848
      %3880 = vmatprep.subr.mxu0 0.0
      %3881 = vmatpush1.msra.mxu0 %v3841
      %3882 = vmatprep.subr.mxu0 0.0
      %3883 = vmatpush2.msra.mxu0 0.0
      %3884 = vmatprep.subr.mxu0 0.0
      %3885 = vmatpush2.msra.mxu0 0.0
      %3886 = vmatprep.subr.mxu0 0.0
      %3887 = vmatpush2.msra.mxu0 0.0
      %3888 = vmatprep.subr.mxu0 0.0
      %3889 = vmatpush2.msra.mxu0 0.0
      %3890 = vmatprep.subr.mxu0 0.0
      %3891 = vmatpush2.msra.mxu0 0.0
      %3892 = vmatprep.subr.mxu0 0.0
      %3893 = vmatpush2.msra.mxu0 0.0
      %3894 = vmatprep.subr.mxu0 0.0
      %3895 = vmatpush2.msra.mxu0 0.0
      %3896 = vmatprep.subr.mxu0 0.0
      %3897 = vmatpush2.msra.mxu0 0.0
      %3898 = vmatprep.subr.mxu0 0.0
      %3899 = vmatpush2.msra.mxu0 0.0
      %3900 = vmatprep.subr.mxu0 0.0
      %3901 = vmatpush2.msra.mxu0 0.0
      %3902 = vmatprep.subr.mxu0 0.0
      %3903 = vmatpush2.msra.mxu0 0.0
      %3904 = vmatprep.subr.mxu0 0.0
      %3905 = vmatpush2.msra.mxu0 0.0
      %3906 = vmatprep.subr.mxu0 0.0
      %3907 = vmatpush2.msra.mxu0 0.0
      %3908 = vmatprep.subr.mxu0 0.0
      %3909 = vmatpush2.msra.mxu0 0.0
      %3910 = vmatprep.subr.mxu0 0.0
      %3911 = vmatpush2.msra.mxu0 0.0
      %3912 = vmatprep.subr.mxu0 0.0
      %3913 = vmatpush2.msra.mxu0 0.0
      %3914 = vmatprep.mubr.f32.mxu0 0.0
      %3915 = vmatmul.mubr.f32.gmra.mxu0 %v3846
      %v3916 = vpop.f32.mrf.mxu0
      %v3917 = vadd.f32 0.0, %v3916
      %v3918 = vpop.f32.mrf.mxu0
      %3919 = vdwg.mxu0
      %3921 = vrot.lane.b32.xlu0 %v2873, 8
      %v3922 = vpop.permute.xlu0 %3921
      %3925 = vrot.lane.b32.xlu0 %v3047, 16
      %v3926 = vpop.permute.xlu0 %3925
      %3929 = vrot.lane.b32.xlu0 %v3221, 24
      %v3930 = vpop.permute.xlu0 %3929
      %3933 = vrot.lane.b32.xlu0 %v3395, 32
      %v3934 = vpop.permute.xlu0 %3933
      %3937 = vrot.lane.b32.xlu0 %v3569, 40
      %v3938 = vpop.permute.xlu0 %3937
      %3941 = vrot.lane.b32.xlu0 %v3743, 48
      %v3942 = vpop.permute.xlu0 %3941
      %3945 = vrot.lane.b32.xlu0 %v3917, 56
      %v3946 = vpop.permute.xlu0 %3945
      %v3948 = vsel %vm821, %v2699, %v3922
      %v3949 = vsel %vm2237, %v3948, %v3926
      %v3950 = vsel %vm2239, %v3949, %v3930
      %v3951 = vsel %vm2241, %v3950, %v3934
      %v3952 = vsel %vm2243, %v3951, %v3938
      %v3953 = vsel %vm2245, %v3952, %v3942
      %v3954 = vsel %vm2247, %v3953, %v3946
      %v3955 = vpack.c.bf16 %v3954, %v3954
      %v3956 = vld [vmem:[%s10] sm:$0xf]
      %v3957 = vld [vmem:[%s10 + $0x4] sm:$0xf]
      %v3958 = vld [vmem:[%s10 + $0x8] sm:$0xf]
      %v3959 = vld [vmem:[%s10 + $0xc] sm:$0xf]
      %v3960 = vld [vmem:[%s10 + $0x10] sm:$0xf]
      %v3961 = vld [vmem:[%s10 + $0x14] sm:$0xf]
      %v3962 = vld [vmem:[%s10 + $0x18] sm:$0xf]
      %v3963 = vld [vmem:[%s10 + $0x1c] sm:$0xf]
      %v3964 = vld [vmem:[%s11] sm:$0x1]
      %v3966 = vlaneseq
      %v3967 = vshrl.u32 %v3966, 7
      %v3968 = vsub.s32 0, %v3967
      %v3969 = vrot.slane %v3964, %v3968
      %v3979 = vunpack.c.l.b16 %v3956
      %v3980 = vunpack.c.l.b16 %v3957
      %v3981 = vunpack.c.l.b16 %v3958
      %v3982 = vunpack.c.l.b16 %v3959
      %v3983 = vunpack.c.l.b16 %v3960
      %v3984 = vunpack.c.l.b16 %v3961
      %v3985 = vunpack.c.l.b16 %v3962
      %v3986 = vunpack.c.l.b16 %v3963
      %v3987 = vpack.c.b16 %v3980, %v3979
      %v3988 = vpack.c.b16 %v3982, %v3981
      %v3989 = vpack.c.b16 %v3984, %v3983
      %v3990 = vpack.c.b16 %v3986, %v3985
      %v3996 = vsel %vm768, %v3955, 0
      %3998 = vmatprep.subr.bf16.mxu0 0
      %3999 = vmatpush1.bf16.msra.mxu0 0
      %4000 = vmatprep.subr.bf16.mxu0 0
      %4001 = vmatpush1.bf16.msra.mxu0 0
      %4002 = vmatprep.subr.bf16.mxu0 0
      %4003 = vmatpush1.bf16.msra.mxu0 0
      %4004 = vmatprep.subr.bf16.mxu0 0
      %4005 = vmatpush1.bf16.msra.mxu0 0
      %4006 = vmatprep.subr.bf16.mxu0 0
      %4007 = vmatpush1.bf16.msra.mxu0 %v3990
      %4008 = vmatprep.subr.bf16.mxu0 0
      %4009 = vmatpush1.bf16.msra.mxu0 %v3989
      %4010 = vmatprep.subr.bf16.mxu0 0
      %4011 = vmatpush1.bf16.msra.mxu0 %v3988
      %4012 = vmatprep.subr.bf16.mxu0 0
      %4013 = vmatpush1.bf16.msra.mxu0 %v3987
      %4014 = vmatprep.subr.bf16.mxu0 0
      %4015 = vmatpush2.bf16.msra.mxu0 0
      %4016 = vmatprep.subr.bf16.mxu0 0
      %4017 = vmatpush2.bf16.msra.mxu0 0
      %4018 = vmatprep.subr.bf16.mxu0 0
      %4019 = vmatpush2.bf16.msra.mxu0 0
      %4020 = vmatprep.subr.bf16.mxu0 0
      %4021 = vmatpush2.bf16.msra.mxu0 0
      %4022 = vmatprep.subr.bf16.mxu0 0
      %4023 = vmatpush2.bf16.msra.mxu0 0
      %4024 = vmatprep.subr.bf16.mxu0 0
      %4025 = vmatpush2.bf16.msra.mxu0 0
      %4026 = vmatprep.subr.bf16.mxu0 0
      %4027 = vmatpush2.bf16.msra.mxu0 0
      %4028 = vmatprep.subr.bf16.mxu0 0
      %4029 = vmatpush2.bf16.msra.mxu0 0
      %4030 = vmatprep.mubr.bf16.mxu0 0
      %4031 = vmatmul.mubr.bf16.gmra.mxu0 %v3996
      %v4032 = vpop.f32.mrf.mxu0
      %v4033 = vadd.f32 %v3969, %v4032
      %v4034 = vpop.f32.mrf.mxu0
      %v4035 = vpop.f32.mrf.mxu0
      %v4036 = vpop.f32.mrf.mxu0
      %4037 = vdwg.mxu0
      %v4038 = vadd.f32 %v2363, %v4033
      %v4039 = vld [vmem:[%s14] sm:$0x1]
      %v4040 = vld [vmem:[%s15] sm:$0x1]
      %v4041 = vsel %vm2335, %v4038, 0.0
      %4042 = vadd.xlane.f32.xlu0 %v4041
      %v4043 = vpop.xlane.xlu0 %4042
      %v4044 = vmul.f32 %v4043, %v2339
      %v4045 = vsub.f32 %v4038, %v4044
      %v4046 = vmul.f32 %v4045, %v4045
      %v4047 = vsel %vm2335, %v4046, 0.0
      %4048 = vadd.xlane.f32.xlu0 %v4047
      %v4049 = vpop.xlane.xlu0 %4048
      %v4050 = vmul.f32 %v4049, %v2339
      %v4051 = vadd.f32 %v4050, 1e-05
      %v4052 = vrsqrt.pop %v4051
      %v4053 = vmul.f32 %v4045, %v4052
      %v4055 = vlaneseq
      %v4056 = vshrl.u32 %v4055, 7
      %v4057 = vsub.s32 0, %v4056
      %v4058 = vrot.slane %v4039, %v4057
      %v4060 = vmul.f32 %v4053, %v4058
      %v4062 = vlaneseq
      %v4063 = vshrl.u32 %v4062, 7
      %v4064 = vsub.s32 0, %v4063
      %v4065 = vrot.slane %v4040, %v4064
      %v4067 = vadd.f32 %v4060, %v4065
      %v4068 = vpack.c.bf16 %v4067, %v4067
      %v4069 = vld [vmem:[%s18] sm:$0xf]
      %v4070 = vld [vmem:[%s18 + $0x4] sm:$0xf]
      %v4071 = vld [vmem:[%s18 + $0x8] sm:$0xf]
      %v4072 = vld [vmem:[%s18 + $0xc] sm:$0xf]
      %v4073 = vld [vmem:[%s18 + $0x10] sm:$0xf]
      %v4074 = vld [vmem:[%s18 + $0x14] sm:$0xf]
      %v4075 = vld [vmem:[%s18 + $0x18] sm:$0xf]
      %v4076 = vld [vmem:[%s18 + $0x1c] sm:$0xf]
      %v4077 = vld [vmem:[%s19] sm:$0x1]
      %v4079 = vlaneseq
      %v4080 = vshrl.u32 %v4079, 7
      %v4081 = vsub.s32 0, %v4080
      %v4082 = vrot.slane %v4077, %v4081
      %v4092 = vunpack.c.l.b16 %v4069
      %v4093 = vunpack.c.l.b16 %v4070
      %v4094 = vunpack.c.l.b16 %v4071
      %v4095 = vunpack.c.l.b16 %v4072
      %v4096 = vunpack.c.l.b16 %v4073
      %v4097 = vunpack.c.l.b16 %v4074
      %v4098 = vunpack.c.l.b16 %v4075
      %v4099 = vunpack.c.l.b16 %v4076
      %v4100 = vpack.c.b16 %v4093, %v4092
      %v4101 = vpack.c.b16 %v4095, %v4094
      %v4102 = vpack.c.b16 %v4097, %v4096
      %v4103 = vpack.c.b16 %v4099, %v4098
      %v4109 = vsel %vm768, %v4068, 0
      %4111 = vmatprep.subr.bf16.mxu0 0
      %4112 = vmatpush1.bf16.msra.mxu0 0
      %4113 = vmatprep.subr.bf16.mxu0 0
      %4114 = vmatpush1.bf16.msra.mxu0 0
      %4115 = vmatprep.subr.bf16.mxu0 0
      %4116 = vmatpush1.bf16.msra.mxu0 0
      %4117 = vmatprep.subr.bf16.mxu0 0
      %4118 = vmatpush1.bf16.msra.mxu0 0
      %4119 = vmatprep.subr.bf16.mxu0 0
      %4120 = vmatpush1.bf16.msra.mxu0 %v4103
      %4121 = vmatprep.subr.bf16.mxu0 0
      %4122 = vmatpush1.bf16.msra.mxu0 %v4102
      %4123 = vmatprep.subr.bf16.mxu0 0
      %4124 = vmatpush1.bf16.msra.mxu0 %v4101
      %4125 = vmatprep.subr.bf16.mxu0 0
      %4126 = vmatpush1.bf16.msra.mxu0 %v4100
      %4127 = vmatprep.subr.bf16.mxu0 0
      %4128 = vmatpush2.bf16.msra.mxu0 0
      %4129 = vmatprep.subr.bf16.mxu0 0
      %4130 = vmatpush2.bf16.msra.mxu0 0
      %4131 = vmatprep.subr.bf16.mxu0 0
      %4132 = vmatpush2.bf16.msra.mxu0 0
      %4133 = vmatprep.subr.bf16.mxu0 0
      %4134 = vmatpush2.bf16.msra.mxu0 0
      %4135 = vmatprep.subr.bf16.mxu0 0
      %4136 = vmatpush2.bf16.msra.mxu0 0
      %4137 = vmatprep.subr.bf16.mxu0 0
      %4138 = vmatpush2.bf16.msra.mxu0 0
      %4139 = vmatprep.subr.bf16.mxu0 0
      %4140 = vmatpush2.bf16.msra.mxu0 0
      %4141 = vmatprep.subr.bf16.mxu0 0
      %4142 = vmatpush2.bf16.msra.mxu0 0
      %4143 = vmatprep.mubr.bf16.mxu0 0
      %4144 = vmatmul.mubr.bf16.gmra.mxu0 %v4109
      %v4145 = vpop.f32.mrf.mxu0
      %v4146 = vadd.f32 %v4082, %v4145
      %v4147 = vpop.f32.mrf.mxu0
      %v4148 = vpop.f32.mrf.mxu0
      %v4149 = vpop.f32.mrf.mxu0
      %4150 = vdwg.mxu0
      %v4151 = vmax.f32 %v4146, 0.0
      %v4152 = vpack.c.bf16 %v4151, %v4151
      %v4153 = vld [vmem:[%s20] sm:$0xf]
      %v4154 = vld [vmem:[%s20 + $0x4] sm:$0xf]
      %v4155 = vld [vmem:[%s20 + $0x8] sm:$0xf]
      %v4156 = vld [vmem:[%s20 + $0xc] sm:$0xf]
      %v4157 = vld [vmem:[%s20 + $0x10] sm:$0xf]
      %v4158 = vld [vmem:[%s20 + $0x14] sm:$0xf]
      %v4159 = vld [vmem:[%s20 + $0x18] sm:$0xf]
      %v4160 = vld [vmem:[%s20 + $0x1c] sm:$0xf]
      %v4161 = vld [vmem:[%s20 + $0x20] sm:$0xf]
      %v4162 = vld [vmem:[%s20 + $0x24] sm:$0xf]
      %v4163 = vld [vmem:[%s20 + $0x28] sm:$0xf]
      %v4164 = vld [vmem:[%s20 + $0x2c] sm:$0xf]
      %v4165 = vld [vmem:[%s20 + $0x30] sm:$0xf]
      %v4166 = vld [vmem:[%s20 + $0x34] sm:$0xf]
      %v4167 = vld [vmem:[%s20 + $0x38] sm:$0xf]
      %v4168 = vld [vmem:[%s20 + $0x3c] sm:$0xf]
      %v4169 = vld [vmem:[%s21] sm:$0x1]
      %v4171 = vlaneseq
      %v4172 = vshrl.u32 %v4171, 7
      %v4173 = vsub.s32 0, %v4172
      %v4174 = vrot.slane %v4169, %v4173
      %v4192 = vunpack.c.l.b16 %v4153
      %v4193 = vunpack.c.l.b16 %v4154
      %v4194 = vunpack.c.l.b16 %v4155
      %v4195 = vunpack.c.l.b16 %v4156
      %v4196 = vunpack.c.l.b16 %v4157
      %v4197 = vunpack.c.l.b16 %v4158
      %v4198 = vunpack.c.l.b16 %v4159
      %v4199 = vunpack.c.l.b16 %v4160
      %v4200 = vunpack.c.l.b16 %v4161
      %v4201 = vunpack.c.l.b16 %v4162
      %v4202 = vunpack.c.l.b16 %v4163
      %v4203 = vunpack.c.l.b16 %v4164
      %v4204 = vunpack.c.l.b16 %v4165
      %v4205 = vunpack.c.l.b16 %v4166
      %v4206 = vunpack.c.l.b16 %v4167
      %v4207 = vunpack.c.l.b16 %v4168
      %v4208 = vpack.c.b16 %v4193, %v4192
      %v4209 = vpack.c.b16 %v4195, %v4194
      %v4210 = vpack.c.b16 %v4197, %v4196
      %v4211 = vpack.c.b16 %v4199, %v4198
      %v4212 = vpack.c.b16 %v4201, %v4200
      %v4213 = vpack.c.b16 %v4203, %v4202
      %v4214 = vpack.c.b16 %v4205, %v4204
      %v4215 = vpack.c.b16 %v4207, %v4206
      %4224 = vmatprep.subr.bf16.mxu0 0
      %4225 = vmatpush1.bf16.msra.mxu0 %v4215
      %4226 = vmatprep.subr.bf16.mxu0 0
      %4227 = vmatpush1.bf16.msra.mxu0 %v4214
      %4228 = vmatprep.subr.bf16.mxu0 0
      %4229 = vmatpush1.bf16.msra.mxu0 %v4213
      %4230 = vmatprep.subr.bf16.mxu0 0
      %4231 = vmatpush1.bf16.msra.mxu0 %v4212
      %4232 = vmatprep.subr.bf16.mxu0 0
      %4233 = vmatpush1.bf16.msra.mxu0 %v4211
      %4234 = vmatprep.subr.bf16.mxu0 0
      %4235 = vmatpush1.bf16.msra.mxu0 %v4210
      %4236 = vmatprep.subr.bf16.mxu0 0
      %4237 = vmatpush1.bf16.msra.mxu0 %v4209
      %4238 = vmatprep.subr.bf16.mxu0 0
      %4239 = vmatpush1.bf16.msra.mxu0 %v4208
      %4240 = vmatprep.subr.bf16.mxu0 0
      %4241 = vmatpush2.bf16.msra.mxu0 0
      %4242 = vmatprep.subr.bf16.mxu0 0
      %4243 = vmatpush2.bf16.msra.mxu0 0
      %4244 = vmatprep.subr.bf16.mxu0 0
      %4245 = vmatpush2.bf16.msra.mxu0 0
      %4246 = vmatprep.subr.bf16.mxu0 0
      %4247 = vmatpush2.bf16.msra.mxu0 0
      %4248 = vmatprep.subr.bf16.mxu0 0
      %4249 = vmatpush2.bf16.msra.mxu0 0
      %4250 = vmatprep.subr.bf16.mxu0 0
      %4251 = vmatpush2.bf16.msra.mxu0 0
      %4252 = vmatprep.subr.bf16.mxu0 0
      %4253 = vmatpush2.bf16.msra.mxu0 0
      %4254 = vmatprep.subr.bf16.mxu0 0
      %4255 = vmatpush2.bf16.msra.mxu0 0
      %4256 = vmatprep.mubr.bf16.mxu0 0
      %4257 = vmatmul.mubr.bf16.gmra.mxu0 %v4152
      %v4258 = vpop.f32.mrf.mxu0
      %v4259 = vadd.f32 %v4174, %v4258
      %v4260 = vpop.f32.mrf.mxu0
      %v4261 = vpop.f32.mrf.mxu0
      %v4262 = vpop.f32.mrf.mxu0
      %4263 = vdwg.mxu0
      %v4264 = vadd.f32 %v4067, %v4259
      %v4265 = vld [vmem:[%s16] sm:$0x1]
      %v4266 = vld [vmem:[%s17] sm:$0x1]
      %v4267 = vsel %vm2335, %v4264, 0.0
      %4268 = vadd.xlane.f32.xlu0 %v4267
      %v4269 = vpop.xlane.xlu0 %4268
      %v4270 = vmul.f32 %v4269, %v2339
      %v4271 = vsub.f32 %v4264, %v4270
      %v4272 = vmul.f32 %v4271, %v4271
      %v4273 = vsel %vm2335, %v4272, 0.0
      %4274 = vadd.xlane.f32.xlu0 %v4273
      %v4275 = vpop.xlane.xlu0 %4274
      %v4276 = vmul.f32 %v4275, %v2339
      %v4277 = vadd.f32 %v4276, 1e-05
      %v4278 = vrsqrt.pop %v4277
      %v4279 = vmul.f32 %v4271, %v4278
      %v4281 = vlaneseq
      %v4282 = vshrl.u32 %v4281, 7
      %v4283 = vsub.s32 0, %v4282
      %v4284 = vrot.slane %v4265, %v4283
      %v4286 = vmul.f32 %v4279, %v4284
      %v4288 = vlaneseq
      %v4289 = vshrl.u32 %v4288, 7
      %v4290 = vsub.s32 0, %v4289
      %v4291 = vrot.slane %v4266, %v4290
      %v4293 = vadd.f32 %v4286, %v4291
      %4294 = vst.msk [vmem:[%s701] sm:$0xf] %vm2335, %v4293
      %p4295 = scmp.lt.s32.totalorder %s33, 3
      %s4296 = scalar_select %p4295, %s33, 3
      %s4297 = smul.addr %s4296, 4
      %s4298 = scalar_lea.vmem %s22, %s4297
      // Predicated region
      $region109: #{_lambda_.12} parent=107 // pred_check
        %p4299 = pneg %p523
      $region110: #{_lambda_.12} parent=107 // pred_check_branch
        %4301 = sbr.rel (%p4299) target = $region112
      $region111: #{_lambda_.12} parent=107 // pred_region
        _
      $region112: #{_lambda_.12} parent=107 // pred_fallthru
        _
    $region108: #{_lambda_.12} parent=5 // pred_fallthru
      _
    %p4302 = scmp.le.s32.totalorder 2, %s28
    // Predicated region
    $region113: #{_lambda_.12} parent=5 // pred_check
      %p4303 = pneg %p4302
    $region114: #{_lambda_.12} parent=5 // pred_check_branch
      %4305 = sbr.rel (%p4303) target = $region116
    $region115: #{_lambda_.12} parent=5 // pred_region
      %s4306 = ssub.s32 %s28, 2
      // Predicated region
      $region117: #{_lambda_.12} parent=115 // pred_check
        %p4307 = pneg %p529
      $region118: #{_lambda_.12} parent=115 // pred_check_branch
        %4309 = sbr.rel (%p4307) target = $region120
      $region119: #{_lambda_.12} parent=115 // pred_region
        %p4310 = scmp.lt.s32.totalorder %s34, 3
        %s4311 = scalar_select %p4310, %s34, 3
        %s4312 = smul.addr %s4311, 4
        %s4313 = scalar_lea.vmem %s22, %s4312
      $region120: #{_lambda_.12} parent=115 // pred_fallthru
        _
    $region116: #{_lambda_.12} parent=5 // pred_fallthru
      _
  $region6: #{_lambda_.12} parent=0 // loop_footer
    %s32 = sadd.s32 1, %s28
  $region7: #{_lambda_.12} parent=0 // loop_footer_branch
    %27 = sbr.rel target = $region3
  $region8: #{_lambda_.12} parent=0 // loop_exit
    _

</llo_original>
